<compile_context>
chip_gen: v6e
topology: v6e:2x2x1
jax: 0.10.0
libtpu: 0.0.40
codegen_flags: <defaults>
</compile_context>

<pallas_src>
import jax
import jax.numpy as jnp
from jax.experimental import pallas as pl
from jax.experimental.pallas import tpu as pltpu

KSIZE = 7
PAD = 3                      # padding = 3 for kernel_size = 7 (as in PyTorch module)
NTAPS = KSIZE * KSIZE


def spatial_attention_kernel(w_ref, x_ref, o_ref, avg_ref, max_ref):
    # w_ref   : SMEM (98,) f32     [avg-weights * (1/C)] ++ [max-weights]
    # x_ref   : VMEM (Nb, C, H*W)  lane-dense input block (one grid step)
    # o_ref   : VMEM (Nb, H*W)     lane-dense output block
    # avg_ref : VMEM (H+2P, Nb, W+2P)  zero-padded pooled channel-mean map
    # max_ref : VMEM (H+2P, Nb, W+2P)  zero-padded pooled channel-max map
    Hp, Nb, Wp = avg_ref.shape
    H = Hp - 2 * PAD
    W = Wp - 2 * PAD

    # ---- channel reduction, lane-dense over H*W (the HBM-bound part) ----
    xs = x_ref[...]                                      # (Nb, C, H*W)
    s = jnp.sum(xs.astype(jnp.float32), axis=1)          # (Nb, H*W); 1/C folded into weights
    m = jnp.max(xs, axis=1).astype(jnp.float32)          # (Nb, H*W)

    # ---- stage zero-padded pooled maps in VMEM scratch ----
    avg_ref[...] = jnp.zeros_like(avg_ref)
    max_ref[...] = jnp.zeros_like(max_ref)
    for h in range(H):                                   # tiny: H row stores
        avg_ref[PAD + h, :, PAD:PAD + W] = s[:, h * W:(h + 1) * W]
        max_ref[PAD + h, :, PAD:PAD + W] = m[:, h * W:(h + 1) * W]

    # ---- 7x7 conv over the 2 pooled channels (VPU MACs) ----
    # Hoist the 7 lane (kj) shifts: one lane-offset window load per kj;
    # the 7 ki taps are leading-dim slices of that value (no cross-lane work).
    acc = jnp.zeros((H, Nb, W), jnp.float32)
    for kj in range(KSIZE):
        a_kj = avg_ref[:, :, kj:kj + W]                  # (Hp, Nb, W)
        m_kj = max_ref[:, :, kj:kj + W]                  # (Hp, Nb, W)
        for ki in range(KSIZE):
            t = ki * KSIZE + kj
            acc = acc + w_ref[t] * a_kj[ki:ki + H] \
                      + w_ref[NTAPS + t] * m_kj[ki:ki + H]

    out = jax.nn.sigmoid(acc).astype(o_ref.dtype)        # (H, Nb, W)

    # ---- emit lane-dense (Nb, H*W) output block ----
    for h in range(H):
        o_ref[:, h * W:(h + 1) * W] = out[h]


def spatial_attention(x, weight, *, block_n=None):
    """x: (N, C, H, W); weight: (1, 2, 7, 7) conv weight (no bias)."""
    N, C, H, W = x.shape
    HW = H * W

    # Free views / tiny prep (no extra HBM pass over x).
    x_flat = x.reshape(N, C, HW)
    w = weight.astype(jnp.float32).reshape(2, NTAPS)
    w_flat = jnp.concatenate([w[0] / C, w[1]])           # (98,), 1/C folded in

    if block_n is None:
        # Batch elements per grid step: amortize the fixed per-step overhead,
        # but keep the double-buffered input block well under the v7x 32 MiB
        # scoped-VMEM default.  (On v7x, very large N would still give >=2
        # parallel grid steps for the two TensorCores.)
        # TODO(synk): for very large C*H*W (e.g. C>=1024 at 64x64) add a C
        # grid axis with running sum / running max (-inf init) accumulators.
        per_elem = 2 * C * HW * x.dtype.itemsize         # x2: double buffering
        budget = 8 << 20
        block_n = 1
        for nb in range(1, N + 1):
            if N % nb == 0 and nb * per_elem <= budget:
                block_n = nb
    grid = (N // block_n,)

    out_flat = pl.pallas_call(
        spatial_attention_kernel,
        out_shape=jax.ShapeDtypeStruct((N, HW), x.dtype),
        grid=grid,
        in_specs=[
            pl.BlockSpec(memory_space=pltpu.MemorySpace.SMEM),          # weights
            pl.BlockSpec((block_n, C, HW), lambda n: (n, 0, 0)),        # unpadded x
        ],
        out_specs=pl.BlockSpec((block_n, HW), lambda n: (n, 0)),
        scratch_shapes=[
            pltpu.VMEM((H + 2 * PAD, block_n, W + 2 * PAD), jnp.float32),
            pltpu.VMEM((H + 2 * PAD, block_n, W + 2 * PAD), jnp.float32),
        ],
        compiler_params=pltpu.CompilerParams(
            dimension_semantics=("parallel",)),
    )(w_flat, x_flat)

    return out_flat.reshape(N, 1, H, W)


def spatial_attention_ref(x, weight):
    """Pure-JAX reference matching the PyTorch forward exactly."""
    avg_out = jnp.mean(x, axis=1, keepdims=True)
    max_out = jnp.max(x, axis=1, keepdims=True)
    pooled = jnp.concatenate([avg_out, max_out], axis=1)
    y = jax.lax.conv_general_dilated(
        pooled, weight, window_strides=(1, 1),
        padding=[(PAD, PAD), (PAD, PAD)],
        dimension_numbers=("NCHW", "OIHW", "NCHW"))
    return jax.nn.sigmoid(y)


if __name__ == "__main__":
    key = jax.random.PRNGKey(0)
    kx, kw = jax.random.split(key)

    N, C, H, W = 2, 4, 16, 16
    x = jax.random.normal(kx, (N, C, H, W), dtype=jnp.float32)
    # Deterministic synthetic conv1 weight: shape (out=1, in=2, 7, 7), no bias.
    weight = jax.random.normal(kw, (1, 2, KSIZE, KSIZE), dtype=jnp.float32) * 0.1

    out = jax.block_until_ready(spatial_attention(x, weight))
    ref = jax.block_until_ready(spatial_attention_ref(x, weight))

    assert out.shape == (N, 1, H, W), out.shape
    assert jnp.allclose(out, ref, atol=1e-5, rtol=1e-5), \
        float(jnp.max(jnp.abs(out - ref)))
    print("KERNEL_OK")
</pallas_src>

<mosaic_0001>
module attributes {stable_mosaic.version = 11 : i64} {
  func.func @spatial_attention_kernel(%arg0: i32, %arg1: memref<98xf32, #tpu.memory_space<smem>>, %arg2: memref<2x4x256xf32, #tpu.memory_space<vmem>>, %arg3: memref<2x256xf32, #tpu.memory_space<vmem>>, %arg4: memref<22x2x22xf32, #tpu.memory_space<vmem>>, %arg5: memref<22x2x22xf32, #tpu.memory_space<vmem>>) attributes {dimension_semantics = [#tpu.dimension_semantics<parallel>], iteration_bounds = array<i64: 1>, scalar_prefetch = 0 : i64, scratch_operands = 2 : i64, tpu.core_type = #tpu.core_type<tc>, window_params = [{transform_indices = @transform_0, window_bounds = array<i64: 98>}, {transform_indices = @transform_1, window_bounds = array<i64: 2, 4, 256>}, {transform_indices = @transform_2, window_bounds = array<i64: 2, 256>}]} {
    %c0 = arith.constant 0 : index
    %c0_0 = arith.constant 0 : index
    %c0_1 = arith.constant 0 : index
    %0 = vector.load %arg2[%c0, %c0_0, %c0_1] : memref<2x4x256xf32, #tpu.memory_space<vmem>>, vector<2x4x256xf32>
    %cst = arith.constant dense<0.000000e+00> : vector<2x256xf32>
    %1 = vector.multi_reduction <add>, %0, %cst [1] : vector<2x4x256xf32> to vector<2x256xf32>
    %cst_2 = arith.constant dense<0xFF800000> : vector<2x256xf32>
    %2 = vector.multi_reduction <maximumf>, %0, %cst_2 [1] : vector<2x4x256xf32> to vector<2x256xf32>
    %cst_3 = arith.constant 0.000000e+00 : f32
    %3 = vector.broadcast %cst_3 : f32 to vector<22x2x22xf32>
    %c0_4 = arith.constant 0 : index
    %c0_5 = arith.constant 0 : index
    %c0_6 = arith.constant 0 : index
    %4 = vector.load %arg4[%c0_4, %c0_5, %c0_6] : memref<22x2x22xf32, #tpu.memory_space<vmem>>, vector<22x2x22xf32>
    tpu.vector_store %arg4[%c0_4, %c0_5, %c0_6], %3 {strides = array<i32>} : memref<22x2x22xf32, #tpu.memory_space<vmem>>, vector<22x2x22xf32>,
    %cst_7 = arith.constant 0.000000e+00 : f32
    %5 = vector.broadcast %cst_7 : f32 to vector<22x2x22xf32>
    %c0_8 = arith.constant 0 : index
    %c0_9 = arith.constant 0 : index
    %c0_10 = arith.constant 0 : index
    %6 = vector.load %arg5[%c0_8, %c0_9, %c0_10] : memref<22x2x22xf32, #tpu.memory_space<vmem>>, vector<22x2x22xf32>
    tpu.vector_store %arg5[%c0_8, %c0_9, %c0_10], %5 {strides = array<i32>} : memref<22x2x22xf32, #tpu.memory_space<vmem>>, vector<22x2x22xf32>,
    %7 = vector.extract_strided_slice %1 {offsets = [0, 0], sizes = [2, 16], strides = [1, 1]} : vector<2x256xf32> to vector<2x16xf32>
    %c3 = arith.constant 3 : index
    %c0_11 = arith.constant 0 : index
    %c3_12 = arith.constant 3 : index
    %8 = vector.load %arg4[%c3, %c0_11, %c3_12] : memref<22x2x22xf32, #tpu.memory_space<vmem>>, vector<1x2x16xf32>
    %9 = vector.shape_cast %8 : vector<1x2x16xf32> to vector<2x16xf32>
    %10 = vector.shape_cast %7 : vector<2x16xf32> to vector<1x2x16xf32>
    tpu.vector_store %arg4[%c3, %c0_11, %c3_12], %10 {strides = array<i32>} : memref<22x2x22xf32, #tpu.memory_space<vmem>>, vector<1x2x16xf32>,
    %11 = vector.extract_strided_slice %2 {offsets = [0, 0], sizes = [2, 16], strides = [1, 1]} : vector<2x256xf32> to vector<2x16xf32>
    %c3_13 = arith.constant 3 : index
    %c0_14 = arith.constant 0 : index
    %c3_15 = arith.constant 3 : index
    %12 = vector.load %arg5[%c3_13, %c0_14, %c3_15] : memref<22x2x22xf32, #tpu.memory_space<vmem>>, vector<1x2x16xf32>
    %13 = vector.shape_cast %12 : vector<1x2x16xf32> to vector<2x16xf32>
    %14 = vector.shape_cast %11 : vector<2x16xf32> to vector<1x2x16xf32>
    tpu.vector_store %arg5[%c3_13, %c0_14, %c3_15], %14 {strides = array<i32>} : memref<22x2x22xf32, #tpu.memory_space<vmem>>, vector<1x2x16xf32>,
    %15 = vector.extract_strided_slice %1 {offsets = [0, 16], sizes = [2, 16], strides = [1, 1]} : vector<2x256xf32> to vector<2x16xf32>
    %c4 = arith.constant 4 : index
    %c0_16 = arith.constant 0 : index
    %c3_17 = arith.constant 3 : index
    %16 = vector.load %arg4[%c4, %c0_16, %c3_17] : memref<22x2x22xf32, #tpu.memory_space<vmem>>, vector<1x2x16xf32>
    %17 = vector.shape_cast %16 : vector<1x2x16xf32> to vector<2x16xf32>
    %18 = vector.shape_cast %15 : vector<2x16xf32> to vector<1x2x16xf32>
    tpu.vector_store %arg4[%c4, %c0_16, %c3_17], %18 {strides = array<i32>} : memref<22x2x22xf32, #tpu.memory_space<vmem>>, vector<1x2x16xf32>,
    %19 = vector.extract_strided_slice %2 {offsets = [0, 16], sizes = [2, 16], strides = [1, 1]} : vector<2x256xf32> to vector<2x16xf32>
    %c4_18 = arith.constant 4 : index
    %c0_19 = arith.constant 0 : index
    %c3_20 = arith.constant 3 : index
    %20 = vector.load %arg5[%c4_18, %c0_19, %c3_20] : memref<22x2x22xf32, #tpu.memory_space<vmem>>, vector<1x2x16xf32>
    %21 = vector.shape_cast %20 : vector<1x2x16xf32> to vector<2x16xf32>
    %22 = vector.shape_cast %19 : vector<2x16xf32> to vector<1x2x16xf32>
    tpu.vector_store %arg5[%c4_18, %c0_19, %c3_20], %22 {strides = array<i32>} : memref<22x2x22xf32, #tpu.memory_space<vmem>>, vector<1x2x16xf32>,
    %23 = vector.extract_strided_slice %1 {offsets = [0, 32], sizes = [2, 16], strides = [1, 1]} : vector<2x256xf32> to vector<2x16xf32>
    %c5 = arith.constant 5 : index
    %c0_21 = arith.constant 0 : index
    %c3_22 = arith.constant 3 : index
    %24 = vector.load %arg4[%c5, %c0_21, %c3_22] : memref<22x2x22xf32, #tpu.memory_space<vmem>>, vector<1x2x16xf32>
    %25 = vector.shape_cast %24 : vector<1x2x16xf32> to vector<2x16xf32>
    %26 = vector.shape_cast %23 : vector<2x16xf32> to vector<1x2x16xf32>
    tpu.vector_store %arg4[%c5, %c0_21, %c3_22], %26 {strides = array<i32>} : memref<22x2x22xf32, #tpu.memory_space<vmem>>, vector<1x2x16xf32>,
    %27 = vector.extract_strided_slice %2 {offsets = [0, 32], sizes = [2, 16], strides = [1, 1]} : vector<2x256xf32> to vector<2x16xf32>
    %c5_23 = arith.constant 5 : index
    %c0_24 = arith.constant 0 : index
    %c3_25 = arith.constant 3 : index
    %28 = vector.load %arg5[%c5_23, %c0_24, %c3_25] : memref<22x2x22xf32, #tpu.memory_space<vmem>>, vector<1x2x16xf32>
    %29 = vector.shape_cast %28 : vector<1x2x16xf32> to vector<2x16xf32>
    %30 = vector.shape_cast %27 : vector<2x16xf32> to vector<1x2x16xf32>
    tpu.vector_store %arg5[%c5_23, %c0_24, %c3_25], %30 {strides = array<i32>} : memref<22x2x22xf32, #tpu.memory_space<vmem>>, vector<1x2x16xf32>,
    %31 = vector.extract_strided_slice %1 {offsets = [0, 48], sizes = [2, 16], strides = [1, 1]} : vector<2x256xf32> to vector<2x16xf32>
    %c6 = arith.constant 6 : index
    %c0_26 = arith.constant 0 : index
    %c3_27 = arith.constant 3 : index
    %32 = vector.load %arg4[%c6, %c0_26, %c3_27] : memref<22x2x22xf32, #tpu.memory_space<vmem>>, vector<1x2x16xf32>
    %33 = vector.shape_cast %32 : vector<1x2x16xf32> to vector<2x16xf32>
    %34 = vector.shape_cast %31 : vector<2x16xf32> to vector<1x2x16xf32>
    tpu.vector_store %arg4[%c6, %c0_26, %c3_27], %34 {strides = array<i32>} : memref<22x2x22xf32, #tpu.memory_space<vmem>>, vector<1x2x16xf32>,
    %35 = vector.extract_strided_slice %2 {offsets = [0, 48], sizes = [2, 16], strides = [1, 1]} : vector<2x256xf32> to vector<2x16xf32>
    %c6_28 = arith.constant 6 : index
    %c0_29 = arith.constant 0 : index
    %c3_30 = arith.constant 3 : index
    %36 = vector.load %arg5[%c6_28, %c0_29, %c3_30] : memref<22x2x22xf32, #tpu.memory_space<vmem>>, vector<1x2x16xf32>
    %37 = vector.shape_cast %36 : vector<1x2x16xf32> to vector<2x16xf32>
    %38 = vector.shape_cast %35 : vector<2x16xf32> to vector<1x2x16xf32>
    tpu.vector_store %arg5[%c6_28, %c0_29, %c3_30], %38 {strides = array<i32>} : memref<22x2x22xf32, #tpu.memory_space<vmem>>, vector<1x2x16xf32>,
    %39 = vector.extract_strided_slice %1 {offsets = [0, 64], sizes = [2, 16], strides = [1, 1]} : vector<2x256xf32> to vector<2x16xf32>
    %c7 = arith.constant 7 : index
    %c0_31 = arith.constant 0 : index
    %c3_32 = arith.constant 3 : index
    %40 = vector.load %arg4[%c7, %c0_31, %c3_32] : memref<22x2x22xf32, #tpu.memory_space<vmem>>, vector<1x2x16xf32>
    %41 = vector.shape_cast %40 : vector<1x2x16xf32> to vector<2x16xf32>
    %42 = vector.shape_cast %39 : vector<2x16xf32> to vector<1x2x16xf32>
    tpu.vector_store %arg4[%c7, %c0_31, %c3_32], %42 {strides = array<i32>} : memref<22x2x22xf32, #tpu.memory_space<vmem>>, vector<1x2x16xf32>,
    %43 = vector.extract_strided_slice %2 {offsets = [0, 64], sizes = [2, 16], strides = [1, 1]} : vector<2x256xf32> to vector<2x16xf32>
    %c7_33 = arith.constant 7 : index
    %c0_34 = arith.constant 0 : index
    %c3_35 = arith.constant 3 : index
    %44 = vector.load %arg5[%c7_33, %c0_34, %c3_35] : memref<22x2x22xf32, #tpu.memory_space<vmem>>, vector<1x2x16xf32>
    %45 = vector.shape_cast %44 : vector<1x2x16xf32> to vector<2x16xf32>
    %46 = vector.shape_cast %43 : vector<2x16xf32> to vector<1x2x16xf32>
    tpu.vector_store %arg5[%c7_33, %c0_34, %c3_35], %46 {strides = array<i32>} : memref<22x2x22xf32, #tpu.memory_space<vmem>>, vector<1x2x16xf32>,
    %47 = vector.extract_strided_slice %1 {offsets = [0, 80], sizes = [2, 16], strides = [1, 1]} : vector<2x256xf32> to vector<2x16xf32>
    %c8 = arith.constant 8 : index
    %c0_36 = arith.constant 0 : index
    %c3_37 = arith.constant 3 : index
    %48 = vector.load %arg4[%c8, %c0_36, %c3_37] : memref<22x2x22xf32, #tpu.memory_space<vmem>>, vector<1x2x16xf32>
    %49 = vector.shape_cast %48 : vector<1x2x16xf32> to vector<2x16xf32>
    %50 = vector.shape_cast %47 : vector<2x16xf32> to vector<1x2x16xf32>
    tpu.vector_store %arg4[%c8, %c0_36, %c3_37], %50 {strides = array<i32>} : memref<22x2x22xf32, #tpu.memory_space<vmem>>, vector<1x2x16xf32>,
    %51 = vector.extract_strided_slice %2 {offsets = [0, 80], sizes = [2, 16], strides = [1, 1]} : vector<2x256xf32> to vector<2x16xf32>
    %c8_38 = arith.constant 8 : index
    %c0_39 = arith.constant 0 : index
    %c3_40 = arith.constant 3 : index
    %52 = vector.load %arg5[%c8_38, %c0_39, %c3_40] : memref<22x2x22xf32, #tpu.memory_space<vmem>>, vector<1x2x16xf32>
    %53 = vector.shape_cast %52 : vector<1x2x16xf32> to vector<2x16xf32>
    %54 = vector.shape_cast %51 : vector<2x16xf32> to vector<1x2x16xf32>
    tpu.vector_store %arg5[%c8_38, %c0_39, %c3_40], %54 {strides = array<i32>} : memref<22x2x22xf32, #tpu.memory_space<vmem>>, vector<1x2x16xf32>,
    %55 = vector.extract_strided_slice %1 {offsets = [0, 96], sizes = [2, 16], strides = [1, 1]} : vector<2x256xf32> to vector<2x16xf32>
    %c9 = arith.constant 9 : index
    %c0_41 = arith.constant 0 : index
    %c3_42 = arith.constant 3 : index
    %56 = vector.load %arg4[%c9, %c0_41, %c3_42] : memref<22x2x22xf32, #tpu.memory_space<vmem>>, vector<1x2x16xf32>
    %57 = vector.shape_cast %56 : vector<1x2x16xf32> to vector<2x16xf32>
    %58 = vector.shape_cast %55 : vector<2x16xf32> to vector<1x2x16xf32>
    tpu.vector_store %arg4[%c9, %c0_41, %c3_42], %58 {strides = array<i32>} : memref<22x2x22xf32, #tpu.memory_space<vmem>>, vector<1x2x16xf32>,
    %59 = vector.extract_strided_slice %2 {offsets = [0, 96], sizes = [2, 16], strides = [1, 1]} : vector<2x256xf32> to vector<2x16xf32>
    %c9_43 = arith.constant 9 : index
    %c0_44 = arith.constant 0 : index
    %c3_45 = arith.constant 3 : index
    %60 = vector.load %arg5[%c9_43, %c0_44, %c3_45] : memref<22x2x22xf32, #tpu.memory_space<vmem>>, vector<1x2x16xf32>
    %61 = vector.shape_cast %60 : vector<1x2x16xf32> to vector<2x16xf32>
    %62 = vector.shape_cast %59 : vector<2x16xf32> to vector<1x2x16xf32>
    tpu.vector_store %arg5[%c9_43, %c0_44, %c3_45], %62 {strides = array<i32>} : memref<22x2x22xf32, #tpu.memory_space<vmem>>, vector<1x2x16xf32>,
    %63 = vector.extract_strided_slice %1 {offsets = [0, 112], sizes = [2, 16], strides = [1, 1]} : vector<2x256xf32> to vector<2x16xf32>
    %c10 = arith.constant 10 : index
    %c0_46 = arith.constant 0 : index
    %c3_47 = arith.constant 3 : index
    %64 = vector.load %arg4[%c10, %c0_46, %c3_47] : memref<22x2x22xf32, #tpu.memory_space<vmem>>, vector<1x2x16xf32>
    %65 = vector.shape_cast %64 : vector<1x2x16xf32> to vector<2x16xf32>
    %66 = vector.shape_cast %63 : vector<2x16xf32> to vector<1x2x16xf32>
    tpu.vector_store %arg4[%c10, %c0_46, %c3_47], %66 {strides = array<i32>} : memref<22x2x22xf32, #tpu.memory_space<vmem>>, vector<1x2x16xf32>,
    %67 = vector.extract_strided_slice %2 {offsets = [0, 112], sizes = [2, 16], strides = [1, 1]} : vector<2x256xf32> to vector<2x16xf32>
    %c10_48 = arith.constant 10 : index
    %c0_49 = arith.constant 0 : index
    %c3_50 = arith.constant 3 : index
    %68 = vector.load %arg5[%c10_48, %c0_49, %c3_50] : memref<22x2x22xf32, #tpu.memory_space<vmem>>, vector<1x2x16xf32>
    %69 = vector.shape_cast %68 : vector<1x2x16xf32> to vector<2x16xf32>
    %70 = vector.shape_cast %67 : vector<2x16xf32> to vector<1x2x16xf32>
    tpu.vector_store %arg5[%c10_48, %c0_49, %c3_50], %70 {strides = array<i32>} : memref<22x2x22xf32, #tpu.memory_space<vmem>>, vector<1x2x16xf32>,
    %71 = vector.extract_strided_slice %1 {offsets = [0, 128], sizes = [2, 16], strides = [1, 1]} : vector<2x256xf32> to vector<2x16xf32>
    %c11 = arith.constant 11 : index
    %c0_51 = arith.constant 0 : index
    %c3_52 = arith.constant 3 : index
    %72 = vector.load %arg4[%c11, %c0_51, %c3_52] : memref<22x2x22xf32, #tpu.memory_space<vmem>>, vector<1x2x16xf32>
    %73 = vector.shape_cast %72 : vector<1x2x16xf32> to vector<2x16xf32>
    %74 = vector.shape_cast %71 : vector<2x16xf32> to vector<1x2x16xf32>
    tpu.vector_store %arg4[%c11, %c0_51, %c3_52], %74 {strides = array<i32>} : memref<22x2x22xf32, #tpu.memory_space<vmem>>, vector<1x2x16xf32>,
    %75 = vector.extract_strided_slice %2 {offsets = [0, 128], sizes = [2, 16], strides = [1, 1]} : vector<2x256xf32> to vector<2x16xf32>
    %c11_53 = arith.constant 11 : index
    %c0_54 = arith.constant 0 : index
    %c3_55 = arith.constant 3 : index
    %76 = vector.load %arg5[%c11_53, %c0_54, %c3_55] : memref<22x2x22xf32, #tpu.memory_space<vmem>>, vector<1x2x16xf32>
    %77 = vector.shape_cast %76 : vector<1x2x16xf32> to vector<2x16xf32>
    %78 = vector.shape_cast %75 : vector<2x16xf32> to vector<1x2x16xf32>
    tpu.vector_store %arg5[%c11_53, %c0_54, %c3_55], %78 {strides = array<i32>} : memref<22x2x22xf32, #tpu.memory_space<vmem>>, vector<1x2x16xf32>,
    %79 = vector.extract_strided_slice %1 {offsets = [0, 144], sizes = [2, 16], strides = [1, 1]} : vector<2x256xf32> to vector<2x16xf32>
    %c12 = arith.constant 12 : index
    %c0_56 = arith.constant 0 : index
    %c3_57 = arith.constant 3 : index
    %80 = vector.load %arg4[%c12, %c0_56, %c3_57] : memref<22x2x22xf32, #tpu.memory_space<vmem>>, vector<1x2x16xf32>
    %81 = vector.shape_cast %80 : vector<1x2x16xf32> to vector<2x16xf32>
    %82 = vector.shape_cast %79 : vector<2x16xf32> to vector<1x2x16xf32>
    tpu.vector_store %arg4[%c12, %c0_56, %c3_57], %82 {strides = array<i32>} : memref<22x2x22xf32, #tpu.memory_space<vmem>>, vector<1x2x16xf32>,
    %83 = vector.extract_strided_slice %2 {offsets = [0, 144], sizes = [2, 16], strides = [1, 1]} : vector<2x256xf32> to vector<2x16xf32>
    %c12_58 = arith.constant 12 : index
    %c0_59 = arith.constant 0 : index
    %c3_60 = arith.constant 3 : index
    %84 = vector.load %arg5[%c12_58, %c0_59, %c3_60] : memref<22x2x22xf32, #tpu.memory_space<vmem>>, vector<1x2x16xf32>
    %85 = vector.shape_cast %84 : vector<1x2x16xf32> to vector<2x16xf32>
    %86 = vector.shape_cast %83 : vector<2x16xf32> to vector<1x2x16xf32>
    tpu.vector_store %arg5[%c12_58, %c0_59, %c3_60], %86 {strides = array<i32>} : memref<22x2x22xf32, #tpu.memory_space<vmem>>, vector<1x2x16xf32>,
    %87 = vector.extract_strided_slice %1 {offsets = [0, 160], sizes = [2, 16], strides = [1, 1]} : vector<2x256xf32> to vector<2x16xf32>
    %c13 = arith.constant 13 : index
    %c0_61 = arith.constant 0 : index
    %c3_62 = arith.constant 3 : index
    %88 = vector.load %arg4[%c13, %c0_61, %c3_62] : memref<22x2x22xf32, #tpu.memory_space<vmem>>, vector<1x2x16xf32>
    %89 = vector.shape_cast %88 : vector<1x2x16xf32> to vector<2x16xf32>
    %90 = vector.shape_cast %87 : vector<2x16xf32> to vector<1x2x16xf32>
    tpu.vector_store %arg4[%c13, %c0_61, %c3_62], %90 {strides = array<i32>} : memref<22x2x22xf32, #tpu.memory_space<vmem>>, vector<1x2x16xf32>,
    %91 = vector.extract_strided_slice %2 {offsets = [0, 160], sizes = [2, 16], strides = [1, 1]} : vector<2x256xf32> to vector<2x16xf32>
    %c13_63 = arith.constant 13 : index
    %c0_64 = arith.constant 0 : index
    %c3_65 = arith.constant 3 : index
    %92 = vector.load %arg5[%c13_63, %c0_64, %c3_65] : memref<22x2x22xf32, #tpu.memory_space<vmem>>, vector<1x2x16xf32>
    %93 = vector.shape_cast %92 : vector<1x2x16xf32> to vector<2x16xf32>
    %94 = vector.shape_cast %91 : vector<2x16xf32> to vector<1x2x16xf32>
    tpu.vector_store %arg5[%c13_63, %c0_64, %c3_65], %94 {strides = array<i32>} : memref<22x2x22xf32, #tpu.memory_space<vmem>>, vector<1x2x16xf32>,
    %95 = vector.extract_strided_slice %1 {offsets = [0, 176], sizes = [2, 16], strides = [1, 1]} : vector<2x256xf32> to vector<2x16xf32>
    %c14 = arith.constant 14 : index
    %c0_66 = arith.constant 0 : index
    %c3_67 = arith.constant 3 : index
    %96 = vector.load %arg4[%c14, %c0_66, %c3_67] : memref<22x2x22xf32, #tpu.memory_space<vmem>>, vector<1x2x16xf32>
    %97 = vector.shape_cast %96 : vector<1x2x16xf32> to vector<2x16xf32>
    %98 = vector.shape_cast %95 : vector<2x16xf32> to vector<1x2x16xf32>
    tpu.vector_store %arg4[%c14, %c0_66, %c3_67], %98 {strides = array<i32>} : memref<22x2x22xf32, #tpu.memory_space<vmem>>, vector<1x2x16xf32>,
    %99 = vector.extract_strided_slice %2 {offsets = [0, 176], sizes = [2, 16], strides = [1, 1]} : vector<2x256xf32> to vector<2x16xf32>
    %c14_68 = arith.constant 14 : index
    %c0_69 = arith.constant 0 : index
    %c3_70 = arith.constant 3 : index
    %100 = vector.load %arg5[%c14_68, %c0_69, %c3_70] : memref<22x2x22xf32, #tpu.memory_space<vmem>>, vector<1x2x16xf32>
    %101 = vector.shape_cast %100 : vector<1x2x16xf32> to vector<2x16xf32>
    %102 = vector.shape_cast %99 : vector<2x16xf32> to vector<1x2x16xf32>
    tpu.vector_store %arg5[%c14_68, %c0_69, %c3_70], %102 {strides = array<i32>} : memref<22x2x22xf32, #tpu.memory_space<vmem>>, vector<1x2x16xf32>,
    %103 = vector.extract_strided_slice %1 {offsets = [0, 192], sizes = [2, 16], strides = [1, 1]} : vector<2x256xf32> to vector<2x16xf32>
    %c15 = arith.constant 15 : index
    %c0_71 = arith.constant 0 : index
    %c3_72 = arith.constant 3 : index
    %104 = vector.load %arg4[%c15, %c0_71, %c3_72] : memref<22x2x22xf32, #tpu.memory_space<vmem>>, vector<1x2x16xf32>
    %105 = vector.shape_cast %104 : vector<1x2x16xf32> to vector<2x16xf32>
    %106 = vector.shape_cast %103 : vector<2x16xf32> to vector<1x2x16xf32>
    tpu.vector_store %arg4[%c15, %c0_71, %c3_72], %106 {strides = array<i32>} : memref<22x2x22xf32, #tpu.memory_space<vmem>>, vector<1x2x16xf32>,
    %107 = vector.extract_strided_slice %2 {offsets = [0, 192], sizes = [2, 16], strides = [1, 1]} : vector<2x256xf32> to vector<2x16xf32>
    %c15_73 = arith.constant 15 : index
    %c0_74 = arith.constant 0 : index
    %c3_75 = arith.constant 3 : index
    %108 = vector.load %arg5[%c15_73, %c0_74, %c3_75] : memref<22x2x22xf32, #tpu.memory_space<vmem>>, vector<1x2x16xf32>
    %109 = vector.shape_cast %108 : vector<1x2x16xf32> to vector<2x16xf32>
    %110 = vector.shape_cast %107 : vector<2x16xf32> to vector<1x2x16xf32>
    tpu.vector_store %arg5[%c15_73, %c0_74, %c3_75], %110 {strides = array<i32>} : memref<22x2x22xf32, #tpu.memory_space<vmem>>, vector<1x2x16xf32>,
    %111 = vector.extract_strided_slice %1 {offsets = [0, 208], sizes = [2, 16], strides = [1, 1]} : vector<2x256xf32> to vector<2x16xf32>
    %c16 = arith.constant 16 : index
    %c0_76 = arith.constant 0 : index
    %c3_77 = arith.constant 3 : index
    %112 = vector.load %arg4[%c16, %c0_76, %c3_77] : memref<22x2x22xf32, #tpu.memory_space<vmem>>, vector<1x2x16xf32>
    %113 = vector.shape_cast %112 : vector<1x2x16xf32> to vector<2x16xf32>
    %114 = vector.shape_cast %111 : vector<2x16xf32> to vector<1x2x16xf32>
    tpu.vector_store %arg4[%c16, %c0_76, %c3_77], %114 {strides = array<i32>} : memref<22x2x22xf32, #tpu.memory_space<vmem>>, vector<1x2x16xf32>,
    %115 = vector.extract_strided_slice %2 {offsets = [0, 208], sizes = [2, 16], strides = [1, 1]} : vector<2x256xf32> to vector<2x16xf32>
    %c16_78 = arith.constant 16 : index
    %c0_79 = arith.constant 0 : index
    %c3_80 = arith.constant 3 : index
    %116 = vector.load %arg5[%c16_78, %c0_79, %c3_80] : memref<22x2x22xf32, #tpu.memory_space<vmem>>, vector<1x2x16xf32>
    %117 = vector.shape_cast %116 : vector<1x2x16xf32> to vector<2x16xf32>
    %118 = vector.shape_cast %115 : vector<2x16xf32> to vector<1x2x16xf32>
    tpu.vector_store %arg5[%c16_78, %c0_79, %c3_80], %118 {strides = array<i32>} : memref<22x2x22xf32, #tpu.memory_space<vmem>>, vector<1x2x16xf32>,
    %119 = vector.extract_strided_slice %1 {offsets = [0, 224], sizes = [2, 16], strides = [1, 1]} : vector<2x256xf32> to vector<2x16xf32>
    %c17 = arith.constant 17 : index
    %c0_81 = arith.constant 0 : index
    %c3_82 = arith.constant 3 : index
    %120 = vector.load %arg4[%c17, %c0_81, %c3_82] : memref<22x2x22xf32, #tpu.memory_space<vmem>>, vector<1x2x16xf32>
    %121 = vector.shape_cast %120 : vector<1x2x16xf32> to vector<2x16xf32>
    %122 = vector.shape_cast %119 : vector<2x16xf32> to vector<1x2x16xf32>
    tpu.vector_store %arg4[%c17, %c0_81, %c3_82], %122 {strides = array<i32>} : memref<22x2x22xf32, #tpu.memory_space<vmem>>, vector<1x2x16xf32>,
    %123 = vector.extract_strided_slice %2 {offsets = [0, 224], sizes = [2, 16], strides = [1, 1]} : vector<2x256xf32> to vector<2x16xf32>
    %c17_83 = arith.constant 17 : index
    %c0_84 = arith.constant 0 : index
    %c3_85 = arith.constant 3 : index
    %124 = vector.load %arg5[%c17_83, %c0_84, %c3_85] : memref<22x2x22xf32, #tpu.memory_space<vmem>>, vector<1x2x16xf32>
    %125 = vector.shape_cast %124 : vector<1x2x16xf32> to vector<2x16xf32>
    %126 = vector.shape_cast %123 : vector<2x16xf32> to vector<1x2x16xf32>
    tpu.vector_store %arg5[%c17_83, %c0_84, %c3_85], %126 {strides = array<i32>} : memref<22x2x22xf32, #tpu.memory_space<vmem>>, vector<1x2x16xf32>,
    %127 = vector.extract_strided_slice %1 {offsets = [0, 240], sizes = [2, 16], strides = [1, 1]} : vector<2x256xf32> to vector<2x16xf32>
    %c18 = arith.constant 18 : index
    %c0_86 = arith.constant 0 : index
    %c3_87 = arith.constant 3 : index
    %128 = vector.load %arg4[%c18, %c0_86, %c3_87] : memref<22x2x22xf32, #tpu.memory_space<vmem>>, vector<1x2x16xf32>
    %129 = vector.shape_cast %128 : vector<1x2x16xf32> to vector<2x16xf32>
    %130 = vector.shape_cast %127 : vector<2x16xf32> to vector<1x2x16xf32>
    tpu.vector_store %arg4[%c18, %c0_86, %c3_87], %130 {strides = array<i32>} : memref<22x2x22xf32, #tpu.memory_space<vmem>>, vector<1x2x16xf32>,
    %131 = vector.extract_strided_slice %2 {offsets = [0, 240], sizes = [2, 16], strides = [1, 1]} : vector<2x256xf32> to vector<2x16xf32>
    %c18_88 = arith.constant 18 : index
    %c0_89 = arith.constant 0 : index
    %c3_90 = arith.constant 3 : index
    %132 = vector.load %arg5[%c18_88, %c0_89, %c3_90] : memref<22x2x22xf32, #tpu.memory_space<vmem>>, vector<1x2x16xf32>
    %133 = vector.shape_cast %132 : vector<1x2x16xf32> to vector<2x16xf32>
    %134 = vector.shape_cast %131 : vector<2x16xf32> to vector<1x2x16xf32>
    tpu.vector_store %arg5[%c18_88, %c0_89, %c3_90], %134 {strides = array<i32>} : memref<22x2x22xf32, #tpu.memory_space<vmem>>, vector<1x2x16xf32>,
    %cst_91 = arith.constant 0.000000e+00 : f32
    %135 = vector.broadcast %cst_91 : f32 to vector<16x2x16xf32>
    %c0_92 = arith.constant 0 : index
    %c0_93 = arith.constant 0 : index
    %c0_94 = arith.constant 0 : index
    %136 = vector.load %arg4[%c0_92, %c0_93, %c0_94] : memref<22x2x22xf32, #tpu.memory_space<vmem>>, vector<22x2x16xf32>
    %c0_95 = arith.constant 0 : index
    %c0_96 = arith.constant 0 : index
    %c0_97 = arith.constant 0 : index
    %137 = vector.load %arg5[%c0_95, %c0_96, %c0_97] : memref<22x2x22xf32, #tpu.memory_space<vmem>>, vector<22x2x16xf32>
    %c0_98 = arith.constant 0 : index
    %138 = memref.load %arg1[%c0_98] : memref<98xf32, #tpu.memory_space<smem>>
    %139 = vector.extract_strided_slice %136 {offsets = [0, 0, 0], sizes = [16, 2, 16], strides = [1, 1, 1]} : vector<22x2x16xf32> to vector<16x2x16xf32>
    %140 = vector.broadcast %138 : f32 to vector<16x2x16xf32>
    %141 = arith.mulf %140, %139 : vector<16x2x16xf32>
    %142 = arith.addf %135, %141 : vector<16x2x16xf32>
    %c49 = arith.constant 49 : index
    %143 = memref.load %arg1[%c49] : memref<98xf32, #tpu.memory_space<smem>>
    %144 = vector.extract_strided_slice %137 {offsets = [0, 0, 0], sizes = [16, 2, 16], strides = [1, 1, 1]} : vector<22x2x16xf32> to vector<16x2x16xf32>
    %145 = vector.broadcast %143 : f32 to vector<16x2x16xf32>
    %146 = arith.mulf %145, %144 : vector<16x2x16xf32>
    %147 = arith.addf %142, %146 : vector<16x2x16xf32>
    %c7_99 = arith.constant 7 : index
    %148 = memref.load %arg1[%c7_99] : memref<98xf32, #tpu.memory_space<smem>>
    %149 = vector.extract_strided_slice %136 {offsets = [1, 0, 0], sizes = [16, 2, 16], strides = [1, 1, 1]} : vector<22x2x16xf32> to vector<16x2x16xf32>
    %150 = vector.broadcast %148 : f32 to vector<16x2x16xf32>
    %151 = arith.mulf %150, %149 : vector<16x2x16xf32>
    %152 = arith.addf %147, %151 : vector<16x2x16xf32>
    %c56 = arith.constant 56 : index
    %153 = memref.load %arg1[%c56] : memref<98xf32, #tpu.memory_space<smem>>
    %154 = vector.extract_strided_slice %137 {offsets = [1, 0, 0], sizes = [16, 2, 16], strides = [1, 1, 1]} : vector<22x2x16xf32> to vector<16x2x16xf32>
    %155 = vector.broadcast %153 : f32 to vector<16x2x16xf32>
    %156 = arith.mulf %155, %154 : vector<16x2x16xf32>
    %157 = arith.addf %152, %156 : vector<16x2x16xf32>
    %c14_100 = arith.constant 14 : index
    %158 = memref.load %arg1[%c14_100] : memref<98xf32, #tpu.memory_space<smem>>
    %159 = vector.extract_strided_slice %136 {offsets = [2, 0, 0], sizes = [16, 2, 16], strides = [1, 1, 1]} : vector<22x2x16xf32> to vector<16x2x16xf32>
    %160 = vector.broadcast %158 : f32 to vector<16x2x16xf32>
    %161 = arith.mulf %160, %159 : vector<16x2x16xf32>
    %162 = arith.addf %157, %161 : vector<16x2x16xf32>
    %c63 = arith.constant 63 : index
    %163 = memref.load %arg1[%c63] : memref<98xf32, #tpu.memory_space<smem>>
    %164 = vector.extract_strided_slice %137 {offsets = [2, 0, 0], sizes = [16, 2, 16], strides = [1, 1, 1]} : vector<22x2x16xf32> to vector<16x2x16xf32>
    %165 = vector.broadcast %163 : f32 to vector<16x2x16xf32>
    %166 = arith.mulf %165, %164 : vector<16x2x16xf32>
    %167 = arith.addf %162, %166 : vector<16x2x16xf32>
    %c21 = arith.constant 21 : index
    %168 = memref.load %arg1[%c21] : memref<98xf32, #tpu.memory_space<smem>>
    %169 = vector.extract_strided_slice %136 {offsets = [3, 0, 0], sizes = [16, 2, 16], strides = [1, 1, 1]} : vector<22x2x16xf32> to vector<16x2x16xf32>
    %170 = vector.broadcast %168 : f32 to vector<16x2x16xf32>
    %171 = arith.mulf %170, %169 : vector<16x2x16xf32>
    %172 = arith.addf %167, %171 : vector<16x2x16xf32>
    %c70 = arith.constant 70 : index
    %173 = memref.load %arg1[%c70] : memref<98xf32, #tpu.memory_space<smem>>
    %174 = vector.extract_strided_slice %137 {offsets = [3, 0, 0], sizes = [16, 2, 16], strides = [1, 1, 1]} : vector<22x2x16xf32> to vector<16x2x16xf32>
    %175 = vector.broadcast %173 : f32 to vector<16x2x16xf32>
    %176 = arith.mulf %175, %174 : vector<16x2x16xf32>
    %177 = arith.addf %172, %176 : vector<16x2x16xf32>
    %c28 = arith.constant 28 : index
    %178 = memref.load %arg1[%c28] : memref<98xf32, #tpu.memory_space<smem>>
    %179 = vector.extract_strided_slice %136 {offsets = [4, 0, 0], sizes = [16, 2, 16], strides = [1, 1, 1]} : vector<22x2x16xf32> to vector<16x2x16xf32>
    %180 = vector.broadcast %178 : f32 to vector<16x2x16xf32>
    %181 = arith.mulf %180, %179 : vector<16x2x16xf32>
    %182 = arith.addf %177, %181 : vector<16x2x16xf32>
    %c77 = arith.constant 77 : index
    %183 = memref.load %arg1[%c77] : memref<98xf32, #tpu.memory_space<smem>>
    %184 = vector.extract_strided_slice %137 {offsets = [4, 0, 0], sizes = [16, 2, 16], strides = [1, 1, 1]} : vector<22x2x16xf32> to vector<16x2x16xf32>
    %185 = vector.broadcast %183 : f32 to vector<16x2x16xf32>
    %186 = arith.mulf %185, %184 : vector<16x2x16xf32>
    %187 = arith.addf %182, %186 : vector<16x2x16xf32>
    %c35 = arith.constant 35 : index
    %188 = memref.load %arg1[%c35] : memref<98xf32, #tpu.memory_space<smem>>
    %189 = vector.extract_strided_slice %136 {offsets = [5, 0, 0], sizes = [16, 2, 16], strides = [1, 1, 1]} : vector<22x2x16xf32> to vector<16x2x16xf32>
    %190 = vector.broadcast %188 : f32 to vector<16x2x16xf32>
    %191 = arith.mulf %190, %189 : vector<16x2x16xf32>
    %192 = arith.addf %187, %191 : vector<16x2x16xf32>
    %c84 = arith.constant 84 : index
    %193 = memref.load %arg1[%c84] : memref<98xf32, #tpu.memory_space<smem>>
    %194 = vector.extract_strided_slice %137 {offsets = [5, 0, 0], sizes = [16, 2, 16], strides = [1, 1, 1]} : vector<22x2x16xf32> to vector<16x2x16xf32>
    %195 = vector.broadcast %193 : f32 to vector<16x2x16xf32>
    %196 = arith.mulf %195, %194 : vector<16x2x16xf32>
    %197 = arith.addf %192, %196 : vector<16x2x16xf32>
    %c42 = arith.constant 42 : index
    %198 = memref.load %arg1[%c42] : memref<98xf32, #tpu.memory_space<smem>>
    %199 = vector.extract_strided_slice %136 {offsets = [6, 0, 0], sizes = [16, 2, 16], strides = [1, 1, 1]} : vector<22x2x16xf32> to vector<16x2x16xf32>
    %200 = vector.broadcast %198 : f32 to vector<16x2x16xf32>
    %201 = arith.mulf %200, %199 : vector<16x2x16xf32>
    %202 = arith.addf %197, %201 : vector<16x2x16xf32>
    %c91 = arith.constant 91 : index
    %203 = memref.load %arg1[%c91] : memref<98xf32, #tpu.memory_space<smem>>
    %204 = vector.extract_strided_slice %137 {offsets = [6, 0, 0], sizes = [16, 2, 16], strides = [1, 1, 1]} : vector<22x2x16xf32> to vector<16x2x16xf32>
    %205 = vector.broadcast %203 : f32 to vector<16x2x16xf32>
    %206 = arith.mulf %205, %204 : vector<16x2x16xf32>
    %207 = arith.addf %202, %206 : vector<16x2x16xf32>
    %c0_101 = arith.constant 0 : index
    %c0_102 = arith.constant 0 : index
    %c1 = arith.constant 1 : index
    %208 = vector.load %arg4[%c0_101, %c0_102, %c1] : memref<22x2x22xf32, #tpu.memory_space<vmem>>, vector<22x2x16xf32>
    %c0_103 = arith.constant 0 : index
    %c0_104 = arith.constant 0 : index
    %c1_105 = arith.constant 1 : index
    %209 = vector.load %arg5[%c0_103, %c0_104, %c1_105] : memref<22x2x22xf32, #tpu.memory_space<vmem>>, vector<22x2x16xf32>
    %c1_106 = arith.constant 1 : index
    %210 = memref.load %arg1[%c1_106] : memref<98xf32, #tpu.memory_space<smem>>
    %211 = vector.extract_strided_slice %208 {offsets = [0, 0, 0], sizes = [16, 2, 16], strides = [1, 1, 1]} : vector<22x2x16xf32> to vector<16x2x16xf32>
    %212 = vector.broadcast %210 : f32 to vector<16x2x16xf32>
    %213 = arith.mulf %212, %211 : vector<16x2x16xf32>
    %214 = arith.addf %207, %213 : vector<16x2x16xf32>
    %c50 = arith.constant 50 : index
    %215 = memref.load %arg1[%c50] : memref<98xf32, #tpu.memory_space<smem>>
    %216 = vector.extract_strided_slice %209 {offsets = [0, 0, 0], sizes = [16, 2, 16], strides = [1, 1, 1]} : vector<22x2x16xf32> to vector<16x2x16xf32>
    %217 = vector.broadcast %215 : f32 to vector<16x2x16xf32>
    %218 = arith.mulf %217, %216 : vector<16x2x16xf32>
    %219 = arith.addf %214, %218 : vector<16x2x16xf32>
    %c8_107 = arith.constant 8 : index
    %220 = memref.load %arg1[%c8_107] : memref<98xf32, #tpu.memory_space<smem>>
    %221 = vector.extract_strided_slice %208 {offsets = [1, 0, 0], sizes = [16, 2, 16], strides = [1, 1, 1]} : vector<22x2x16xf32> to vector<16x2x16xf32>
    %222 = vector.broadcast %220 : f32 to vector<16x2x16xf32>
    %223 = arith.mulf %222, %221 : vector<16x2x16xf32>
    %224 = arith.addf %219, %223 : vector<16x2x16xf32>
    %c57 = arith.constant 57 : index
    %225 = memref.load %arg1[%c57] : memref<98xf32, #tpu.memory_space<smem>>
    %226 = vector.extract_strided_slice %209 {offsets = [1, 0, 0], sizes = [16, 2, 16], strides = [1, 1, 1]} : vector<22x2x16xf32> to vector<16x2x16xf32>
    %227 = vector.broadcast %225 : f32 to vector<16x2x16xf32>
    %228 = arith.mulf %227, %226 : vector<16x2x16xf32>
    %229 = arith.addf %224, %228 : vector<16x2x16xf32>
    %c15_108 = arith.constant 15 : index
    %230 = memref.load %arg1[%c15_108] : memref<98xf32, #tpu.memory_space<smem>>
    %231 = vector.extract_strided_slice %208 {offsets = [2, 0, 0], sizes = [16, 2, 16], strides = [1, 1, 1]} : vector<22x2x16xf32> to vector<16x2x16xf32>
    %232 = vector.broadcast %230 : f32 to vector<16x2x16xf32>
    %233 = arith.mulf %232, %231 : vector<16x2x16xf32>
    %234 = arith.addf %229, %233 : vector<16x2x16xf32>
    %c64 = arith.constant 64 : index
    %235 = memref.load %arg1[%c64] : memref<98xf32, #tpu.memory_space<smem>>
    %236 = vector.extract_strided_slice %209 {offsets = [2, 0, 0], sizes = [16, 2, 16], strides = [1, 1, 1]} : vector<22x2x16xf32> to vector<16x2x16xf32>
    %237 = vector.broadcast %235 : f32 to vector<16x2x16xf32>
    %238 = arith.mulf %237, %236 : vector<16x2x16xf32>
    %239 = arith.addf %234, %238 : vector<16x2x16xf32>
    %c22 = arith.constant 22 : index
    %240 = memref.load %arg1[%c22] : memref<98xf32, #tpu.memory_space<smem>>
    %241 = vector.extract_strided_slice %208 {offsets = [3, 0, 0], sizes = [16, 2, 16], strides = [1, 1, 1]} : vector<22x2x16xf32> to vector<16x2x16xf32>
    %242 = vector.broadcast %240 : f32 to vector<16x2x16xf32>
    %243 = arith.mulf %242, %241 : vector<16x2x16xf32>
    %244 = arith.addf %239, %243 : vector<16x2x16xf32>
    %c71 = arith.constant 71 : index
    %245 = memref.load %arg1[%c71] : memref<98xf32, #tpu.memory_space<smem>>
    %246 = vector.extract_strided_slice %209 {offsets = [3, 0, 0], sizes = [16, 2, 16], strides = [1, 1, 1]} : vector<22x2x16xf32> to vector<16x2x16xf32>
    %247 = vector.broadcast %245 : f32 to vector<16x2x16xf32>
    %248 = arith.mulf %247, %246 : vector<16x2x16xf32>
    %249 = arith.addf %244, %248 : vector<16x2x16xf32>
    %c29 = arith.constant 29 : index
    %250 = memref.load %arg1[%c29] : memref<98xf32, #tpu.memory_space<smem>>
    %251 = vector.extract_strided_slice %208 {offsets = [4, 0, 0], sizes = [16, 2, 16], strides = [1, 1, 1]} : vector<22x2x16xf32> to vector<16x2x16xf32>
    %252 = vector.broadcast %250 : f32 to vector<16x2x16xf32>
    %253 = arith.mulf %252, %251 : vector<16x2x16xf32>
    %254 = arith.addf %249, %253 : vector<16x2x16xf32>
    %c78 = arith.constant 78 : index
    %255 = memref.load %arg1[%c78] : memref<98xf32, #tpu.memory_space<smem>>
    %256 = vector.extract_strided_slice %209 {offsets = [4, 0, 0], sizes = [16, 2, 16], strides = [1, 1, 1]} : vector<22x2x16xf32> to vector<16x2x16xf32>
    %257 = vector.broadcast %255 : f32 to vector<16x2x16xf32>
    %258 = arith.mulf %257, %256 : vector<16x2x16xf32>
    %259 = arith.addf %254, %258 : vector<16x2x16xf32>
    %c36 = arith.constant 36 : index
    %260 = memref.load %arg1[%c36] : memref<98xf32, #tpu.memory_space<smem>>
    %261 = vector.extract_strided_slice %208 {offsets = [5, 0, 0], sizes = [16, 2, 16], strides = [1, 1, 1]} : vector<22x2x16xf32> to vector<16x2x16xf32>
    %262 = vector.broadcast %260 : f32 to vector<16x2x16xf32>
    %263 = arith.mulf %262, %261 : vector<16x2x16xf32>
    %264 = arith.addf %259, %263 : vector<16x2x16xf32>
    %c85 = arith.constant 85 : index
    %265 = memref.load %arg1[%c85] : memref<98xf32, #tpu.memory_space<smem>>
    %266 = vector.extract_strided_slice %209 {offsets = [5, 0, 0], sizes = [16, 2, 16], strides = [1, 1, 1]} : vector<22x2x16xf32> to vector<16x2x16xf32>
    %267 = vector.broadcast %265 : f32 to vector<16x2x16xf32>
    %268 = arith.mulf %267, %266 : vector<16x2x16xf32>
    %269 = arith.addf %264, %268 : vector<16x2x16xf32>
    %c43 = arith.constant 43 : index
    %270 = memref.load %arg1[%c43] : memref<98xf32, #tpu.memory_space<smem>>
    %271 = vector.extract_strided_slice %208 {offsets = [6, 0, 0], sizes = [16, 2, 16], strides = [1, 1, 1]} : vector<22x2x16xf32> to vector<16x2x16xf32>
    %272 = vector.broadcast %270 : f32 to vector<16x2x16xf32>
    %273 = arith.mulf %272, %271 : vector<16x2x16xf32>
    %274 = arith.addf %269, %273 : vector<16x2x16xf32>
    %c92 = arith.constant 92 : index
    %275 = memref.load %arg1[%c92] : memref<98xf32, #tpu.memory_space<smem>>
    %276 = vector.extract_strided_slice %209 {offsets = [6, 0, 0], sizes = [16, 2, 16], strides = [1, 1, 1]} : vector<22x2x16xf32> to vector<16x2x16xf32>
    %277 = vector.broadcast %275 : f32 to vector<16x2x16xf32>
    %278 = arith.mulf %277, %276 : vector<16x2x16xf32>
    %279 = arith.addf %274, %278 : vector<16x2x16xf32>
    %c0_109 = arith.constant 0 : index
    %c0_110 = arith.constant 0 : index
    %c2 = arith.constant 2 : index
    %280 = vector.load %arg4[%c0_109, %c0_110, %c2] : memref<22x2x22xf32, #tpu.memory_space<vmem>>, vector<22x2x16xf32>
    %c0_111 = arith.constant 0 : index
    %c0_112 = arith.constant 0 : index
    %c2_113 = arith.constant 2 : index
    %281 = vector.load %arg5[%c0_111, %c0_112, %c2_113] : memref<22x2x22xf32, #tpu.memory_space<vmem>>, vector<22x2x16xf32>
    %c2_114 = arith.constant 2 : index
    %282 = memref.load %arg1[%c2_114] : memref<98xf32, #tpu.memory_space<smem>>
    %283 = vector.extract_strided_slice %280 {offsets = [0, 0, 0], sizes = [16, 2, 16], strides = [1, 1, 1]} : vector<22x2x16xf32> to vector<16x2x16xf32>
    %284 = vector.broadcast %282 : f32 to vector<16x2x16xf32>
    %285 = arith.mulf %284, %283 : vector<16x2x16xf32>
    %286 = arith.addf %279, %285 : vector<16x2x16xf32>
    %c51 = arith.constant 51 : index
    %287 = memref.load %arg1[%c51] : memref<98xf32, #tpu.memory_space<smem>>
    %288 = vector.extract_strided_slice %281 {offsets = [0, 0, 0], sizes = [16, 2, 16], strides = [1, 1, 1]} : vector<22x2x16xf32> to vector<16x2x16xf32>
    %289 = vector.broadcast %287 : f32 to vector<16x2x16xf32>
    %290 = arith.mulf %289, %288 : vector<16x2x16xf32>
    %291 = arith.addf %286, %290 : vector<16x2x16xf32>
    %c9_115 = arith.constant 9 : index
    %292 = memref.load %arg1[%c9_115] : memref<98xf32, #tpu.memory_space<smem>>
    %293 = vector.extract_strided_slice %280 {offsets = [1, 0, 0], sizes = [16, 2, 16], strides = [1, 1, 1]} : vector<22x2x16xf32> to vector<16x2x16xf32>
    %294 = vector.broadcast %292 : f32 to vector<16x2x16xf32>
    %295 = arith.mulf %294, %293 : vector<16x2x16xf32>
    %296 = arith.addf %291, %295 : vector<16x2x16xf32>
    %c58 = arith.constant 58 : index
    %297 = memref.load %arg1[%c58] : memref<98xf32, #tpu.memory_space<smem>>
    %298 = vector.extract_strided_slice %281 {offsets = [1, 0, 0], sizes = [16, 2, 16], strides = [1, 1, 1]} : vector<22x2x16xf32> to vector<16x2x16xf32>
    %299 = vector.broadcast %297 : f32 to vector<16x2x16xf32>
    %300 = arith.mulf %299, %298 : vector<16x2x16xf32>
    %301 = arith.addf %296, %300 : vector<16x2x16xf32>
    %c16_116 = arith.constant 16 : index
    %302 = memref.load %arg1[%c16_116] : memref<98xf32, #tpu.memory_space<smem>>
    %303 = vector.extract_strided_slice %280 {offsets = [2, 0, 0], sizes = [16, 2, 16], strides = [1, 1, 1]} : vector<22x2x16xf32> to vector<16x2x16xf32>
    %304 = vector.broadcast %302 : f32 to vector<16x2x16xf32>
    %305 = arith.mulf %304, %303 : vector<16x2x16xf32>
    %306 = arith.addf %301, %305 : vector<16x2x16xf32>
    %c65 = arith.constant 65 : index
    %307 = memref.load %arg1[%c65] : memref<98xf32, #tpu.memory_space<smem>>
    %308 = vector.extract_strided_slice %281 {offsets = [2, 0, 0], sizes = [16, 2, 16], strides = [1, 1, 1]} : vector<22x2x16xf32> to vector<16x2x16xf32>
    %309 = vector.broadcast %307 : f32 to vector<16x2x16xf32>
    %310 = arith.mulf %309, %308 : vector<16x2x16xf32>
    %311 = arith.addf %306, %310 : vector<16x2x16xf32>
    %c23 = arith.constant 23 : index
    %312 = memref.load %arg1[%c23] : memref<98xf32, #tpu.memory_space<smem>>
    %313 = vector.extract_strided_slice %280 {offsets = [3, 0, 0], sizes = [16, 2, 16], strides = [1, 1, 1]} : vector<22x2x16xf32> to vector<16x2x16xf32>
    %314 = vector.broadcast %312 : f32 to vector<16x2x16xf32>
    %315 = arith.mulf %314, %313 : vector<16x2x16xf32>
    %316 = arith.addf %311, %315 : vector<16x2x16xf32>
    %c72 = arith.constant 72 : index
    %317 = memref.load %arg1[%c72] : memref<98xf32, #tpu.memory_space<smem>>
    %318 = vector.extract_strided_slice %281 {offsets = [3, 0, 0], sizes = [16, 2, 16], strides = [1, 1, 1]} : vector<22x2x16xf32> to vector<16x2x16xf32>
    %319 = vector.broadcast %317 : f32 to vector<16x2x16xf32>
    %320 = arith.mulf %319, %318 : vector<16x2x16xf32>
    %321 = arith.addf %316, %320 : vector<16x2x16xf32>
    %c30 = arith.constant 30 : index
    %322 = memref.load %arg1[%c30] : memref<98xf32, #tpu.memory_space<smem>>
    %323 = vector.extract_strided_slice %280 {offsets = [4, 0, 0], sizes = [16, 2, 16], strides = [1, 1, 1]} : vector<22x2x16xf32> to vector<16x2x16xf32>
    %324 = vector.broadcast %322 : f32 to vector<16x2x16xf32>
    %325 = arith.mulf %324, %323 : vector<16x2x16xf32>
    %326 = arith.addf %321, %325 : vector<16x2x16xf32>
    %c79 = arith.constant 79 : index
    %327 = memref.load %arg1[%c79] : memref<98xf32, #tpu.memory_space<smem>>
    %328 = vector.extract_strided_slice %281 {offsets = [4, 0, 0], sizes = [16, 2, 16], strides = [1, 1, 1]} : vector<22x2x16xf32> to vector<16x2x16xf32>
    %329 = vector.broadcast %327 : f32 to vector<16x2x16xf32>
    %330 = arith.mulf %329, %328 : vector<16x2x16xf32>
    %331 = arith.addf %326, %330 : vector<16x2x16xf32>
    %c37 = arith.constant 37 : index
    %332 = memref.load %arg1[%c37] : memref<98xf32, #tpu.memory_space<smem>>
    %333 = vector.extract_strided_slice %280 {offsets = [5, 0, 0], sizes = [16, 2, 16], strides = [1, 1, 1]} : vector<22x2x16xf32> to vector<16x2x16xf32>
    %334 = vector.broadcast %332 : f32 to vector<16x2x16xf32>
    %335 = arith.mulf %334, %333 : vector<16x2x16xf32>
    %336 = arith.addf %331, %335 : vector<16x2x16xf32>
    %c86 = arith.constant 86 : index
    %337 = memref.load %arg1[%c86] : memref<98xf32, #tpu.memory_space<smem>>
    %338 = vector.extract_strided_slice %281 {offsets = [5, 0, 0], sizes = [16, 2, 16], strides = [1, 1, 1]} : vector<22x2x16xf32> to vector<16x2x16xf32>
    %339 = vector.broadcast %337 : f32 to vector<16x2x16xf32>
    %340 = arith.mulf %339, %338 : vector<16x2x16xf32>
    %341 = arith.addf %336, %340 : vector<16x2x16xf32>
    %c44 = arith.constant 44 : index
    %342 = memref.load %arg1[%c44] : memref<98xf32, #tpu.memory_space<smem>>
    %343 = vector.extract_strided_slice %280 {offsets = [6, 0, 0], sizes = [16, 2, 16], strides = [1, 1, 1]} : vector<22x2x16xf32> to vector<16x2x16xf32>
    %344 = vector.broadcast %342 : f32 to vector<16x2x16xf32>
    %345 = arith.mulf %344, %343 : vector<16x2x16xf32>
    %346 = arith.addf %341, %345 : vector<16x2x16xf32>
    %c93 = arith.constant 93 : index
    %347 = memref.load %arg1[%c93] : memref<98xf32, #tpu.memory_space<smem>>
    %348 = vector.extract_strided_slice %281 {offsets = [6, 0, 0], sizes = [16, 2, 16], strides = [1, 1, 1]} : vector<22x2x16xf32> to vector<16x2x16xf32>
    %349 = vector.broadcast %347 : f32 to vector<16x2x16xf32>
    %350 = arith.mulf %349, %348 : vector<16x2x16xf32>
    %351 = arith.addf %346, %350 : vector<16x2x16xf32>
    %c0_117 = arith.constant 0 : index
    %c0_118 = arith.constant 0 : index
    %c3_119 = arith.constant 3 : index
    %352 = vector.load %arg4[%c0_117, %c0_118, %c3_119] : memref<22x2x22xf32, #tpu.memory_space<vmem>>, vector<22x2x16xf32>
    %c0_120 = arith.constant 0 : index
    %c0_121 = arith.constant 0 : index
    %c3_122 = arith.constant 3 : index
    %353 = vector.load %arg5[%c0_120, %c0_121, %c3_122] : memref<22x2x22xf32, #tpu.memory_space<vmem>>, vector<22x2x16xf32>
    %c3_123 = arith.constant 3 : index
    %354 = memref.load %arg1[%c3_123] : memref<98xf32, #tpu.memory_space<smem>>
    %355 = vector.extract_strided_slice %352 {offsets = [0, 0, 0], sizes = [16, 2, 16], strides = [1, 1, 1]} : vector<22x2x16xf32> to vector<16x2x16xf32>
    %356 = vector.broadcast %354 : f32 to vector<16x2x16xf32>
    %357 = arith.mulf %356, %355 : vector<16x2x16xf32>
    %358 = arith.addf %351, %357 : vector<16x2x16xf32>
    %c52 = arith.constant 52 : index
    %359 = memref.load %arg1[%c52] : memref<98xf32, #tpu.memory_space<smem>>
    %360 = vector.extract_strided_slice %353 {offsets = [0, 0, 0], sizes = [16, 2, 16], strides = [1, 1, 1]} : vector<22x2x16xf32> to vector<16x2x16xf32>
    %361 = vector.broadcast %359 : f32 to vector<16x2x16xf32>
    %362 = arith.mulf %361, %360 : vector<16x2x16xf32>
    %363 = arith.addf %358, %362 : vector<16x2x16xf32>
    %c10_124 = arith.constant 10 : index
    %364 = memref.load %arg1[%c10_124] : memref<98xf32, #tpu.memory_space<smem>>
    %365 = vector.extract_strided_slice %352 {offsets = [1, 0, 0], sizes = [16, 2, 16], strides = [1, 1, 1]} : vector<22x2x16xf32> to vector<16x2x16xf32>
    %366 = vector.broadcast %364 : f32 to vector<16x2x16xf32>
    %367 = arith.mulf %366, %365 : vector<16x2x16xf32>
    %368 = arith.addf %363, %367 : vector<16x2x16xf32>
    %c59 = arith.constant 59 : index
    %369 = memref.load %arg1[%c59] : memref<98xf32, #tpu.memory_space<smem>>
    %370 = vector.extract_strided_slice %353 {offsets = [1, 0, 0], sizes = [16, 2, 16], strides = [1, 1, 1]} : vector<22x2x16xf32> to vector<16x2x16xf32>
    %371 = vector.broadcast %369 : f32 to vector<16x2x16xf32>
    %372 = arith.mulf %371, %370 : vector<16x2x16xf32>
    %373 = arith.addf %368, %372 : vector<16x2x16xf32>
    %c17_125 = arith.constant 17 : index
    %374 = memref.load %arg1[%c17_125] : memref<98xf32, #tpu.memory_space<smem>>
    %375 = vector.extract_strided_slice %352 {offsets = [2, 0, 0], sizes = [16, 2, 16], strides = [1, 1, 1]} : vector<22x2x16xf32> to vector<16x2x16xf32>
    %376 = vector.broadcast %374 : f32 to vector<16x2x16xf32>
    %377 = arith.mulf %376, %375 : vector<16x2x16xf32>
    %378 = arith.addf %373, %377 : vector<16x2x16xf32>
    %c66 = arith.constant 66 : index
    %379 = memref.load %arg1[%c66] : memref<98xf32, #tpu.memory_space<smem>>
    %380 = vector.extract_strided_slice %353 {offsets = [2, 0, 0], sizes = [16, 2, 16], strides = [1, 1, 1]} : vector<22x2x16xf32> to vector<16x2x16xf32>
    %381 = vector.broadcast %379 : f32 to vector<16x2x16xf32>
    %382 = arith.mulf %381, %380 : vector<16x2x16xf32>
    %383 = arith.addf %378, %382 : vector<16x2x16xf32>
    %c24 = arith.constant 24 : index
    %384 = memref.load %arg1[%c24] : memref<98xf32, #tpu.memory_space<smem>>
    %385 = vector.extract_strided_slice %352 {offsets = [3, 0, 0], sizes = [16, 2, 16], strides = [1, 1, 1]} : vector<22x2x16xf32> to vector<16x2x16xf32>
    %386 = vector.broadcast %384 : f32 to vector<16x2x16xf32>
    %387 = arith.mulf %386, %385 : vector<16x2x16xf32>
    %388 = arith.addf %383, %387 : vector<16x2x16xf32>
    %c73 = arith.constant 73 : index
    %389 = memref.load %arg1[%c73] : memref<98xf32, #tpu.memory_space<smem>>
    %390 = vector.extract_strided_slice %353 {offsets = [3, 0, 0], sizes = [16, 2, 16], strides = [1, 1, 1]} : vector<22x2x16xf32> to vector<16x2x16xf32>
    %391 = vector.broadcast %389 : f32 to vector<16x2x16xf32>
    %392 = arith.mulf %391, %390 : vector<16x2x16xf32>
    %393 = arith.addf %388, %392 : vector<16x2x16xf32>
    %c31 = arith.constant 31 : index
    %394 = memref.load %arg1[%c31] : memref<98xf32, #tpu.memory_space<smem>>
    %395 = vector.extract_strided_slice %352 {offsets = [4, 0, 0], sizes = [16, 2, 16], strides = [1, 1, 1]} : vector<22x2x16xf32> to vector<16x2x16xf32>
    %396 = vector.broadcast %394 : f32 to vector<16x2x16xf32>
    %397 = arith.mulf %396, %395 : vector<16x2x16xf32>
    %398 = arith.addf %393, %397 : vector<16x2x16xf32>
    %c80 = arith.constant 80 : index
    %399 = memref.load %arg1[%c80] : memref<98xf32, #tpu.memory_space<smem>>
    %400 = vector.extract_strided_slice %353 {offsets = [4, 0, 0], sizes = [16, 2, 16], strides = [1, 1, 1]} : vector<22x2x16xf32> to vector<16x2x16xf32>
    %401 = vector.broadcast %399 : f32 to vector<16x2x16xf32>
    %402 = arith.mulf %401, %400 : vector<16x2x16xf32>
    %403 = arith.addf %398, %402 : vector<16x2x16xf32>
    %c38 = arith.constant 38 : index
    %404 = memref.load %arg1[%c38] : memref<98xf32, #tpu.memory_space<smem>>
    %405 = vector.extract_strided_slice %352 {offsets = [5, 0, 0], sizes = [16, 2, 16], strides = [1, 1, 1]} : vector<22x2x16xf32> to vector<16x2x16xf32>
    %406 = vector.broadcast %404 : f32 to vector<16x2x16xf32>
    %407 = arith.mulf %406, %405 : vector<16x2x16xf32>
    %408 = arith.addf %403, %407 : vector<16x2x16xf32>
    %c87 = arith.constant 87 : index
    %409 = memref.load %arg1[%c87] : memref<98xf32, #tpu.memory_space<smem>>
    %410 = vector.extract_strided_slice %353 {offsets = [5, 0, 0], sizes = [16, 2, 16], strides = [1, 1, 1]} : vector<22x2x16xf32> to vector<16x2x16xf32>
    %411 = vector.broadcast %409 : f32 to vector<16x2x16xf32>
    %412 = arith.mulf %411, %410 : vector<16x2x16xf32>
    %413 = arith.addf %408, %412 : vector<16x2x16xf32>
    %c45 = arith.constant 45 : index
    %414 = memref.load %arg1[%c45] : memref<98xf32, #tpu.memory_space<smem>>
    %415 = vector.extract_strided_slice %352 {offsets = [6, 0, 0], sizes = [16, 2, 16], strides = [1, 1, 1]} : vector<22x2x16xf32> to vector<16x2x16xf32>
    %416 = vector.broadcast %414 : f32 to vector<16x2x16xf32>
    %417 = arith.mulf %416, %415 : vector<16x2x16xf32>
    %418 = arith.addf %413, %417 : vector<16x2x16xf32>
    %c94 = arith.constant 94 : index
    %419 = memref.load %arg1[%c94] : memref<98xf32, #tpu.memory_space<smem>>
    %420 = vector.extract_strided_slice %353 {offsets = [6, 0, 0], sizes = [16, 2, 16], strides = [1, 1, 1]} : vector<22x2x16xf32> to vector<16x2x16xf32>
    %421 = vector.broadcast %419 : f32 to vector<16x2x16xf32>
    %422 = arith.mulf %421, %420 : vector<16x2x16xf32>
    %423 = arith.addf %418, %422 : vector<16x2x16xf32>
    %c0_126 = arith.constant 0 : index
    %c0_127 = arith.constant 0 : index
    %c4_128 = arith.constant 4 : index
    %424 = vector.load %arg4[%c0_126, %c0_127, %c4_128] : memref<22x2x22xf32, #tpu.memory_space<vmem>>, vector<22x2x16xf32>
    %c0_129 = arith.constant 0 : index
    %c0_130 = arith.constant 0 : index
    %c4_131 = arith.constant 4 : index
    %425 = vector.load %arg5[%c0_129, %c0_130, %c4_131] : memref<22x2x22xf32, #tpu.memory_space<vmem>>, vector<22x2x16xf32>
    %c4_132 = arith.constant 4 : index
    %426 = memref.load %arg1[%c4_132] : memref<98xf32, #tpu.memory_space<smem>>
    %427 = vector.extract_strided_slice %424 {offsets = [0, 0, 0], sizes = [16, 2, 16], strides = [1, 1, 1]} : vector<22x2x16xf32> to vector<16x2x16xf32>
    %428 = vector.broadcast %426 : f32 to vector<16x2x16xf32>
    %429 = arith.mulf %428, %427 : vector<16x2x16xf32>
    %430 = arith.addf %423, %429 : vector<16x2x16xf32>
    %c53 = arith.constant 53 : index
    %431 = memref.load %arg1[%c53] : memref<98xf32, #tpu.memory_space<smem>>
    %432 = vector.extract_strided_slice %425 {offsets = [0, 0, 0], sizes = [16, 2, 16], strides = [1, 1, 1]} : vector<22x2x16xf32> to vector<16x2x16xf32>
    %433 = vector.broadcast %431 : f32 to vector<16x2x16xf32>
    %434 = arith.mulf %433, %432 : vector<16x2x16xf32>
    %435 = arith.addf %430, %434 : vector<16x2x16xf32>
    %c11_133 = arith.constant 11 : index
    %436 = memref.load %arg1[%c11_133] : memref<98xf32, #tpu.memory_space<smem>>
    %437 = vector.extract_strided_slice %424 {offsets = [1, 0, 0], sizes = [16, 2, 16], strides = [1, 1, 1]} : vector<22x2x16xf32> to vector<16x2x16xf32>
    %438 = vector.broadcast %436 : f32 to vector<16x2x16xf32>
    %439 = arith.mulf %438, %437 : vector<16x2x16xf32>
    %440 = arith.addf %435, %439 : vector<16x2x16xf32>
    %c60 = arith.constant 60 : index
    %441 = memref.load %arg1[%c60] : memref<98xf32, #tpu.memory_space<smem>>
    %442 = vector.extract_strided_slice %425 {offsets = [1, 0, 0], sizes = [16, 2, 16], strides = [1, 1, 1]} : vector<22x2x16xf32> to vector<16x2x16xf32>
    %443 = vector.broadcast %441 : f32 to vector<16x2x16xf32>
    %444 = arith.mulf %443, %442 : vector<16x2x16xf32>
    %445 = arith.addf %440, %444 : vector<16x2x16xf32>
    %c18_134 = arith.constant 18 : index
    %446 = memref.load %arg1[%c18_134] : memref<98xf32, #tpu.memory_space<smem>>
    %447 = vector.extract_strided_slice %424 {offsets = [2, 0, 0], sizes = [16, 2, 16], strides = [1, 1, 1]} : vector<22x2x16xf32> to vector<16x2x16xf32>
    %448 = vector.broadcast %446 : f32 to vector<16x2x16xf32>
    %449 = arith.mulf %448, %447 : vector<16x2x16xf32>
    %450 = arith.addf %445, %449 : vector<16x2x16xf32>
    %c67 = arith.constant 67 : index
    %451 = memref.load %arg1[%c67] : memref<98xf32, #tpu.memory_space<smem>>
    %452 = vector.extract_strided_slice %425 {offsets = [2, 0, 0], sizes = [16, 2, 16], strides = [1, 1, 1]} : vector<22x2x16xf32> to vector<16x2x16xf32>
    %453 = vector.broadcast %451 : f32 to vector<16x2x16xf32>
    %454 = arith.mulf %453, %452 : vector<16x2x16xf32>
    %455 = arith.addf %450, %454 : vector<16x2x16xf32>
    %c25 = arith.constant 25 : index
    %456 = memref.load %arg1[%c25] : memref<98xf32, #tpu.memory_space<smem>>
    %457 = vector.extract_strided_slice %424 {offsets = [3, 0, 0], sizes = [16, 2, 16], strides = [1, 1, 1]} : vector<22x2x16xf32> to vector<16x2x16xf32>
    %458 = vector.broadcast %456 : f32 to vector<16x2x16xf32>
    %459 = arith.mulf %458, %457 : vector<16x2x16xf32>
    %460 = arith.addf %455, %459 : vector<16x2x16xf32>
    %c74 = arith.constant 74 : index
    %461 = memref.load %arg1[%c74] : memref<98xf32, #tpu.memory_space<smem>>
    %462 = vector.extract_strided_slice %425 {offsets = [3, 0, 0], sizes = [16, 2, 16], strides = [1, 1, 1]} : vector<22x2x16xf32> to vector<16x2x16xf32>
    %463 = vector.broadcast %461 : f32 to vector<16x2x16xf32>
    %464 = arith.mulf %463, %462 : vector<16x2x16xf32>
    %465 = arith.addf %460, %464 : vector<16x2x16xf32>
    %c32 = arith.constant 32 : index
    %466 = memref.load %arg1[%c32] : memref<98xf32, #tpu.memory_space<smem>>
    %467 = vector.extract_strided_slice %424 {offsets = [4, 0, 0], sizes = [16, 2, 16], strides = [1, 1, 1]} : vector<22x2x16xf32> to vector<16x2x16xf32>
    %468 = vector.broadcast %466 : f32 to vector<16x2x16xf32>
    %469 = arith.mulf %468, %467 : vector<16x2x16xf32>
    %470 = arith.addf %465, %469 : vector<16x2x16xf32>
    %c81 = arith.constant 81 : index
    %471 = memref.load %arg1[%c81] : memref<98xf32, #tpu.memory_space<smem>>
    %472 = vector.extract_strided_slice %425 {offsets = [4, 0, 0], sizes = [16, 2, 16], strides = [1, 1, 1]} : vector<22x2x16xf32> to vector<16x2x16xf32>
    %473 = vector.broadcast %471 : f32 to vector<16x2x16xf32>
    %474 = arith.mulf %473, %472 : vector<16x2x16xf32>
    %475 = arith.addf %470, %474 : vector<16x2x16xf32>
    %c39 = arith.constant 39 : index
    %476 = memref.load %arg1[%c39] : memref<98xf32, #tpu.memory_space<smem>>
    %477 = vector.extract_strided_slice %424 {offsets = [5, 0, 0], sizes = [16, 2, 16], strides = [1, 1, 1]} : vector<22x2x16xf32> to vector<16x2x16xf32>
    %478 = vector.broadcast %476 : f32 to vector<16x2x16xf32>
    %479 = arith.mulf %478, %477 : vector<16x2x16xf32>
    %480 = arith.addf %475, %479 : vector<16x2x16xf32>
    %c88 = arith.constant 88 : index
    %481 = memref.load %arg1[%c88] : memref<98xf32, #tpu.memory_space<smem>>
    %482 = vector.extract_strided_slice %425 {offsets = [5, 0, 0], sizes = [16, 2, 16], strides = [1, 1, 1]} : vector<22x2x16xf32> to vector<16x2x16xf32>
    %483 = vector.broadcast %481 : f32 to vector<16x2x16xf32>
    %484 = arith.mulf %483, %482 : vector<16x2x16xf32>
    %485 = arith.addf %480, %484 : vector<16x2x16xf32>
    %c46 = arith.constant 46 : index
    %486 = memref.load %arg1[%c46] : memref<98xf32, #tpu.memory_space<smem>>
    %487 = vector.extract_strided_slice %424 {offsets = [6, 0, 0], sizes = [16, 2, 16], strides = [1, 1, 1]} : vector<22x2x16xf32> to vector<16x2x16xf32>
    %488 = vector.broadcast %486 : f32 to vector<16x2x16xf32>
    %489 = arith.mulf %488, %487 : vector<16x2x16xf32>
    %490 = arith.addf %485, %489 : vector<16x2x16xf32>
    %c95 = arith.constant 95 : index
    %491 = memref.load %arg1[%c95] : memref<98xf32, #tpu.memory_space<smem>>
    %492 = vector.extract_strided_slice %425 {offsets = [6, 0, 0], sizes = [16, 2, 16], strides = [1, 1, 1]} : vector<22x2x16xf32> to vector<16x2x16xf32>
    %493 = vector.broadcast %491 : f32 to vector<16x2x16xf32>
    %494 = arith.mulf %493, %492 : vector<16x2x16xf32>
    %495 = arith.addf %490, %494 : vector<16x2x16xf32>
    %c0_135 = arith.constant 0 : index
    %c0_136 = arith.constant 0 : index
    %c5_137 = arith.constant 5 : index
    %496 = vector.load %arg4[%c0_135, %c0_136, %c5_137] : memref<22x2x22xf32, #tpu.memory_space<vmem>>, vector<22x2x16xf32>
    %c0_138 = arith.constant 0 : index
    %c0_139 = arith.constant 0 : index
    %c5_140 = arith.constant 5 : index
    %497 = vector.load %arg5[%c0_138, %c0_139, %c5_140] : memref<22x2x22xf32, #tpu.memory_space<vmem>>, vector<22x2x16xf32>
    %c5_141 = arith.constant 5 : index
    %498 = memref.load %arg1[%c5_141] : memref<98xf32, #tpu.memory_space<smem>>
    %499 = vector.extract_strided_slice %496 {offsets = [0, 0, 0], sizes = [16, 2, 16], strides = [1, 1, 1]} : vector<22x2x16xf32> to vector<16x2x16xf32>
    %500 = vector.broadcast %498 : f32 to vector<16x2x16xf32>
    %501 = arith.mulf %500, %499 : vector<16x2x16xf32>
    %502 = arith.addf %495, %501 : vector<16x2x16xf32>
    %c54 = arith.constant 54 : index
    %503 = memref.load %arg1[%c54] : memref<98xf32, #tpu.memory_space<smem>>
    %504 = vector.extract_strided_slice %497 {offsets = [0, 0, 0], sizes = [16, 2, 16], strides = [1, 1, 1]} : vector<22x2x16xf32> to vector<16x2x16xf32>
    %505 = vector.broadcast %503 : f32 to vector<16x2x16xf32>
    %506 = arith.mulf %505, %504 : vector<16x2x16xf32>
    %507 = arith.addf %502, %506 : vector<16x2x16xf32>
    %c12_142 = arith.constant 12 : index
    %508 = memref.load %arg1[%c12_142] : memref<98xf32, #tpu.memory_space<smem>>
    %509 = vector.extract_strided_slice %496 {offsets = [1, 0, 0], sizes = [16, 2, 16], strides = [1, 1, 1]} : vector<22x2x16xf32> to vector<16x2x16xf32>
    %510 = vector.broadcast %508 : f32 to vector<16x2x16xf32>
    %511 = arith.mulf %510, %509 : vector<16x2x16xf32>
    %512 = arith.addf %507, %511 : vector<16x2x16xf32>
    %c61 = arith.constant 61 : index
    %513 = memref.load %arg1[%c61] : memref<98xf32, #tpu.memory_space<smem>>
    %514 = vector.extract_strided_slice %497 {offsets = [1, 0, 0], sizes = [16, 2, 16], strides = [1, 1, 1]} : vector<22x2x16xf32> to vector<16x2x16xf32>
    %515 = vector.broadcast %513 : f32 to vector<16x2x16xf32>
    %516 = arith.mulf %515, %514 : vector<16x2x16xf32>
    %517 = arith.addf %512, %516 : vector<16x2x16xf32>
    %c19 = arith.constant 19 : index
    %518 = memref.load %arg1[%c19] : memref<98xf32, #tpu.memory_space<smem>>
    %519 = vector.extract_strided_slice %496 {offsets = [2, 0, 0], sizes = [16, 2, 16], strides = [1, 1, 1]} : vector<22x2x16xf32> to vector<16x2x16xf32>
    %520 = vector.broadcast %518 : f32 to vector<16x2x16xf32>
    %521 = arith.mulf %520, %519 : vector<16x2x16xf32>
    %522 = arith.addf %517, %521 : vector<16x2x16xf32>
    %c68 = arith.constant 68 : index
    %523 = memref.load %arg1[%c68] : memref<98xf32, #tpu.memory_space<smem>>
    %524 = vector.extract_strided_slice %497 {offsets = [2, 0, 0], sizes = [16, 2, 16], strides = [1, 1, 1]} : vector<22x2x16xf32> to vector<16x2x16xf32>
    %525 = vector.broadcast %523 : f32 to vector<16x2x16xf32>
    %526 = arith.mulf %525, %524 : vector<16x2x16xf32>
    %527 = arith.addf %522, %526 : vector<16x2x16xf32>
    %c26 = arith.constant 26 : index
    %528 = memref.load %arg1[%c26] : memref<98xf32, #tpu.memory_space<smem>>
    %529 = vector.extract_strided_slice %496 {offsets = [3, 0, 0], sizes = [16, 2, 16], strides = [1, 1, 1]} : vector<22x2x16xf32> to vector<16x2x16xf32>
    %530 = vector.broadcast %528 : f32 to vector<16x2x16xf32>
    %531 = arith.mulf %530, %529 : vector<16x2x16xf32>
    %532 = arith.addf %527, %531 : vector<16x2x16xf32>
    %c75 = arith.constant 75 : index
    %533 = memref.load %arg1[%c75] : memref<98xf32, #tpu.memory_space<smem>>
    %534 = vector.extract_strided_slice %497 {offsets = [3, 0, 0], sizes = [16, 2, 16], strides = [1, 1, 1]} : vector<22x2x16xf32> to vector<16x2x16xf32>
    %535 = vector.broadcast %533 : f32 to vector<16x2x16xf32>
    %536 = arith.mulf %535, %534 : vector<16x2x16xf32>
    %537 = arith.addf %532, %536 : vector<16x2x16xf32>
    %c33 = arith.constant 33 : index
    %538 = memref.load %arg1[%c33] : memref<98xf32, #tpu.memory_space<smem>>
    %539 = vector.extract_strided_slice %496 {offsets = [4, 0, 0], sizes = [16, 2, 16], strides = [1, 1, 1]} : vector<22x2x16xf32> to vector<16x2x16xf32>
    %540 = vector.broadcast %538 : f32 to vector<16x2x16xf32>
    %541 = arith.mulf %540, %539 : vector<16x2x16xf32>
    %542 = arith.addf %537, %541 : vector<16x2x16xf32>
    %c82 = arith.constant 82 : index
    %543 = memref.load %arg1[%c82] : memref<98xf32, #tpu.memory_space<smem>>
    %544 = vector.extract_strided_slice %497 {offsets = [4, 0, 0], sizes = [16, 2, 16], strides = [1, 1, 1]} : vector<22x2x16xf32> to vector<16x2x16xf32>
    %545 = vector.broadcast %543 : f32 to vector<16x2x16xf32>
    %546 = arith.mulf %545, %544 : vector<16x2x16xf32>
    %547 = arith.addf %542, %546 : vector<16x2x16xf32>
    %c40 = arith.constant 40 : index
    %548 = memref.load %arg1[%c40] : memref<98xf32, #tpu.memory_space<smem>>
    %549 = vector.extract_strided_slice %496 {offsets = [5, 0, 0], sizes = [16, 2, 16], strides = [1, 1, 1]} : vector<22x2x16xf32> to vector<16x2x16xf32>
    %550 = vector.broadcast %548 : f32 to vector<16x2x16xf32>
    %551 = arith.mulf %550, %549 : vector<16x2x16xf32>
    %552 = arith.addf %547, %551 : vector<16x2x16xf32>
    %c89 = arith.constant 89 : index
    %553 = memref.load %arg1[%c89] : memref<98xf32, #tpu.memory_space<smem>>
    %554 = vector.extract_strided_slice %497 {offsets = [5, 0, 0], sizes = [16, 2, 16], strides = [1, 1, 1]} : vector<22x2x16xf32> to vector<16x2x16xf32>
    %555 = vector.broadcast %553 : f32 to vector<16x2x16xf32>
    %556 = arith.mulf %555, %554 : vector<16x2x16xf32>
    %557 = arith.addf %552, %556 : vector<16x2x16xf32>
    %c47 = arith.constant 47 : index
    %558 = memref.load %arg1[%c47] : memref<98xf32, #tpu.memory_space<smem>>
    %559 = vector.extract_strided_slice %496 {offsets = [6, 0, 0], sizes = [16, 2, 16], strides = [1, 1, 1]} : vector<22x2x16xf32> to vector<16x2x16xf32>
    %560 = vector.broadcast %558 : f32 to vector<16x2x16xf32>
    %561 = arith.mulf %560, %559 : vector<16x2x16xf32>
    %562 = arith.addf %557, %561 : vector<16x2x16xf32>
    %c96 = arith.constant 96 : index
    %563 = memref.load %arg1[%c96] : memref<98xf32, #tpu.memory_space<smem>>
    %564 = vector.extract_strided_slice %497 {offsets = [6, 0, 0], sizes = [16, 2, 16], strides = [1, 1, 1]} : vector<22x2x16xf32> to vector<16x2x16xf32>
    %565 = vector.broadcast %563 : f32 to vector<16x2x16xf32>
    %566 = arith.mulf %565, %564 : vector<16x2x16xf32>
    %567 = arith.addf %562, %566 : vector<16x2x16xf32>
    %c0_143 = arith.constant 0 : index
    %c0_144 = arith.constant 0 : index
    %c6_145 = arith.constant 6 : index
    %568 = vector.load %arg4[%c0_143, %c0_144, %c6_145] : memref<22x2x22xf32, #tpu.memory_space<vmem>>, vector<22x2x16xf32>
    %c0_146 = arith.constant 0 : index
    %c0_147 = arith.constant 0 : index
    %c6_148 = arith.constant 6 : index
    %569 = vector.load %arg5[%c0_146, %c0_147, %c6_148] : memref<22x2x22xf32, #tpu.memory_space<vmem>>, vector<22x2x16xf32>
    %c6_149 = arith.constant 6 : index
    %570 = memref.load %arg1[%c6_149] : memref<98xf32, #tpu.memory_space<smem>>
    %571 = vector.extract_strided_slice %568 {offsets = [0, 0, 0], sizes = [16, 2, 16], strides = [1, 1, 1]} : vector<22x2x16xf32> to vector<16x2x16xf32>
    %572 = vector.broadcast %570 : f32 to vector<16x2x16xf32>
    %573 = arith.mulf %572, %571 : vector<16x2x16xf32>
    %574 = arith.addf %567, %573 : vector<16x2x16xf32>
    %c55 = arith.constant 55 : index
    %575 = memref.load %arg1[%c55] : memref<98xf32, #tpu.memory_space<smem>>
    %576 = vector.extract_strided_slice %569 {offsets = [0, 0, 0], sizes = [16, 2, 16], strides = [1, 1, 1]} : vector<22x2x16xf32> to vector<16x2x16xf32>
    %577 = vector.broadcast %575 : f32 to vector<16x2x16xf32>
    %578 = arith.mulf %577, %576 : vector<16x2x16xf32>
    %579 = arith.addf %574, %578 : vector<16x2x16xf32>
    %c13_150 = arith.constant 13 : index
    %580 = memref.load %arg1[%c13_150] : memref<98xf32, #tpu.memory_space<smem>>
    %581 = vector.extract_strided_slice %568 {offsets = [1, 0, 0], sizes = [16, 2, 16], strides = [1, 1, 1]} : vector<22x2x16xf32> to vector<16x2x16xf32>
    %582 = vector.broadcast %580 : f32 to vector<16x2x16xf32>
    %583 = arith.mulf %582, %581 : vector<16x2x16xf32>
    %584 = arith.addf %579, %583 : vector<16x2x16xf32>
    %c62 = arith.constant 62 : index
    %585 = memref.load %arg1[%c62] : memref<98xf32, #tpu.memory_space<smem>>
    %586 = vector.extract_strided_slice %569 {offsets = [1, 0, 0], sizes = [16, 2, 16], strides = [1, 1, 1]} : vector<22x2x16xf32> to vector<16x2x16xf32>
    %587 = vector.broadcast %585 : f32 to vector<16x2x16xf32>
    %588 = arith.mulf %587, %586 : vector<16x2x16xf32>
    %589 = arith.addf %584, %588 : vector<16x2x16xf32>
    %c20 = arith.constant 20 : index
    %590 = memref.load %arg1[%c20] : memref<98xf32, #tpu.memory_space<smem>>
    %591 = vector.extract_strided_slice %568 {offsets = [2, 0, 0], sizes = [16, 2, 16], strides = [1, 1, 1]} : vector<22x2x16xf32> to vector<16x2x16xf32>
    %592 = vector.broadcast %590 : f32 to vector<16x2x16xf32>
    %593 = arith.mulf %592, %591 : vector<16x2x16xf32>
    %594 = arith.addf %589, %593 : vector<16x2x16xf32>
    %c69 = arith.constant 69 : index
    %595 = memref.load %arg1[%c69] : memref<98xf32, #tpu.memory_space<smem>>
    %596 = vector.extract_strided_slice %569 {offsets = [2, 0, 0], sizes = [16, 2, 16], strides = [1, 1, 1]} : vector<22x2x16xf32> to vector<16x2x16xf32>
    %597 = vector.broadcast %595 : f32 to vector<16x2x16xf32>
    %598 = arith.mulf %597, %596 : vector<16x2x16xf32>
    %599 = arith.addf %594, %598 : vector<16x2x16xf32>
    %c27 = arith.constant 27 : index
    %600 = memref.load %arg1[%c27] : memref<98xf32, #tpu.memory_space<smem>>
    %601 = vector.extract_strided_slice %568 {offsets = [3, 0, 0], sizes = [16, 2, 16], strides = [1, 1, 1]} : vector<22x2x16xf32> to vector<16x2x16xf32>
    %602 = vector.broadcast %600 : f32 to vector<16x2x16xf32>
    %603 = arith.mulf %602, %601 : vector<16x2x16xf32>
    %604 = arith.addf %599, %603 : vector<16x2x16xf32>
    %c76 = arith.constant 76 : index
    %605 = memref.load %arg1[%c76] : memref<98xf32, #tpu.memory_space<smem>>
    %606 = vector.extract_strided_slice %569 {offsets = [3, 0, 0], sizes = [16, 2, 16], strides = [1, 1, 1]} : vector<22x2x16xf32> to vector<16x2x16xf32>
    %607 = vector.broadcast %605 : f32 to vector<16x2x16xf32>
    %608 = arith.mulf %607, %606 : vector<16x2x16xf32>
    %609 = arith.addf %604, %608 : vector<16x2x16xf32>
    %c34 = arith.constant 34 : index
    %610 = memref.load %arg1[%c34] : memref<98xf32, #tpu.memory_space<smem>>
    %611 = vector.extract_strided_slice %568 {offsets = [4, 0, 0], sizes = [16, 2, 16], strides = [1, 1, 1]} : vector<22x2x16xf32> to vector<16x2x16xf32>
    %612 = vector.broadcast %610 : f32 to vector<16x2x16xf32>
    %613 = arith.mulf %612, %611 : vector<16x2x16xf32>
    %614 = arith.addf %609, %613 : vector<16x2x16xf32>
    %c83 = arith.constant 83 : index
    %615 = memref.load %arg1[%c83] : memref<98xf32, #tpu.memory_space<smem>>
    %616 = vector.extract_strided_slice %569 {offsets = [4, 0, 0], sizes = [16, 2, 16], strides = [1, 1, 1]} : vector<22x2x16xf32> to vector<16x2x16xf32>
    %617 = vector.broadcast %615 : f32 to vector<16x2x16xf32>
    %618 = arith.mulf %617, %616 : vector<16x2x16xf32>
    %619 = arith.addf %614, %618 : vector<16x2x16xf32>
    %c41 = arith.constant 41 : index
    %620 = memref.load %arg1[%c41] : memref<98xf32, #tpu.memory_space<smem>>
    %621 = vector.extract_strided_slice %568 {offsets = [5, 0, 0], sizes = [16, 2, 16], strides = [1, 1, 1]} : vector<22x2x16xf32> to vector<16x2x16xf32>
    %622 = vector.broadcast %620 : f32 to vector<16x2x16xf32>
    %623 = arith.mulf %622, %621 : vector<16x2x16xf32>
    %624 = arith.addf %619, %623 : vector<16x2x16xf32>
    %c90 = arith.constant 90 : index
    %625 = memref.load %arg1[%c90] : memref<98xf32, #tpu.memory_space<smem>>
    %626 = vector.extract_strided_slice %569 {offsets = [5, 0, 0], sizes = [16, 2, 16], strides = [1, 1, 1]} : vector<22x2x16xf32> to vector<16x2x16xf32>
    %627 = vector.broadcast %625 : f32 to vector<16x2x16xf32>
    %628 = arith.mulf %627, %626 : vector<16x2x16xf32>
    %629 = arith.addf %624, %628 : vector<16x2x16xf32>
    %c48 = arith.constant 48 : index
    %630 = memref.load %arg1[%c48] : memref<98xf32, #tpu.memory_space<smem>>
    %631 = vector.extract_strided_slice %568 {offsets = [6, 0, 0], sizes = [16, 2, 16], strides = [1, 1, 1]} : vector<22x2x16xf32> to vector<16x2x16xf32>
    %632 = vector.broadcast %630 : f32 to vector<16x2x16xf32>
    %633 = arith.mulf %632, %631 : vector<16x2x16xf32>
    %634 = arith.addf %629, %633 : vector<16x2x16xf32>
    %c97 = arith.constant 97 : index
    %635 = memref.load %arg1[%c97] : memref<98xf32, #tpu.memory_space<smem>>
    %636 = vector.extract_strided_slice %569 {offsets = [6, 0, 0], sizes = [16, 2, 16], strides = [1, 1, 1]} : vector<22x2x16xf32> to vector<16x2x16xf32>
    %637 = vector.broadcast %635 : f32 to vector<16x2x16xf32>
    %638 = arith.mulf %637, %636 : vector<16x2x16xf32>
    %639 = arith.addf %634, %638 : vector<16x2x16xf32>
    %640 = arith.negf %639 : vector<16x2x16xf32>
    %641 = math.exp %640 : vector<16x2x16xf32>
    %cst_151 = arith.constant 1.000000e+00 : f32
    %642 = vector.broadcast %cst_151 : f32 to vector<16x2x16xf32>
    %643 = arith.addf %642, %641 : vector<16x2x16xf32>
    %644 = arith.divf %642, %643 : vector<16x2x16xf32>
    %645 = vector.extract_strided_slice %644 {offsets = [0, 0, 0], sizes = [1, 2, 16], strides = [1, 1, 1]} : vector<16x2x16xf32> to vector<1x2x16xf32>
    %646 = vector.shape_cast %645 : vector<1x2x16xf32> to vector<2x16xf32>
    %c0_152 = arith.constant 0 : index
    %c0_153 = arith.constant 0 : index
    %647 = vector.load %arg3[%c0_152, %c0_153] : memref<2x256xf32, #tpu.memory_space<vmem>>, vector<2x16xf32>
    tpu.vector_store %arg3[%c0_152, %c0_153], %646 {strides = array<i32>} : memref<2x256xf32, #tpu.memory_space<vmem>>, vector<2x16xf32>,
    %648 = vector.extract_strided_slice %644 {offsets = [1, 0, 0], sizes = [1, 2, 16], strides = [1, 1, 1]} : vector<16x2x16xf32> to vector<1x2x16xf32>
    %649 = vector.shape_cast %648 : vector<1x2x16xf32> to vector<2x16xf32>
    %c0_154 = arith.constant 0 : index
    %c16_155 = arith.constant 16 : index
    %650 = vector.load %arg3[%c0_154, %c16_155] : memref<2x256xf32, #tpu.memory_space<vmem>>, vector<2x16xf32>
    tpu.vector_store %arg3[%c0_154, %c16_155], %649 {strides = array<i32>} : memref<2x256xf32, #tpu.memory_space<vmem>>, vector<2x16xf32>,
    %651 = vector.extract_strided_slice %644 {offsets = [2, 0, 0], sizes = [1, 2, 16], strides = [1, 1, 1]} : vector<16x2x16xf32> to vector<1x2x16xf32>
    %652 = vector.shape_cast %651 : vector<1x2x16xf32> to vector<2x16xf32>
    %c0_156 = arith.constant 0 : index
    %c32_157 = arith.constant 32 : index
    %653 = vector.load %arg3[%c0_156, %c32_157] : memref<2x256xf32, #tpu.memory_space<vmem>>, vector<2x16xf32>
    tpu.vector_store %arg3[%c0_156, %c32_157], %652 {strides = array<i32>} : memref<2x256xf32, #tpu.memory_space<vmem>>, vector<2x16xf32>,
    %654 = vector.extract_strided_slice %644 {offsets = [3, 0, 0], sizes = [1, 2, 16], strides = [1, 1, 1]} : vector<16x2x16xf32> to vector<1x2x16xf32>
    %655 = vector.shape_cast %654 : vector<1x2x16xf32> to vector<2x16xf32>
    %c0_158 = arith.constant 0 : index
    %c48_159 = arith.constant 48 : index
    %656 = vector.load %arg3[%c0_158, %c48_159] : memref<2x256xf32, #tpu.memory_space<vmem>>, vector<2x16xf32>
    tpu.vector_store %arg3[%c0_158, %c48_159], %655 {strides = array<i32>} : memref<2x256xf32, #tpu.memory_space<vmem>>, vector<2x16xf32>,
    %657 = vector.extract_strided_slice %644 {offsets = [4, 0, 0], sizes = [1, 2, 16], strides = [1, 1, 1]} : vector<16x2x16xf32> to vector<1x2x16xf32>
    %658 = vector.shape_cast %657 : vector<1x2x16xf32> to vector<2x16xf32>
    %c0_160 = arith.constant 0 : index
    %c64_161 = arith.constant 64 : index
    %659 = vector.load %arg3[%c0_160, %c64_161] : memref<2x256xf32, #tpu.memory_space<vmem>>, vector<2x16xf32>
    tpu.vector_store %arg3[%c0_160, %c64_161], %658 {strides = array<i32>} : memref<2x256xf32, #tpu.memory_space<vmem>>, vector<2x16xf32>,
    %660 = vector.extract_strided_slice %644 {offsets = [5, 0, 0], sizes = [1, 2, 16], strides = [1, 1, 1]} : vector<16x2x16xf32> to vector<1x2x16xf32>
    %661 = vector.shape_cast %660 : vector<1x2x16xf32> to vector<2x16xf32>
    %c0_162 = arith.constant 0 : index
    %c80_163 = arith.constant 80 : index
    %662 = vector.load %arg3[%c0_162, %c80_163] : memref<2x256xf32, #tpu.memory_space<vmem>>, vector<2x16xf32>
    tpu.vector_store %arg3[%c0_162, %c80_163], %661 {strides = array<i32>} : memref<2x256xf32, #tpu.memory_space<vmem>>, vector<2x16xf32>,
    %663 = vector.extract_strided_slice %644 {offsets = [6, 0, 0], sizes = [1, 2, 16], strides = [1, 1, 1]} : vector<16x2x16xf32> to vector<1x2x16xf32>
    %664 = vector.shape_cast %663 : vector<1x2x16xf32> to vector<2x16xf32>
    %c0_164 = arith.constant 0 : index
    %c96_165 = arith.constant 96 : index
    %665 = vector.load %arg3[%c0_164, %c96_165] : memref<2x256xf32, #tpu.memory_space<vmem>>, vector<2x16xf32>
    tpu.vector_store %arg3[%c0_164, %c96_165], %664 {strides = array<i32>} : memref<2x256xf32, #tpu.memory_space<vmem>>, vector<2x16xf32>,
    %666 = vector.extract_strided_slice %644 {offsets = [7, 0, 0], sizes = [1, 2, 16], strides = [1, 1, 1]} : vector<16x2x16xf32> to vector<1x2x16xf32>
    %667 = vector.shape_cast %666 : vector<1x2x16xf32> to vector<2x16xf32>
    %c0_166 = arith.constant 0 : index
    %c112 = arith.constant 112 : index
    %668 = vector.load %arg3[%c0_166, %c112] : memref<2x256xf32, #tpu.memory_space<vmem>>, vector<2x16xf32>
    tpu.vector_store %arg3[%c0_166, %c112], %667 {strides = array<i32>} : memref<2x256xf32, #tpu.memory_space<vmem>>, vector<2x16xf32>,
    %669 = vector.extract_strided_slice %644 {offsets = [8, 0, 0], sizes = [1, 2, 16], strides = [1, 1, 1]} : vector<16x2x16xf32> to vector<1x2x16xf32>
    %670 = vector.shape_cast %669 : vector<1x2x16xf32> to vector<2x16xf32>
    %c0_167 = arith.constant 0 : index
    %c128 = arith.constant 128 : index
    %671 = vector.load %arg3[%c0_167, %c128] : memref<2x256xf32, #tpu.memory_space<vmem>>, vector<2x16xf32>
    tpu.vector_store %arg3[%c0_167, %c128], %670 {strides = array<i32>} : memref<2x256xf32, #tpu.memory_space<vmem>>, vector<2x16xf32>,
    %672 = vector.extract_strided_slice %644 {offsets = [9, 0, 0], sizes = [1, 2, 16], strides = [1, 1, 1]} : vector<16x2x16xf32> to vector<1x2x16xf32>
    %673 = vector.shape_cast %672 : vector<1x2x16xf32> to vector<2x16xf32>
    %c0_168 = arith.constant 0 : index
    %c144 = arith.constant 144 : index
    %674 = vector.load %arg3[%c0_168, %c144] : memref<2x256xf32, #tpu.memory_space<vmem>>, vector<2x16xf32>
    tpu.vector_store %arg3[%c0_168, %c144], %673 {strides = array<i32>} : memref<2x256xf32, #tpu.memory_space<vmem>>, vector<2x16xf32>,
    %675 = vector.extract_strided_slice %644 {offsets = [10, 0, 0], sizes = [1, 2, 16], strides = [1, 1, 1]} : vector<16x2x16xf32> to vector<1x2x16xf32>
    %676 = vector.shape_cast %675 : vector<1x2x16xf32> to vector<2x16xf32>
    %c0_169 = arith.constant 0 : index
    %c160 = arith.constant 160 : index
    %677 = vector.load %arg3[%c0_169, %c160] : memref<2x256xf32, #tpu.memory_space<vmem>>, vector<2x16xf32>
    tpu.vector_store %arg3[%c0_169, %c160], %676 {strides = array<i32>} : memref<2x256xf32, #tpu.memory_space<vmem>>, vector<2x16xf32>,
    %678 = vector.extract_strided_slice %644 {offsets = [11, 0, 0], sizes = [1, 2, 16], strides = [1, 1, 1]} : vector<16x2x16xf32> to vector<1x2x16xf32>
    %679 = vector.shape_cast %678 : vector<1x2x16xf32> to vector<2x16xf32>
    %c0_170 = arith.constant 0 : index
    %c176 = arith.constant 176 : index
    %680 = vector.load %arg3[%c0_170, %c176] : memref<2x256xf32, #tpu.memory_space<vmem>>, vector<2x16xf32>
    tpu.vector_store %arg3[%c0_170, %c176], %679 {strides = array<i32>} : memref<2x256xf32, #tpu.memory_space<vmem>>, vector<2x16xf32>,
    %681 = vector.extract_strided_slice %644 {offsets = [12, 0, 0], sizes = [1, 2, 16], strides = [1, 1, 1]} : vector<16x2x16xf32> to vector<1x2x16xf32>
    %682 = vector.shape_cast %681 : vector<1x2x16xf32> to vector<2x16xf32>
    %c0_171 = arith.constant 0 : index
    %c192 = arith.constant 192 : index
    %683 = vector.load %arg3[%c0_171, %c192] : memref<2x256xf32, #tpu.memory_space<vmem>>, vector<2x16xf32>
    tpu.vector_store %arg3[%c0_171, %c192], %682 {strides = array<i32>} : memref<2x256xf32, #tpu.memory_space<vmem>>, vector<2x16xf32>,
    %684 = vector.extract_strided_slice %644 {offsets = [13, 0, 0], sizes = [1, 2, 16], strides = [1, 1, 1]} : vector<16x2x16xf32> to vector<1x2x16xf32>
    %685 = vector.shape_cast %684 : vector<1x2x16xf32> to vector<2x16xf32>
    %c0_172 = arith.constant 0 : index
    %c208 = arith.constant 208 : index
    %686 = vector.load %arg3[%c0_172, %c208] : memref<2x256xf32, #tpu.memory_space<vmem>>, vector<2x16xf32>
    tpu.vector_store %arg3[%c0_172, %c208], %685 {strides = array<i32>} : memref<2x256xf32, #tpu.memory_space<vmem>>, vector<2x16xf32>,
    %687 = vector.extract_strided_slice %644 {offsets = [14, 0, 0], sizes = [1, 2, 16], strides = [1, 1, 1]} : vector<16x2x16xf32> to vector<1x2x16xf32>
    %688 = vector.shape_cast %687 : vector<1x2x16xf32> to vector<2x16xf32>
    %c0_173 = arith.constant 0 : index
    %c224 = arith.constant 224 : index
    %689 = vector.load %arg3[%c0_173, %c224] : memref<2x256xf32, #tpu.memory_space<vmem>>, vector<2x16xf32>
    tpu.vector_store %arg3[%c0_173, %c224], %688 {strides = array<i32>} : memref<2x256xf32, #tpu.memory_space<vmem>>, vector<2x16xf32>,
    %690 = vector.extract_strided_slice %644 {offsets = [15, 0, 0], sizes = [1, 2, 16], strides = [1, 1, 1]} : vector<16x2x16xf32> to vector<1x2x16xf32>
    %691 = vector.shape_cast %690 : vector<1x2x16xf32> to vector<2x16xf32>
    %c0_174 = arith.constant 0 : index
    %c240 = arith.constant 240 : index
    %692 = vector.load %arg3[%c0_174, %c240] : memref<2x256xf32, #tpu.memory_space<vmem>>, vector<2x16xf32>
    tpu.vector_store %arg3[%c0_174, %c240], %691 {strides = array<i32>} : memref<2x256xf32, #tpu.memory_space<vmem>>, vector<2x16xf32>,
    return
  }
  func.func @transform_0(%arg0: i32) -> i32 {
    %c0_i32 = arith.constant 0 : i32
    %c0_i32_0 = arith.constant 0 : i32
    return %c0_i32 : i32
  }
  func.func @transform_1(%arg0: i32) -> (i32, i32, i32) {
    %c0_i32 = arith.constant 0 : i32
    %c0_i32_0 = arith.constant 0 : i32
    %c0_i32_1 = arith.constant 0 : i32
    return %arg0, %c0_i32, %c0_i32_0 : i32, i32, i32
  }
  func.func @transform_2(%arg0: i32) -> (i32, i32) {
    %c0_i32 = arith.constant 0 : i32
    %c0_i32_0 = arith.constant 0 : i32
    return %arg0, %c0_i32 : i32, i32
  }
}

</mosaic_0001>

<llo_original>
// kernel: tpu_custom_call.1
$region0: #{tpu_custom_call.1}
  #allocation0 [shape = 'u32[]', space=smem, size = 0x4, offset = 0x4, fixed_abs, tag = 'smem constant byte address 0x4 - core index']
  #allocation1 [shape = 'u32[144,128]{1,0:T(1,128)}', space=vmem, size = 0x12000, scoped, tag = 'internal scratch']
  #allocation2 [shape = 'f32[22,2,22]{2,1,0:T(2,128)}', space=vmem, size = 0x5800, scoped, tag = 'scratch operand']
  #allocation3 [shape = 'f32[22,2,22]{2,1,0:T(2,128)}', space=vmem, size = 0x5800, scoped, tag = 'scratch operand']
  %s0 = inlined_call_operand.hbm [shape: f32[98], index: 0, kind: input, shape index: {}]
  %s1 = inlined_call_operand.hbm [shape: f32[2,4,256], index: 1, kind: input, shape index: {}]
  %s2 = inlined_call_operand.hbm [shape: f32[2,256], index: 2, kind: output, shape index: {}]
  %s3 = sld [smem:[#allocation0]]
  $region26: #{tpu_custom_call.1} parent=0
    _
  %s5 = ssub.s32 1, %s3
  %s6 = scalar_select 0, %s5, %s3
  $region1: #{tpu_custom_call.1} parent=0
    #allocation4 [shape = 'u8[512]{0}', space=smem, size = 0x200, scoped, tag = 'input window, operand 0, single buffered']
    #allocation5 [shape = 's32[1]{0}', space=sflag, size = 0x4, scoped, tag = 'scoped memory for tpu_custom_call.1']
    #allocation6 [shape = 's32[1]{0}', space=sflag, size = 0x4, scoped, tag = 'scoped memory for tpu_custom_call.1']
    #allocation7 [shape = 's32[1]{0}', space=sflag, size = 0x4, scoped, tag = 'scoped memory for tpu_custom_call.1']
    #allocation8 [shape = 'u8[8192]{0}', space=vmem, size = 0x2000, scoped, tag = 'input window, operand 1, single buffered']
    #allocation9 [shape = 'u8[2048]{0}', space=vmem, size = 0x800, scoped, tag = 'output window, operand 0, single buffered']
    %7 = vsyncpa [#allocation7], 0
    %8 = vsyncpa [#allocation5], 0
    %9 = vsyncpa [#allocation6], 0
    // Predicated region
    $region2: #{tpu_custom_call.1} parent=1 // pred_check
      _
    $region3: #{tpu_custom_call.1} parent=1 // pred_check_branch
      %11 = sbr.rel (0) target = $region5
    $region4: #{tpu_custom_call.1} parent=1 // pred_region
      %s13 = ssub.s32 16, 16
      %14 = vsyncadd [#allocation7], %s13
      %17 = dma.hbm_to_smem %s0, 16, [#allocation4], [#allocation7]
    $region5: #{tpu_custom_call.1} parent=1 // pred_fallthru
      _
    // Predicated region
    $region6: #{tpu_custom_call.1} parent=1 // pred_check
      _
    $region7: #{tpu_custom_call.1} parent=1 // pred_check_branch
      %19 = sbr.rel (0) target = $region9
    $region8: #{tpu_custom_call.1} parent=1 // pred_region
      %s21 = ssub.s32 256, 256
      %22 = vsyncadd [#allocation5], %s21
      %s23 = sshll.u32 [#allocation8], 4
      %s24 = int_to_ptr.vmem [resolvable:$true] %s23
      %29 = dma.hbm_to_vmem [thread:$0]  %s1, 256, %s24, [#allocation5], 128, 128, 8
    $region9: #{tpu_custom_call.1} parent=1 // pred_fallthru
      _
    // Predicated region
    $region10: #{tpu_custom_call.1} parent=1 // pred_check
      _
    $region11: #{tpu_custom_call.1} parent=1 // pred_check_branch
      %31 = sbr.rel (0) target = $region13
    $region12: #{tpu_custom_call.1} parent=1 // pred_region
      %32 = dma.done [#allocation7], 16
    $region13: #{tpu_custom_call.1} parent=1 // pred_fallthru
      _
    // Predicated region
    $region14: #{tpu_custom_call.1} parent=1 // pred_check
      _
    $region15: #{tpu_custom_call.1} parent=1 // pred_check_branch
      %34 = sbr.rel (0) target = $region17
    $region16: #{tpu_custom_call.1} parent=1 // pred_region
      %35 = dma.done [#allocation5], 256
    $region17: #{tpu_custom_call.1} parent=1 // pred_fallthru
      _
    %36 = sfence
    %v37 = vld [vmem:[#allocation8] sm:$0xff]
    %v38 = vld [vmem:[#allocation8 + $0x8] sm:$0xff]
    %v41 = vcombine.high %v37, %v37
    %v42 = vcombine.high %v38, %v38
    %vm45 = vcmask 1043456
    %v46 = vsel %vm45, %v37, 0.0
    %v47 = vrot.slane %v46, 4
    %v48 = vadd.f32 %v46, %v47
    %v49 = vrot.slane %v48, 2
    %v50 = vadd.f32 %v48, %v49
    %v51 = vrot.slane %v50, 1
    %v52 = vadd.f32 %v50, %v51
    %v53 = vsel %vm45, %v41, 0.0
    %v54 = vrot.slane %v53, 4
    %v55 = vadd.f32 %v53, %v54
    %v56 = vrot.slane %v55, 2
    %v57 = vadd.f32 %v55, %v56
    %v58 = vrot.slane %v57, 1
    %v59 = vadd.f32 %v57, %v58
    %v60 = vsel %vm45, %v38, 0.0
    %v61 = vrot.slane %v60, 4
    %v62 = vadd.f32 %v60, %v61
    %v63 = vrot.slane %v62, 2
    %v64 = vadd.f32 %v62, %v63
    %v65 = vrot.slane %v64, 1
    %v66 = vadd.f32 %v64, %v65
    %v67 = vsel %vm45, %v42, 0.0
    %v68 = vrot.slane %v67, 4
    %v69 = vadd.f32 %v67, %v68
    %v70 = vrot.slane %v69, 2
    %v71 = vadd.f32 %v69, %v70
    %v72 = vrot.slane %v71, 1
    %v73 = vadd.f32 %v71, %v72
    %v74 = vsel %vm45, %v37, -inf
    %v75 = vrot.slane %v74, 4
    %v76 = vmax.f32 %v74, %v75
    %v77 = vrot.slane %v76, 2
    %v78 = vmax.f32 %v76, %v77
    %v79 = vrot.slane %v78, 1
    %v80 = vmax.f32 %v78, %v79
    %v81 = vsel %vm45, %v41, -inf
    %v82 = vrot.slane %v81, 4
    %v83 = vmax.f32 %v81, %v82
    %v84 = vrot.slane %v83, 2
    %v85 = vmax.f32 %v83, %v84
    %v86 = vrot.slane %v85, 1
    %v87 = vmax.f32 %v85, %v86
    %v88 = vsel %vm45, %v38, -inf
    %v89 = vrot.slane %v88, 4
    %v90 = vmax.f32 %v88, %v89
    %v91 = vrot.slane %v90, 2
    %v92 = vmax.f32 %v90, %v91
    %v93 = vrot.slane %v92, 1
    %v94 = vmax.f32 %v92, %v93
    %v95 = vsel %vm45, %v42, -inf
    %v96 = vrot.slane %v95, 4
    %v97 = vmax.f32 %v95, %v96
    %v98 = vrot.slane %v97, 2
    %v99 = vmax.f32 %v97, %v98
    %v100 = vrot.slane %v99, 1
    %v101 = vmax.f32 %v99, %v100
    %vm102 = vcmask 173056
    %103 = vst.msk [vmem:[#allocation2] sm:$0x3] %vm102, 0.0
    %104 = vst.msk [vmem:[#allocation2 + $0x2] sm:$0x3] %vm102, 0.0
    %105 = vst.msk [vmem:[#allocation2 + $0x4] sm:$0x3] %vm102, 0.0
    %106 = vst.msk [vmem:[#allocation2 + $0x6] sm:$0x3] %vm102, 0.0
    %107 = vst.msk [vmem:[#allocation2 + $0x8] sm:$0x3] %vm102, 0.0
    %108 = vst.msk [vmem:[#allocation2 + $0xa] sm:$0x3] %vm102, 0.0
    %109 = vst.msk [vmem:[#allocation2 + $0xc] sm:$0x3] %vm102, 0.0
    %110 = vst.msk [vmem:[#allocation2 + $0xe] sm:$0x3] %vm102, 0.0
    %111 = vst.msk [vmem:[#allocation2 + $0x10] sm:$0x3] %vm102, 0.0
    %112 = vst.msk [vmem:[#allocation2 + $0x12] sm:$0x3] %vm102, 0.0
    %113 = vst.msk [vmem:[#allocation2 + $0x14] sm:$0x3] %vm102, 0.0
    %114 = vst.msk [vmem:[#allocation2 + $0x16] sm:$0x3] %vm102, 0.0
    %115 = vst.msk [vmem:[#allocation2 + $0x18] sm:$0x3] %vm102, 0.0
    %116 = vst.msk [vmem:[#allocation2 + $0x1a] sm:$0x3] %vm102, 0.0
    %117 = vst.msk [vmem:[#allocation2 + $0x1c] sm:$0x3] %vm102, 0.0
    %118 = vst.msk [vmem:[#allocation2 + $0x1e] sm:$0x3] %vm102, 0.0
    %119 = vst.msk [vmem:[#allocation2 + $0x20] sm:$0x3] %vm102, 0.0
    %120 = vst.msk [vmem:[#allocation2 + $0x22] sm:$0x3] %vm102, 0.0
    %121 = vst.msk [vmem:[#allocation2 + $0x24] sm:$0x3] %vm102, 0.0
    %122 = vst.msk [vmem:[#allocation2 + $0x26] sm:$0x3] %vm102, 0.0
    %123 = vst.msk [vmem:[#allocation2 + $0x28] sm:$0x3] %vm102, 0.0
    %124 = vst.msk [vmem:[#allocation2 + $0x2a] sm:$0x3] %vm102, 0.0
    %125 = vst.msk [vmem:[#allocation3] sm:$0x3] %vm102, 0.0
    %126 = vst.msk [vmem:[#allocation3 + $0x2] sm:$0x3] %vm102, 0.0
    %127 = vst.msk [vmem:[#allocation3 + $0x4] sm:$0x3] %vm102, 0.0
    %128 = vst.msk [vmem:[#allocation3 + $0x6] sm:$0x3] %vm102, 0.0
    %129 = vst.msk [vmem:[#allocation3 + $0x8] sm:$0x3] %vm102, 0.0
    %130 = vst.msk [vmem:[#allocation3 + $0xa] sm:$0x3] %vm102, 0.0
    %131 = vst.msk [vmem:[#allocation3 + $0xc] sm:$0x3] %vm102, 0.0
    %132 = vst.msk [vmem:[#allocation3 + $0xe] sm:$0x3] %vm102, 0.0
    %133 = vst.msk [vmem:[#allocation3 + $0x10] sm:$0x3] %vm102, 0.0
    %134 = vst.msk [vmem:[#allocation3 + $0x12] sm:$0x3] %vm102, 0.0
    %135 = vst.msk [vmem:[#allocation3 + $0x14] sm:$0x3] %vm102, 0.0
    %136 = vst.msk [vmem:[#allocation3 + $0x16] sm:$0x3] %vm102, 0.0
    %137 = vst.msk [vmem:[#allocation3 + $0x18] sm:$0x3] %vm102, 0.0
    %138 = vst.msk [vmem:[#allocation3 + $0x1a] sm:$0x3] %vm102, 0.0
    %139 = vst.msk [vmem:[#allocation3 + $0x1c] sm:$0x3] %vm102, 0.0
    %140 = vst.msk [vmem:[#allocation3 + $0x1e] sm:$0x3] %vm102, 0.0
    %141 = vst.msk [vmem:[#allocation3 + $0x20] sm:$0x3] %vm102, 0.0
    %142 = vst.msk [vmem:[#allocation3 + $0x22] sm:$0x3] %vm102, 0.0
    %143 = vst.msk [vmem:[#allocation3 + $0x24] sm:$0x3] %vm102, 0.0
    %144 = vst.msk [vmem:[#allocation3 + $0x26] sm:$0x3] %vm102, 0.0
    %145 = vst.msk [vmem:[#allocation3 + $0x28] sm:$0x3] %vm102, 0.0
    %146 = vst.msk [vmem:[#allocation3 + $0x2a] sm:$0x3] %vm102, 0.0
    %vm149 = vcmask 1041409
    %v150 = vsel %vm149, %v66, %v52
    %151 = vrot.lane.b32.xlu0 %v150, 3
    %v152 = vpop.permute.xlu0 %151
    %s154 = scalar_lea.vmem [#allocation2], 6
    %vm155 = vcmask 148504
    %156 = vst.msk [vmem:[%s154] sm:$0x3] %vm155, %v152
    %v159 = vsel %vm149, %v94, %v80
    %160 = vrot.lane.b32.xlu0 %v159, 3
    %v161 = vpop.permute.xlu0 %160
    %s163 = scalar_lea.vmem [#allocation3], 6
    %164 = vst.msk [vmem:[%s163] sm:$0x3] %vm155, %v161
    %165 = vrot.lane.b32.xlu0 %v150, 115
    %v166 = vpop.permute.xlu0 %165
    %s168 = scalar_lea.vmem [#allocation2], 8
    %169 = vst.msk [vmem:[%s168] sm:$0x3] %vm155, %v166
    %170 = vrot.lane.b32.xlu0 %v159, 115
    %v171 = vpop.permute.xlu0 %170
    %s173 = scalar_lea.vmem [#allocation3], 8
    %174 = vst.msk [vmem:[%s173] sm:$0x3] %vm155, %v171
    %175 = vrot.lane.b32.xlu0 %v150, 99
    %v176 = vpop.permute.xlu0 %175
    %s178 = scalar_lea.vmem [#allocation2], 10
    %179 = vst.msk [vmem:[%s178] sm:$0x3] %vm155, %v176
    %180 = vrot.lane.b32.xlu0 %v159, 99
    %v181 = vpop.permute.xlu0 %180
    %s183 = scalar_lea.vmem [#allocation3], 10
    %184 = vst.msk [vmem:[%s183] sm:$0x3] %vm155, %v181
    %185 = vrot.lane.b32.xlu0 %v150, 83
    %v186 = vpop.permute.xlu0 %185
    %s188 = scalar_lea.vmem [#allocation2], 12
    %189 = vst.msk [vmem:[%s188] sm:$0x3] %vm155, %v186
    %190 = vrot.lane.b32.xlu0 %v159, 83
    %v191 = vpop.permute.xlu0 %190
    %s193 = scalar_lea.vmem [#allocation3], 12
    %194 = vst.msk [vmem:[%s193] sm:$0x3] %vm155, %v191
    %195 = vrot.lane.b32.xlu0 %v150, 67
    %v196 = vpop.permute.xlu0 %195
    %s198 = scalar_lea.vmem [#allocation2], 14
    %199 = vst.msk [vmem:[%s198] sm:$0x3] %vm155, %v196
    %200 = vrot.lane.b32.xlu0 %v159, 67
    %v201 = vpop.permute.xlu0 %200
    %s203 = scalar_lea.vmem [#allocation3], 14
    %204 = vst.msk [vmem:[%s203] sm:$0x3] %vm155, %v201
    %205 = vrot.lane.b32.xlu0 %v150, 51
    %v206 = vpop.permute.xlu0 %205
    %s208 = scalar_lea.vmem [#allocation2], 16
    %209 = vst.msk [vmem:[%s208] sm:$0x3] %vm155, %v206
    %210 = vrot.lane.b32.xlu0 %v159, 51
    %v211 = vpop.permute.xlu0 %210
    %s213 = scalar_lea.vmem [#allocation3], 16
    %214 = vst.msk [vmem:[%s213] sm:$0x3] %vm155, %v211
    %215 = vrot.lane.b32.xlu0 %v150, 35
    %v216 = vpop.permute.xlu0 %215
    %s218 = scalar_lea.vmem [#allocation2], 18
    %219 = vst.msk [vmem:[%s218] sm:$0x3] %vm155, %v216
    %220 = vrot.lane.b32.xlu0 %v159, 35
    %v221 = vpop.permute.xlu0 %220
    %s223 = scalar_lea.vmem [#allocation3], 18
    %224 = vst.msk [vmem:[%s223] sm:$0x3] %vm155, %v221
    %225 = vrot.lane.b32.xlu0 %v150, 19
    %v226 = vpop.permute.xlu0 %225
    %s228 = scalar_lea.vmem [#allocation2], 20
    %229 = vst.msk [vmem:[%s228] sm:$0x3] %vm155, %v226
    %230 = vrot.lane.b32.xlu0 %v159, 19
    %v231 = vpop.permute.xlu0 %230
    %s233 = scalar_lea.vmem [#allocation3], 20
    %234 = vst.msk [vmem:[%s233] sm:$0x3] %vm155, %v231
    %v237 = vsel %vm149, %v73, %v59
    %238 = vrot.lane.b32.xlu0 %v237, 3
    %v239 = vpop.permute.xlu0 %238
    %s241 = scalar_lea.vmem [#allocation2], 22
    %242 = vst.msk [vmem:[%s241] sm:$0x3] %vm155, %v239
    %v245 = vsel %vm149, %v101, %v87
    %246 = vrot.lane.b32.xlu0 %v245, 3
    %v247 = vpop.permute.xlu0 %246
    %s249 = scalar_lea.vmem [#allocation3], 22
    %250 = vst.msk [vmem:[%s249] sm:$0x3] %vm155, %v247
    %251 = vrot.lane.b32.xlu0 %v237, 115
    %v252 = vpop.permute.xlu0 %251
    %s254 = scalar_lea.vmem [#allocation2], 24
    %255 = vst.msk [vmem:[%s254] sm:$0x3] %vm155, %v252
    %256 = vrot.lane.b32.xlu0 %v245, 115
    %v257 = vpop.permute.xlu0 %256
    %s259 = scalar_lea.vmem [#allocation3], 24
    %260 = vst.msk [vmem:[%s259] sm:$0x3] %vm155, %v257
    %261 = vrot.lane.b32.xlu0 %v237, 99
    %v262 = vpop.permute.xlu0 %261
    %s264 = scalar_lea.vmem [#allocation2], 26
    %265 = vst.msk [vmem:[%s264] sm:$0x3] %vm155, %v262
    %266 = vrot.lane.b32.xlu0 %v245, 99
    %v267 = vpop.permute.xlu0 %266
    %s269 = scalar_lea.vmem [#allocation3], 26
    %270 = vst.msk [vmem:[%s269] sm:$0x3] %vm155, %v267
    %271 = vrot.lane.b32.xlu0 %v237, 83
    %v272 = vpop.permute.xlu0 %271
    %s274 = scalar_lea.vmem [#allocation2], 28
    %275 = vst.msk [vmem:[%s274] sm:$0x3] %vm155, %v272
    %276 = vrot.lane.b32.xlu0 %v245, 83
    %v277 = vpop.permute.xlu0 %276
    %s279 = scalar_lea.vmem [#allocation3], 28
    %280 = vst.msk [vmem:[%s279] sm:$0x3] %vm155, %v277
    %281 = vrot.lane.b32.xlu0 %v237, 67
    %v282 = vpop.permute.xlu0 %281
    %s284 = scalar_lea.vmem [#allocation2], 30
    %285 = vst.msk [vmem:[%s284] sm:$0x3] %vm155, %v282
    %286 = vrot.lane.b32.xlu0 %v245, 67
    %v287 = vpop.permute.xlu0 %286
    %s289 = scalar_lea.vmem [#allocation3], 30
    %290 = vst.msk [vmem:[%s289] sm:$0x3] %vm155, %v287
    %291 = vrot.lane.b32.xlu0 %v237, 51
    %v292 = vpop.permute.xlu0 %291
    %s294 = scalar_lea.vmem [#allocation2], 32
    %295 = vst.msk [vmem:[%s294] sm:$0x3] %vm155, %v292
    %296 = vrot.lane.b32.xlu0 %v245, 51
    %v297 = vpop.permute.xlu0 %296
    %s299 = scalar_lea.vmem [#allocation3], 32
    %300 = vst.msk [vmem:[%s299] sm:$0x3] %vm155, %v297
    %301 = vrot.lane.b32.xlu0 %v237, 35
    %v302 = vpop.permute.xlu0 %301
    %s304 = scalar_lea.vmem [#allocation2], 34
    %305 = vst.msk [vmem:[%s304] sm:$0x3] %vm155, %v302
    %306 = vrot.lane.b32.xlu0 %v245, 35
    %v307 = vpop.permute.xlu0 %306
    %s309 = scalar_lea.vmem [#allocation3], 34
    %310 = vst.msk [vmem:[%s309] sm:$0x3] %vm155, %v307
    %311 = vrot.lane.b32.xlu0 %v237, 19
    %v312 = vpop.permute.xlu0 %311
    %s314 = scalar_lea.vmem [#allocation2], 36
    %315 = vst.msk [vmem:[%s314] sm:$0x3] %vm155, %v312
    %316 = vrot.lane.b32.xlu0 %v245, 19
    %v317 = vpop.permute.xlu0 %316
    %s319 = scalar_lea.vmem [#allocation3], 36
    %320 = vst.msk [vmem:[%s319] sm:$0x3] %vm155, %v317
    %v321 = vld [vmem:[#allocation2] sm:$0x3]
    %v322 = vld [vmem:[#allocation2 + $0x2] sm:$0x3]
    %v323 = vld [vmem:[#allocation2 + $0x4] sm:$0x3]
    %v324 = vld [vmem:[#allocation2 + $0x6] sm:$0x3]
    %v325 = vld [vmem:[#allocation2 + $0x8] sm:$0x3]
    %v326 = vld [vmem:[#allocation2 + $0xa] sm:$0x3]
    %v327 = vld [vmem:[#allocation2 + $0xc] sm:$0x3]
    %v328 = vld [vmem:[#allocation2 + $0xe] sm:$0x3]
    %v329 = vld [vmem:[#allocation2 + $0x10] sm:$0x3]
    %v330 = vld [vmem:[#allocation2 + $0x12] sm:$0x3]
    %v331 = vld [vmem:[#allocation2 + $0x14] sm:$0x3]
    %v332 = vld [vmem:[#allocation2 + $0x16] sm:$0x3]
    %v333 = vld [vmem:[#allocation2 + $0x18] sm:$0x3]
    %v334 = vld [vmem:[#allocation2 + $0x1a] sm:$0x3]
    %v335 = vld [vmem:[#allocation2 + $0x1c] sm:$0x3]
    %v336 = vld [vmem:[#allocation2 + $0x1e] sm:$0x3]
    %v337 = vld [vmem:[#allocation2 + $0x20] sm:$0x3]
    %v338 = vld [vmem:[#allocation2 + $0x22] sm:$0x3]
    %v339 = vld [vmem:[#allocation2 + $0x24] sm:$0x3]
    %v340 = vld [vmem:[#allocation2 + $0x26] sm:$0x3]
    %v341 = vld [vmem:[#allocation2 + $0x28] sm:$0x3]
    %v342 = vld [vmem:[#allocation2 + $0x2a] sm:$0x3]
    %v343 = vld [vmem:[#allocation3] sm:$0x3]
    %v344 = vld [vmem:[#allocation3 + $0x2] sm:$0x3]
    %v345 = vld [vmem:[#allocation3 + $0x4] sm:$0x3]
    %v346 = vld [vmem:[#allocation3 + $0x6] sm:$0x3]
    %v347 = vld [vmem:[#allocation3 + $0x8] sm:$0x3]
    %v348 = vld [vmem:[#allocation3 + $0xa] sm:$0x3]
    %v349 = vld [vmem:[#allocation3 + $0xc] sm:$0x3]
    %v350 = vld [vmem:[#allocation3 + $0xe] sm:$0x3]
    %v351 = vld [vmem:[#allocation3 + $0x10] sm:$0x3]
    %v352 = vld [vmem:[#allocation3 + $0x12] sm:$0x3]
    %v353 = vld [vmem:[#allocation3 + $0x14] sm:$0x3]
    %v354 = vld [vmem:[#allocation3 + $0x16] sm:$0x3]
    %v355 = vld [vmem:[#allocation3 + $0x18] sm:$0x3]
    %v356 = vld [vmem:[#allocation3 + $0x1a] sm:$0x3]
    %v357 = vld [vmem:[#allocation3 + $0x1c] sm:$0x3]
    %v358 = vld [vmem:[#allocation3 + $0x1e] sm:$0x3]
    %v359 = vld [vmem:[#allocation3 + $0x20] sm:$0x3]
    %v360 = vld [vmem:[#allocation3 + $0x22] sm:$0x3]
    %v361 = vld [vmem:[#allocation3 + $0x24] sm:$0x3]
    %v362 = vld [vmem:[#allocation3 + $0x26] sm:$0x3]
    %v363 = vld [vmem:[#allocation3 + $0x28] sm:$0x3]
    %v364 = vld [vmem:[#allocation3 + $0x2a] sm:$0x3]
    %s365 = sld [smem:[#allocation4]]
    %v366 = vstv %s365
    %v367 = vmul.f32 %v366, %v321
    %v368 = vmul.f32 %v366, %v322
    %v369 = vmul.f32 %v366, %v323
    %v370 = vmul.f32 %v366, %v324
    %v371 = vmul.f32 %v366, %v325
    %v372 = vmul.f32 %v366, %v326
    %v373 = vmul.f32 %v366, %v327
    %v374 = vmul.f32 %v366, %v328
    %v375 = vmul.f32 %v366, %v329
    %v376 = vmul.f32 %v366, %v330
    %v377 = vmul.f32 %v366, %v331
    %v378 = vmul.f32 %v366, %v332
    %v379 = vmul.f32 %v366, %v333
    %v380 = vmul.f32 %v366, %v334
    %v381 = vmul.f32 %v366, %v335
    %v382 = vmul.f32 %v366, %v336
    %v383 = vadd.f32 %v367, 0.0
    %v384 = vadd.f32 %v368, 0.0
    %v385 = vadd.f32 %v369, 0.0
    %v386 = vadd.f32 %v370, 0.0
    %v387 = vadd.f32 %v371, 0.0
    %v388 = vadd.f32 %v372, 0.0
    %v389 = vadd.f32 %v373, 0.0
    %v390 = vadd.f32 %v374, 0.0
    %v391 = vadd.f32 %v375, 0.0
    %v392 = vadd.f32 %v376, 0.0
    %v393 = vadd.f32 %v377, 0.0
    %v394 = vadd.f32 %v378, 0.0
    %v395 = vadd.f32 %v379, 0.0
    %v396 = vadd.f32 %v380, 0.0
    %v397 = vadd.f32 %v381, 0.0
    %v398 = vadd.f32 %v382, 0.0
    %s399 = sld [smem:[#allocation4 + $0x31]]
    %v400 = vstv %s399
    %v401 = vmul.f32 %v400, %v343
    %v402 = vmul.f32 %v400, %v344
    %v403 = vmul.f32 %v400, %v345
    %v404 = vmul.f32 %v400, %v346
    %v405 = vmul.f32 %v400, %v347
    %v406 = vmul.f32 %v400, %v348
    %v407 = vmul.f32 %v400, %v349
    %v408 = vmul.f32 %v400, %v350
    %v409 = vmul.f32 %v400, %v351
    %v410 = vmul.f32 %v400, %v352
    %v411 = vmul.f32 %v400, %v353
    %v412 = vmul.f32 %v400, %v354
    %v413 = vmul.f32 %v400, %v355
    %v414 = vmul.f32 %v400, %v356
    %v415 = vmul.f32 %v400, %v357
    %v416 = vmul.f32 %v400, %v358
    %v417 = vadd.f32 %v383, %v401
    %v418 = vadd.f32 %v384, %v402
    %v419 = vadd.f32 %v385, %v403
    %v420 = vadd.f32 %v386, %v404
    %v421 = vadd.f32 %v387, %v405
    %v422 = vadd.f32 %v388, %v406
    %v423 = vadd.f32 %v389, %v407
    %v424 = vadd.f32 %v390, %v408
    %v425 = vadd.f32 %v391, %v409
    %v426 = vadd.f32 %v392, %v410
    %v427 = vadd.f32 %v393, %v411
    %v428 = vadd.f32 %v394, %v412
    %v429 = vadd.f32 %v395, %v413
    %v430 = vadd.f32 %v396, %v414
    %v431 = vadd.f32 %v397, %v415
    %v432 = vadd.f32 %v398, %v416
    %s433 = sld [smem:[#allocation4 + $0x7]]
    %v434 = vstv %s433
    %v435 = vmul.f32 %v434, %v322
    %v436 = vmul.f32 %v434, %v323
    %v437 = vmul.f32 %v434, %v324
    %v438 = vmul.f32 %v434, %v325
    %v439 = vmul.f32 %v434, %v326
    %v440 = vmul.f32 %v434, %v327
    %v441 = vmul.f32 %v434, %v328
    %v442 = vmul.f32 %v434, %v329
    %v443 = vmul.f32 %v434, %v330
    %v444 = vmul.f32 %v434, %v331
    %v445 = vmul.f32 %v434, %v332
    %v446 = vmul.f32 %v434, %v333
    %v447 = vmul.f32 %v434, %v334
    %v448 = vmul.f32 %v434, %v335
    %v449 = vmul.f32 %v434, %v336
    %v450 = vmul.f32 %v434, %v337
    %v451 = vadd.f32 %v417, %v435
    %v452 = vadd.f32 %v418, %v436
    %v453 = vadd.f32 %v419, %v437
    %v454 = vadd.f32 %v420, %v438
    %v455 = vadd.f32 %v421, %v439
    %v456 = vadd.f32 %v422, %v440
    %v457 = vadd.f32 %v423, %v441
    %v458 = vadd.f32 %v424, %v442
    %v459 = vadd.f32 %v425, %v443
    %v460 = vadd.f32 %v426, %v444
    %v461 = vadd.f32 %v427, %v445
    %v462 = vadd.f32 %v428, %v446
    %v463 = vadd.f32 %v429, %v447
    %v464 = vadd.f32 %v430, %v448
    %v465 = vadd.f32 %v431, %v449
    %v466 = vadd.f32 %v432, %v450
    %s467 = sld [smem:[#allocation4 + $0x38]]
    %v468 = vstv %s467
    %v469 = vmul.f32 %v468, %v344
    %v470 = vmul.f32 %v468, %v345
    %v471 = vmul.f32 %v468, %v346
    %v472 = vmul.f32 %v468, %v347
    %v473 = vmul.f32 %v468, %v348
    %v474 = vmul.f32 %v468, %v349
    %v475 = vmul.f32 %v468, %v350
    %v476 = vmul.f32 %v468, %v351
    %v477 = vmul.f32 %v468, %v352
    %v478 = vmul.f32 %v468, %v353
    %v479 = vmul.f32 %v468, %v354
    %v480 = vmul.f32 %v468, %v355
    %v481 = vmul.f32 %v468, %v356
    %v482 = vmul.f32 %v468, %v357
    %v483 = vmul.f32 %v468, %v358
    %v484 = vmul.f32 %v468, %v359
    %v485 = vadd.f32 %v451, %v469
    %v486 = vadd.f32 %v452, %v470
    %v487 = vadd.f32 %v453, %v471
    %v488 = vadd.f32 %v454, %v472
    %v489 = vadd.f32 %v455, %v473
    %v490 = vadd.f32 %v456, %v474
    %v491 = vadd.f32 %v457, %v475
    %v492 = vadd.f32 %v458, %v476
    %v493 = vadd.f32 %v459, %v477
    %v494 = vadd.f32 %v460, %v478
    %v495 = vadd.f32 %v461, %v479
    %v496 = vadd.f32 %v462, %v480
    %v497 = vadd.f32 %v463, %v481
    %v498 = vadd.f32 %v464, %v482
    %v499 = vadd.f32 %v465, %v483
    %v500 = vadd.f32 %v466, %v484
    %s501 = sld [smem:[#allocation4 + $0xe]]
    %v502 = vstv %s501
    %v503 = vmul.f32 %v502, %v323
    %v504 = vmul.f32 %v502, %v324
    %v505 = vmul.f32 %v502, %v325
    %v506 = vmul.f32 %v502, %v326
    %v507 = vmul.f32 %v502, %v327
    %v508 = vmul.f32 %v502, %v328
    %v509 = vmul.f32 %v502, %v329
    %v510 = vmul.f32 %v502, %v330
    %v511 = vmul.f32 %v502, %v331
    %v512 = vmul.f32 %v502, %v332
    %v513 = vmul.f32 %v502, %v333
    %v514 = vmul.f32 %v502, %v334
    %v515 = vmul.f32 %v502, %v335
    %v516 = vmul.f32 %v502, %v336
    %v517 = vmul.f32 %v502, %v337
    %v518 = vmul.f32 %v502, %v338
    %v519 = vadd.f32 %v485, %v503
    %v520 = vadd.f32 %v486, %v504
    %v521 = vadd.f32 %v487, %v505
    %v522 = vadd.f32 %v488, %v506
    %v523 = vadd.f32 %v489, %v507
    %v524 = vadd.f32 %v490, %v508
    %v525 = vadd.f32 %v491, %v509
    %v526 = vadd.f32 %v492, %v510
    %v527 = vadd.f32 %v493, %v511
    %v528 = vadd.f32 %v494, %v512
    %v529 = vadd.f32 %v495, %v513
    %v530 = vadd.f32 %v496, %v514
    %v531 = vadd.f32 %v497, %v515
    %v532 = vadd.f32 %v498, %v516
    %v533 = vadd.f32 %v499, %v517
    %v534 = vadd.f32 %v500, %v518
    %s535 = sld [smem:[#allocation4 + $0x3f]]
    %v536 = vstv %s535
    %v537 = vmul.f32 %v536, %v345
    %v538 = vmul.f32 %v536, %v346
    %v539 = vmul.f32 %v536, %v347
    %v540 = vmul.f32 %v536, %v348
    %v541 = vmul.f32 %v536, %v349
    %v542 = vmul.f32 %v536, %v350
    %v543 = vmul.f32 %v536, %v351
    %v544 = vmul.f32 %v536, %v352
    %v545 = vmul.f32 %v536, %v353
    %v546 = vmul.f32 %v536, %v354
    %v547 = vmul.f32 %v536, %v355
    %v548 = vmul.f32 %v536, %v356
    %v549 = vmul.f32 %v536, %v357
    %v550 = vmul.f32 %v536, %v358
    %v551 = vmul.f32 %v536, %v359
    %v552 = vmul.f32 %v536, %v360
    %v553 = vadd.f32 %v519, %v537
    %v554 = vadd.f32 %v520, %v538
    %v555 = vadd.f32 %v521, %v539
    %v556 = vadd.f32 %v522, %v540
    %v557 = vadd.f32 %v523, %v541
    %v558 = vadd.f32 %v524, %v542
    %v559 = vadd.f32 %v525, %v543
    %v560 = vadd.f32 %v526, %v544
    %v561 = vadd.f32 %v527, %v545
    %v562 = vadd.f32 %v528, %v546
    %v563 = vadd.f32 %v529, %v547
    %v564 = vadd.f32 %v530, %v548
    %v565 = vadd.f32 %v531, %v549
    %v566 = vadd.f32 %v532, %v550
    %v567 = vadd.f32 %v533, %v551
    %v568 = vadd.f32 %v534, %v552
    %s569 = sld [smem:[#allocation4 + $0x15]]
    %v570 = vstv %s569
    %v571 = vmul.f32 %v570, %v324
    %v572 = vmul.f32 %v570, %v325
    %v573 = vmul.f32 %v570, %v326
    %v574 = vmul.f32 %v570, %v327
    %v575 = vmul.f32 %v570, %v328
    %v576 = vmul.f32 %v570, %v329
    %v577 = vmul.f32 %v570, %v330
    %v578 = vmul.f32 %v570, %v331
    %v579 = vmul.f32 %v570, %v332
    %v580 = vmul.f32 %v570, %v333
    %v581 = vmul.f32 %v570, %v334
    %v582 = vmul.f32 %v570, %v335
    %v583 = vmul.f32 %v570, %v336
    %v584 = vmul.f32 %v570, %v337
    %v585 = vmul.f32 %v570, %v338
    %v586 = vmul.f32 %v570, %v339
    %v587 = vadd.f32 %v553, %v571
    %v588 = vadd.f32 %v554, %v572
    %v589 = vadd.f32 %v555, %v573
    %v590 = vadd.f32 %v556, %v574
    %v591 = vadd.f32 %v557, %v575
    %v592 = vadd.f32 %v558, %v576
    %v593 = vadd.f32 %v559, %v577
    %v594 = vadd.f32 %v560, %v578
    %v595 = vadd.f32 %v561, %v579
    %v596 = vadd.f32 %v562, %v580
    %v597 = vadd.f32 %v563, %v581
    %v598 = vadd.f32 %v564, %v582
    %v599 = vadd.f32 %v565, %v583
    %v600 = vadd.f32 %v566, %v584
    %v601 = vadd.f32 %v567, %v585
    %v602 = vadd.f32 %v568, %v586
    %s603 = sld [smem:[#allocation4 + $0x46]]
    %v604 = vstv %s603
    %v605 = vmul.f32 %v604, %v346
    %v606 = vmul.f32 %v604, %v347
    %v607 = vmul.f32 %v604, %v348
    %v608 = vmul.f32 %v604, %v349
    %v609 = vmul.f32 %v604, %v350
    %v610 = vmul.f32 %v604, %v351
    %v611 = vmul.f32 %v604, %v352
    %v612 = vmul.f32 %v604, %v353
    %v613 = vmul.f32 %v604, %v354
    %v614 = vmul.f32 %v604, %v355
    %v615 = vmul.f32 %v604, %v356
    %v616 = vmul.f32 %v604, %v357
    %v617 = vmul.f32 %v604, %v358
    %v618 = vmul.f32 %v604, %v359
    %v619 = vmul.f32 %v604, %v360
    %v620 = vmul.f32 %v604, %v361
    %v621 = vadd.f32 %v587, %v605
    %v622 = vadd.f32 %v588, %v606
    %v623 = vadd.f32 %v589, %v607
    %v624 = vadd.f32 %v590, %v608
    %v625 = vadd.f32 %v591, %v609
    %v626 = vadd.f32 %v592, %v610
    %v627 = vadd.f32 %v593, %v611
    %v628 = vadd.f32 %v594, %v612
    %v629 = vadd.f32 %v595, %v613
    %v630 = vadd.f32 %v596, %v614
    %v631 = vadd.f32 %v597, %v615
    %v632 = vadd.f32 %v598, %v616
    %v633 = vadd.f32 %v599, %v617
    %v634 = vadd.f32 %v600, %v618
    %v635 = vadd.f32 %v601, %v619
    %v636 = vadd.f32 %v602, %v620
    %s637 = sld [smem:[#allocation4 + $0x1c]]
    %v638 = vstv %s637
    %v639 = vmul.f32 %v638, %v325
    %v640 = vmul.f32 %v638, %v326
    %v641 = vmul.f32 %v638, %v327
    %v642 = vmul.f32 %v638, %v328
    %v643 = vmul.f32 %v638, %v329
    %v644 = vmul.f32 %v638, %v330
    %v645 = vmul.f32 %v638, %v331
    %v646 = vmul.f32 %v638, %v332
    %v647 = vmul.f32 %v638, %v333
    %v648 = vmul.f32 %v638, %v334
    %v649 = vmul.f32 %v638, %v335
    %v650 = vmul.f32 %v638, %v336
    %v651 = vmul.f32 %v638, %v337
    %v652 = vmul.f32 %v638, %v338
    %v653 = vmul.f32 %v638, %v339
    %v654 = vmul.f32 %v638, %v340
    %v655 = vadd.f32 %v621, %v639
    %v656 = vadd.f32 %v622, %v640
    %v657 = vadd.f32 %v623, %v641
    %v658 = vadd.f32 %v624, %v642
    %v659 = vadd.f32 %v625, %v643
    %v660 = vadd.f32 %v626, %v644
    %v661 = vadd.f32 %v627, %v645
    %v662 = vadd.f32 %v628, %v646
    %v663 = vadd.f32 %v629, %v647
    %v664 = vadd.f32 %v630, %v648
    %v665 = vadd.f32 %v631, %v649
    %v666 = vadd.f32 %v632, %v650
    %v667 = vadd.f32 %v633, %v651
    %v668 = vadd.f32 %v634, %v652
    %v669 = vadd.f32 %v635, %v653
    %v670 = vadd.f32 %v636, %v654
    %s671 = sld [smem:[#allocation4 + $0x4d]]
    %v672 = vstv %s671
    %v673 = vmul.f32 %v672, %v347
    %v674 = vmul.f32 %v672, %v348
    %v675 = vmul.f32 %v672, %v349
    %v676 = vmul.f32 %v672, %v350
    %v677 = vmul.f32 %v672, %v351
    %v678 = vmul.f32 %v672, %v352
    %v679 = vmul.f32 %v672, %v353
    %v680 = vmul.f32 %v672, %v354
    %v681 = vmul.f32 %v672, %v355
    %v682 = vmul.f32 %v672, %v356
    %v683 = vmul.f32 %v672, %v357
    %v684 = vmul.f32 %v672, %v358
    %v685 = vmul.f32 %v672, %v359
    %v686 = vmul.f32 %v672, %v360
    %v687 = vmul.f32 %v672, %v361
    %v688 = vmul.f32 %v672, %v362
    %v689 = vadd.f32 %v655, %v673
    %v690 = vadd.f32 %v656, %v674
    %v691 = vadd.f32 %v657, %v675
    %v692 = vadd.f32 %v658, %v676
    %v693 = vadd.f32 %v659, %v677
    %v694 = vadd.f32 %v660, %v678
    %v695 = vadd.f32 %v661, %v679
    %v696 = vadd.f32 %v662, %v680
    %v697 = vadd.f32 %v663, %v681
    %v698 = vadd.f32 %v664, %v682
    %v699 = vadd.f32 %v665, %v683
    %v700 = vadd.f32 %v666, %v684
    %v701 = vadd.f32 %v667, %v685
    %v702 = vadd.f32 %v668, %v686
    %v703 = vadd.f32 %v669, %v687
    %v704 = vadd.f32 %v670, %v688
    %s705 = sld [smem:[#allocation4 + $0x23]]
    %v706 = vstv %s705
    %v707 = vmul.f32 %v706, %v326
    %v708 = vmul.f32 %v706, %v327
    %v709 = vmul.f32 %v706, %v328
    %v710 = vmul.f32 %v706, %v329
    %v711 = vmul.f32 %v706, %v330
    %v712 = vmul.f32 %v706, %v331
    %v713 = vmul.f32 %v706, %v332
    %v714 = vmul.f32 %v706, %v333
    %v715 = vmul.f32 %v706, %v334
    %v716 = vmul.f32 %v706, %v335
    %v717 = vmul.f32 %v706, %v336
    %v718 = vmul.f32 %v706, %v337
    %v719 = vmul.f32 %v706, %v338
    %v720 = vmul.f32 %v706, %v339
    %v721 = vmul.f32 %v706, %v340
    %v722 = vmul.f32 %v706, %v341
    %v723 = vadd.f32 %v689, %v707
    %v724 = vadd.f32 %v690, %v708
    %v725 = vadd.f32 %v691, %v709
    %v726 = vadd.f32 %v692, %v710
    %v727 = vadd.f32 %v693, %v711
    %v728 = vadd.f32 %v694, %v712
    %v729 = vadd.f32 %v695, %v713
    %v730 = vadd.f32 %v696, %v714
    %v731 = vadd.f32 %v697, %v715
    %v732 = vadd.f32 %v698, %v716
    %v733 = vadd.f32 %v699, %v717
    %v734 = vadd.f32 %v700, %v718
    %v735 = vadd.f32 %v701, %v719
    %v736 = vadd.f32 %v702, %v720
    %v737 = vadd.f32 %v703, %v721
    %v738 = vadd.f32 %v704, %v722
    %s739 = sld [smem:[#allocation4 + $0x54]]
    %v740 = vstv %s739
    %v741 = vmul.f32 %v740, %v348
    %v742 = vmul.f32 %v740, %v349
    %v743 = vmul.f32 %v740, %v350
    %v744 = vmul.f32 %v740, %v351
    %v745 = vmul.f32 %v740, %v352
    %v746 = vmul.f32 %v740, %v353
    %v747 = vmul.f32 %v740, %v354
    %v748 = vmul.f32 %v740, %v355
    %v749 = vmul.f32 %v740, %v356
    %v750 = vmul.f32 %v740, %v357
    %v751 = vmul.f32 %v740, %v358
    %v752 = vmul.f32 %v740, %v359
    %v753 = vmul.f32 %v740, %v360
    %v754 = vmul.f32 %v740, %v361
    %v755 = vmul.f32 %v740, %v362
    %v756 = vmul.f32 %v740, %v363
    %v757 = vadd.f32 %v723, %v741
    %v758 = vadd.f32 %v724, %v742
    %v759 = vadd.f32 %v725, %v743
    %v760 = vadd.f32 %v726, %v744
    %v761 = vadd.f32 %v727, %v745
    %v762 = vadd.f32 %v728, %v746
    %v763 = vadd.f32 %v729, %v747
    %v764 = vadd.f32 %v730, %v748
    %v765 = vadd.f32 %v731, %v749
    %v766 = vadd.f32 %v732, %v750
    %v767 = vadd.f32 %v733, %v751
    %v768 = vadd.f32 %v734, %v752
    %v769 = vadd.f32 %v735, %v753
    %v770 = vadd.f32 %v736, %v754
    %v771 = vadd.f32 %v737, %v755
    %v772 = vadd.f32 %v738, %v756
    %s773 = sld [smem:[#allocation4 + $0x2a]]
    %v774 = vstv %s773
    %v775 = vmul.f32 %v774, %v327
    %v776 = vmul.f32 %v774, %v328
    %v777 = vmul.f32 %v774, %v329
    %v778 = vmul.f32 %v774, %v330
    %v779 = vmul.f32 %v774, %v331
    %v780 = vmul.f32 %v774, %v332
    %v781 = vmul.f32 %v774, %v333
    %v782 = vmul.f32 %v774, %v334
    %v783 = vmul.f32 %v774, %v335
    %v784 = vmul.f32 %v774, %v336
    %v785 = vmul.f32 %v774, %v337
    %v786 = vmul.f32 %v774, %v338
    %v787 = vmul.f32 %v774, %v339
    %v788 = vmul.f32 %v774, %v340
    %v789 = vmul.f32 %v774, %v341
    %v790 = vmul.f32 %v774, %v342
    %v791 = vadd.f32 %v757, %v775
    %v792 = vadd.f32 %v758, %v776
    %v793 = vadd.f32 %v759, %v777
    %v794 = vadd.f32 %v760, %v778
    %v795 = vadd.f32 %v761, %v779
    %v796 = vadd.f32 %v762, %v780
    %v797 = vadd.f32 %v763, %v781
    %v798 = vadd.f32 %v764, %v782
    %v799 = vadd.f32 %v765, %v783
    %v800 = vadd.f32 %v766, %v784
    %v801 = vadd.f32 %v767, %v785
    %v802 = vadd.f32 %v768, %v786
    %v803 = vadd.f32 %v769, %v787
    %v804 = vadd.f32 %v770, %v788
    %v805 = vadd.f32 %v771, %v789
    %v806 = vadd.f32 %v772, %v790
    %s807 = sld [smem:[#allocation4 + $0x5b]]
    %v808 = vstv %s807
    %v809 = vmul.f32 %v808, %v349
    %v810 = vmul.f32 %v808, %v350
    %v811 = vmul.f32 %v808, %v351
    %v812 = vmul.f32 %v808, %v352
    %v813 = vmul.f32 %v808, %v353
    %v814 = vmul.f32 %v808, %v354
    %v815 = vmul.f32 %v808, %v355
    %v816 = vmul.f32 %v808, %v356
    %v817 = vmul.f32 %v808, %v357
    %v818 = vmul.f32 %v808, %v358
    %v819 = vmul.f32 %v808, %v359
    %v820 = vmul.f32 %v808, %v360
    %v821 = vmul.f32 %v808, %v361
    %v822 = vmul.f32 %v808, %v362
    %v823 = vmul.f32 %v808, %v363
    %v824 = vmul.f32 %v808, %v364
    %v825 = vadd.f32 %v791, %v809
    %v826 = vadd.f32 %v792, %v810
    %v827 = vadd.f32 %v793, %v811
    %v828 = vadd.f32 %v794, %v812
    %v829 = vadd.f32 %v795, %v813
    %v830 = vadd.f32 %v796, %v814
    %v831 = vadd.f32 %v797, %v815
    %v832 = vadd.f32 %v798, %v816
    %v833 = vadd.f32 %v799, %v817
    %v834 = vadd.f32 %v800, %v818
    %v835 = vadd.f32 %v801, %v819
    %v836 = vadd.f32 %v802, %v820
    %v837 = vadd.f32 %v803, %v821
    %v838 = vadd.f32 %v804, %v822
    %v839 = vadd.f32 %v805, %v823
    %v840 = vadd.f32 %v806, %v824
    %s841 = sld [smem:[#allocation4 + $0x1]]
    %v842 = vstv %s841
    %v843 = vmul.f32 %v842, %v321
    %v844 = vmul.f32 %v842, %v322
    %v845 = vmul.f32 %v842, %v323
    %v846 = vmul.f32 %v842, %v324
    %v847 = vmul.f32 %v842, %v325
    %v848 = vmul.f32 %v842, %v326
    %v849 = vmul.f32 %v842, %v327
    %v850 = vmul.f32 %v842, %v328
    %v851 = vmul.f32 %v842, %v329
    %v852 = vmul.f32 %v842, %v330
    %v853 = vmul.f32 %v842, %v331
    %v854 = vmul.f32 %v842, %v332
    %v855 = vmul.f32 %v842, %v333
    %v856 = vmul.f32 %v842, %v334
    %v857 = vmul.f32 %v842, %v335
    %v858 = vmul.f32 %v842, %v336
    %875 = vrot.lane.b32.xlu0 %v843, 127
    %v876 = vpop.permute.xlu0 %875
    %877 = vrot.lane.b32.xlu0 %v844, 127
    %v878 = vpop.permute.xlu0 %877
    %879 = vrot.lane.b32.xlu0 %v845, 127
    %v880 = vpop.permute.xlu0 %879
    %881 = vrot.lane.b32.xlu0 %v846, 127
    %v882 = vpop.permute.xlu0 %881
    %883 = vrot.lane.b32.xlu0 %v847, 127
    %v884 = vpop.permute.xlu0 %883
    %885 = vrot.lane.b32.xlu0 %v848, 127
    %v886 = vpop.permute.xlu0 %885
    %887 = vrot.lane.b32.xlu0 %v849, 127
    %v888 = vpop.permute.xlu0 %887
    %889 = vrot.lane.b32.xlu0 %v850, 127
    %v890 = vpop.permute.xlu0 %889
    %891 = vrot.lane.b32.xlu0 %v851, 127
    %v892 = vpop.permute.xlu0 %891
    %893 = vrot.lane.b32.xlu0 %v852, 127
    %v894 = vpop.permute.xlu0 %893
    %895 = vrot.lane.b32.xlu0 %v853, 127
    %v896 = vpop.permute.xlu0 %895
    %897 = vrot.lane.b32.xlu0 %v854, 127
    %v898 = vpop.permute.xlu0 %897
    %899 = vrot.lane.b32.xlu0 %v855, 127
    %v900 = vpop.permute.xlu0 %899
    %901 = vrot.lane.b32.xlu0 %v856, 127
    %v902 = vpop.permute.xlu0 %901
    %903 = vrot.lane.b32.xlu0 %v857, 127
    %v904 = vpop.permute.xlu0 %903
    %905 = vrot.lane.b32.xlu0 %v858, 127
    %v906 = vpop.permute.xlu0 %905
    %v923 = vadd.f32 %v825, %v876
    %v924 = vadd.f32 %v826, %v878
    %v925 = vadd.f32 %v827, %v880
    %v926 = vadd.f32 %v828, %v882
    %v927 = vadd.f32 %v829, %v884
    %v928 = vadd.f32 %v830, %v886
    %v929 = vadd.f32 %v831, %v888
    %v930 = vadd.f32 %v832, %v890
    %v931 = vadd.f32 %v833, %v892
    %v932 = vadd.f32 %v834, %v894
    %v933 = vadd.f32 %v835, %v896
    %v934 = vadd.f32 %v836, %v898
    %v935 = vadd.f32 %v837, %v900
    %v936 = vadd.f32 %v838, %v902
    %v937 = vadd.f32 %v839, %v904
    %v938 = vadd.f32 %v840, %v906
    %s939 = sld [smem:[#allocation4 + $0x32]]
    %v940 = vstv %s939
    %v941 = vmul.f32 %v940, %v343
    %v942 = vmul.f32 %v940, %v344
    %v943 = vmul.f32 %v940, %v345
    %v944 = vmul.f32 %v940, %v346
    %v945 = vmul.f32 %v940, %v347
    %v946 = vmul.f32 %v940, %v348
    %v947 = vmul.f32 %v940, %v349
    %v948 = vmul.f32 %v940, %v350
    %v949 = vmul.f32 %v940, %v351
    %v950 = vmul.f32 %v940, %v352
    %v951 = vmul.f32 %v940, %v353
    %v952 = vmul.f32 %v940, %v354
    %v953 = vmul.f32 %v940, %v355
    %v954 = vmul.f32 %v940, %v356
    %v955 = vmul.f32 %v940, %v357
    %v956 = vmul.f32 %v940, %v358
    %973 = vrot.lane.b32.xlu0 %v941, 127
    %v974 = vpop.permute.xlu0 %973
    %975 = vrot.lane.b32.xlu0 %v942, 127
    %v976 = vpop.permute.xlu0 %975
    %977 = vrot.lane.b32.xlu0 %v943, 127
    %v978 = vpop.permute.xlu0 %977
    %979 = vrot.lane.b32.xlu0 %v944, 127
    %v980 = vpop.permute.xlu0 %979
    %981 = vrot.lane.b32.xlu0 %v945, 127
    %v982 = vpop.permute.xlu0 %981
    %983 = vrot.lane.b32.xlu0 %v946, 127
    %v984 = vpop.permute.xlu0 %983
    %985 = vrot.lane.b32.xlu0 %v947, 127
    %v986 = vpop.permute.xlu0 %985
    %987 = vrot.lane.b32.xlu0 %v948, 127
    %v988 = vpop.permute.xlu0 %987
    %989 = vrot.lane.b32.xlu0 %v949, 127
    %v990 = vpop.permute.xlu0 %989
    %991 = vrot.lane.b32.xlu0 %v950, 127
    %v992 = vpop.permute.xlu0 %991
    %993 = vrot.lane.b32.xlu0 %v951, 127
    %v994 = vpop.permute.xlu0 %993
    %995 = vrot.lane.b32.xlu0 %v952, 127
    %v996 = vpop.permute.xlu0 %995
    %997 = vrot.lane.b32.xlu0 %v953, 127
    %v998 = vpop.permute.xlu0 %997
    %999 = vrot.lane.b32.xlu0 %v954, 127
    %v1000 = vpop.permute.xlu0 %999
    %1001 = vrot.lane.b32.xlu0 %v955, 127
    %v1002 = vpop.permute.xlu0 %1001
    %1003 = vrot.lane.b32.xlu0 %v956, 127
    %v1004 = vpop.permute.xlu0 %1003
    %v1021 = vadd.f32 %v923, %v974
    %v1022 = vadd.f32 %v924, %v976
    %v1023 = vadd.f32 %v925, %v978
    %v1024 = vadd.f32 %v926, %v980
    %v1025 = vadd.f32 %v927, %v982
    %v1026 = vadd.f32 %v928, %v984
    %v1027 = vadd.f32 %v929, %v986
    %v1028 = vadd.f32 %v930, %v988
    %v1029 = vadd.f32 %v931, %v990
    %v1030 = vadd.f32 %v932, %v992
    %v1031 = vadd.f32 %v933, %v994
    %v1032 = vadd.f32 %v934, %v996
    %v1033 = vadd.f32 %v935, %v998
    %v1034 = vadd.f32 %v936, %v1000
    %v1035 = vadd.f32 %v937, %v1002
    %v1036 = vadd.f32 %v938, %v1004
    %s1037 = sld [smem:[#allocation4 + $0x8]]
    %v1038 = vstv %s1037
    %v1039 = vmul.f32 %v1038, %v322
    %v1040 = vmul.f32 %v1038, %v323
    %v1041 = vmul.f32 %v1038, %v324
    %v1042 = vmul.f32 %v1038, %v325
    %v1043 = vmul.f32 %v1038, %v326
    %v1044 = vmul.f32 %v1038, %v327
    %v1045 = vmul.f32 %v1038, %v328
    %v1046 = vmul.f32 %v1038, %v329
    %v1047 = vmul.f32 %v1038, %v330
    %v1048 = vmul.f32 %v1038, %v331
    %v1049 = vmul.f32 %v1038, %v332
    %v1050 = vmul.f32 %v1038, %v333
    %v1051 = vmul.f32 %v1038, %v334
    %v1052 = vmul.f32 %v1038, %v335
    %v1053 = vmul.f32 %v1038, %v336
    %v1054 = vmul.f32 %v1038, %v337
    %1071 = vrot.lane.b32.xlu0 %v1039, 127
    %v1072 = vpop.permute.xlu0 %1071
    %1073 = vrot.lane.b32.xlu0 %v1040, 127
    %v1074 = vpop.permute.xlu0 %1073
    %1075 = vrot.lane.b32.xlu0 %v1041, 127
    %v1076 = vpop.permute.xlu0 %1075
    %1077 = vrot.lane.b32.xlu0 %v1042, 127
    %v1078 = vpop.permute.xlu0 %1077
    %1079 = vrot.lane.b32.xlu0 %v1043, 127
    %v1080 = vpop.permute.xlu0 %1079
    %1081 = vrot.lane.b32.xlu0 %v1044, 127
    %v1082 = vpop.permute.xlu0 %1081
    %1083 = vrot.lane.b32.xlu0 %v1045, 127
    %v1084 = vpop.permute.xlu0 %1083
    %1085 = vrot.lane.b32.xlu0 %v1046, 127
    %v1086 = vpop.permute.xlu0 %1085
    %1087 = vrot.lane.b32.xlu0 %v1047, 127
    %v1088 = vpop.permute.xlu0 %1087
    %1089 = vrot.lane.b32.xlu0 %v1048, 127
    %v1090 = vpop.permute.xlu0 %1089
    %1091 = vrot.lane.b32.xlu0 %v1049, 127
    %v1092 = vpop.permute.xlu0 %1091
    %1093 = vrot.lane.b32.xlu0 %v1050, 127
    %v1094 = vpop.permute.xlu0 %1093
    %1095 = vrot.lane.b32.xlu0 %v1051, 127
    %v1096 = vpop.permute.xlu0 %1095
    %1097 = vrot.lane.b32.xlu0 %v1052, 127
    %v1098 = vpop.permute.xlu0 %1097
    %1099 = vrot.lane.b32.xlu0 %v1053, 127
    %v1100 = vpop.permute.xlu0 %1099
    %1101 = vrot.lane.b32.xlu0 %v1054, 127
    %v1102 = vpop.permute.xlu0 %1101
    %v1119 = vadd.f32 %v1021, %v1072
    %v1120 = vadd.f32 %v1022, %v1074
    %v1121 = vadd.f32 %v1023, %v1076
    %v1122 = vadd.f32 %v1024, %v1078
    %v1123 = vadd.f32 %v1025, %v1080
    %v1124 = vadd.f32 %v1026, %v1082
    %v1125 = vadd.f32 %v1027, %v1084
    %v1126 = vadd.f32 %v1028, %v1086
    %v1127 = vadd.f32 %v1029, %v1088
    %v1128 = vadd.f32 %v1030, %v1090
    %v1129 = vadd.f32 %v1031, %v1092
    %v1130 = vadd.f32 %v1032, %v1094
    %v1131 = vadd.f32 %v1033, %v1096
    %v1132 = vadd.f32 %v1034, %v1098
    %v1133 = vadd.f32 %v1035, %v1100
    %v1134 = vadd.f32 %v1036, %v1102
    %s1135 = sld [smem:[#allocation4 + $0x39]]
    %v1136 = vstv %s1135
    %v1137 = vmul.f32 %v1136, %v344
    %v1138 = vmul.f32 %v1136, %v345
    %v1139 = vmul.f32 %v1136, %v346
    %v1140 = vmul.f32 %v1136, %v347
    %v1141 = vmul.f32 %v1136, %v348
    %v1142 = vmul.f32 %v1136, %v349
    %v1143 = vmul.f32 %v1136, %v350
    %v1144 = vmul.f32 %v1136, %v351
    %v1145 = vmul.f32 %v1136, %v352
    %v1146 = vmul.f32 %v1136, %v353
    %v1147 = vmul.f32 %v1136, %v354
    %v1148 = vmul.f32 %v1136, %v355
    %v1149 = vmul.f32 %v1136, %v356
    %v1150 = vmul.f32 %v1136, %v357
    %v1151 = vmul.f32 %v1136, %v358
    %v1152 = vmul.f32 %v1136, %v359
    %1169 = vrot.lane.b32.xlu0 %v1137, 127
    %v1170 = vpop.permute.xlu0 %1169
    %1171 = vrot.lane.b32.xlu0 %v1138, 127
    %v1172 = vpop.permute.xlu0 %1171
    %1173 = vrot.lane.b32.xlu0 %v1139, 127
    %v1174 = vpop.permute.xlu0 %1173
    %1175 = vrot.lane.b32.xlu0 %v1140, 127
    %v1176 = vpop.permute.xlu0 %1175
    %1177 = vrot.lane.b32.xlu0 %v1141, 127
    %v1178 = vpop.permute.xlu0 %1177
    %1179 = vrot.lane.b32.xlu0 %v1142, 127
    %v1180 = vpop.permute.xlu0 %1179
    %1181 = vrot.lane.b32.xlu0 %v1143, 127
    %v1182 = vpop.permute.xlu0 %1181
    %1183 = vrot.lane.b32.xlu0 %v1144, 127
    %v1184 = vpop.permute.xlu0 %1183
    %1185 = vrot.lane.b32.xlu0 %v1145, 127
    %v1186 = vpop.permute.xlu0 %1185
    %1187 = vrot.lane.b32.xlu0 %v1146, 127
    %v1188 = vpop.permute.xlu0 %1187
    %1189 = vrot.lane.b32.xlu0 %v1147, 127
    %v1190 = vpop.permute.xlu0 %1189
    %1191 = vrot.lane.b32.xlu0 %v1148, 127
    %v1192 = vpop.permute.xlu0 %1191
    %1193 = vrot.lane.b32.xlu0 %v1149, 127
    %v1194 = vpop.permute.xlu0 %1193
    %1195 = vrot.lane.b32.xlu0 %v1150, 127
    %v1196 = vpop.permute.xlu0 %1195
    %1197 = vrot.lane.b32.xlu0 %v1151, 127
    %v1198 = vpop.permute.xlu0 %1197
    %1199 = vrot.lane.b32.xlu0 %v1152, 127
    %v1200 = vpop.permute.xlu0 %1199
    %v1217 = vadd.f32 %v1119, %v1170
    %v1218 = vadd.f32 %v1120, %v1172
    %v1219 = vadd.f32 %v1121, %v1174
    %v1220 = vadd.f32 %v1122, %v1176
    %v1221 = vadd.f32 %v1123, %v1178
    %v1222 = vadd.f32 %v1124, %v1180
    %v1223 = vadd.f32 %v1125, %v1182
    %v1224 = vadd.f32 %v1126, %v1184
    %v1225 = vadd.f32 %v1127, %v1186
    %v1226 = vadd.f32 %v1128, %v1188
    %v1227 = vadd.f32 %v1129, %v1190
    %v1228 = vadd.f32 %v1130, %v1192
    %v1229 = vadd.f32 %v1131, %v1194
    %v1230 = vadd.f32 %v1132, %v1196
    %v1231 = vadd.f32 %v1133, %v1198
    %v1232 = vadd.f32 %v1134, %v1200
    %s1233 = sld [smem:[#allocation4 + $0xf]]
    %v1234 = vstv %s1233
    %v1235 = vmul.f32 %v1234, %v323
    %v1236 = vmul.f32 %v1234, %v324
    %v1237 = vmul.f32 %v1234, %v325
    %v1238 = vmul.f32 %v1234, %v326
    %v1239 = vmul.f32 %v1234, %v327
    %v1240 = vmul.f32 %v1234, %v328
    %v1241 = vmul.f32 %v1234, %v329
    %v1242 = vmul.f32 %v1234, %v330
    %v1243 = vmul.f32 %v1234, %v331
    %v1244 = vmul.f32 %v1234, %v332
    %v1245 = vmul.f32 %v1234, %v333
    %v1246 = vmul.f32 %v1234, %v334
    %v1247 = vmul.f32 %v1234, %v335
    %v1248 = vmul.f32 %v1234, %v336
    %v1249 = vmul.f32 %v1234, %v337
    %v1250 = vmul.f32 %v1234, %v338
    %1267 = vrot.lane.b32.xlu0 %v1235, 127
    %v1268 = vpop.permute.xlu0 %1267
    %1269 = vrot.lane.b32.xlu0 %v1236, 127
    %v1270 = vpop.permute.xlu0 %1269
    %1271 = vrot.lane.b32.xlu0 %v1237, 127
    %v1272 = vpop.permute.xlu0 %1271
    %1273 = vrot.lane.b32.xlu0 %v1238, 127
    %v1274 = vpop.permute.xlu0 %1273
    %1275 = vrot.lane.b32.xlu0 %v1239, 127
    %v1276 = vpop.permute.xlu0 %1275
    %1277 = vrot.lane.b32.xlu0 %v1240, 127
    %v1278 = vpop.permute.xlu0 %1277
    %1279 = vrot.lane.b32.xlu0 %v1241, 127
    %v1280 = vpop.permute.xlu0 %1279
    %1281 = vrot.lane.b32.xlu0 %v1242, 127
    %v1282 = vpop.permute.xlu0 %1281
    %1283 = vrot.lane.b32.xlu0 %v1243, 127
    %v1284 = vpop.permute.xlu0 %1283
    %1285 = vrot.lane.b32.xlu0 %v1244, 127
    %v1286 = vpop.permute.xlu0 %1285
    %1287 = vrot.lane.b32.xlu0 %v1245, 127
    %v1288 = vpop.permute.xlu0 %1287
    %1289 = vrot.lane.b32.xlu0 %v1246, 127
    %v1290 = vpop.permute.xlu0 %1289
    %1291 = vrot.lane.b32.xlu0 %v1247, 127
    %v1292 = vpop.permute.xlu0 %1291
    %1293 = vrot.lane.b32.xlu0 %v1248, 127
    %v1294 = vpop.permute.xlu0 %1293
    %1295 = vrot.lane.b32.xlu0 %v1249, 127
    %v1296 = vpop.permute.xlu0 %1295
    %1297 = vrot.lane.b32.xlu0 %v1250, 127
    %v1298 = vpop.permute.xlu0 %1297
    %v1315 = vadd.f32 %v1217, %v1268
    %v1316 = vadd.f32 %v1218, %v1270
    %v1317 = vadd.f32 %v1219, %v1272
    %v1318 = vadd.f32 %v1220, %v1274
    %v1319 = vadd.f32 %v1221, %v1276
    %v1320 = vadd.f32 %v1222, %v1278
    %v1321 = vadd.f32 %v1223, %v1280
    %v1322 = vadd.f32 %v1224, %v1282
    %v1323 = vadd.f32 %v1225, %v1284
    %v1324 = vadd.f32 %v1226, %v1286
    %v1325 = vadd.f32 %v1227, %v1288
    %v1326 = vadd.f32 %v1228, %v1290
    %v1327 = vadd.f32 %v1229, %v1292
    %v1328 = vadd.f32 %v1230, %v1294
    %v1329 = vadd.f32 %v1231, %v1296
    %v1330 = vadd.f32 %v1232, %v1298
    %s1331 = sld [smem:[#allocation4 + $0x40]]
    %v1332 = vstv %s1331
    %v1333 = vmul.f32 %v1332, %v345
    %v1334 = vmul.f32 %v1332, %v346
    %v1335 = vmul.f32 %v1332, %v347
    %v1336 = vmul.f32 %v1332, %v348
    %v1337 = vmul.f32 %v1332, %v349
    %v1338 = vmul.f32 %v1332, %v350
    %v1339 = vmul.f32 %v1332, %v351
    %v1340 = vmul.f32 %v1332, %v352
    %v1341 = vmul.f32 %v1332, %v353
    %v1342 = vmul.f32 %v1332, %v354
    %v1343 = vmul.f32 %v1332, %v355
    %v1344 = vmul.f32 %v1332, %v356
    %v1345 = vmul.f32 %v1332, %v357
    %v1346 = vmul.f32 %v1332, %v358
    %v1347 = vmul.f32 %v1332, %v359
    %v1348 = vmul.f32 %v1332, %v360
    %1365 = vrot.lane.b32.xlu0 %v1333, 127
    %v1366 = vpop.permute.xlu0 %1365
    %1367 = vrot.lane.b32.xlu0 %v1334, 127
    %v1368 = vpop.permute.xlu0 %1367
    %1369 = vrot.lane.b32.xlu0 %v1335, 127
    %v1370 = vpop.permute.xlu0 %1369
    %1371 = vrot.lane.b32.xlu0 %v1336, 127
    %v1372 = vpop.permute.xlu0 %1371
    %1373 = vrot.lane.b32.xlu0 %v1337, 127
    %v1374 = vpop.permute.xlu0 %1373
    %1375 = vrot.lane.b32.xlu0 %v1338, 127
    %v1376 = vpop.permute.xlu0 %1375
    %1377 = vrot.lane.b32.xlu0 %v1339, 127
    %v1378 = vpop.permute.xlu0 %1377
    %1379 = vrot.lane.b32.xlu0 %v1340, 127
    %v1380 = vpop.permute.xlu0 %1379
    %1381 = vrot.lane.b32.xlu0 %v1341, 127
    %v1382 = vpop.permute.xlu0 %1381
    %1383 = vrot.lane.b32.xlu0 %v1342, 127
    %v1384 = vpop.permute.xlu0 %1383
    %1385 = vrot.lane.b32.xlu0 %v1343, 127
    %v1386 = vpop.permute.xlu0 %1385
    %1387 = vrot.lane.b32.xlu0 %v1344, 127
    %v1388 = vpop.permute.xlu0 %1387
    %1389 = vrot.lane.b32.xlu0 %v1345, 127
    %v1390 = vpop.permute.xlu0 %1389
    %1391 = vrot.lane.b32.xlu0 %v1346, 127
    %v1392 = vpop.permute.xlu0 %1391
    %1393 = vrot.lane.b32.xlu0 %v1347, 127
    %v1394 = vpop.permute.xlu0 %1393
    %1395 = vrot.lane.b32.xlu0 %v1348, 127
    %v1396 = vpop.permute.xlu0 %1395
    %v1413 = vadd.f32 %v1315, %v1366
    %v1414 = vadd.f32 %v1316, %v1368
    %v1415 = vadd.f32 %v1317, %v1370
    %v1416 = vadd.f32 %v1318, %v1372
    %v1417 = vadd.f32 %v1319, %v1374
    %v1418 = vadd.f32 %v1320, %v1376
    %v1419 = vadd.f32 %v1321, %v1378
    %v1420 = vadd.f32 %v1322, %v1380
    %v1421 = vadd.f32 %v1323, %v1382
    %v1422 = vadd.f32 %v1324, %v1384
    %v1423 = vadd.f32 %v1325, %v1386
    %v1424 = vadd.f32 %v1326, %v1388
    %v1425 = vadd.f32 %v1327, %v1390
    %v1426 = vadd.f32 %v1328, %v1392
    %v1427 = vadd.f32 %v1329, %v1394
    %v1428 = vadd.f32 %v1330, %v1396
    %s1429 = sld [smem:[#allocation4 + $0x16]]
    %v1430 = vstv %s1429
    %v1431 = vmul.f32 %v1430, %v324
    %v1432 = vmul.f32 %v1430, %v325
    %v1433 = vmul.f32 %v1430, %v326
    %v1434 = vmul.f32 %v1430, %v327
    %v1435 = vmul.f32 %v1430, %v328
    %v1436 = vmul.f32 %v1430, %v329
    %v1437 = vmul.f32 %v1430, %v330
    %v1438 = vmul.f32 %v1430, %v331
    %v1439 = vmul.f32 %v1430, %v332
    %v1440 = vmul.f32 %v1430, %v333
    %v1441 = vmul.f32 %v1430, %v334
    %v1442 = vmul.f32 %v1430, %v335
    %v1443 = vmul.f32 %v1430, %v336
    %v1444 = vmul.f32 %v1430, %v337
    %v1445 = vmul.f32 %v1430, %v338
    %v1446 = vmul.f32 %v1430, %v339
    %1463 = vrot.lane.b32.xlu0 %v1431, 127
    %v1464 = vpop.permute.xlu0 %1463
    %1465 = vrot.lane.b32.xlu0 %v1432, 127
    %v1466 = vpop.permute.xlu0 %1465
    %1467 = vrot.lane.b32.xlu0 %v1433, 127
    %v1468 = vpop.permute.xlu0 %1467
    %1469 = vrot.lane.b32.xlu0 %v1434, 127
    %v1470 = vpop.permute.xlu0 %1469
    %1471 = vrot.lane.b32.xlu0 %v1435, 127
    %v1472 = vpop.permute.xlu0 %1471
    %1473 = vrot.lane.b32.xlu0 %v1436, 127
    %v1474 = vpop.permute.xlu0 %1473
    %1475 = vrot.lane.b32.xlu0 %v1437, 127
    %v1476 = vpop.permute.xlu0 %1475
    %1477 = vrot.lane.b32.xlu0 %v1438, 127
    %v1478 = vpop.permute.xlu0 %1477
    %1479 = vrot.lane.b32.xlu0 %v1439, 127
    %v1480 = vpop.permute.xlu0 %1479
    %1481 = vrot.lane.b32.xlu0 %v1440, 127
    %v1482 = vpop.permute.xlu0 %1481
    %1483 = vrot.lane.b32.xlu0 %v1441, 127
    %v1484 = vpop.permute.xlu0 %1483
    %1485 = vrot.lane.b32.xlu0 %v1442, 127
    %v1486 = vpop.permute.xlu0 %1485
    %1487 = vrot.lane.b32.xlu0 %v1443, 127
    %v1488 = vpop.permute.xlu0 %1487
    %1489 = vrot.lane.b32.xlu0 %v1444, 127
    %v1490 = vpop.permute.xlu0 %1489
    %1491 = vrot.lane.b32.xlu0 %v1445, 127
    %v1492 = vpop.permute.xlu0 %1491
    %1493 = vrot.lane.b32.xlu0 %v1446, 127
    %v1494 = vpop.permute.xlu0 %1493
    %v1511 = vadd.f32 %v1413, %v1464
    %v1512 = vadd.f32 %v1414, %v1466
    %v1513 = vadd.f32 %v1415, %v1468
    %v1514 = vadd.f32 %v1416, %v1470
    %v1515 = vadd.f32 %v1417, %v1472
    %v1516 = vadd.f32 %v1418, %v1474
    %v1517 = vadd.f32 %v1419, %v1476
    %v1518 = vadd.f32 %v1420, %v1478
    %v1519 = vadd.f32 %v1421, %v1480
    %v1520 = vadd.f32 %v1422, %v1482
    %v1521 = vadd.f32 %v1423, %v1484
    %v1522 = vadd.f32 %v1424, %v1486
    %v1523 = vadd.f32 %v1425, %v1488
    %v1524 = vadd.f32 %v1426, %v1490
    %v1525 = vadd.f32 %v1427, %v1492
    %v1526 = vadd.f32 %v1428, %v1494
    %s1527 = sld [smem:[#allocation4 + $0x47]]
    %v1528 = vstv %s1527
    %v1529 = vmul.f32 %v1528, %v346
    %v1530 = vmul.f32 %v1528, %v347
    %v1531 = vmul.f32 %v1528, %v348
    %v1532 = vmul.f32 %v1528, %v349
    %v1533 = vmul.f32 %v1528, %v350
    %v1534 = vmul.f32 %v1528, %v351
    %v1535 = vmul.f32 %v1528, %v352
    %v1536 = vmul.f32 %v1528, %v353
    %v1537 = vmul.f32 %v1528, %v354
    %v1538 = vmul.f32 %v1528, %v355
    %v1539 = vmul.f32 %v1528, %v356
    %v1540 = vmul.f32 %v1528, %v357
    %v1541 = vmul.f32 %v1528, %v358
    %v1542 = vmul.f32 %v1528, %v359
    %v1543 = vmul.f32 %v1528, %v360
    %v1544 = vmul.f32 %v1528, %v361
    %1561 = vrot.lane.b32.xlu0 %v1529, 127
    %v1562 = vpop.permute.xlu0 %1561
    %1563 = vrot.lane.b32.xlu0 %v1530, 127
    %v1564 = vpop.permute.xlu0 %1563
    %1565 = vrot.lane.b32.xlu0 %v1531, 127
    %v1566 = vpop.permute.xlu0 %1565
    %1567 = vrot.lane.b32.xlu0 %v1532, 127
    %v1568 = vpop.permute.xlu0 %1567
    %1569 = vrot.lane.b32.xlu0 %v1533, 127
    %v1570 = vpop.permute.xlu0 %1569
    %1571 = vrot.lane.b32.xlu0 %v1534, 127
    %v1572 = vpop.permute.xlu0 %1571
    %1573 = vrot.lane.b32.xlu0 %v1535, 127
    %v1574 = vpop.permute.xlu0 %1573
    %1575 = vrot.lane.b32.xlu0 %v1536, 127
    %v1576 = vpop.permute.xlu0 %1575
    %1577 = vrot.lane.b32.xlu0 %v1537, 127
    %v1578 = vpop.permute.xlu0 %1577
    %1579 = vrot.lane.b32.xlu0 %v1538, 127
    %v1580 = vpop.permute.xlu0 %1579
    %1581 = vrot.lane.b32.xlu0 %v1539, 127
    %v1582 = vpop.permute.xlu0 %1581
    %1583 = vrot.lane.b32.xlu0 %v1540, 127
    %v1584 = vpop.permute.xlu0 %1583
    %1585 = vrot.lane.b32.xlu0 %v1541, 127
    %v1586 = vpop.permute.xlu0 %1585
    %1587 = vrot.lane.b32.xlu0 %v1542, 127
    %v1588 = vpop.permute.xlu0 %1587
    %1589 = vrot.lane.b32.xlu0 %v1543, 127
    %v1590 = vpop.permute.xlu0 %1589
    %1591 = vrot.lane.b32.xlu0 %v1544, 127
    %v1592 = vpop.permute.xlu0 %1591
    %v1609 = vadd.f32 %v1511, %v1562
    %v1610 = vadd.f32 %v1512, %v1564
    %v1611 = vadd.f32 %v1513, %v1566
    %v1612 = vadd.f32 %v1514, %v1568
    %v1613 = vadd.f32 %v1515, %v1570
    %v1614 = vadd.f32 %v1516, %v1572
    %v1615 = vadd.f32 %v1517, %v1574
    %v1616 = vadd.f32 %v1518, %v1576
    %v1617 = vadd.f32 %v1519, %v1578
    %v1618 = vadd.f32 %v1520, %v1580
    %v1619 = vadd.f32 %v1521, %v1582
    %v1620 = vadd.f32 %v1522, %v1584
    %v1621 = vadd.f32 %v1523, %v1586
    %v1622 = vadd.f32 %v1524, %v1588
    %v1623 = vadd.f32 %v1525, %v1590
    %v1624 = vadd.f32 %v1526, %v1592
    %s1625 = sld [smem:[#allocation4 + $0x1d]]
    %v1626 = vstv %s1625
    %v1627 = vmul.f32 %v1626, %v325
    %v1628 = vmul.f32 %v1626, %v326
    %v1629 = vmul.f32 %v1626, %v327
    %v1630 = vmul.f32 %v1626, %v328
    %v1631 = vmul.f32 %v1626, %v329
    %v1632 = vmul.f32 %v1626, %v330
    %v1633 = vmul.f32 %v1626, %v331
    %v1634 = vmul.f32 %v1626, %v332
    %v1635 = vmul.f32 %v1626, %v333
    %v1636 = vmul.f32 %v1626, %v334
    %v1637 = vmul.f32 %v1626, %v335
    %v1638 = vmul.f32 %v1626, %v336
    %v1639 = vmul.f32 %v1626, %v337
    %v1640 = vmul.f32 %v1626, %v338
    %v1641 = vmul.f32 %v1626, %v339
    %v1642 = vmul.f32 %v1626, %v340
    %1659 = vrot.lane.b32.xlu0 %v1627, 127
    %v1660 = vpop.permute.xlu0 %1659
    %1661 = vrot.lane.b32.xlu0 %v1628, 127
    %v1662 = vpop.permute.xlu0 %1661
    %1663 = vrot.lane.b32.xlu0 %v1629, 127
    %v1664 = vpop.permute.xlu0 %1663
    %1665 = vrot.lane.b32.xlu0 %v1630, 127
    %v1666 = vpop.permute.xlu0 %1665
    %1667 = vrot.lane.b32.xlu0 %v1631, 127
    %v1668 = vpop.permute.xlu0 %1667
    %1669 = vrot.lane.b32.xlu0 %v1632, 127
    %v1670 = vpop.permute.xlu0 %1669
    %1671 = vrot.lane.b32.xlu0 %v1633, 127
    %v1672 = vpop.permute.xlu0 %1671
    %1673 = vrot.lane.b32.xlu0 %v1634, 127
    %v1674 = vpop.permute.xlu0 %1673
    %1675 = vrot.lane.b32.xlu0 %v1635, 127
    %v1676 = vpop.permute.xlu0 %1675
    %1677 = vrot.lane.b32.xlu0 %v1636, 127
    %v1678 = vpop.permute.xlu0 %1677
    %1679 = vrot.lane.b32.xlu0 %v1637, 127
    %v1680 = vpop.permute.xlu0 %1679
    %1681 = vrot.lane.b32.xlu0 %v1638, 127
    %v1682 = vpop.permute.xlu0 %1681
    %1683 = vrot.lane.b32.xlu0 %v1639, 127
    %v1684 = vpop.permute.xlu0 %1683
    %1685 = vrot.lane.b32.xlu0 %v1640, 127
    %v1686 = vpop.permute.xlu0 %1685
    %1687 = vrot.lane.b32.xlu0 %v1641, 127
    %v1688 = vpop.permute.xlu0 %1687
    %1689 = vrot.lane.b32.xlu0 %v1642, 127
    %v1690 = vpop.permute.xlu0 %1689
    %v1707 = vadd.f32 %v1609, %v1660
    %v1708 = vadd.f32 %v1610, %v1662
    %v1709 = vadd.f32 %v1611, %v1664
    %v1710 = vadd.f32 %v1612, %v1666
    %v1711 = vadd.f32 %v1613, %v1668
    %v1712 = vadd.f32 %v1614, %v1670
    %v1713 = vadd.f32 %v1615, %v1672
    %v1714 = vadd.f32 %v1616, %v1674
    %v1715 = vadd.f32 %v1617, %v1676
    %v1716 = vadd.f32 %v1618, %v1678
    %v1717 = vadd.f32 %v1619, %v1680
    %v1718 = vadd.f32 %v1620, %v1682
    %v1719 = vadd.f32 %v1621, %v1684
    %v1720 = vadd.f32 %v1622, %v1686
    %v1721 = vadd.f32 %v1623, %v1688
    %v1722 = vadd.f32 %v1624, %v1690
    %s1723 = sld [smem:[#allocation4 + $0x4e]]
    %v1724 = vstv %s1723
    %v1725 = vmul.f32 %v1724, %v347
    %v1726 = vmul.f32 %v1724, %v348
    %v1727 = vmul.f32 %v1724, %v349
    %v1728 = vmul.f32 %v1724, %v350
    %v1729 = vmul.f32 %v1724, %v351
    %v1730 = vmul.f32 %v1724, %v352
    %v1731 = vmul.f32 %v1724, %v353
    %v1732 = vmul.f32 %v1724, %v354
    %v1733 = vmul.f32 %v1724, %v355
    %v1734 = vmul.f32 %v1724, %v356
    %v1735 = vmul.f32 %v1724, %v357
    %v1736 = vmul.f32 %v1724, %v358
    %v1737 = vmul.f32 %v1724, %v359
    %v1738 = vmul.f32 %v1724, %v360
    %v1739 = vmul.f32 %v1724, %v361
    %v1740 = vmul.f32 %v1724, %v362
    %1757 = vrot.lane.b32.xlu0 %v1725, 127
    %v1758 = vpop.permute.xlu0 %1757
    %1759 = vrot.lane.b32.xlu0 %v1726, 127
    %v1760 = vpop.permute.xlu0 %1759
    %1761 = vrot.lane.b32.xlu0 %v1727, 127
    %v1762 = vpop.permute.xlu0 %1761
    %1763 = vrot.lane.b32.xlu0 %v1728, 127
    %v1764 = vpop.permute.xlu0 %1763
    %1765 = vrot.lane.b32.xlu0 %v1729, 127
    %v1766 = vpop.permute.xlu0 %1765
    %1767 = vrot.lane.b32.xlu0 %v1730, 127
    %v1768 = vpop.permute.xlu0 %1767
    %1769 = vrot.lane.b32.xlu0 %v1731, 127
    %v1770 = vpop.permute.xlu0 %1769
    %1771 = vrot.lane.b32.xlu0 %v1732, 127
    %v1772 = vpop.permute.xlu0 %1771
    %1773 = vrot.lane.b32.xlu0 %v1733, 127
    %v1774 = vpop.permute.xlu0 %1773
    %1775 = vrot.lane.b32.xlu0 %v1734, 127
    %v1776 = vpop.permute.xlu0 %1775
    %1777 = vrot.lane.b32.xlu0 %v1735, 127
    %v1778 = vpop.permute.xlu0 %1777
    %1779 = vrot.lane.b32.xlu0 %v1736, 127
    %v1780 = vpop.permute.xlu0 %1779
    %1781 = vrot.lane.b32.xlu0 %v1737, 127
    %v1782 = vpop.permute.xlu0 %1781
    %1783 = vrot.lane.b32.xlu0 %v1738, 127
    %v1784 = vpop.permute.xlu0 %1783
    %1785 = vrot.lane.b32.xlu0 %v1739, 127
    %v1786 = vpop.permute.xlu0 %1785
    %1787 = vrot.lane.b32.xlu0 %v1740, 127
    %v1788 = vpop.permute.xlu0 %1787
    %v1805 = vadd.f32 %v1707, %v1758
    %v1806 = vadd.f32 %v1708, %v1760
    %v1807 = vadd.f32 %v1709, %v1762
    %v1808 = vadd.f32 %v1710, %v1764
    %v1809 = vadd.f32 %v1711, %v1766
    %v1810 = vadd.f32 %v1712, %v1768
    %v1811 = vadd.f32 %v1713, %v1770
    %v1812 = vadd.f32 %v1714, %v1772
    %v1813 = vadd.f32 %v1715, %v1774
    %v1814 = vadd.f32 %v1716, %v1776
    %v1815 = vadd.f32 %v1717, %v1778
    %v1816 = vadd.f32 %v1718, %v1780
    %v1817 = vadd.f32 %v1719, %v1782
    %v1818 = vadd.f32 %v1720, %v1784
    %v1819 = vadd.f32 %v1721, %v1786
    %v1820 = vadd.f32 %v1722, %v1788
    %s1821 = sld [smem:[#allocation4 + $0x24]]
    %v1822 = vstv %s1821
    %v1823 = vmul.f32 %v1822, %v326
    %v1824 = vmul.f32 %v1822, %v327
    %v1825 = vmul.f32 %v1822, %v328
    %v1826 = vmul.f32 %v1822, %v329
    %v1827 = vmul.f32 %v1822, %v330
    %v1828 = vmul.f32 %v1822, %v331
    %v1829 = vmul.f32 %v1822, %v332
    %v1830 = vmul.f32 %v1822, %v333
    %v1831 = vmul.f32 %v1822, %v334
    %v1832 = vmul.f32 %v1822, %v335
    %v1833 = vmul.f32 %v1822, %v336
    %v1834 = vmul.f32 %v1822, %v337
    %v1835 = vmul.f32 %v1822, %v338
    %v1836 = vmul.f32 %v1822, %v339
    %v1837 = vmul.f32 %v1822, %v340
    %v1838 = vmul.f32 %v1822, %v341
    %1855 = vrot.lane.b32.xlu0 %v1823, 127
    %v1856 = vpop.permute.xlu0 %1855
    %1857 = vrot.lane.b32.xlu0 %v1824, 127
    %v1858 = vpop.permute.xlu0 %1857
    %1859 = vrot.lane.b32.xlu0 %v1825, 127
    %v1860 = vpop.permute.xlu0 %1859
    %1861 = vrot.lane.b32.xlu0 %v1826, 127
    %v1862 = vpop.permute.xlu0 %1861
    %1863 = vrot.lane.b32.xlu0 %v1827, 127
    %v1864 = vpop.permute.xlu0 %1863
    %1865 = vrot.lane.b32.xlu0 %v1828, 127
    %v1866 = vpop.permute.xlu0 %1865
    %1867 = vrot.lane.b32.xlu0 %v1829, 127
    %v1868 = vpop.permute.xlu0 %1867
    %1869 = vrot.lane.b32.xlu0 %v1830, 127
    %v1870 = vpop.permute.xlu0 %1869
    %1871 = vrot.lane.b32.xlu0 %v1831, 127
    %v1872 = vpop.permute.xlu0 %1871
    %1873 = vrot.lane.b32.xlu0 %v1832, 127
    %v1874 = vpop.permute.xlu0 %1873
    %1875 = vrot.lane.b32.xlu0 %v1833, 127
    %v1876 = vpop.permute.xlu0 %1875
    %1877 = vrot.lane.b32.xlu0 %v1834, 127
    %v1878 = vpop.permute.xlu0 %1877
    %1879 = vrot.lane.b32.xlu0 %v1835, 127
    %v1880 = vpop.permute.xlu0 %1879
    %1881 = vrot.lane.b32.xlu0 %v1836, 127
    %v1882 = vpop.permute.xlu0 %1881
    %1883 = vrot.lane.b32.xlu0 %v1837, 127
    %v1884 = vpop.permute.xlu0 %1883
    %1885 = vrot.lane.b32.xlu0 %v1838, 127
    %v1886 = vpop.permute.xlu0 %1885
    %v1903 = vadd.f32 %v1805, %v1856
    %v1904 = vadd.f32 %v1806, %v1858
    %v1905 = vadd.f32 %v1807, %v1860
    %v1906 = vadd.f32 %v1808, %v1862
    %v1907 = vadd.f32 %v1809, %v1864
    %v1908 = vadd.f32 %v1810, %v1866
    %v1909 = vadd.f32 %v1811, %v1868
    %v1910 = vadd.f32 %v1812, %v1870
    %v1911 = vadd.f32 %v1813, %v1872
    %v1912 = vadd.f32 %v1814, %v1874
    %v1913 = vadd.f32 %v1815, %v1876
    %v1914 = vadd.f32 %v1816, %v1878
    %v1915 = vadd.f32 %v1817, %v1880
    %v1916 = vadd.f32 %v1818, %v1882
    %v1917 = vadd.f32 %v1819, %v1884
    %v1918 = vadd.f32 %v1820, %v1886
    %s1919 = sld [smem:[#allocation4 + $0x55]]
    %v1920 = vstv %s1919
    %v1921 = vmul.f32 %v1920, %v348
    %v1922 = vmul.f32 %v1920, %v349
    %v1923 = vmul.f32 %v1920, %v350
    %v1924 = vmul.f32 %v1920, %v351
    %v1925 = vmul.f32 %v1920, %v352
    %v1926 = vmul.f32 %v1920, %v353
    %v1927 = vmul.f32 %v1920, %v354
    %v1928 = vmul.f32 %v1920, %v355
    %v1929 = vmul.f32 %v1920, %v356
    %v1930 = vmul.f32 %v1920, %v357
    %v1931 = vmul.f32 %v1920, %v358
    %v1932 = vmul.f32 %v1920, %v359
    %v1933 = vmul.f32 %v1920, %v360
    %v1934 = vmul.f32 %v1920, %v361
    %v1935 = vmul.f32 %v1920, %v362
    %v1936 = vmul.f32 %v1920, %v363
    %1953 = vrot.lane.b32.xlu0 %v1921, 127
    %v1954 = vpop.permute.xlu0 %1953
    %1955 = vrot.lane.b32.xlu0 %v1922, 127
    %v1956 = vpop.permute.xlu0 %1955
    %1957 = vrot.lane.b32.xlu0 %v1923, 127
    %v1958 = vpop.permute.xlu0 %1957
    %1959 = vrot.lane.b32.xlu0 %v1924, 127
    %v1960 = vpop.permute.xlu0 %1959
    %1961 = vrot.lane.b32.xlu0 %v1925, 127
    %v1962 = vpop.permute.xlu0 %1961
    %1963 = vrot.lane.b32.xlu0 %v1926, 127
    %v1964 = vpop.permute.xlu0 %1963
    %1965 = vrot.lane.b32.xlu0 %v1927, 127
    %v1966 = vpop.permute.xlu0 %1965
    %1967 = vrot.lane.b32.xlu0 %v1928, 127
    %v1968 = vpop.permute.xlu0 %1967
    %1969 = vrot.lane.b32.xlu0 %v1929, 127
    %v1970 = vpop.permute.xlu0 %1969
    %1971 = vrot.lane.b32.xlu0 %v1930, 127
    %v1972 = vpop.permute.xlu0 %1971
    %1973 = vrot.lane.b32.xlu0 %v1931, 127
    %v1974 = vpop.permute.xlu0 %1973
    %1975 = vrot.lane.b32.xlu0 %v1932, 127
    %v1976 = vpop.permute.xlu0 %1975
    %1977 = vrot.lane.b32.xlu0 %v1933, 127
    %v1978 = vpop.permute.xlu0 %1977
    %1979 = vrot.lane.b32.xlu0 %v1934, 127
    %v1980 = vpop.permute.xlu0 %1979
    %1981 = vrot.lane.b32.xlu0 %v1935, 127
    %v1982 = vpop.permute.xlu0 %1981
    %1983 = vrot.lane.b32.xlu0 %v1936, 127
    %v1984 = vpop.permute.xlu0 %1983
    %v2001 = vadd.f32 %v1903, %v1954
    %v2002 = vadd.f32 %v1904, %v1956
    %v2003 = vadd.f32 %v1905, %v1958
    %v2004 = vadd.f32 %v1906, %v1960
    %v2005 = vadd.f32 %v1907, %v1962
    %v2006 = vadd.f32 %v1908, %v1964
    %v2007 = vadd.f32 %v1909, %v1966
    %v2008 = vadd.f32 %v1910, %v1968
    %v2009 = vadd.f32 %v1911, %v1970
    %v2010 = vadd.f32 %v1912, %v1972
    %v2011 = vadd.f32 %v1913, %v1974
    %v2012 = vadd.f32 %v1914, %v1976
    %v2013 = vadd.f32 %v1915, %v1978
    %v2014 = vadd.f32 %v1916, %v1980
    %v2015 = vadd.f32 %v1917, %v1982
    %v2016 = vadd.f32 %v1918, %v1984
    %s2017 = sld [smem:[#allocation4 + $0x2b]]
    %v2018 = vstv %s2017
    %v2019 = vmul.f32 %v2018, %v327
    %v2020 = vmul.f32 %v2018, %v328
    %v2021 = vmul.f32 %v2018, %v329
    %v2022 = vmul.f32 %v2018, %v330
    %v2023 = vmul.f32 %v2018, %v331
    %v2024 = vmul.f32 %v2018, %v332
    %v2025 = vmul.f32 %v2018, %v333
    %v2026 = vmul.f32 %v2018, %v334
    %v2027 = vmul.f32 %v2018, %v335
    %v2028 = vmul.f32 %v2018, %v336
    %v2029 = vmul.f32 %v2018, %v337
    %v2030 = vmul.f32 %v2018, %v338
    %v2031 = vmul.f32 %v2018, %v339
    %v2032 = vmul.f32 %v2018, %v340
    %v2033 = vmul.f32 %v2018, %v341
    %v2034 = vmul.f32 %v2018, %v342
    %2051 = vrot.lane.b32.xlu0 %v2019, 127
    %v2052 = vpop.permute.xlu0 %2051
    %2053 = vrot.lane.b32.xlu0 %v2020, 127
    %v2054 = vpop.permute.xlu0 %2053
    %2055 = vrot.lane.b32.xlu0 %v2021, 127
    %v2056 = vpop.permute.xlu0 %2055
    %2057 = vrot.lane.b32.xlu0 %v2022, 127
    %v2058 = vpop.permute.xlu0 %2057
    %2059 = vrot.lane.b32.xlu0 %v2023, 127
    %v2060 = vpop.permute.xlu0 %2059
    %2061 = vrot.lane.b32.xlu0 %v2024, 127
    %v2062 = vpop.permute.xlu0 %2061
    %2063 = vrot.lane.b32.xlu0 %v2025, 127
    %v2064 = vpop.permute.xlu0 %2063
    %2065 = vrot.lane.b32.xlu0 %v2026, 127
    %v2066 = vpop.permute.xlu0 %2065
    %2067 = vrot.lane.b32.xlu0 %v2027, 127
    %v2068 = vpop.permute.xlu0 %2067
    %2069 = vrot.lane.b32.xlu0 %v2028, 127
    %v2070 = vpop.permute.xlu0 %2069
    %2071 = vrot.lane.b32.xlu0 %v2029, 127
    %v2072 = vpop.permute.xlu0 %2071
    %2073 = vrot.lane.b32.xlu0 %v2030, 127
    %v2074 = vpop.permute.xlu0 %2073
    %2075 = vrot.lane.b32.xlu0 %v2031, 127
    %v2076 = vpop.permute.xlu0 %2075
    %2077 = vrot.lane.b32.xlu0 %v2032, 127
    %v2078 = vpop.permute.xlu0 %2077
    %2079 = vrot.lane.b32.xlu0 %v2033, 127
    %v2080 = vpop.permute.xlu0 %2079
    %2081 = vrot.lane.b32.xlu0 %v2034, 127
    %v2082 = vpop.permute.xlu0 %2081
    %v2099 = vadd.f32 %v2001, %v2052
    %v2100 = vadd.f32 %v2002, %v2054
    %v2101 = vadd.f32 %v2003, %v2056
    %v2102 = vadd.f32 %v2004, %v2058
    %v2103 = vadd.f32 %v2005, %v2060
    %v2104 = vadd.f32 %v2006, %v2062
    %v2105 = vadd.f32 %v2007, %v2064
    %v2106 = vadd.f32 %v2008, %v2066
    %v2107 = vadd.f32 %v2009, %v2068
    %v2108 = vadd.f32 %v2010, %v2070
    %v2109 = vadd.f32 %v2011, %v2072
    %v2110 = vadd.f32 %v2012, %v2074
    %v2111 = vadd.f32 %v2013, %v2076
    %v2112 = vadd.f32 %v2014, %v2078
    %v2113 = vadd.f32 %v2015, %v2080
    %v2114 = vadd.f32 %v2016, %v2082
    %s2115 = sld [smem:[#allocation4 + $0x5c]]
    %v2116 = vstv %s2115
    %v2117 = vmul.f32 %v2116, %v349
    %v2118 = vmul.f32 %v2116, %v350
    %v2119 = vmul.f32 %v2116, %v351
    %v2120 = vmul.f32 %v2116, %v352
    %v2121 = vmul.f32 %v2116, %v353
    %v2122 = vmul.f32 %v2116, %v354
    %v2123 = vmul.f32 %v2116, %v355
    %v2124 = vmul.f32 %v2116, %v356
    %v2125 = vmul.f32 %v2116, %v357
    %v2126 = vmul.f32 %v2116, %v358
    %v2127 = vmul.f32 %v2116, %v359
    %v2128 = vmul.f32 %v2116, %v360
    %v2129 = vmul.f32 %v2116, %v361
    %v2130 = vmul.f32 %v2116, %v362
    %v2131 = vmul.f32 %v2116, %v363
    %v2132 = vmul.f32 %v2116, %v364
    %2149 = vrot.lane.b32.xlu0 %v2117, 127
    %v2150 = vpop.permute.xlu0 %2149
    %2151 = vrot.lane.b32.xlu0 %v2118, 127
    %v2152 = vpop.permute.xlu0 %2151
    %2153 = vrot.lane.b32.xlu0 %v2119, 127
    %v2154 = vpop.permute.xlu0 %2153
    %2155 = vrot.lane.b32.xlu0 %v2120, 127
    %v2156 = vpop.permute.xlu0 %2155
    %2157 = vrot.lane.b32.xlu0 %v2121, 127
    %v2158 = vpop.permute.xlu0 %2157
    %2159 = vrot.lane.b32.xlu0 %v2122, 127
    %v2160 = vpop.permute.xlu0 %2159
    %2161 = vrot.lane.b32.xlu0 %v2123, 127
    %v2162 = vpop.permute.xlu0 %2161
    %2163 = vrot.lane.b32.xlu0 %v2124, 127
    %v2164 = vpop.permute.xlu0 %2163
    %2165 = vrot.lane.b32.xlu0 %v2125, 127
    %v2166 = vpop.permute.xlu0 %2165
    %2167 = vrot.lane.b32.xlu0 %v2126, 127
    %v2168 = vpop.permute.xlu0 %2167
    %2169 = vrot.lane.b32.xlu0 %v2127, 127
    %v2170 = vpop.permute.xlu0 %2169
    %2171 = vrot.lane.b32.xlu0 %v2128, 127
    %v2172 = vpop.permute.xlu0 %2171
    %2173 = vrot.lane.b32.xlu0 %v2129, 127
    %v2174 = vpop.permute.xlu0 %2173
    %2175 = vrot.lane.b32.xlu0 %v2130, 127
    %v2176 = vpop.permute.xlu0 %2175
    %2177 = vrot.lane.b32.xlu0 %v2131, 127
    %v2178 = vpop.permute.xlu0 %2177
    %2179 = vrot.lane.b32.xlu0 %v2132, 127
    %v2180 = vpop.permute.xlu0 %2179
    %v2197 = vadd.f32 %v2099, %v2150
    %v2198 = vadd.f32 %v2100, %v2152
    %v2199 = vadd.f32 %v2101, %v2154
    %v2200 = vadd.f32 %v2102, %v2156
    %v2201 = vadd.f32 %v2103, %v2158
    %v2202 = vadd.f32 %v2104, %v2160
    %v2203 = vadd.f32 %v2105, %v2162
    %v2204 = vadd.f32 %v2106, %v2164
    %v2205 = vadd.f32 %v2107, %v2166
    %v2206 = vadd.f32 %v2108, %v2168
    %v2207 = vadd.f32 %v2109, %v2170
    %v2208 = vadd.f32 %v2110, %v2172
    %v2209 = vadd.f32 %v2111, %v2174
    %v2210 = vadd.f32 %v2112, %v2176
    %v2211 = vadd.f32 %v2113, %v2178
    %v2212 = vadd.f32 %v2114, %v2180
    %s2213 = sld [smem:[#allocation4 + $0x2]]
    %v2214 = vstv %s2213
    %v2215 = vmul.f32 %v2214, %v321
    %v2216 = vmul.f32 %v2214, %v322
    %v2217 = vmul.f32 %v2214, %v323
    %v2218 = vmul.f32 %v2214, %v324
    %v2219 = vmul.f32 %v2214, %v325
    %v2220 = vmul.f32 %v2214, %v326
    %v2221 = vmul.f32 %v2214, %v327
    %v2222 = vmul.f32 %v2214, %v328
    %v2223 = vmul.f32 %v2214, %v329
    %v2224 = vmul.f32 %v2214, %v330
    %v2225 = vmul.f32 %v2214, %v331
    %v2226 = vmul.f32 %v2214, %v332
    %v2227 = vmul.f32 %v2214, %v333
    %v2228 = vmul.f32 %v2214, %v334
    %v2229 = vmul.f32 %v2214, %v335
    %v2230 = vmul.f32 %v2214, %v336
    %2247 = vrot.lane.b32.xlu0 %v2215, 126
    %v2248 = vpop.permute.xlu0 %2247
    %2249 = vrot.lane.b32.xlu0 %v2216, 126
    %v2250 = vpop.permute.xlu0 %2249
    %2251 = vrot.lane.b32.xlu0 %v2217, 126
    %v2252 = vpop.permute.xlu0 %2251
    %2253 = vrot.lane.b32.xlu0 %v2218, 126
    %v2254 = vpop.permute.xlu0 %2253
    %2255 = vrot.lane.b32.xlu0 %v2219, 126
    %v2256 = vpop.permute.xlu0 %2255
    %2257 = vrot.lane.b32.xlu0 %v2220, 126
    %v2258 = vpop.permute.xlu0 %2257
    %2259 = vrot.lane.b32.xlu0 %v2221, 126
    %v2260 = vpop.permute.xlu0 %2259
    %2261 = vrot.lane.b32.xlu0 %v2222, 126
    %v2262 = vpop.permute.xlu0 %2261
    %2263 = vrot.lane.b32.xlu0 %v2223, 126
    %v2264 = vpop.permute.xlu0 %2263
    %2265 = vrot.lane.b32.xlu0 %v2224, 126
    %v2266 = vpop.permute.xlu0 %2265
    %2267 = vrot.lane.b32.xlu0 %v2225, 126
    %v2268 = vpop.permute.xlu0 %2267
    %2269 = vrot.lane.b32.xlu0 %v2226, 126
    %v2270 = vpop.permute.xlu0 %2269
    %2271 = vrot.lane.b32.xlu0 %v2227, 126
    %v2272 = vpop.permute.xlu0 %2271
    %2273 = vrot.lane.b32.xlu0 %v2228, 126
    %v2274 = vpop.permute.xlu0 %2273
    %2275 = vrot.lane.b32.xlu0 %v2229, 126
    %v2276 = vpop.permute.xlu0 %2275
    %2277 = vrot.lane.b32.xlu0 %v2230, 126
    %v2278 = vpop.permute.xlu0 %2277
    %v2295 = vadd.f32 %v2197, %v2248
    %v2296 = vadd.f32 %v2198, %v2250
    %v2297 = vadd.f32 %v2199, %v2252
    %v2298 = vadd.f32 %v2200, %v2254
    %v2299 = vadd.f32 %v2201, %v2256
    %v2300 = vadd.f32 %v2202, %v2258
    %v2301 = vadd.f32 %v2203, %v2260
    %v2302 = vadd.f32 %v2204, %v2262
    %v2303 = vadd.f32 %v2205, %v2264
    %v2304 = vadd.f32 %v2206, %v2266
    %v2305 = vadd.f32 %v2207, %v2268
    %v2306 = vadd.f32 %v2208, %v2270
    %v2307 = vadd.f32 %v2209, %v2272
    %v2308 = vadd.f32 %v2210, %v2274
    %v2309 = vadd.f32 %v2211, %v2276
    %v2310 = vadd.f32 %v2212, %v2278
    %s2311 = sld [smem:[#allocation4 + $0x33]]
    %v2312 = vstv %s2311
    %v2313 = vmul.f32 %v2312, %v343
    %v2314 = vmul.f32 %v2312, %v344
    %v2315 = vmul.f32 %v2312, %v345
    %v2316 = vmul.f32 %v2312, %v346
    %v2317 = vmul.f32 %v2312, %v347
    %v2318 = vmul.f32 %v2312, %v348
    %v2319 = vmul.f32 %v2312, %v349
    %v2320 = vmul.f32 %v2312, %v350
    %v2321 = vmul.f32 %v2312, %v351
    %v2322 = vmul.f32 %v2312, %v352
    %v2323 = vmul.f32 %v2312, %v353
    %v2324 = vmul.f32 %v2312, %v354
    %v2325 = vmul.f32 %v2312, %v355
    %v2326 = vmul.f32 %v2312, %v356
    %v2327 = vmul.f32 %v2312, %v357
    %v2328 = vmul.f32 %v2312, %v358
    %2345 = vrot.lane.b32.xlu0 %v2313, 126
    %v2346 = vpop.permute.xlu0 %2345
    %2347 = vrot.lane.b32.xlu0 %v2314, 126
    %v2348 = vpop.permute.xlu0 %2347
    %2349 = vrot.lane.b32.xlu0 %v2315, 126
    %v2350 = vpop.permute.xlu0 %2349
    %2351 = vrot.lane.b32.xlu0 %v2316, 126
    %v2352 = vpop.permute.xlu0 %2351
    %2353 = vrot.lane.b32.xlu0 %v2317, 126
    %v2354 = vpop.permute.xlu0 %2353
    %2355 = vrot.lane.b32.xlu0 %v2318, 126
    %v2356 = vpop.permute.xlu0 %2355
    %2357 = vrot.lane.b32.xlu0 %v2319, 126
    %v2358 = vpop.permute.xlu0 %2357
    %2359 = vrot.lane.b32.xlu0 %v2320, 126
    %v2360 = vpop.permute.xlu0 %2359
    %2361 = vrot.lane.b32.xlu0 %v2321, 126
    %v2362 = vpop.permute.xlu0 %2361
    %2363 = vrot.lane.b32.xlu0 %v2322, 126
    %v2364 = vpop.permute.xlu0 %2363
    %2365 = vrot.lane.b32.xlu0 %v2323, 126
    %v2366 = vpop.permute.xlu0 %2365
    %2367 = vrot.lane.b32.xlu0 %v2324, 126
    %v2368 = vpop.permute.xlu0 %2367
    %2369 = vrot.lane.b32.xlu0 %v2325, 126
    %v2370 = vpop.permute.xlu0 %2369
    %2371 = vrot.lane.b32.xlu0 %v2326, 126
    %v2372 = vpop.permute.xlu0 %2371
    %2373 = vrot.lane.b32.xlu0 %v2327, 126
    %v2374 = vpop.permute.xlu0 %2373
    %2375 = vrot.lane.b32.xlu0 %v2328, 126
    %v2376 = vpop.permute.xlu0 %2375
    %v2393 = vadd.f32 %v2295, %v2346
    %v2394 = vadd.f32 %v2296, %v2348
    %v2395 = vadd.f32 %v2297, %v2350
    %v2396 = vadd.f32 %v2298, %v2352
    %v2397 = vadd.f32 %v2299, %v2354
    %v2398 = vadd.f32 %v2300, %v2356
    %v2399 = vadd.f32 %v2301, %v2358
    %v2400 = vadd.f32 %v2302, %v2360
    %v2401 = vadd.f32 %v2303, %v2362
    %v2402 = vadd.f32 %v2304, %v2364
    %v2403 = vadd.f32 %v2305, %v2366
    %v2404 = vadd.f32 %v2306, %v2368
    %v2405 = vadd.f32 %v2307, %v2370
    %v2406 = vadd.f32 %v2308, %v2372
    %v2407 = vadd.f32 %v2309, %v2374
    %v2408 = vadd.f32 %v2310, %v2376
    %s2409 = sld [smem:[#allocation4 + $0x9]]
    %v2410 = vstv %s2409
    %v2411 = vmul.f32 %v2410, %v322
    %v2412 = vmul.f32 %v2410, %v323
    %v2413 = vmul.f32 %v2410, %v324
    %v2414 = vmul.f32 %v2410, %v325
    %v2415 = vmul.f32 %v2410, %v326
    %v2416 = vmul.f32 %v2410, %v327
    %v2417 = vmul.f32 %v2410, %v328
    %v2418 = vmul.f32 %v2410, %v329
    %v2419 = vmul.f32 %v2410, %v330
    %v2420 = vmul.f32 %v2410, %v331
    %v2421 = vmul.f32 %v2410, %v332
    %v2422 = vmul.f32 %v2410, %v333
    %v2423 = vmul.f32 %v2410, %v334
    %v2424 = vmul.f32 %v2410, %v335
    %v2425 = vmul.f32 %v2410, %v336
    %v2426 = vmul.f32 %v2410, %v337
    %2443 = vrot.lane.b32.xlu0 %v2411, 126
    %v2444 = vpop.permute.xlu0 %2443
    %2445 = vrot.lane.b32.xlu0 %v2412, 126
    %v2446 = vpop.permute.xlu0 %2445
    %2447 = vrot.lane.b32.xlu0 %v2413, 126
    %v2448 = vpop.permute.xlu0 %2447
    %2449 = vrot.lane.b32.xlu0 %v2414, 126
    %v2450 = vpop.permute.xlu0 %2449
    %2451 = vrot.lane.b32.xlu0 %v2415, 126
    %v2452 = vpop.permute.xlu0 %2451
    %2453 = vrot.lane.b32.xlu0 %v2416, 126
    %v2454 = vpop.permute.xlu0 %2453
    %2455 = vrot.lane.b32.xlu0 %v2417, 126
    %v2456 = vpop.permute.xlu0 %2455
    %2457 = vrot.lane.b32.xlu0 %v2418, 126
    %v2458 = vpop.permute.xlu0 %2457
    %2459 = vrot.lane.b32.xlu0 %v2419, 126
    %v2460 = vpop.permute.xlu0 %2459
    %2461 = vrot.lane.b32.xlu0 %v2420, 126
    %v2462 = vpop.permute.xlu0 %2461
    %2463 = vrot.lane.b32.xlu0 %v2421, 126
    %v2464 = vpop.permute.xlu0 %2463
    %2465 = vrot.lane.b32.xlu0 %v2422, 126
    %v2466 = vpop.permute.xlu0 %2465
    %2467 = vrot.lane.b32.xlu0 %v2423, 126
    %v2468 = vpop.permute.xlu0 %2467
    %2469 = vrot.lane.b32.xlu0 %v2424, 126
    %v2470 = vpop.permute.xlu0 %2469
    %2471 = vrot.lane.b32.xlu0 %v2425, 126
    %v2472 = vpop.permute.xlu0 %2471
    %2473 = vrot.lane.b32.xlu0 %v2426, 126
    %v2474 = vpop.permute.xlu0 %2473
    %v2491 = vadd.f32 %v2393, %v2444
    %v2492 = vadd.f32 %v2394, %v2446
    %v2493 = vadd.f32 %v2395, %v2448
    %v2494 = vadd.f32 %v2396, %v2450
    %v2495 = vadd.f32 %v2397, %v2452
    %v2496 = vadd.f32 %v2398, %v2454
    %v2497 = vadd.f32 %v2399, %v2456
    %v2498 = vadd.f32 %v2400, %v2458
    %v2499 = vadd.f32 %v2401, %v2460
    %v2500 = vadd.f32 %v2402, %v2462
    %v2501 = vadd.f32 %v2403, %v2464
    %v2502 = vadd.f32 %v2404, %v2466
    %v2503 = vadd.f32 %v2405, %v2468
    %v2504 = vadd.f32 %v2406, %v2470
    %v2505 = vadd.f32 %v2407, %v2472
    %v2506 = vadd.f32 %v2408, %v2474
    %s2507 = sld [smem:[#allocation4 + $0x3a]]
    %v2508 = vstv %s2507
    %v2509 = vmul.f32 %v2508, %v344
    %v2510 = vmul.f32 %v2508, %v345
    %v2511 = vmul.f32 %v2508, %v346
    %v2512 = vmul.f32 %v2508, %v347
    %v2513 = vmul.f32 %v2508, %v348
    %v2514 = vmul.f32 %v2508, %v349
    %v2515 = vmul.f32 %v2508, %v350
    %v2516 = vmul.f32 %v2508, %v351
    %v2517 = vmul.f32 %v2508, %v352
    %v2518 = vmul.f32 %v2508, %v353
    %v2519 = vmul.f32 %v2508, %v354
    %v2520 = vmul.f32 %v2508, %v355
    %v2521 = vmul.f32 %v2508, %v356
    %v2522 = vmul.f32 %v2508, %v357
    %v2523 = vmul.f32 %v2508, %v358
    %v2524 = vmul.f32 %v2508, %v359
    %2541 = vrot.lane.b32.xlu0 %v2509, 126
    %v2542 = vpop.permute.xlu0 %2541
    %2543 = vrot.lane.b32.xlu0 %v2510, 126
    %v2544 = vpop.permute.xlu0 %2543
    %2545 = vrot.lane.b32.xlu0 %v2511, 126
    %v2546 = vpop.permute.xlu0 %2545
    %2547 = vrot.lane.b32.xlu0 %v2512, 126
    %v2548 = vpop.permute.xlu0 %2547
    %2549 = vrot.lane.b32.xlu0 %v2513, 126
    %v2550 = vpop.permute.xlu0 %2549
    %2551 = vrot.lane.b32.xlu0 %v2514, 126
    %v2552 = vpop.permute.xlu0 %2551
    %2553 = vrot.lane.b32.xlu0 %v2515, 126
    %v2554 = vpop.permute.xlu0 %2553
    %2555 = vrot.lane.b32.xlu0 %v2516, 126
    %v2556 = vpop.permute.xlu0 %2555
    %2557 = vrot.lane.b32.xlu0 %v2517, 126
    %v2558 = vpop.permute.xlu0 %2557
    %2559 = vrot.lane.b32.xlu0 %v2518, 126
    %v2560 = vpop.permute.xlu0 %2559
    %2561 = vrot.lane.b32.xlu0 %v2519, 126
    %v2562 = vpop.permute.xlu0 %2561
    %2563 = vrot.lane.b32.xlu0 %v2520, 126
    %v2564 = vpop.permute.xlu0 %2563
    %2565 = vrot.lane.b32.xlu0 %v2521, 126
    %v2566 = vpop.permute.xlu0 %2565
    %2567 = vrot.lane.b32.xlu0 %v2522, 126
    %v2568 = vpop.permute.xlu0 %2567
    %2569 = vrot.lane.b32.xlu0 %v2523, 126
    %v2570 = vpop.permute.xlu0 %2569
    %2571 = vrot.lane.b32.xlu0 %v2524, 126
    %v2572 = vpop.permute.xlu0 %2571
    %v2589 = vadd.f32 %v2491, %v2542
    %v2590 = vadd.f32 %v2492, %v2544
    %v2591 = vadd.f32 %v2493, %v2546
    %v2592 = vadd.f32 %v2494, %v2548
    %v2593 = vadd.f32 %v2495, %v2550
    %v2594 = vadd.f32 %v2496, %v2552
    %v2595 = vadd.f32 %v2497, %v2554
    %v2596 = vadd.f32 %v2498, %v2556
    %v2597 = vadd.f32 %v2499, %v2558
    %v2598 = vadd.f32 %v2500, %v2560
    %v2599 = vadd.f32 %v2501, %v2562
    %v2600 = vadd.f32 %v2502, %v2564
    %v2601 = vadd.f32 %v2503, %v2566
    %v2602 = vadd.f32 %v2504, %v2568
    %v2603 = vadd.f32 %v2505, %v2570
    %v2604 = vadd.f32 %v2506, %v2572
    %s2605 = sld [smem:[#allocation4 + $0x10]]
    %v2606 = vstv %s2605
    %v2607 = vmul.f32 %v2606, %v323
    %v2608 = vmul.f32 %v2606, %v324
    %v2609 = vmul.f32 %v2606, %v325
    %v2610 = vmul.f32 %v2606, %v326
    %v2611 = vmul.f32 %v2606, %v327
    %v2612 = vmul.f32 %v2606, %v328
    %v2613 = vmul.f32 %v2606, %v329
    %v2614 = vmul.f32 %v2606, %v330
    %v2615 = vmul.f32 %v2606, %v331
    %v2616 = vmul.f32 %v2606, %v332
    %v2617 = vmul.f32 %v2606, %v333
    %v2618 = vmul.f32 %v2606, %v334
    %v2619 = vmul.f32 %v2606, %v335
    %v2620 = vmul.f32 %v2606, %v336
    %v2621 = vmul.f32 %v2606, %v337
    %v2622 = vmul.f32 %v2606, %v338
    %2639 = vrot.lane.b32.xlu0 %v2607, 126
    %v2640 = vpop.permute.xlu0 %2639
    %2641 = vrot.lane.b32.xlu0 %v2608, 126
    %v2642 = vpop.permute.xlu0 %2641
    %2643 = vrot.lane.b32.xlu0 %v2609, 126
    %v2644 = vpop.permute.xlu0 %2643
    %2645 = vrot.lane.b32.xlu0 %v2610, 126
    %v2646 = vpop.permute.xlu0 %2645
    %2647 = vrot.lane.b32.xlu0 %v2611, 126
    %v2648 = vpop.permute.xlu0 %2647
    %2649 = vrot.lane.b32.xlu0 %v2612, 126
    %v2650 = vpop.permute.xlu0 %2649
    %2651 = vrot.lane.b32.xlu0 %v2613, 126
    %v2652 = vpop.permute.xlu0 %2651
    %2653 = vrot.lane.b32.xlu0 %v2614, 126
    %v2654 = vpop.permute.xlu0 %2653
    %2655 = vrot.lane.b32.xlu0 %v2615, 126
    %v2656 = vpop.permute.xlu0 %2655
    %2657 = vrot.lane.b32.xlu0 %v2616, 126
    %v2658 = vpop.permute.xlu0 %2657
    %2659 = vrot.lane.b32.xlu0 %v2617, 126
    %v2660 = vpop.permute.xlu0 %2659
    %2661 = vrot.lane.b32.xlu0 %v2618, 126
    %v2662 = vpop.permute.xlu0 %2661
    %2663 = vrot.lane.b32.xlu0 %v2619, 126
    %v2664 = vpop.permute.xlu0 %2663
    %2665 = vrot.lane.b32.xlu0 %v2620, 126
    %v2666 = vpop.permute.xlu0 %2665
    %2667 = vrot.lane.b32.xlu0 %v2621, 126
    %v2668 = vpop.permute.xlu0 %2667
    %2669 = vrot.lane.b32.xlu0 %v2622, 126
    %v2670 = vpop.permute.xlu0 %2669
    %v2687 = vadd.f32 %v2589, %v2640
    %v2688 = vadd.f32 %v2590, %v2642
    %v2689 = vadd.f32 %v2591, %v2644
    %v2690 = vadd.f32 %v2592, %v2646
    %v2691 = vadd.f32 %v2593, %v2648
    %v2692 = vadd.f32 %v2594, %v2650
    %v2693 = vadd.f32 %v2595, %v2652
    %v2694 = vadd.f32 %v2596, %v2654
    %v2695 = vadd.f32 %v2597, %v2656
    %v2696 = vadd.f32 %v2598, %v2658
    %v2697 = vadd.f32 %v2599, %v2660
    %v2698 = vadd.f32 %v2600, %v2662
    %v2699 = vadd.f32 %v2601, %v2664
    %v2700 = vadd.f32 %v2602, %v2666
    %v2701 = vadd.f32 %v2603, %v2668
    %v2702 = vadd.f32 %v2604, %v2670
    %s2703 = sld [smem:[#allocation4 + $0x41]]
    %v2704 = vstv %s2703
    %v2705 = vmul.f32 %v2704, %v345
    %v2706 = vmul.f32 %v2704, %v346
    %v2707 = vmul.f32 %v2704, %v347
    %v2708 = vmul.f32 %v2704, %v348
    %v2709 = vmul.f32 %v2704, %v349
    %v2710 = vmul.f32 %v2704, %v350
    %v2711 = vmul.f32 %v2704, %v351
    %v2712 = vmul.f32 %v2704, %v352
    %v2713 = vmul.f32 %v2704, %v353
    %v2714 = vmul.f32 %v2704, %v354
    %v2715 = vmul.f32 %v2704, %v355
    %v2716 = vmul.f32 %v2704, %v356
    %v2717 = vmul.f32 %v2704, %v357
    %v2718 = vmul.f32 %v2704, %v358
    %v2719 = vmul.f32 %v2704, %v359
    %v2720 = vmul.f32 %v2704, %v360
    %2737 = vrot.lane.b32.xlu0 %v2705, 126
    %v2738 = vpop.permute.xlu0 %2737
    %2739 = vrot.lane.b32.xlu0 %v2706, 126
    %v2740 = vpop.permute.xlu0 %2739
    %2741 = vrot.lane.b32.xlu0 %v2707, 126
    %v2742 = vpop.permute.xlu0 %2741
    %2743 = vrot.lane.b32.xlu0 %v2708, 126
    %v2744 = vpop.permute.xlu0 %2743
    %2745 = vrot.lane.b32.xlu0 %v2709, 126
    %v2746 = vpop.permute.xlu0 %2745
    %2747 = vrot.lane.b32.xlu0 %v2710, 126
    %v2748 = vpop.permute.xlu0 %2747
    %2749 = vrot.lane.b32.xlu0 %v2711, 126
    %v2750 = vpop.permute.xlu0 %2749
    %2751 = vrot.lane.b32.xlu0 %v2712, 126
    %v2752 = vpop.permute.xlu0 %2751
    %2753 = vrot.lane.b32.xlu0 %v2713, 126
    %v2754 = vpop.permute.xlu0 %2753
    %2755 = vrot.lane.b32.xlu0 %v2714, 126
    %v2756 = vpop.permute.xlu0 %2755
    %2757 = vrot.lane.b32.xlu0 %v2715, 126
    %v2758 = vpop.permute.xlu0 %2757
    %2759 = vrot.lane.b32.xlu0 %v2716, 126
    %v2760 = vpop.permute.xlu0 %2759
    %2761 = vrot.lane.b32.xlu0 %v2717, 126
    %v2762 = vpop.permute.xlu0 %2761
    %2763 = vrot.lane.b32.xlu0 %v2718, 126
    %v2764 = vpop.permute.xlu0 %2763
    %2765 = vrot.lane.b32.xlu0 %v2719, 126
    %v2766 = vpop.permute.xlu0 %2765
    %2767 = vrot.lane.b32.xlu0 %v2720, 126
    %v2768 = vpop.permute.xlu0 %2767
    %v2785 = vadd.f32 %v2687, %v2738
    %v2786 = vadd.f32 %v2688, %v2740
    %v2787 = vadd.f32 %v2689, %v2742
    %v2788 = vadd.f32 %v2690, %v2744
    %v2789 = vadd.f32 %v2691, %v2746
    %v2790 = vadd.f32 %v2692, %v2748
    %v2791 = vadd.f32 %v2693, %v2750
    %v2792 = vadd.f32 %v2694, %v2752
    %v2793 = vadd.f32 %v2695, %v2754
    %v2794 = vadd.f32 %v2696, %v2756
    %v2795 = vadd.f32 %v2697, %v2758
    %v2796 = vadd.f32 %v2698, %v2760
    %v2797 = vadd.f32 %v2699, %v2762
    %v2798 = vadd.f32 %v2700, %v2764
    %v2799 = vadd.f32 %v2701, %v2766
    %v2800 = vadd.f32 %v2702, %v2768
    %s2801 = sld [smem:[#allocation4 + $0x17]]
    %v2802 = vstv %s2801
    %v2803 = vmul.f32 %v2802, %v324
    %v2804 = vmul.f32 %v2802, %v325
    %v2805 = vmul.f32 %v2802, %v326
    %v2806 = vmul.f32 %v2802, %v327
    %v2807 = vmul.f32 %v2802, %v328
    %v2808 = vmul.f32 %v2802, %v329
    %v2809 = vmul.f32 %v2802, %v330
    %v2810 = vmul.f32 %v2802, %v331
    %v2811 = vmul.f32 %v2802, %v332
    %v2812 = vmul.f32 %v2802, %v333
    %v2813 = vmul.f32 %v2802, %v334
    %v2814 = vmul.f32 %v2802, %v335
    %v2815 = vmul.f32 %v2802, %v336
    %v2816 = vmul.f32 %v2802, %v337
    %v2817 = vmul.f32 %v2802, %v338
    %v2818 = vmul.f32 %v2802, %v339
    %2835 = vrot.lane.b32.xlu0 %v2803, 126
    %v2836 = vpop.permute.xlu0 %2835
    %2837 = vrot.lane.b32.xlu0 %v2804, 126
    %v2838 = vpop.permute.xlu0 %2837
    %2839 = vrot.lane.b32.xlu0 %v2805, 126
    %v2840 = vpop.permute.xlu0 %2839
    %2841 = vrot.lane.b32.xlu0 %v2806, 126
    %v2842 = vpop.permute.xlu0 %2841
    %2843 = vrot.lane.b32.xlu0 %v2807, 126
    %v2844 = vpop.permute.xlu0 %2843
    %2845 = vrot.lane.b32.xlu0 %v2808, 126
    %v2846 = vpop.permute.xlu0 %2845
    %2847 = vrot.lane.b32.xlu0 %v2809, 126
    %v2848 = vpop.permute.xlu0 %2847
    %2849 = vrot.lane.b32.xlu0 %v2810, 126
    %v2850 = vpop.permute.xlu0 %2849
    %2851 = vrot.lane.b32.xlu0 %v2811, 126
    %v2852 = vpop.permute.xlu0 %2851
    %2853 = vrot.lane.b32.xlu0 %v2812, 126
    %v2854 = vpop.permute.xlu0 %2853
    %2855 = vrot.lane.b32.xlu0 %v2813, 126
    %v2856 = vpop.permute.xlu0 %2855
    %2857 = vrot.lane.b32.xlu0 %v2814, 126
    %v2858 = vpop.permute.xlu0 %2857
    %2859 = vrot.lane.b32.xlu0 %v2815, 126
    %v2860 = vpop.permute.xlu0 %2859
    %2861 = vrot.lane.b32.xlu0 %v2816, 126
    %v2862 = vpop.permute.xlu0 %2861
    %2863 = vrot.lane.b32.xlu0 %v2817, 126
    %v2864 = vpop.permute.xlu0 %2863
    %2865 = vrot.lane.b32.xlu0 %v2818, 126
    %v2866 = vpop.permute.xlu0 %2865
    %v2883 = vadd.f32 %v2785, %v2836
    %v2884 = vadd.f32 %v2786, %v2838
    %v2885 = vadd.f32 %v2787, %v2840
    %v2886 = vadd.f32 %v2788, %v2842
    %v2887 = vadd.f32 %v2789, %v2844
    %v2888 = vadd.f32 %v2790, %v2846
    %v2889 = vadd.f32 %v2791, %v2848
    %v2890 = vadd.f32 %v2792, %v2850
    %v2891 = vadd.f32 %v2793, %v2852
    %v2892 = vadd.f32 %v2794, %v2854
    %v2893 = vadd.f32 %v2795, %v2856
    %v2894 = vadd.f32 %v2796, %v2858
    %v2895 = vadd.f32 %v2797, %v2860
    %v2896 = vadd.f32 %v2798, %v2862
    %v2897 = vadd.f32 %v2799, %v2864
    %v2898 = vadd.f32 %v2800, %v2866
    %s2899 = sld [smem:[#allocation4 + $0x48]]
    %v2900 = vstv %s2899
    %v2901 = vmul.f32 %v2900, %v346
    %v2902 = vmul.f32 %v2900, %v347
    %v2903 = vmul.f32 %v2900, %v348
    %v2904 = vmul.f32 %v2900, %v349
    %v2905 = vmul.f32 %v2900, %v350
    %v2906 = vmul.f32 %v2900, %v351
    %v2907 = vmul.f32 %v2900, %v352
    %v2908 = vmul.f32 %v2900, %v353
    %v2909 = vmul.f32 %v2900, %v354
    %v2910 = vmul.f32 %v2900, %v355
    %v2911 = vmul.f32 %v2900, %v356
    %v2912 = vmul.f32 %v2900, %v357
    %v2913 = vmul.f32 %v2900, %v358
    %v2914 = vmul.f32 %v2900, %v359
    %v2915 = vmul.f32 %v2900, %v360
    %v2916 = vmul.f32 %v2900, %v361
    %2933 = vrot.lane.b32.xlu0 %v2901, 126
    %v2934 = vpop.permute.xlu0 %2933
    %2935 = vrot.lane.b32.xlu0 %v2902, 126
    %v2936 = vpop.permute.xlu0 %2935
    %2937 = vrot.lane.b32.xlu0 %v2903, 126
    %v2938 = vpop.permute.xlu0 %2937
    %2939 = vrot.lane.b32.xlu0 %v2904, 126
    %v2940 = vpop.permute.xlu0 %2939
    %2941 = vrot.lane.b32.xlu0 %v2905, 126
    %v2942 = vpop.permute.xlu0 %2941
    %2943 = vrot.lane.b32.xlu0 %v2906, 126
    %v2944 = vpop.permute.xlu0 %2943
    %2945 = vrot.lane.b32.xlu0 %v2907, 126
    %v2946 = vpop.permute.xlu0 %2945
    %2947 = vrot.lane.b32.xlu0 %v2908, 126
    %v2948 = vpop.permute.xlu0 %2947
    %2949 = vrot.lane.b32.xlu0 %v2909, 126
    %v2950 = vpop.permute.xlu0 %2949
    %2951 = vrot.lane.b32.xlu0 %v2910, 126
    %v2952 = vpop.permute.xlu0 %2951
    %2953 = vrot.lane.b32.xlu0 %v2911, 126
    %v2954 = vpop.permute.xlu0 %2953
    %2955 = vrot.lane.b32.xlu0 %v2912, 126
    %v2956 = vpop.permute.xlu0 %2955
    %2957 = vrot.lane.b32.xlu0 %v2913, 126
    %v2958 = vpop.permute.xlu0 %2957
    %2959 = vrot.lane.b32.xlu0 %v2914, 126
    %v2960 = vpop.permute.xlu0 %2959
    %2961 = vrot.lane.b32.xlu0 %v2915, 126
    %v2962 = vpop.permute.xlu0 %2961
    %2963 = vrot.lane.b32.xlu0 %v2916, 126
    %v2964 = vpop.permute.xlu0 %2963
    %v2981 = vadd.f32 %v2883, %v2934
    %v2982 = vadd.f32 %v2884, %v2936
    %v2983 = vadd.f32 %v2885, %v2938
    %v2984 = vadd.f32 %v2886, %v2940
    %v2985 = vadd.f32 %v2887, %v2942
    %v2986 = vadd.f32 %v2888, %v2944
    %v2987 = vadd.f32 %v2889, %v2946
    %v2988 = vadd.f32 %v2890, %v2948
    %v2989 = vadd.f32 %v2891, %v2950
    %v2990 = vadd.f32 %v2892, %v2952
    %v2991 = vadd.f32 %v2893, %v2954
    %v2992 = vadd.f32 %v2894, %v2956
    %v2993 = vadd.f32 %v2895, %v2958
    %v2994 = vadd.f32 %v2896, %v2960
    %v2995 = vadd.f32 %v2897, %v2962
    %v2996 = vadd.f32 %v2898, %v2964
    %s2997 = sld [smem:[#allocation4 + $0x1e]]
    %v2998 = vstv %s2997
    %v2999 = vmul.f32 %v2998, %v325
    %v3000 = vmul.f32 %v2998, %v326
    %v3001 = vmul.f32 %v2998, %v327
    %v3002 = vmul.f32 %v2998, %v328
    %v3003 = vmul.f32 %v2998, %v329
    %v3004 = vmul.f32 %v2998, %v330
    %v3005 = vmul.f32 %v2998, %v331
    %v3006 = vmul.f32 %v2998, %v332
    %v3007 = vmul.f32 %v2998, %v333
    %v3008 = vmul.f32 %v2998, %v334
    %v3009 = vmul.f32 %v2998, %v335
    %v3010 = vmul.f32 %v2998, %v336
    %v3011 = vmul.f32 %v2998, %v337
    %v3012 = vmul.f32 %v2998, %v338
    %v3013 = vmul.f32 %v2998, %v339
    %v3014 = vmul.f32 %v2998, %v340
    %3031 = vrot.lane.b32.xlu0 %v2999, 126
    %v3032 = vpop.permute.xlu0 %3031
    %3033 = vrot.lane.b32.xlu0 %v3000, 126
    %v3034 = vpop.permute.xlu0 %3033
    %3035 = vrot.lane.b32.xlu0 %v3001, 126
    %v3036 = vpop.permute.xlu0 %3035
    %3037 = vrot.lane.b32.xlu0 %v3002, 126
    %v3038 = vpop.permute.xlu0 %3037
    %3039 = vrot.lane.b32.xlu0 %v3003, 126
    %v3040 = vpop.permute.xlu0 %3039
    %3041 = vrot.lane.b32.xlu0 %v3004, 126
    %v3042 = vpop.permute.xlu0 %3041
    %3043 = vrot.lane.b32.xlu0 %v3005, 126
    %v3044 = vpop.permute.xlu0 %3043
    %3045 = vrot.lane.b32.xlu0 %v3006, 126
    %v3046 = vpop.permute.xlu0 %3045
    %3047 = vrot.lane.b32.xlu0 %v3007, 126
    %v3048 = vpop.permute.xlu0 %3047
    %3049 = vrot.lane.b32.xlu0 %v3008, 126
    %v3050 = vpop.permute.xlu0 %3049
    %3051 = vrot.lane.b32.xlu0 %v3009, 126
    %v3052 = vpop.permute.xlu0 %3051
    %3053 = vrot.lane.b32.xlu0 %v3010, 126
    %v3054 = vpop.permute.xlu0 %3053
    %3055 = vrot.lane.b32.xlu0 %v3011, 126
    %v3056 = vpop.permute.xlu0 %3055
    %3057 = vrot.lane.b32.xlu0 %v3012, 126
    %v3058 = vpop.permute.xlu0 %3057
    %3059 = vrot.lane.b32.xlu0 %v3013, 126
    %v3060 = vpop.permute.xlu0 %3059
    %3061 = vrot.lane.b32.xlu0 %v3014, 126
    %v3062 = vpop.permute.xlu0 %3061
    %v3079 = vadd.f32 %v2981, %v3032
    %v3080 = vadd.f32 %v2982, %v3034
    %v3081 = vadd.f32 %v2983, %v3036
    %v3082 = vadd.f32 %v2984, %v3038
    %v3083 = vadd.f32 %v2985, %v3040
    %v3084 = vadd.f32 %v2986, %v3042
    %v3085 = vadd.f32 %v2987, %v3044
    %v3086 = vadd.f32 %v2988, %v3046
    %v3087 = vadd.f32 %v2989, %v3048
    %v3088 = vadd.f32 %v2990, %v3050
    %v3089 = vadd.f32 %v2991, %v3052
    %v3090 = vadd.f32 %v2992, %v3054
    %v3091 = vadd.f32 %v2993, %v3056
    %v3092 = vadd.f32 %v2994, %v3058
    %v3093 = vadd.f32 %v2995, %v3060
    %v3094 = vadd.f32 %v2996, %v3062
    %s3095 = sld [smem:[#allocation4 + $0x4f]]
    %v3096 = vstv %s3095
    %v3097 = vmul.f32 %v3096, %v347
    %v3098 = vmul.f32 %v3096, %v348
    %v3099 = vmul.f32 %v3096, %v349
    %v3100 = vmul.f32 %v3096, %v350
    %v3101 = vmul.f32 %v3096, %v351
    %v3102 = vmul.f32 %v3096, %v352
    %v3103 = vmul.f32 %v3096, %v353
    %v3104 = vmul.f32 %v3096, %v354
    %v3105 = vmul.f32 %v3096, %v355
    %v3106 = vmul.f32 %v3096, %v356
    %v3107 = vmul.f32 %v3096, %v357
    %v3108 = vmul.f32 %v3096, %v358
    %v3109 = vmul.f32 %v3096, %v359
    %v3110 = vmul.f32 %v3096, %v360
    %v3111 = vmul.f32 %v3096, %v361
    %v3112 = vmul.f32 %v3096, %v362
    %3129 = vrot.lane.b32.xlu0 %v3097, 126
    %v3130 = vpop.permute.xlu0 %3129
    %3131 = vrot.lane.b32.xlu0 %v3098, 126
    %v3132 = vpop.permute.xlu0 %3131
    %3133 = vrot.lane.b32.xlu0 %v3099, 126
    %v3134 = vpop.permute.xlu0 %3133
    %3135 = vrot.lane.b32.xlu0 %v3100, 126
    %v3136 = vpop.permute.xlu0 %3135
    %3137 = vrot.lane.b32.xlu0 %v3101, 126
    %v3138 = vpop.permute.xlu0 %3137
    %3139 = vrot.lane.b32.xlu0 %v3102, 126
    %v3140 = vpop.permute.xlu0 %3139
    %3141 = vrot.lane.b32.xlu0 %v3103, 126
    %v3142 = vpop.permute.xlu0 %3141
    %3143 = vrot.lane.b32.xlu0 %v3104, 126
    %v3144 = vpop.permute.xlu0 %3143
    %3145 = vrot.lane.b32.xlu0 %v3105, 126
    %v3146 = vpop.permute.xlu0 %3145
    %3147 = vrot.lane.b32.xlu0 %v3106, 126
    %v3148 = vpop.permute.xlu0 %3147
    %3149 = vrot.lane.b32.xlu0 %v3107, 126
    %v3150 = vpop.permute.xlu0 %3149
    %3151 = vrot.lane.b32.xlu0 %v3108, 126
    %v3152 = vpop.permute.xlu0 %3151
    %3153 = vrot.lane.b32.xlu0 %v3109, 126
    %v3154 = vpop.permute.xlu0 %3153
    %3155 = vrot.lane.b32.xlu0 %v3110, 126
    %v3156 = vpop.permute.xlu0 %3155
    %3157 = vrot.lane.b32.xlu0 %v3111, 126
    %v3158 = vpop.permute.xlu0 %3157
    %3159 = vrot.lane.b32.xlu0 %v3112, 126
    %v3160 = vpop.permute.xlu0 %3159
    %v3177 = vadd.f32 %v3079, %v3130
    %v3178 = vadd.f32 %v3080, %v3132
    %v3179 = vadd.f32 %v3081, %v3134
    %v3180 = vadd.f32 %v3082, %v3136
    %v3181 = vadd.f32 %v3083, %v3138
    %v3182 = vadd.f32 %v3084, %v3140
    %v3183 = vadd.f32 %v3085, %v3142
    %v3184 = vadd.f32 %v3086, %v3144
    %v3185 = vadd.f32 %v3087, %v3146
    %v3186 = vadd.f32 %v3088, %v3148
    %v3187 = vadd.f32 %v3089, %v3150
    %v3188 = vadd.f32 %v3090, %v3152
    %v3189 = vadd.f32 %v3091, %v3154
    %v3190 = vadd.f32 %v3092, %v3156
    %v3191 = vadd.f32 %v3093, %v3158
    %v3192 = vadd.f32 %v3094, %v3160
    %s3193 = sld [smem:[#allocation4 + $0x25]]
    %v3194 = vstv %s3193
    %v3195 = vmul.f32 %v3194, %v326
    %v3196 = vmul.f32 %v3194, %v327
    %v3197 = vmul.f32 %v3194, %v328
    %v3198 = vmul.f32 %v3194, %v329
    %v3199 = vmul.f32 %v3194, %v330
    %v3200 = vmul.f32 %v3194, %v331
    %v3201 = vmul.f32 %v3194, %v332
    %v3202 = vmul.f32 %v3194, %v333
    %v3203 = vmul.f32 %v3194, %v334
    %v3204 = vmul.f32 %v3194, %v335
    %v3205 = vmul.f32 %v3194, %v336
    %v3206 = vmul.f32 %v3194, %v337
    %v3207 = vmul.f32 %v3194, %v338
    %v3208 = vmul.f32 %v3194, %v339
    %v3209 = vmul.f32 %v3194, %v340
    %v3210 = vmul.f32 %v3194, %v341
    %3227 = vrot.lane.b32.xlu0 %v3195, 126
    %v3228 = vpop.permute.xlu0 %3227
    %3229 = vrot.lane.b32.xlu0 %v3196, 126
    %v3230 = vpop.permute.xlu0 %3229
    %3231 = vrot.lane.b32.xlu0 %v3197, 126
    %v3232 = vpop.permute.xlu0 %3231
    %3233 = vrot.lane.b32.xlu0 %v3198, 126
    %v3234 = vpop.permute.xlu0 %3233
    %3235 = vrot.lane.b32.xlu0 %v3199, 126
    %v3236 = vpop.permute.xlu0 %3235
    %3237 = vrot.lane.b32.xlu0 %v3200, 126
    %v3238 = vpop.permute.xlu0 %3237
    %3239 = vrot.lane.b32.xlu0 %v3201, 126
    %v3240 = vpop.permute.xlu0 %3239
    %3241 = vrot.lane.b32.xlu0 %v3202, 126
    %v3242 = vpop.permute.xlu0 %3241
    %3243 = vrot.lane.b32.xlu0 %v3203, 126
    %v3244 = vpop.permute.xlu0 %3243
    %3245 = vrot.lane.b32.xlu0 %v3204, 126
    %v3246 = vpop.permute.xlu0 %3245
    %3247 = vrot.lane.b32.xlu0 %v3205, 126
    %v3248 = vpop.permute.xlu0 %3247
    %3249 = vrot.lane.b32.xlu0 %v3206, 126
    %v3250 = vpop.permute.xlu0 %3249
    %3251 = vrot.lane.b32.xlu0 %v3207, 126
    %v3252 = vpop.permute.xlu0 %3251
    %3253 = vrot.lane.b32.xlu0 %v3208, 126
    %v3254 = vpop.permute.xlu0 %3253
    %3255 = vrot.lane.b32.xlu0 %v3209, 126
    %v3256 = vpop.permute.xlu0 %3255
    %3257 = vrot.lane.b32.xlu0 %v3210, 126
    %v3258 = vpop.permute.xlu0 %3257
    %v3275 = vadd.f32 %v3177, %v3228
    %v3276 = vadd.f32 %v3178, %v3230
    %v3277 = vadd.f32 %v3179, %v3232
    %v3278 = vadd.f32 %v3180, %v3234
    %v3279 = vadd.f32 %v3181, %v3236
    %v3280 = vadd.f32 %v3182, %v3238
    %v3281 = vadd.f32 %v3183, %v3240
    %v3282 = vadd.f32 %v3184, %v3242
    %v3283 = vadd.f32 %v3185, %v3244
    %v3284 = vadd.f32 %v3186, %v3246
    %v3285 = vadd.f32 %v3187, %v3248
    %v3286 = vadd.f32 %v3188, %v3250
    %v3287 = vadd.f32 %v3189, %v3252
    %v3288 = vadd.f32 %v3190, %v3254
    %v3289 = vadd.f32 %v3191, %v3256
    %v3290 = vadd.f32 %v3192, %v3258
    %s3291 = sld [smem:[#allocation4 + $0x56]]
    %v3292 = vstv %s3291
    %v3293 = vmul.f32 %v3292, %v348
    %v3294 = vmul.f32 %v3292, %v349
    %v3295 = vmul.f32 %v3292, %v350
    %v3296 = vmul.f32 %v3292, %v351
    %v3297 = vmul.f32 %v3292, %v352
    %v3298 = vmul.f32 %v3292, %v353
    %v3299 = vmul.f32 %v3292, %v354
    %v3300 = vmul.f32 %v3292, %v355
    %v3301 = vmul.f32 %v3292, %v356
    %v3302 = vmul.f32 %v3292, %v357
    %v3303 = vmul.f32 %v3292, %v358
    %v3304 = vmul.f32 %v3292, %v359
    %v3305 = vmul.f32 %v3292, %v360
    %v3306 = vmul.f32 %v3292, %v361
    %v3307 = vmul.f32 %v3292, %v362
    %v3308 = vmul.f32 %v3292, %v363
    %3325 = vrot.lane.b32.xlu0 %v3293, 126
    %v3326 = vpop.permute.xlu0 %3325
    %3327 = vrot.lane.b32.xlu0 %v3294, 126
    %v3328 = vpop.permute.xlu0 %3327
    %3329 = vrot.lane.b32.xlu0 %v3295, 126
    %v3330 = vpop.permute.xlu0 %3329
    %3331 = vrot.lane.b32.xlu0 %v3296, 126
    %v3332 = vpop.permute.xlu0 %3331
    %3333 = vrot.lane.b32.xlu0 %v3297, 126
    %v3334 = vpop.permute.xlu0 %3333
    %3335 = vrot.lane.b32.xlu0 %v3298, 126
    %v3336 = vpop.permute.xlu0 %3335
    %3337 = vrot.lane.b32.xlu0 %v3299, 126
    %v3338 = vpop.permute.xlu0 %3337
    %3339 = vrot.lane.b32.xlu0 %v3300, 126
    %v3340 = vpop.permute.xlu0 %3339
    %3341 = vrot.lane.b32.xlu0 %v3301, 126
    %v3342 = vpop.permute.xlu0 %3341
    %3343 = vrot.lane.b32.xlu0 %v3302, 126
    %v3344 = vpop.permute.xlu0 %3343
    %3345 = vrot.lane.b32.xlu0 %v3303, 126
    %v3346 = vpop.permute.xlu0 %3345
    %3347 = vrot.lane.b32.xlu0 %v3304, 126
    %v3348 = vpop.permute.xlu0 %3347
    %3349 = vrot.lane.b32.xlu0 %v3305, 126
    %v3350 = vpop.permute.xlu0 %3349
    %3351 = vrot.lane.b32.xlu0 %v3306, 126
    %v3352 = vpop.permute.xlu0 %3351
    %3353 = vrot.lane.b32.xlu0 %v3307, 126
    %v3354 = vpop.permute.xlu0 %3353
    %3355 = vrot.lane.b32.xlu0 %v3308, 126
    %v3356 = vpop.permute.xlu0 %3355
    %v3373 = vadd.f32 %v3275, %v3326
    %v3374 = vadd.f32 %v3276, %v3328
    %v3375 = vadd.f32 %v3277, %v3330
    %v3376 = vadd.f32 %v3278, %v3332
    %v3377 = vadd.f32 %v3279, %v3334
    %v3378 = vadd.f32 %v3280, %v3336
    %v3379 = vadd.f32 %v3281, %v3338
    %v3380 = vadd.f32 %v3282, %v3340
    %v3381 = vadd.f32 %v3283, %v3342
    %v3382 = vadd.f32 %v3284, %v3344
    %v3383 = vadd.f32 %v3285, %v3346
    %v3384 = vadd.f32 %v3286, %v3348
    %v3385 = vadd.f32 %v3287, %v3350
    %v3386 = vadd.f32 %v3288, %v3352
    %v3387 = vadd.f32 %v3289, %v3354
    %v3388 = vadd.f32 %v3290, %v3356
    %s3389 = sld [smem:[#allocation4 + $0x2c]]
    %v3390 = vstv %s3389
    %v3391 = vmul.f32 %v3390, %v327
    %v3392 = vmul.f32 %v3390, %v328
    %v3393 = vmul.f32 %v3390, %v329
    %v3394 = vmul.f32 %v3390, %v330
    %v3395 = vmul.f32 %v3390, %v331
    %v3396 = vmul.f32 %v3390, %v332
    %v3397 = vmul.f32 %v3390, %v333
    %v3398 = vmul.f32 %v3390, %v334
    %v3399 = vmul.f32 %v3390, %v335
    %v3400 = vmul.f32 %v3390, %v336
    %v3401 = vmul.f32 %v3390, %v337
    %v3402 = vmul.f32 %v3390, %v338
    %v3403 = vmul.f32 %v3390, %v339
    %v3404 = vmul.f32 %v3390, %v340
    %v3405 = vmul.f32 %v3390, %v341
    %v3406 = vmul.f32 %v3390, %v342
    %3423 = vrot.lane.b32.xlu0 %v3391, 126
    %v3424 = vpop.permute.xlu0 %3423
    %3425 = vrot.lane.b32.xlu0 %v3392, 126
    %v3426 = vpop.permute.xlu0 %3425
    %3427 = vrot.lane.b32.xlu0 %v3393, 126
    %v3428 = vpop.permute.xlu0 %3427
    %3429 = vrot.lane.b32.xlu0 %v3394, 126
    %v3430 = vpop.permute.xlu0 %3429
    %3431 = vrot.lane.b32.xlu0 %v3395, 126
    %v3432 = vpop.permute.xlu0 %3431
    %3433 = vrot.lane.b32.xlu0 %v3396, 126
    %v3434 = vpop.permute.xlu0 %3433
    %3435 = vrot.lane.b32.xlu0 %v3397, 126
    %v3436 = vpop.permute.xlu0 %3435
    %3437 = vrot.lane.b32.xlu0 %v3398, 126
    %v3438 = vpop.permute.xlu0 %3437
    %3439 = vrot.lane.b32.xlu0 %v3399, 126
    %v3440 = vpop.permute.xlu0 %3439
    %3441 = vrot.lane.b32.xlu0 %v3400, 126
    %v3442 = vpop.permute.xlu0 %3441
    %3443 = vrot.lane.b32.xlu0 %v3401, 126
    %v3444 = vpop.permute.xlu0 %3443
    %3445 = vrot.lane.b32.xlu0 %v3402, 126
    %v3446 = vpop.permute.xlu0 %3445
    %3447 = vrot.lane.b32.xlu0 %v3403, 126
    %v3448 = vpop.permute.xlu0 %3447
    %3449 = vrot.lane.b32.xlu0 %v3404, 126
    %v3450 = vpop.permute.xlu0 %3449
    %3451 = vrot.lane.b32.xlu0 %v3405, 126
    %v3452 = vpop.permute.xlu0 %3451
    %3453 = vrot.lane.b32.xlu0 %v3406, 126
    %v3454 = vpop.permute.xlu0 %3453
    %v3471 = vadd.f32 %v3373, %v3424
    %v3472 = vadd.f32 %v3374, %v3426
    %v3473 = vadd.f32 %v3375, %v3428
    %v3474 = vadd.f32 %v3376, %v3430
    %v3475 = vadd.f32 %v3377, %v3432
    %v3476 = vadd.f32 %v3378, %v3434
    %v3477 = vadd.f32 %v3379, %v3436
    %v3478 = vadd.f32 %v3380, %v3438
    %v3479 = vadd.f32 %v3381, %v3440
    %v3480 = vadd.f32 %v3382, %v3442
    %v3481 = vadd.f32 %v3383, %v3444
    %v3482 = vadd.f32 %v3384, %v3446
    %v3483 = vadd.f32 %v3385, %v3448
    %v3484 = vadd.f32 %v3386, %v3450
    %v3485 = vadd.f32 %v3387, %v3452
    %v3486 = vadd.f32 %v3388, %v3454
    %s3487 = sld [smem:[#allocation4 + $0x5d]]
    %v3488 = vstv %s3487
    %v3489 = vmul.f32 %v3488, %v349
    %v3490 = vmul.f32 %v3488, %v350
    %v3491 = vmul.f32 %v3488, %v351
    %v3492 = vmul.f32 %v3488, %v352
    %v3493 = vmul.f32 %v3488, %v353
    %v3494 = vmul.f32 %v3488, %v354
    %v3495 = vmul.f32 %v3488, %v355
    %v3496 = vmul.f32 %v3488, %v356
    %v3497 = vmul.f32 %v3488, %v357
    %v3498 = vmul.f32 %v3488, %v358
    %v3499 = vmul.f32 %v3488, %v359
    %v3500 = vmul.f32 %v3488, %v360
    %v3501 = vmul.f32 %v3488, %v361
    %v3502 = vmul.f32 %v3488, %v362
    %v3503 = vmul.f32 %v3488, %v363
    %v3504 = vmul.f32 %v3488, %v364
    %3521 = vrot.lane.b32.xlu0 %v3489, 126
    %v3522 = vpop.permute.xlu0 %3521
    %3523 = vrot.lane.b32.xlu0 %v3490, 126
    %v3524 = vpop.permute.xlu0 %3523
    %3525 = vrot.lane.b32.xlu0 %v3491, 126
    %v3526 = vpop.permute.xlu0 %3525
    %3527 = vrot.lane.b32.xlu0 %v3492, 126
    %v3528 = vpop.permute.xlu0 %3527
    %3529 = vrot.lane.b32.xlu0 %v3493, 126
    %v3530 = vpop.permute.xlu0 %3529
    %3531 = vrot.lane.b32.xlu0 %v3494, 126
    %v3532 = vpop.permute.xlu0 %3531
    %3533 = vrot.lane.b32.xlu0 %v3495, 126
    %v3534 = vpop.permute.xlu0 %3533
    %3535 = vrot.lane.b32.xlu0 %v3496, 126
    %v3536 = vpop.permute.xlu0 %3535
    %3537 = vrot.lane.b32.xlu0 %v3497, 126
    %v3538 = vpop.permute.xlu0 %3537
    %3539 = vrot.lane.b32.xlu0 %v3498, 126
    %v3540 = vpop.permute.xlu0 %3539
    %3541 = vrot.lane.b32.xlu0 %v3499, 126
    %v3542 = vpop.permute.xlu0 %3541
    %3543 = vrot.lane.b32.xlu0 %v3500, 126
    %v3544 = vpop.permute.xlu0 %3543
    %3545 = vrot.lane.b32.xlu0 %v3501, 126
    %v3546 = vpop.permute.xlu0 %3545
    %3547 = vrot.lane.b32.xlu0 %v3502, 126
    %v3548 = vpop.permute.xlu0 %3547
    %3549 = vrot.lane.b32.xlu0 %v3503, 126
    %v3550 = vpop.permute.xlu0 %3549
    %3551 = vrot.lane.b32.xlu0 %v3504, 126
    %v3552 = vpop.permute.xlu0 %3551
    %v3569 = vadd.f32 %v3471, %v3522
    %v3570 = vadd.f32 %v3472, %v3524
    %v3571 = vadd.f32 %v3473, %v3526
    %v3572 = vadd.f32 %v3474, %v3528
    %v3573 = vadd.f32 %v3475, %v3530
    %v3574 = vadd.f32 %v3476, %v3532
    %v3575 = vadd.f32 %v3477, %v3534
    %v3576 = vadd.f32 %v3478, %v3536
    %v3577 = vadd.f32 %v3479, %v3538
    %v3578 = vadd.f32 %v3480, %v3540
    %v3579 = vadd.f32 %v3481, %v3542
    %v3580 = vadd.f32 %v3482, %v3544
    %v3581 = vadd.f32 %v3483, %v3546
    %v3582 = vadd.f32 %v3484, %v3548
    %v3583 = vadd.f32 %v3485, %v3550
    %v3584 = vadd.f32 %v3486, %v3552
    %s3585 = sld [smem:[#allocation4 + $0x3]]
    %v3586 = vstv %s3585
    %v3587 = vmul.f32 %v3586, %v321
    %v3588 = vmul.f32 %v3586, %v322
    %v3589 = vmul.f32 %v3586, %v323
    %v3590 = vmul.f32 %v3586, %v324
    %v3591 = vmul.f32 %v3586, %v325
    %v3592 = vmul.f32 %v3586, %v326
    %v3593 = vmul.f32 %v3586, %v327
    %v3594 = vmul.f32 %v3586, %v328
    %v3595 = vmul.f32 %v3586, %v329
    %v3596 = vmul.f32 %v3586, %v330
    %v3597 = vmul.f32 %v3586, %v331
    %v3598 = vmul.f32 %v3586, %v332
    %v3599 = vmul.f32 %v3586, %v333
    %v3600 = vmul.f32 %v3586, %v334
    %v3601 = vmul.f32 %v3586, %v335
    %v3602 = vmul.f32 %v3586, %v336
    %3619 = vrot.lane.b32.xlu0 %v3587, 125
    %v3620 = vpop.permute.xlu0 %3619
    %3621 = vrot.lane.b32.xlu0 %v3588, 125
    %v3622 = vpop.permute.xlu0 %3621
    %3623 = vrot.lane.b32.xlu0 %v3589, 125
    %v3624 = vpop.permute.xlu0 %3623
    %3625 = vrot.lane.b32.xlu0 %v3590, 125
    %v3626 = vpop.permute.xlu0 %3625
    %3627 = vrot.lane.b32.xlu0 %v3591, 125
    %v3628 = vpop.permute.xlu0 %3627
    %3629 = vrot.lane.b32.xlu0 %v3592, 125
    %v3630 = vpop.permute.xlu0 %3629
    %3631 = vrot.lane.b32.xlu0 %v3593, 125
    %v3632 = vpop.permute.xlu0 %3631
    %3633 = vrot.lane.b32.xlu0 %v3594, 125
    %v3634 = vpop.permute.xlu0 %3633
    %3635 = vrot.lane.b32.xlu0 %v3595, 125
    %v3636 = vpop.permute.xlu0 %3635
    %3637 = vrot.lane.b32.xlu0 %v3596, 125
    %v3638 = vpop.permute.xlu0 %3637
    %3639 = vrot.lane.b32.xlu0 %v3597, 125
    %v3640 = vpop.permute.xlu0 %3639
    %3641 = vrot.lane.b32.xlu0 %v3598, 125
    %v3642 = vpop.permute.xlu0 %3641
    %3643 = vrot.lane.b32.xlu0 %v3599, 125
    %v3644 = vpop.permute.xlu0 %3643
    %3645 = vrot.lane.b32.xlu0 %v3600, 125
    %v3646 = vpop.permute.xlu0 %3645
    %3647 = vrot.lane.b32.xlu0 %v3601, 125
    %v3648 = vpop.permute.xlu0 %3647
    %3649 = vrot.lane.b32.xlu0 %v3602, 125
    %v3650 = vpop.permute.xlu0 %3649
    %v3667 = vadd.f32 %v3569, %v3620
    %v3668 = vadd.f32 %v3570, %v3622
    %v3669 = vadd.f32 %v3571, %v3624
    %v3670 = vadd.f32 %v3572, %v3626
    %v3671 = vadd.f32 %v3573, %v3628
    %v3672 = vadd.f32 %v3574, %v3630
    %v3673 = vadd.f32 %v3575, %v3632
    %v3674 = vadd.f32 %v3576, %v3634
    %v3675 = vadd.f32 %v3577, %v3636
    %v3676 = vadd.f32 %v3578, %v3638
    %v3677 = vadd.f32 %v3579, %v3640
    %v3678 = vadd.f32 %v3580, %v3642
    %v3679 = vadd.f32 %v3581, %v3644
    %v3680 = vadd.f32 %v3582, %v3646
    %v3681 = vadd.f32 %v3583, %v3648
    %v3682 = vadd.f32 %v3584, %v3650
    %s3683 = sld [smem:[#allocation4 + $0x34]]
    %v3684 = vstv %s3683
    %v3685 = vmul.f32 %v3684, %v343
    %v3686 = vmul.f32 %v3684, %v344
    %v3687 = vmul.f32 %v3684, %v345
    %v3688 = vmul.f32 %v3684, %v346
    %v3689 = vmul.f32 %v3684, %v347
    %v3690 = vmul.f32 %v3684, %v348
    %v3691 = vmul.f32 %v3684, %v349
    %v3692 = vmul.f32 %v3684, %v350
    %v3693 = vmul.f32 %v3684, %v351
    %v3694 = vmul.f32 %v3684, %v352
    %v3695 = vmul.f32 %v3684, %v353
    %v3696 = vmul.f32 %v3684, %v354
    %v3697 = vmul.f32 %v3684, %v355
    %v3698 = vmul.f32 %v3684, %v356
    %v3699 = vmul.f32 %v3684, %v357
    %v3700 = vmul.f32 %v3684, %v358
    %3717 = vrot.lane.b32.xlu0 %v3685, 125
    %v3718 = vpop.permute.xlu0 %3717
    %3719 = vrot.lane.b32.xlu0 %v3686, 125
    %v3720 = vpop.permute.xlu0 %3719
    %3721 = vrot.lane.b32.xlu0 %v3687, 125
    %v3722 = vpop.permute.xlu0 %3721
    %3723 = vrot.lane.b32.xlu0 %v3688, 125
    %v3724 = vpop.permute.xlu0 %3723
    %3725 = vrot.lane.b32.xlu0 %v3689, 125
    %v3726 = vpop.permute.xlu0 %3725
    %3727 = vrot.lane.b32.xlu0 %v3690, 125
    %v3728 = vpop.permute.xlu0 %3727
    %3729 = vrot.lane.b32.xlu0 %v3691, 125
    %v3730 = vpop.permute.xlu0 %3729
    %3731 = vrot.lane.b32.xlu0 %v3692, 125
    %v3732 = vpop.permute.xlu0 %3731
    %3733 = vrot.lane.b32.xlu0 %v3693, 125
    %v3734 = vpop.permute.xlu0 %3733
    %3735 = vrot.lane.b32.xlu0 %v3694, 125
    %v3736 = vpop.permute.xlu0 %3735
    %3737 = vrot.lane.b32.xlu0 %v3695, 125
    %v3738 = vpop.permute.xlu0 %3737
    %3739 = vrot.lane.b32.xlu0 %v3696, 125
    %v3740 = vpop.permute.xlu0 %3739
    %3741 = vrot.lane.b32.xlu0 %v3697, 125
    %v3742 = vpop.permute.xlu0 %3741
    %3743 = vrot.lane.b32.xlu0 %v3698, 125
    %v3744 = vpop.permute.xlu0 %3743
    %3745 = vrot.lane.b32.xlu0 %v3699, 125
    %v3746 = vpop.permute.xlu0 %3745
    %3747 = vrot.lane.b32.xlu0 %v3700, 125
    %v3748 = vpop.permute.xlu0 %3747
    %v3765 = vadd.f32 %v3667, %v3718
    %v3766 = vadd.f32 %v3668, %v3720
    %v3767 = vadd.f32 %v3669, %v3722
    %v3768 = vadd.f32 %v3670, %v3724
    %v3769 = vadd.f32 %v3671, %v3726
    %v3770 = vadd.f32 %v3672, %v3728
    %v3771 = vadd.f32 %v3673, %v3730
    %v3772 = vadd.f32 %v3674, %v3732
    %v3773 = vadd.f32 %v3675, %v3734
    %v3774 = vadd.f32 %v3676, %v3736
    %v3775 = vadd.f32 %v3677, %v3738
    %v3776 = vadd.f32 %v3678, %v3740
    %v3777 = vadd.f32 %v3679, %v3742
    %v3778 = vadd.f32 %v3680, %v3744
    %v3779 = vadd.f32 %v3681, %v3746
    %v3780 = vadd.f32 %v3682, %v3748
    %s3781 = sld [smem:[#allocation4 + $0xa]]
    %v3782 = vstv %s3781
    %v3783 = vmul.f32 %v3782, %v322
    %v3784 = vmul.f32 %v3782, %v323
    %v3785 = vmul.f32 %v3782, %v324
    %v3786 = vmul.f32 %v3782, %v325
    %v3787 = vmul.f32 %v3782, %v326
    %v3788 = vmul.f32 %v3782, %v327
    %v3789 = vmul.f32 %v3782, %v328
    %v3790 = vmul.f32 %v3782, %v329
    %v3791 = vmul.f32 %v3782, %v330
    %v3792 = vmul.f32 %v3782, %v331
    %v3793 = vmul.f32 %v3782, %v332
    %v3794 = vmul.f32 %v3782, %v333
    %v3795 = vmul.f32 %v3782, %v334
    %v3796 = vmul.f32 %v3782, %v335
    %v3797 = vmul.f32 %v3782, %v336
    %v3798 = vmul.f32 %v3782, %v337
    %3815 = vrot.lane.b32.xlu0 %v3783, 125
    %v3816 = vpop.permute.xlu0 %3815
    %3817 = vrot.lane.b32.xlu0 %v3784, 125
    %v3818 = vpop.permute.xlu0 %3817
    %3819 = vrot.lane.b32.xlu0 %v3785, 125
    %v3820 = vpop.permute.xlu0 %3819
    %3821 = vrot.lane.b32.xlu0 %v3786, 125
    %v3822 = vpop.permute.xlu0 %3821
    %3823 = vrot.lane.b32.xlu0 %v3787, 125
    %v3824 = vpop.permute.xlu0 %3823
    %3825 = vrot.lane.b32.xlu0 %v3788, 125
    %v3826 = vpop.permute.xlu0 %3825
    %3827 = vrot.lane.b32.xlu0 %v3789, 125
    %v3828 = vpop.permute.xlu0 %3827
    %3829 = vrot.lane.b32.xlu0 %v3790, 125
    %v3830 = vpop.permute.xlu0 %3829
    %3831 = vrot.lane.b32.xlu0 %v3791, 125
    %v3832 = vpop.permute.xlu0 %3831
    %3833 = vrot.lane.b32.xlu0 %v3792, 125
    %v3834 = vpop.permute.xlu0 %3833
    %3835 = vrot.lane.b32.xlu0 %v3793, 125
    %v3836 = vpop.permute.xlu0 %3835
    %3837 = vrot.lane.b32.xlu0 %v3794, 125
    %v3838 = vpop.permute.xlu0 %3837
    %3839 = vrot.lane.b32.xlu0 %v3795, 125
    %v3840 = vpop.permute.xlu0 %3839
    %3841 = vrot.lane.b32.xlu0 %v3796, 125
    %v3842 = vpop.permute.xlu0 %3841
    %3843 = vrot.lane.b32.xlu0 %v3797, 125
    %v3844 = vpop.permute.xlu0 %3843
    %3845 = vrot.lane.b32.xlu0 %v3798, 125
    %v3846 = vpop.permute.xlu0 %3845
    %v3863 = vadd.f32 %v3765, %v3816
    %v3864 = vadd.f32 %v3766, %v3818
    %v3865 = vadd.f32 %v3767, %v3820
    %v3866 = vadd.f32 %v3768, %v3822
    %v3867 = vadd.f32 %v3769, %v3824
    %v3868 = vadd.f32 %v3770, %v3826
    %v3869 = vadd.f32 %v3771, %v3828
    %v3870 = vadd.f32 %v3772, %v3830
    %v3871 = vadd.f32 %v3773, %v3832
    %v3872 = vadd.f32 %v3774, %v3834
    %v3873 = vadd.f32 %v3775, %v3836
    %v3874 = vadd.f32 %v3776, %v3838
    %v3875 = vadd.f32 %v3777, %v3840
    %v3876 = vadd.f32 %v3778, %v3842
    %v3877 = vadd.f32 %v3779, %v3844
    %v3878 = vadd.f32 %v3780, %v3846
    %s3879 = sld [smem:[#allocation4 + $0x3b]]
    %v3880 = vstv %s3879
    %v3881 = vmul.f32 %v3880, %v344
    %v3882 = vmul.f32 %v3880, %v345
    %v3883 = vmul.f32 %v3880, %v346
    %v3884 = vmul.f32 %v3880, %v347
    %v3885 = vmul.f32 %v3880, %v348
    %v3886 = vmul.f32 %v3880, %v349
    %v3887 = vmul.f32 %v3880, %v350
    %v3888 = vmul.f32 %v3880, %v351
    %v3889 = vmul.f32 %v3880, %v352
    %v3890 = vmul.f32 %v3880, %v353
    %v3891 = vmul.f32 %v3880, %v354
    %v3892 = vmul.f32 %v3880, %v355
    %v3893 = vmul.f32 %v3880, %v356
    %v3894 = vmul.f32 %v3880, %v357
    %v3895 = vmul.f32 %v3880, %v358
    %v3896 = vmul.f32 %v3880, %v359
    %3913 = vrot.lane.b32.xlu0 %v3881, 125
    %v3914 = vpop.permute.xlu0 %3913
    %3915 = vrot.lane.b32.xlu0 %v3882, 125
    %v3916 = vpop.permute.xlu0 %3915
    %3917 = vrot.lane.b32.xlu0 %v3883, 125
    %v3918 = vpop.permute.xlu0 %3917
    %3919 = vrot.lane.b32.xlu0 %v3884, 125
    %v3920 = vpop.permute.xlu0 %3919
    %3921 = vrot.lane.b32.xlu0 %v3885, 125
    %v3922 = vpop.permute.xlu0 %3921
    %3923 = vrot.lane.b32.xlu0 %v3886, 125
    %v3924 = vpop.permute.xlu0 %3923
    %3925 = vrot.lane.b32.xlu0 %v3887, 125
    %v3926 = vpop.permute.xlu0 %3925
    %3927 = vrot.lane.b32.xlu0 %v3888, 125
    %v3928 = vpop.permute.xlu0 %3927
    %3929 = vrot.lane.b32.xlu0 %v3889, 125
    %v3930 = vpop.permute.xlu0 %3929
    %3931 = vrot.lane.b32.xlu0 %v3890, 125
    %v3932 = vpop.permute.xlu0 %3931
    %3933 = vrot.lane.b32.xlu0 %v3891, 125
    %v3934 = vpop.permute.xlu0 %3933
    %3935 = vrot.lane.b32.xlu0 %v3892, 125
    %v3936 = vpop.permute.xlu0 %3935
    %3937 = vrot.lane.b32.xlu0 %v3893, 125
    %v3938 = vpop.permute.xlu0 %3937
    %3939 = vrot.lane.b32.xlu0 %v3894, 125
    %v3940 = vpop.permute.xlu0 %3939
    %3941 = vrot.lane.b32.xlu0 %v3895, 125
    %v3942 = vpop.permute.xlu0 %3941
    %3943 = vrot.lane.b32.xlu0 %v3896, 125
    %v3944 = vpop.permute.xlu0 %3943
    %v3961 = vadd.f32 %v3863, %v3914
    %v3962 = vadd.f32 %v3864, %v3916
    %v3963 = vadd.f32 %v3865, %v3918
    %v3964 = vadd.f32 %v3866, %v3920
    %v3965 = vadd.f32 %v3867, %v3922
    %v3966 = vadd.f32 %v3868, %v3924
    %v3967 = vadd.f32 %v3869, %v3926
    %v3968 = vadd.f32 %v3870, %v3928
    %v3969 = vadd.f32 %v3871, %v3930
    %v3970 = vadd.f32 %v3872, %v3932
    %v3971 = vadd.f32 %v3873, %v3934
    %v3972 = vadd.f32 %v3874, %v3936
    %v3973 = vadd.f32 %v3875, %v3938
    %v3974 = vadd.f32 %v3876, %v3940
    %v3975 = vadd.f32 %v3877, %v3942
    %v3976 = vadd.f32 %v3878, %v3944
    %s3977 = sld [smem:[#allocation4 + $0x11]]
    %v3978 = vstv %s3977
    %v3979 = vmul.f32 %v3978, %v323
    %v3980 = vmul.f32 %v3978, %v324
    %v3981 = vmul.f32 %v3978, %v325
    %v3982 = vmul.f32 %v3978, %v326
    %v3983 = vmul.f32 %v3978, %v327
    %v3984 = vmul.f32 %v3978, %v328
    %v3985 = vmul.f32 %v3978, %v329
    %v3986 = vmul.f32 %v3978, %v330
    %v3987 = vmul.f32 %v3978, %v331
    %v3988 = vmul.f32 %v3978, %v332
    %v3989 = vmul.f32 %v3978, %v333
    %v3990 = vmul.f32 %v3978, %v334
    %v3991 = vmul.f32 %v3978, %v335
    %v3992 = vmul.f32 %v3978, %v336
    %v3993 = vmul.f32 %v3978, %v337
    %v3994 = vmul.f32 %v3978, %v338
    %4011 = vrot.lane.b32.xlu0 %v3979, 125
    %v4012 = vpop.permute.xlu0 %4011
    %4013 = vrot.lane.b32.xlu0 %v3980, 125
    %v4014 = vpop.permute.xlu0 %4013
    %4015 = vrot.lane.b32.xlu0 %v3981, 125
    %v4016 = vpop.permute.xlu0 %4015
    %4017 = vrot.lane.b32.xlu0 %v3982, 125
    %v4018 = vpop.permute.xlu0 %4017
    %4019 = vrot.lane.b32.xlu0 %v3983, 125
    %v4020 = vpop.permute.xlu0 %4019
    %4021 = vrot.lane.b32.xlu0 %v3984, 125
    %v4022 = vpop.permute.xlu0 %4021
    %4023 = vrot.lane.b32.xlu0 %v3985, 125
    %v4024 = vpop.permute.xlu0 %4023
    %4025 = vrot.lane.b32.xlu0 %v3986, 125
    %v4026 = vpop.permute.xlu0 %4025
    %4027 = vrot.lane.b32.xlu0 %v3987, 125
    %v4028 = vpop.permute.xlu0 %4027
    %4029 = vrot.lane.b32.xlu0 %v3988, 125
    %v4030 = vpop.permute.xlu0 %4029
    %4031 = vrot.lane.b32.xlu0 %v3989, 125
    %v4032 = vpop.permute.xlu0 %4031
    %4033 = vrot.lane.b32.xlu0 %v3990, 125
    %v4034 = vpop.permute.xlu0 %4033
    %4035 = vrot.lane.b32.xlu0 %v3991, 125
    %v4036 = vpop.permute.xlu0 %4035
    %4037 = vrot.lane.b32.xlu0 %v3992, 125
    %v4038 = vpop.permute.xlu0 %4037
    %4039 = vrot.lane.b32.xlu0 %v3993, 125
    %v4040 = vpop.permute.xlu0 %4039
    %4041 = vrot.lane.b32.xlu0 %v3994, 125
    %v4042 = vpop.permute.xlu0 %4041
    %v4059 = vadd.f32 %v3961, %v4012
    %v4060 = vadd.f32 %v3962, %v4014
    %v4061 = vadd.f32 %v3963, %v4016
    %v4062 = vadd.f32 %v3964, %v4018
    %v4063 = vadd.f32 %v3965, %v4020
    %v4064 = vadd.f32 %v3966, %v4022
    %v4065 = vadd.f32 %v3967, %v4024
    %v4066 = vadd.f32 %v3968, %v4026
    %v4067 = vadd.f32 %v3969, %v4028
    %v4068 = vadd.f32 %v3970, %v4030
    %v4069 = vadd.f32 %v3971, %v4032
    %v4070 = vadd.f32 %v3972, %v4034
    %v4071 = vadd.f32 %v3973, %v4036
    %v4072 = vadd.f32 %v3974, %v4038
    %v4073 = vadd.f32 %v3975, %v4040
    %v4074 = vadd.f32 %v3976, %v4042
    %s4075 = sld [smem:[#allocation4 + $0x42]]
    %v4076 = vstv %s4075
    %v4077 = vmul.f32 %v4076, %v345
    %v4078 = vmul.f32 %v4076, %v346
    %v4079 = vmul.f32 %v4076, %v347
    %v4080 = vmul.f32 %v4076, %v348
    %v4081 = vmul.f32 %v4076, %v349
    %v4082 = vmul.f32 %v4076, %v350
    %v4083 = vmul.f32 %v4076, %v351
    %v4084 = vmul.f32 %v4076, %v352
    %v4085 = vmul.f32 %v4076, %v353
    %v4086 = vmul.f32 %v4076, %v354
    %v4087 = vmul.f32 %v4076, %v355
    %v4088 = vmul.f32 %v4076, %v356
    %v4089 = vmul.f32 %v4076, %v357
    %v4090 = vmul.f32 %v4076, %v358
    %v4091 = vmul.f32 %v4076, %v359
    %v4092 = vmul.f32 %v4076, %v360
    %4109 = vrot.lane.b32.xlu0 %v4077, 125
    %v4110 = vpop.permute.xlu0 %4109
    %4111 = vrot.lane.b32.xlu0 %v4078, 125
    %v4112 = vpop.permute.xlu0 %4111
    %4113 = vrot.lane.b32.xlu0 %v4079, 125
    %v4114 = vpop.permute.xlu0 %4113
    %4115 = vrot.lane.b32.xlu0 %v4080, 125
    %v4116 = vpop.permute.xlu0 %4115
    %4117 = vrot.lane.b32.xlu0 %v4081, 125
    %v4118 = vpop.permute.xlu0 %4117
    %4119 = vrot.lane.b32.xlu0 %v4082, 125
    %v4120 = vpop.permute.xlu0 %4119
    %4121 = vrot.lane.b32.xlu0 %v4083, 125
    %v4122 = vpop.permute.xlu0 %4121
    %4123 = vrot.lane.b32.xlu0 %v4084, 125
    %v4124 = vpop.permute.xlu0 %4123
    %4125 = vrot.lane.b32.xlu0 %v4085, 125
    %v4126 = vpop.permute.xlu0 %4125
    %4127 = vrot.lane.b32.xlu0 %v4086, 125
    %v4128 = vpop.permute.xlu0 %4127
    %4129 = vrot.lane.b32.xlu0 %v4087, 125
    %v4130 = vpop.permute.xlu0 %4129
    %4131 = vrot.lane.b32.xlu0 %v4088, 125
    %v4132 = vpop.permute.xlu0 %4131
    %4133 = vrot.lane.b32.xlu0 %v4089, 125
    %v4134 = vpop.permute.xlu0 %4133
    %4135 = vrot.lane.b32.xlu0 %v4090, 125
    %v4136 = vpop.permute.xlu0 %4135
    %4137 = vrot.lane.b32.xlu0 %v4091, 125
    %v4138 = vpop.permute.xlu0 %4137
    %4139 = vrot.lane.b32.xlu0 %v4092, 125
    %v4140 = vpop.permute.xlu0 %4139
    %v4157 = vadd.f32 %v4059, %v4110
    %v4158 = vadd.f32 %v4060, %v4112
    %v4159 = vadd.f32 %v4061, %v4114
    %v4160 = vadd.f32 %v4062, %v4116
    %v4161 = vadd.f32 %v4063, %v4118
    %v4162 = vadd.f32 %v4064, %v4120
    %v4163 = vadd.f32 %v4065, %v4122
    %v4164 = vadd.f32 %v4066, %v4124
    %v4165 = vadd.f32 %v4067, %v4126
    %v4166 = vadd.f32 %v4068, %v4128
    %v4167 = vadd.f32 %v4069, %v4130
    %v4168 = vadd.f32 %v4070, %v4132
    %v4169 = vadd.f32 %v4071, %v4134
    %v4170 = vadd.f32 %v4072, %v4136
    %v4171 = vadd.f32 %v4073, %v4138
    %v4172 = vadd.f32 %v4074, %v4140
    %s4173 = sld [smem:[#allocation4 + $0x18]]
    %v4174 = vstv %s4173
    %v4175 = vmul.f32 %v4174, %v324
    %v4176 = vmul.f32 %v4174, %v325
    %v4177 = vmul.f32 %v4174, %v326
    %v4178 = vmul.f32 %v4174, %v327
    %v4179 = vmul.f32 %v4174, %v328
    %v4180 = vmul.f32 %v4174, %v329
    %v4181 = vmul.f32 %v4174, %v330
    %v4182 = vmul.f32 %v4174, %v331
    %v4183 = vmul.f32 %v4174, %v332
    %v4184 = vmul.f32 %v4174, %v333
    %v4185 = vmul.f32 %v4174, %v334
    %v4186 = vmul.f32 %v4174, %v335
    %v4187 = vmul.f32 %v4174, %v336
    %v4188 = vmul.f32 %v4174, %v337
    %v4189 = vmul.f32 %v4174, %v338
    %v4190 = vmul.f32 %v4174, %v339
    %4207 = vrot.lane.b32.xlu0 %v4175, 125
    %v4208 = vpop.permute.xlu0 %4207
    %4209 = vrot.lane.b32.xlu0 %v4176, 125
    %v4210 = vpop.permute.xlu0 %4209
    %4211 = vrot.lane.b32.xlu0 %v4177, 125
    %v4212 = vpop.permute.xlu0 %4211
    %4213 = vrot.lane.b32.xlu0 %v4178, 125
    %v4214 = vpop.permute.xlu0 %4213
    %4215 = vrot.lane.b32.xlu0 %v4179, 125
    %v4216 = vpop.permute.xlu0 %4215
    %4217 = vrot.lane.b32.xlu0 %v4180, 125
    %v4218 = vpop.permute.xlu0 %4217
    %4219 = vrot.lane.b32.xlu0 %v4181, 125
    %v4220 = vpop.permute.xlu0 %4219
    %4221 = vrot.lane.b32.xlu0 %v4182, 125
    %v4222 = vpop.permute.xlu0 %4221
    %4223 = vrot.lane.b32.xlu0 %v4183, 125
    %v4224 = vpop.permute.xlu0 %4223
    %4225 = vrot.lane.b32.xlu0 %v4184, 125
    %v4226 = vpop.permute.xlu0 %4225
    %4227 = vrot.lane.b32.xlu0 %v4185, 125
    %v4228 = vpop.permute.xlu0 %4227
    %4229 = vrot.lane.b32.xlu0 %v4186, 125
    %v4230 = vpop.permute.xlu0 %4229
    %4231 = vrot.lane.b32.xlu0 %v4187, 125
    %v4232 = vpop.permute.xlu0 %4231
    %4233 = vrot.lane.b32.xlu0 %v4188, 125
    %v4234 = vpop.permute.xlu0 %4233
    %4235 = vrot.lane.b32.xlu0 %v4189, 125
    %v4236 = vpop.permute.xlu0 %4235
    %4237 = vrot.lane.b32.xlu0 %v4190, 125
    %v4238 = vpop.permute.xlu0 %4237
    %v4255 = vadd.f32 %v4157, %v4208
    %v4256 = vadd.f32 %v4158, %v4210
    %v4257 = vadd.f32 %v4159, %v4212
    %v4258 = vadd.f32 %v4160, %v4214
    %v4259 = vadd.f32 %v4161, %v4216
    %v4260 = vadd.f32 %v4162, %v4218
    %v4261 = vadd.f32 %v4163, %v4220
    %v4262 = vadd.f32 %v4164, %v4222
    %v4263 = vadd.f32 %v4165, %v4224
    %v4264 = vadd.f32 %v4166, %v4226
    %v4265 = vadd.f32 %v4167, %v4228
    %v4266 = vadd.f32 %v4168, %v4230
    %v4267 = vadd.f32 %v4169, %v4232
    %v4268 = vadd.f32 %v4170, %v4234
    %v4269 = vadd.f32 %v4171, %v4236
    %v4270 = vadd.f32 %v4172, %v4238
    %s4271 = sld [smem:[#allocation4 + $0x49]]
    %v4272 = vstv %s4271
    %v4273 = vmul.f32 %v4272, %v346
    %v4274 = vmul.f32 %v4272, %v347
    %v4275 = vmul.f32 %v4272, %v348
    %v4276 = vmul.f32 %v4272, %v349
    %v4277 = vmul.f32 %v4272, %v350
    %v4278 = vmul.f32 %v4272, %v351
    %v4279 = vmul.f32 %v4272, %v352
    %v4280 = vmul.f32 %v4272, %v353
    %v4281 = vmul.f32 %v4272, %v354
    %v4282 = vmul.f32 %v4272, %v355
    %v4283 = vmul.f32 %v4272, %v356
    %v4284 = vmul.f32 %v4272, %v357
    %v4285 = vmul.f32 %v4272, %v358
    %v4286 = vmul.f32 %v4272, %v359
    %v4287 = vmul.f32 %v4272, %v360
    %v4288 = vmul.f32 %v4272, %v361
    %4305 = vrot.lane.b32.xlu0 %v4273, 125
    %v4306 = vpop.permute.xlu0 %4305
    %4307 = vrot.lane.b32.xlu0 %v4274, 125
    %v4308 = vpop.permute.xlu0 %4307
    %4309 = vrot.lane.b32.xlu0 %v4275, 125
    %v4310 = vpop.permute.xlu0 %4309
    %4311 = vrot.lane.b32.xlu0 %v4276, 125
    %v4312 = vpop.permute.xlu0 %4311
    %4313 = vrot.lane.b32.xlu0 %v4277, 125
    %v4314 = vpop.permute.xlu0 %4313
    %4315 = vrot.lane.b32.xlu0 %v4278, 125
    %v4316 = vpop.permute.xlu0 %4315
    %4317 = vrot.lane.b32.xlu0 %v4279, 125
    %v4318 = vpop.permute.xlu0 %4317
    %4319 = vrot.lane.b32.xlu0 %v4280, 125
    %v4320 = vpop.permute.xlu0 %4319
    %4321 = vrot.lane.b32.xlu0 %v4281, 125
    %v4322 = vpop.permute.xlu0 %4321
    %4323 = vrot.lane.b32.xlu0 %v4282, 125
    %v4324 = vpop.permute.xlu0 %4323
    %4325 = vrot.lane.b32.xlu0 %v4283, 125
    %v4326 = vpop.permute.xlu0 %4325
    %4327 = vrot.lane.b32.xlu0 %v4284, 125
    %v4328 = vpop.permute.xlu0 %4327
    %4329 = vrot.lane.b32.xlu0 %v4285, 125
    %v4330 = vpop.permute.xlu0 %4329
    %4331 = vrot.lane.b32.xlu0 %v4286, 125
    %v4332 = vpop.permute.xlu0 %4331
    %4333 = vrot.lane.b32.xlu0 %v4287, 125
    %v4334 = vpop.permute.xlu0 %4333
    %4335 = vrot.lane.b32.xlu0 %v4288, 125
    %v4336 = vpop.permute.xlu0 %4335
    %v4353 = vadd.f32 %v4255, %v4306
    %v4354 = vadd.f32 %v4256, %v4308
    %v4355 = vadd.f32 %v4257, %v4310
    %v4356 = vadd.f32 %v4258, %v4312
    %v4357 = vadd.f32 %v4259, %v4314
    %v4358 = vadd.f32 %v4260, %v4316
    %v4359 = vadd.f32 %v4261, %v4318
    %v4360 = vadd.f32 %v4262, %v4320
    %v4361 = vadd.f32 %v4263, %v4322
    %v4362 = vadd.f32 %v4264, %v4324
    %v4363 = vadd.f32 %v4265, %v4326
    %v4364 = vadd.f32 %v4266, %v4328
    %v4365 = vadd.f32 %v4267, %v4330
    %v4366 = vadd.f32 %v4268, %v4332
    %v4367 = vadd.f32 %v4269, %v4334
    %v4368 = vadd.f32 %v4270, %v4336
    %s4369 = sld [smem:[#allocation4 + $0x1f]]
    %v4370 = vstv %s4369
    %v4371 = vmul.f32 %v4370, %v325
    %v4372 = vmul.f32 %v4370, %v326
    %v4373 = vmul.f32 %v4370, %v327
    %v4374 = vmul.f32 %v4370, %v328
    %v4375 = vmul.f32 %v4370, %v329
    %v4376 = vmul.f32 %v4370, %v330
    %v4377 = vmul.f32 %v4370, %v331
    %v4378 = vmul.f32 %v4370, %v332
    %v4379 = vmul.f32 %v4370, %v333
    %v4380 = vmul.f32 %v4370, %v334
    %v4381 = vmul.f32 %v4370, %v335
    %v4382 = vmul.f32 %v4370, %v336
    %v4383 = vmul.f32 %v4370, %v337
    %v4384 = vmul.f32 %v4370, %v338
    %v4385 = vmul.f32 %v4370, %v339
    %v4386 = vmul.f32 %v4370, %v340
    %4403 = vrot.lane.b32.xlu0 %v4371, 125
    %v4404 = vpop.permute.xlu0 %4403
    %4405 = vrot.lane.b32.xlu0 %v4372, 125
    %v4406 = vpop.permute.xlu0 %4405
    %4407 = vrot.lane.b32.xlu0 %v4373, 125
    %v4408 = vpop.permute.xlu0 %4407
    %4409 = vrot.lane.b32.xlu0 %v4374, 125
    %v4410 = vpop.permute.xlu0 %4409
    %4411 = vrot.lane.b32.xlu0 %v4375, 125
    %v4412 = vpop.permute.xlu0 %4411
    %4413 = vrot.lane.b32.xlu0 %v4376, 125
    %v4414 = vpop.permute.xlu0 %4413
    %4415 = vrot.lane.b32.xlu0 %v4377, 125
    %v4416 = vpop.permute.xlu0 %4415
    %4417 = vrot.lane.b32.xlu0 %v4378, 125
    %v4418 = vpop.permute.xlu0 %4417
    %4419 = vrot.lane.b32.xlu0 %v4379, 125
    %v4420 = vpop.permute.xlu0 %4419
    %4421 = vrot.lane.b32.xlu0 %v4380, 125
    %v4422 = vpop.permute.xlu0 %4421
    %4423 = vrot.lane.b32.xlu0 %v4381, 125
    %v4424 = vpop.permute.xlu0 %4423
    %4425 = vrot.lane.b32.xlu0 %v4382, 125
    %v4426 = vpop.permute.xlu0 %4425
    %4427 = vrot.lane.b32.xlu0 %v4383, 125
    %v4428 = vpop.permute.xlu0 %4427
    %4429 = vrot.lane.b32.xlu0 %v4384, 125
    %v4430 = vpop.permute.xlu0 %4429
    %4431 = vrot.lane.b32.xlu0 %v4385, 125
    %v4432 = vpop.permute.xlu0 %4431
    %4433 = vrot.lane.b32.xlu0 %v4386, 125
    %v4434 = vpop.permute.xlu0 %4433
    %v4451 = vadd.f32 %v4353, %v4404
    %v4452 = vadd.f32 %v4354, %v4406
    %v4453 = vadd.f32 %v4355, %v4408
    %v4454 = vadd.f32 %v4356, %v4410
    %v4455 = vadd.f32 %v4357, %v4412
    %v4456 = vadd.f32 %v4358, %v4414
    %v4457 = vadd.f32 %v4359, %v4416
    %v4458 = vadd.f32 %v4360, %v4418
    %v4459 = vadd.f32 %v4361, %v4420
    %v4460 = vadd.f32 %v4362, %v4422
    %v4461 = vadd.f32 %v4363, %v4424
    %v4462 = vadd.f32 %v4364, %v4426
    %v4463 = vadd.f32 %v4365, %v4428
    %v4464 = vadd.f32 %v4366, %v4430
    %v4465 = vadd.f32 %v4367, %v4432
    %v4466 = vadd.f32 %v4368, %v4434
    %s4467 = sld [smem:[#allocation4 + $0x50]]
    %v4468 = vstv %s4467
    %v4469 = vmul.f32 %v4468, %v347
    %v4470 = vmul.f32 %v4468, %v348
    %v4471 = vmul.f32 %v4468, %v349
    %v4472 = vmul.f32 %v4468, %v350
    %v4473 = vmul.f32 %v4468, %v351
    %v4474 = vmul.f32 %v4468, %v352
    %v4475 = vmul.f32 %v4468, %v353
    %v4476 = vmul.f32 %v4468, %v354
    %v4477 = vmul.f32 %v4468, %v355
    %v4478 = vmul.f32 %v4468, %v356
    %v4479 = vmul.f32 %v4468, %v357
    %v4480 = vmul.f32 %v4468, %v358
    %v4481 = vmul.f32 %v4468, %v359
    %v4482 = vmul.f32 %v4468, %v360
    %v4483 = vmul.f32 %v4468, %v361
    %v4484 = vmul.f32 %v4468, %v362
    %4501 = vrot.lane.b32.xlu0 %v4469, 125
    %v4502 = vpop.permute.xlu0 %4501
    %4503 = vrot.lane.b32.xlu0 %v4470, 125
    %v4504 = vpop.permute.xlu0 %4503
    %4505 = vrot.lane.b32.xlu0 %v4471, 125
    %v4506 = vpop.permute.xlu0 %4505
    %4507 = vrot.lane.b32.xlu0 %v4472, 125
    %v4508 = vpop.permute.xlu0 %4507
    %4509 = vrot.lane.b32.xlu0 %v4473, 125
    %v4510 = vpop.permute.xlu0 %4509
    %4511 = vrot.lane.b32.xlu0 %v4474, 125
    %v4512 = vpop.permute.xlu0 %4511
    %4513 = vrot.lane.b32.xlu0 %v4475, 125
    %v4514 = vpop.permute.xlu0 %4513
    %4515 = vrot.lane.b32.xlu0 %v4476, 125
    %v4516 = vpop.permute.xlu0 %4515
    %4517 = vrot.lane.b32.xlu0 %v4477, 125
    %v4518 = vpop.permute.xlu0 %4517
    %4519 = vrot.lane.b32.xlu0 %v4478, 125
    %v4520 = vpop.permute.xlu0 %4519
    %4521 = vrot.lane.b32.xlu0 %v4479, 125
    %v4522 = vpop.permute.xlu0 %4521
    %4523 = vrot.lane.b32.xlu0 %v4480, 125
    %v4524 = vpop.permute.xlu0 %4523
    %4525 = vrot.lane.b32.xlu0 %v4481, 125
    %v4526 = vpop.permute.xlu0 %4525
    %4527 = vrot.lane.b32.xlu0 %v4482, 125
    %v4528 = vpop.permute.xlu0 %4527
    %4529 = vrot.lane.b32.xlu0 %v4483, 125
    %v4530 = vpop.permute.xlu0 %4529
    %4531 = vrot.lane.b32.xlu0 %v4484, 125
    %v4532 = vpop.permute.xlu0 %4531
    %v4549 = vadd.f32 %v4451, %v4502
    %v4550 = vadd.f32 %v4452, %v4504
    %v4551 = vadd.f32 %v4453, %v4506
    %v4552 = vadd.f32 %v4454, %v4508
    %v4553 = vadd.f32 %v4455, %v4510
    %v4554 = vadd.f32 %v4456, %v4512
    %v4555 = vadd.f32 %v4457, %v4514
    %v4556 = vadd.f32 %v4458, %v4516
    %v4557 = vadd.f32 %v4459, %v4518
    %v4558 = vadd.f32 %v4460, %v4520
    %v4559 = vadd.f32 %v4461, %v4522
    %v4560 = vadd.f32 %v4462, %v4524
    %v4561 = vadd.f32 %v4463, %v4526
    %v4562 = vadd.f32 %v4464, %v4528
    %v4563 = vadd.f32 %v4465, %v4530
    %v4564 = vadd.f32 %v4466, %v4532
    %s4565 = sld [smem:[#allocation4 + $0x26]]
    %v4566 = vstv %s4565
    %v4567 = vmul.f32 %v4566, %v326
    %v4568 = vmul.f32 %v4566, %v327
    %v4569 = vmul.f32 %v4566, %v328
    %v4570 = vmul.f32 %v4566, %v329
    %v4571 = vmul.f32 %v4566, %v330
    %v4572 = vmul.f32 %v4566, %v331
    %v4573 = vmul.f32 %v4566, %v332
    %v4574 = vmul.f32 %v4566, %v333
    %v4575 = vmul.f32 %v4566, %v334
    %v4576 = vmul.f32 %v4566, %v335
    %v4577 = vmul.f32 %v4566, %v336
    %v4578 = vmul.f32 %v4566, %v337
    %v4579 = vmul.f32 %v4566, %v338
    %v4580 = vmul.f32 %v4566, %v339
    %v4581 = vmul.f32 %v4566, %v340
    %v4582 = vmul.f32 %v4566, %v341
    %4599 = vrot.lane.b32.xlu0 %v4567, 125
    %v4600 = vpop.permute.xlu0 %4599
    %4601 = vrot.lane.b32.xlu0 %v4568, 125
    %v4602 = vpop.permute.xlu0 %4601
    %4603 = vrot.lane.b32.xlu0 %v4569, 125
    %v4604 = vpop.permute.xlu0 %4603
    %4605 = vrot.lane.b32.xlu0 %v4570, 125
    %v4606 = vpop.permute.xlu0 %4605
    %4607 = vrot.lane.b32.xlu0 %v4571, 125
    %v4608 = vpop.permute.xlu0 %4607
    %4609 = vrot.lane.b32.xlu0 %v4572, 125
    %v4610 = vpop.permute.xlu0 %4609
    %4611 = vrot.lane.b32.xlu0 %v4573, 125
    %v4612 = vpop.permute.xlu0 %4611
    %4613 = vrot.lane.b32.xlu0 %v4574, 125
    %v4614 = vpop.permute.xlu0 %4613
    %4615 = vrot.lane.b32.xlu0 %v4575, 125
    %v4616 = vpop.permute.xlu0 %4615
    %4617 = vrot.lane.b32.xlu0 %v4576, 125
    %v4618 = vpop.permute.xlu0 %4617
    %4619 = vrot.lane.b32.xlu0 %v4577, 125
    %v4620 = vpop.permute.xlu0 %4619
    %4621 = vrot.lane.b32.xlu0 %v4578, 125
    %v4622 = vpop.permute.xlu0 %4621
    %4623 = vrot.lane.b32.xlu0 %v4579, 125
    %v4624 = vpop.permute.xlu0 %4623
    %4625 = vrot.lane.b32.xlu0 %v4580, 125
    %v4626 = vpop.permute.xlu0 %4625
    %4627 = vrot.lane.b32.xlu0 %v4581, 125
    %v4628 = vpop.permute.xlu0 %4627
    %4629 = vrot.lane.b32.xlu0 %v4582, 125
    %v4630 = vpop.permute.xlu0 %4629
    %v4647 = vadd.f32 %v4549, %v4600
    %v4648 = vadd.f32 %v4550, %v4602
    %v4649 = vadd.f32 %v4551, %v4604
    %v4650 = vadd.f32 %v4552, %v4606
    %v4651 = vadd.f32 %v4553, %v4608
    %v4652 = vadd.f32 %v4554, %v4610
    %v4653 = vadd.f32 %v4555, %v4612
    %v4654 = vadd.f32 %v4556, %v4614
    %v4655 = vadd.f32 %v4557, %v4616
    %v4656 = vadd.f32 %v4558, %v4618
    %v4657 = vadd.f32 %v4559, %v4620
    %v4658 = vadd.f32 %v4560, %v4622
    %v4659 = vadd.f32 %v4561, %v4624
    %v4660 = vadd.f32 %v4562, %v4626
    %v4661 = vadd.f32 %v4563, %v4628
    %v4662 = vadd.f32 %v4564, %v4630
    %s4663 = sld [smem:[#allocation4 + $0x57]]
    %v4664 = vstv %s4663
    %v4665 = vmul.f32 %v4664, %v348
    %v4666 = vmul.f32 %v4664, %v349
    %v4667 = vmul.f32 %v4664, %v350
    %v4668 = vmul.f32 %v4664, %v351
    %v4669 = vmul.f32 %v4664, %v352
    %v4670 = vmul.f32 %v4664, %v353
    %v4671 = vmul.f32 %v4664, %v354
    %v4672 = vmul.f32 %v4664, %v355
    %v4673 = vmul.f32 %v4664, %v356
    %v4674 = vmul.f32 %v4664, %v357
    %v4675 = vmul.f32 %v4664, %v358
    %v4676 = vmul.f32 %v4664, %v359
    %v4677 = vmul.f32 %v4664, %v360
    %v4678 = vmul.f32 %v4664, %v361
    %v4679 = vmul.f32 %v4664, %v362
    %v4680 = vmul.f32 %v4664, %v363
    %4697 = vrot.lane.b32.xlu0 %v4665, 125
    %v4698 = vpop.permute.xlu0 %4697
    %4699 = vrot.lane.b32.xlu0 %v4666, 125
    %v4700 = vpop.permute.xlu0 %4699
    %4701 = vrot.lane.b32.xlu0 %v4667, 125
    %v4702 = vpop.permute.xlu0 %4701
    %4703 = vrot.lane.b32.xlu0 %v4668, 125
    %v4704 = vpop.permute.xlu0 %4703
    %4705 = vrot.lane.b32.xlu0 %v4669, 125
    %v4706 = vpop.permute.xlu0 %4705
    %4707 = vrot.lane.b32.xlu0 %v4670, 125
    %v4708 = vpop.permute.xlu0 %4707
    %4709 = vrot.lane.b32.xlu0 %v4671, 125
    %v4710 = vpop.permute.xlu0 %4709
    %4711 = vrot.lane.b32.xlu0 %v4672, 125
    %v4712 = vpop.permute.xlu0 %4711
    %4713 = vrot.lane.b32.xlu0 %v4673, 125
    %v4714 = vpop.permute.xlu0 %4713
    %4715 = vrot.lane.b32.xlu0 %v4674, 125
    %v4716 = vpop.permute.xlu0 %4715
    %4717 = vrot.lane.b32.xlu0 %v4675, 125
    %v4718 = vpop.permute.xlu0 %4717
    %4719 = vrot.lane.b32.xlu0 %v4676, 125
    %v4720 = vpop.permute.xlu0 %4719
    %4721 = vrot.lane.b32.xlu0 %v4677, 125
    %v4722 = vpop.permute.xlu0 %4721
    %4723 = vrot.lane.b32.xlu0 %v4678, 125
    %v4724 = vpop.permute.xlu0 %4723
    %4725 = vrot.lane.b32.xlu0 %v4679, 125
    %v4726 = vpop.permute.xlu0 %4725
    %4727 = vrot.lane.b32.xlu0 %v4680, 125
    %v4728 = vpop.permute.xlu0 %4727
    %v4745 = vadd.f32 %v4647, %v4698
    %v4746 = vadd.f32 %v4648, %v4700
    %v4747 = vadd.f32 %v4649, %v4702
    %v4748 = vadd.f32 %v4650, %v4704
    %v4749 = vadd.f32 %v4651, %v4706
    %v4750 = vadd.f32 %v4652, %v4708
    %v4751 = vadd.f32 %v4653, %v4710
    %v4752 = vadd.f32 %v4654, %v4712
    %v4753 = vadd.f32 %v4655, %v4714
    %v4754 = vadd.f32 %v4656, %v4716
    %v4755 = vadd.f32 %v4657, %v4718
    %v4756 = vadd.f32 %v4658, %v4720
    %v4757 = vadd.f32 %v4659, %v4722
    %v4758 = vadd.f32 %v4660, %v4724
    %v4759 = vadd.f32 %v4661, %v4726
    %v4760 = vadd.f32 %v4662, %v4728
    %s4761 = sld [smem:[#allocation4 + $0x2d]]
    %v4762 = vstv %s4761
    %v4763 = vmul.f32 %v4762, %v327
    %v4764 = vmul.f32 %v4762, %v328
    %v4765 = vmul.f32 %v4762, %v329
    %v4766 = vmul.f32 %v4762, %v330
    %v4767 = vmul.f32 %v4762, %v331
    %v4768 = vmul.f32 %v4762, %v332
    %v4769 = vmul.f32 %v4762, %v333
    %v4770 = vmul.f32 %v4762, %v334
    %v4771 = vmul.f32 %v4762, %v335
    %v4772 = vmul.f32 %v4762, %v336
    %v4773 = vmul.f32 %v4762, %v337
    %v4774 = vmul.f32 %v4762, %v338
    %v4775 = vmul.f32 %v4762, %v339
    %v4776 = vmul.f32 %v4762, %v340
    %v4777 = vmul.f32 %v4762, %v341
    %v4778 = vmul.f32 %v4762, %v342
    %4795 = vrot.lane.b32.xlu0 %v4763, 125
    %v4796 = vpop.permute.xlu0 %4795
    %4797 = vrot.lane.b32.xlu0 %v4764, 125
    %v4798 = vpop.permute.xlu0 %4797
    %4799 = vrot.lane.b32.xlu0 %v4765, 125
    %v4800 = vpop.permute.xlu0 %4799
    %4801 = vrot.lane.b32.xlu0 %v4766, 125
    %v4802 = vpop.permute.xlu0 %4801
    %4803 = vrot.lane.b32.xlu0 %v4767, 125
    %v4804 = vpop.permute.xlu0 %4803
    %4805 = vrot.lane.b32.xlu0 %v4768, 125
    %v4806 = vpop.permute.xlu0 %4805
    %4807 = vrot.lane.b32.xlu0 %v4769, 125
    %v4808 = vpop.permute.xlu0 %4807
    %4809 = vrot.lane.b32.xlu0 %v4770, 125
    %v4810 = vpop.permute.xlu0 %4809
    %4811 = vrot.lane.b32.xlu0 %v4771, 125
    %v4812 = vpop.permute.xlu0 %4811
    %4813 = vrot.lane.b32.xlu0 %v4772, 125
    %v4814 = vpop.permute.xlu0 %4813
    %4815 = vrot.lane.b32.xlu0 %v4773, 125
    %v4816 = vpop.permute.xlu0 %4815
    %4817 = vrot.lane.b32.xlu0 %v4774, 125
    %v4818 = vpop.permute.xlu0 %4817
    %4819 = vrot.lane.b32.xlu0 %v4775, 125
    %v4820 = vpop.permute.xlu0 %4819
    %4821 = vrot.lane.b32.xlu0 %v4776, 125
    %v4822 = vpop.permute.xlu0 %4821
    %4823 = vrot.lane.b32.xlu0 %v4777, 125
    %v4824 = vpop.permute.xlu0 %4823
    %4825 = vrot.lane.b32.xlu0 %v4778, 125
    %v4826 = vpop.permute.xlu0 %4825
    %v4843 = vadd.f32 %v4745, %v4796
    %v4844 = vadd.f32 %v4746, %v4798
    %v4845 = vadd.f32 %v4747, %v4800
    %v4846 = vadd.f32 %v4748, %v4802
    %v4847 = vadd.f32 %v4749, %v4804
    %v4848 = vadd.f32 %v4750, %v4806
    %v4849 = vadd.f32 %v4751, %v4808
    %v4850 = vadd.f32 %v4752, %v4810
    %v4851 = vadd.f32 %v4753, %v4812
    %v4852 = vadd.f32 %v4754, %v4814
    %v4853 = vadd.f32 %v4755, %v4816
    %v4854 = vadd.f32 %v4756, %v4818
    %v4855 = vadd.f32 %v4757, %v4820
    %v4856 = vadd.f32 %v4758, %v4822
    %v4857 = vadd.f32 %v4759, %v4824
    %v4858 = vadd.f32 %v4760, %v4826
    %s4859 = sld [smem:[#allocation4 + $0x5e]]
    %v4860 = vstv %s4859
    %v4861 = vmul.f32 %v4860, %v349
    %v4862 = vmul.f32 %v4860, %v350
    %v4863 = vmul.f32 %v4860, %v351
    %v4864 = vmul.f32 %v4860, %v352
    %v4865 = vmul.f32 %v4860, %v353
    %v4866 = vmul.f32 %v4860, %v354
    %v4867 = vmul.f32 %v4860, %v355
    %v4868 = vmul.f32 %v4860, %v356
    %v4869 = vmul.f32 %v4860, %v357
    %v4870 = vmul.f32 %v4860, %v358
    %v4871 = vmul.f32 %v4860, %v359
    %v4872 = vmul.f32 %v4860, %v360
    %v4873 = vmul.f32 %v4860, %v361
    %v4874 = vmul.f32 %v4860, %v362
    %v4875 = vmul.f32 %v4860, %v363
    %v4876 = vmul.f32 %v4860, %v364
    %4893 = vrot.lane.b32.xlu0 %v4861, 125
    %v4894 = vpop.permute.xlu0 %4893
    %4895 = vrot.lane.b32.xlu0 %v4862, 125
    %v4896 = vpop.permute.xlu0 %4895
    %4897 = vrot.lane.b32.xlu0 %v4863, 125
    %v4898 = vpop.permute.xlu0 %4897
    %4899 = vrot.lane.b32.xlu0 %v4864, 125
    %v4900 = vpop.permute.xlu0 %4899
    %4901 = vrot.lane.b32.xlu0 %v4865, 125
    %v4902 = vpop.permute.xlu0 %4901
    %4903 = vrot.lane.b32.xlu0 %v4866, 125
    %v4904 = vpop.permute.xlu0 %4903
    %4905 = vrot.lane.b32.xlu0 %v4867, 125
    %v4906 = vpop.permute.xlu0 %4905
    %4907 = vrot.lane.b32.xlu0 %v4868, 125
    %v4908 = vpop.permute.xlu0 %4907
    %4909 = vrot.lane.b32.xlu0 %v4869, 125
    %v4910 = vpop.permute.xlu0 %4909
    %4911 = vrot.lane.b32.xlu0 %v4870, 125
    %v4912 = vpop.permute.xlu0 %4911
    %4913 = vrot.lane.b32.xlu0 %v4871, 125
    %v4914 = vpop.permute.xlu0 %4913
    %4915 = vrot.lane.b32.xlu0 %v4872, 125
    %v4916 = vpop.permute.xlu0 %4915
    %4917 = vrot.lane.b32.xlu0 %v4873, 125
    %v4918 = vpop.permute.xlu0 %4917
    %4919 = vrot.lane.b32.xlu0 %v4874, 125
    %v4920 = vpop.permute.xlu0 %4919
    %4921 = vrot.lane.b32.xlu0 %v4875, 125
    %v4922 = vpop.permute.xlu0 %4921
    %4923 = vrot.lane.b32.xlu0 %v4876, 125
    %v4924 = vpop.permute.xlu0 %4923
    %v4941 = vadd.f32 %v4843, %v4894
    %v4942 = vadd.f32 %v4844, %v4896
    %v4943 = vadd.f32 %v4845, %v4898
    %v4944 = vadd.f32 %v4846, %v4900
    %v4945 = vadd.f32 %v4847, %v4902
    %v4946 = vadd.f32 %v4848, %v4904
    %v4947 = vadd.f32 %v4849, %v4906
    %v4948 = vadd.f32 %v4850, %v4908
    %v4949 = vadd.f32 %v4851, %v4910
    %v4950 = vadd.f32 %v4852, %v4912
    %v4951 = vadd.f32 %v4853, %v4914
    %v4952 = vadd.f32 %v4854, %v4916
    %v4953 = vadd.f32 %v4855, %v4918
    %v4954 = vadd.f32 %v4856, %v4920
    %v4955 = vadd.f32 %v4857, %v4922
    %v4956 = vadd.f32 %v4858, %v4924
    %s4957 = sld [smem:[#allocation4 + $0x4]]
    %v4958 = vstv %s4957
    %v4959 = vmul.f32 %v4958, %v321
    %v4960 = vmul.f32 %v4958, %v322
    %v4961 = vmul.f32 %v4958, %v323
    %v4962 = vmul.f32 %v4958, %v324
    %v4963 = vmul.f32 %v4958, %v325
    %v4964 = vmul.f32 %v4958, %v326
    %v4965 = vmul.f32 %v4958, %v327
    %v4966 = vmul.f32 %v4958, %v328
    %v4967 = vmul.f32 %v4958, %v329
    %v4968 = vmul.f32 %v4958, %v330
    %v4969 = vmul.f32 %v4958, %v331
    %v4970 = vmul.f32 %v4958, %v332
    %v4971 = vmul.f32 %v4958, %v333
    %v4972 = vmul.f32 %v4958, %v334
    %v4973 = vmul.f32 %v4958, %v335
    %v4974 = vmul.f32 %v4958, %v336
    %4991 = vrot.lane.b32.xlu0 %v4959, 124
    %v4992 = vpop.permute.xlu0 %4991
    %4993 = vrot.lane.b32.xlu0 %v4960, 124
    %v4994 = vpop.permute.xlu0 %4993
    %4995 = vrot.lane.b32.xlu0 %v4961, 124
    %v4996 = vpop.permute.xlu0 %4995
    %4997 = vrot.lane.b32.xlu0 %v4962, 124
    %v4998 = vpop.permute.xlu0 %4997
    %4999 = vrot.lane.b32.xlu0 %v4963, 124
    %v5000 = vpop.permute.xlu0 %4999
    %5001 = vrot.lane.b32.xlu0 %v4964, 124
    %v5002 = vpop.permute.xlu0 %5001
    %5003 = vrot.lane.b32.xlu0 %v4965, 124
    %v5004 = vpop.permute.xlu0 %5003
    %5005 = vrot.lane.b32.xlu0 %v4966, 124
    %v5006 = vpop.permute.xlu0 %5005
    %5007 = vrot.lane.b32.xlu0 %v4967, 124
    %v5008 = vpop.permute.xlu0 %5007
    %5009 = vrot.lane.b32.xlu0 %v4968, 124
    %v5010 = vpop.permute.xlu0 %5009
    %5011 = vrot.lane.b32.xlu0 %v4969, 124
    %v5012 = vpop.permute.xlu0 %5011
    %5013 = vrot.lane.b32.xlu0 %v4970, 124
    %v5014 = vpop.permute.xlu0 %5013
    %5015 = vrot.lane.b32.xlu0 %v4971, 124
    %v5016 = vpop.permute.xlu0 %5015
    %5017 = vrot.lane.b32.xlu0 %v4972, 124
    %v5018 = vpop.permute.xlu0 %5017
    %5019 = vrot.lane.b32.xlu0 %v4973, 124
    %v5020 = vpop.permute.xlu0 %5019
    %5021 = vrot.lane.b32.xlu0 %v4974, 124
    %v5022 = vpop.permute.xlu0 %5021
    %v5039 = vadd.f32 %v4941, %v4992
    %v5040 = vadd.f32 %v4942, %v4994
    %v5041 = vadd.f32 %v4943, %v4996
    %v5042 = vadd.f32 %v4944, %v4998
    %v5043 = vadd.f32 %v4945, %v5000
    %v5044 = vadd.f32 %v4946, %v5002
    %v5045 = vadd.f32 %v4947, %v5004
    %v5046 = vadd.f32 %v4948, %v5006
    %v5047 = vadd.f32 %v4949, %v5008
    %v5048 = vadd.f32 %v4950, %v5010
    %v5049 = vadd.f32 %v4951, %v5012
    %v5050 = vadd.f32 %v4952, %v5014
    %v5051 = vadd.f32 %v4953, %v5016
    %v5052 = vadd.f32 %v4954, %v5018
    %v5053 = vadd.f32 %v4955, %v5020
    %v5054 = vadd.f32 %v4956, %v5022
    %s5055 = sld [smem:[#allocation4 + $0x35]]
    %v5056 = vstv %s5055
    %v5057 = vmul.f32 %v5056, %v343
    %v5058 = vmul.f32 %v5056, %v344
    %v5059 = vmul.f32 %v5056, %v345
    %v5060 = vmul.f32 %v5056, %v346
    %v5061 = vmul.f32 %v5056, %v347
    %v5062 = vmul.f32 %v5056, %v348
    %v5063 = vmul.f32 %v5056, %v349
    %v5064 = vmul.f32 %v5056, %v350
    %v5065 = vmul.f32 %v5056, %v351
    %v5066 = vmul.f32 %v5056, %v352
    %v5067 = vmul.f32 %v5056, %v353
    %v5068 = vmul.f32 %v5056, %v354
    %v5069 = vmul.f32 %v5056, %v355
    %v5070 = vmul.f32 %v5056, %v356
    %v5071 = vmul.f32 %v5056, %v357
    %v5072 = vmul.f32 %v5056, %v358
    %5089 = vrot.lane.b32.xlu0 %v5057, 124
    %v5090 = vpop.permute.xlu0 %5089
    %5091 = vrot.lane.b32.xlu0 %v5058, 124
    %v5092 = vpop.permute.xlu0 %5091
    %5093 = vrot.lane.b32.xlu0 %v5059, 124
    %v5094 = vpop.permute.xlu0 %5093
    %5095 = vrot.lane.b32.xlu0 %v5060, 124
    %v5096 = vpop.permute.xlu0 %5095
    %5097 = vrot.lane.b32.xlu0 %v5061, 124
    %v5098 = vpop.permute.xlu0 %5097
    %5099 = vrot.lane.b32.xlu0 %v5062, 124
    %v5100 = vpop.permute.xlu0 %5099
    %5101 = vrot.lane.b32.xlu0 %v5063, 124
    %v5102 = vpop.permute.xlu0 %5101
    %5103 = vrot.lane.b32.xlu0 %v5064, 124
    %v5104 = vpop.permute.xlu0 %5103
    %5105 = vrot.lane.b32.xlu0 %v5065, 124
    %v5106 = vpop.permute.xlu0 %5105
    %5107 = vrot.lane.b32.xlu0 %v5066, 124
    %v5108 = vpop.permute.xlu0 %5107
    %5109 = vrot.lane.b32.xlu0 %v5067, 124
    %v5110 = vpop.permute.xlu0 %5109
    %5111 = vrot.lane.b32.xlu0 %v5068, 124
    %v5112 = vpop.permute.xlu0 %5111
    %5113 = vrot.lane.b32.xlu0 %v5069, 124
    %v5114 = vpop.permute.xlu0 %5113
    %5115 = vrot.lane.b32.xlu0 %v5070, 124
    %v5116 = vpop.permute.xlu0 %5115
    %5117 = vrot.lane.b32.xlu0 %v5071, 124
    %v5118 = vpop.permute.xlu0 %5117
    %5119 = vrot.lane.b32.xlu0 %v5072, 124
    %v5120 = vpop.permute.xlu0 %5119
    %v5137 = vadd.f32 %v5039, %v5090
    %v5138 = vadd.f32 %v5040, %v5092
    %v5139 = vadd.f32 %v5041, %v5094
    %v5140 = vadd.f32 %v5042, %v5096
    %v5141 = vadd.f32 %v5043, %v5098
    %v5142 = vadd.f32 %v5044, %v5100
    %v5143 = vadd.f32 %v5045, %v5102
    %v5144 = vadd.f32 %v5046, %v5104
    %v5145 = vadd.f32 %v5047, %v5106
    %v5146 = vadd.f32 %v5048, %v5108
    %v5147 = vadd.f32 %v5049, %v5110
    %v5148 = vadd.f32 %v5050, %v5112
    %v5149 = vadd.f32 %v5051, %v5114
    %v5150 = vadd.f32 %v5052, %v5116
    %v5151 = vadd.f32 %v5053, %v5118
    %v5152 = vadd.f32 %v5054, %v5120
    %s5153 = sld [smem:[#allocation4 + $0xb]]
    %v5154 = vstv %s5153
    %v5155 = vmul.f32 %v5154, %v322
    %v5156 = vmul.f32 %v5154, %v323
    %v5157 = vmul.f32 %v5154, %v324
    %v5158 = vmul.f32 %v5154, %v325
    %v5159 = vmul.f32 %v5154, %v326
    %v5160 = vmul.f32 %v5154, %v327
    %v5161 = vmul.f32 %v5154, %v328
    %v5162 = vmul.f32 %v5154, %v329
    %v5163 = vmul.f32 %v5154, %v330
    %v5164 = vmul.f32 %v5154, %v331
    %v5165 = vmul.f32 %v5154, %v332
    %v5166 = vmul.f32 %v5154, %v333
    %v5167 = vmul.f32 %v5154, %v334
    %v5168 = vmul.f32 %v5154, %v335
    %v5169 = vmul.f32 %v5154, %v336
    %v5170 = vmul.f32 %v5154, %v337
    %5187 = vrot.lane.b32.xlu0 %v5155, 124
    %v5188 = vpop.permute.xlu0 %5187
    %5189 = vrot.lane.b32.xlu0 %v5156, 124
    %v5190 = vpop.permute.xlu0 %5189
    %5191 = vrot.lane.b32.xlu0 %v5157, 124
    %v5192 = vpop.permute.xlu0 %5191
    %5193 = vrot.lane.b32.xlu0 %v5158, 124
    %v5194 = vpop.permute.xlu0 %5193
    %5195 = vrot.lane.b32.xlu0 %v5159, 124
    %v5196 = vpop.permute.xlu0 %5195
    %5197 = vrot.lane.b32.xlu0 %v5160, 124
    %v5198 = vpop.permute.xlu0 %5197
    %5199 = vrot.lane.b32.xlu0 %v5161, 124
    %v5200 = vpop.permute.xlu0 %5199
    %5201 = vrot.lane.b32.xlu0 %v5162, 124
    %v5202 = vpop.permute.xlu0 %5201
    %5203 = vrot.lane.b32.xlu0 %v5163, 124
    %v5204 = vpop.permute.xlu0 %5203
    %5205 = vrot.lane.b32.xlu0 %v5164, 124
    %v5206 = vpop.permute.xlu0 %5205
    %5207 = vrot.lane.b32.xlu0 %v5165, 124
    %v5208 = vpop.permute.xlu0 %5207
    %5209 = vrot.lane.b32.xlu0 %v5166, 124
    %v5210 = vpop.permute.xlu0 %5209
    %5211 = vrot.lane.b32.xlu0 %v5167, 124
    %v5212 = vpop.permute.xlu0 %5211
    %5213 = vrot.lane.b32.xlu0 %v5168, 124
    %v5214 = vpop.permute.xlu0 %5213
    %5215 = vrot.lane.b32.xlu0 %v5169, 124
    %v5216 = vpop.permute.xlu0 %5215
    %5217 = vrot.lane.b32.xlu0 %v5170, 124
    %v5218 = vpop.permute.xlu0 %5217
    %v5235 = vadd.f32 %v5137, %v5188
    %v5236 = vadd.f32 %v5138, %v5190
    %v5237 = vadd.f32 %v5139, %v5192
    %v5238 = vadd.f32 %v5140, %v5194
    %v5239 = vadd.f32 %v5141, %v5196
    %v5240 = vadd.f32 %v5142, %v5198
    %v5241 = vadd.f32 %v5143, %v5200
    %v5242 = vadd.f32 %v5144, %v5202
    %v5243 = vadd.f32 %v5145, %v5204
    %v5244 = vadd.f32 %v5146, %v5206
    %v5245 = vadd.f32 %v5147, %v5208
    %v5246 = vadd.f32 %v5148, %v5210
    %v5247 = vadd.f32 %v5149, %v5212
    %v5248 = vadd.f32 %v5150, %v5214
    %v5249 = vadd.f32 %v5151, %v5216
    %v5250 = vadd.f32 %v5152, %v5218
    %s5251 = sld [smem:[#allocation4 + $0x3c]]
    %v5252 = vstv %s5251
    %v5253 = vmul.f32 %v5252, %v344
    %v5254 = vmul.f32 %v5252, %v345
    %v5255 = vmul.f32 %v5252, %v346
    %v5256 = vmul.f32 %v5252, %v347
    %v5257 = vmul.f32 %v5252, %v348
    %v5258 = vmul.f32 %v5252, %v349
    %v5259 = vmul.f32 %v5252, %v350
    %v5260 = vmul.f32 %v5252, %v351
    %v5261 = vmul.f32 %v5252, %v352
    %v5262 = vmul.f32 %v5252, %v353
    %v5263 = vmul.f32 %v5252, %v354
    %v5264 = vmul.f32 %v5252, %v355
    %v5265 = vmul.f32 %v5252, %v356
    %v5266 = vmul.f32 %v5252, %v357
    %v5267 = vmul.f32 %v5252, %v358
    %v5268 = vmul.f32 %v5252, %v359
    %5285 = vrot.lane.b32.xlu0 %v5253, 124
    %v5286 = vpop.permute.xlu0 %5285
    %5287 = vrot.lane.b32.xlu0 %v5254, 124
    %v5288 = vpop.permute.xlu0 %5287
    %5289 = vrot.lane.b32.xlu0 %v5255, 124
    %v5290 = vpop.permute.xlu0 %5289
    %5291 = vrot.lane.b32.xlu0 %v5256, 124
    %v5292 = vpop.permute.xlu0 %5291
    %5293 = vrot.lane.b32.xlu0 %v5257, 124
    %v5294 = vpop.permute.xlu0 %5293
    %5295 = vrot.lane.b32.xlu0 %v5258, 124
    %v5296 = vpop.permute.xlu0 %5295
    %5297 = vrot.lane.b32.xlu0 %v5259, 124
    %v5298 = vpop.permute.xlu0 %5297
    %5299 = vrot.lane.b32.xlu0 %v5260, 124
    %v5300 = vpop.permute.xlu0 %5299
    %5301 = vrot.lane.b32.xlu0 %v5261, 124
    %v5302 = vpop.permute.xlu0 %5301
    %5303 = vrot.lane.b32.xlu0 %v5262, 124
    %v5304 = vpop.permute.xlu0 %5303
    %5305 = vrot.lane.b32.xlu0 %v5263, 124
    %v5306 = vpop.permute.xlu0 %5305
    %5307 = vrot.lane.b32.xlu0 %v5264, 124
    %v5308 = vpop.permute.xlu0 %5307
    %5309 = vrot.lane.b32.xlu0 %v5265, 124
    %v5310 = vpop.permute.xlu0 %5309
    %5311 = vrot.lane.b32.xlu0 %v5266, 124
    %v5312 = vpop.permute.xlu0 %5311
    %5313 = vrot.lane.b32.xlu0 %v5267, 124
    %v5314 = vpop.permute.xlu0 %5313
    %5315 = vrot.lane.b32.xlu0 %v5268, 124
    %v5316 = vpop.permute.xlu0 %5315
    %v5333 = vadd.f32 %v5235, %v5286
    %v5334 = vadd.f32 %v5236, %v5288
    %v5335 = vadd.f32 %v5237, %v5290
    %v5336 = vadd.f32 %v5238, %v5292
    %v5337 = vadd.f32 %v5239, %v5294
    %v5338 = vadd.f32 %v5240, %v5296
    %v5339 = vadd.f32 %v5241, %v5298
    %v5340 = vadd.f32 %v5242, %v5300
    %v5341 = vadd.f32 %v5243, %v5302
    %v5342 = vadd.f32 %v5244, %v5304
    %v5343 = vadd.f32 %v5245, %v5306
    %v5344 = vadd.f32 %v5246, %v5308
    %v5345 = vadd.f32 %v5247, %v5310
    %v5346 = vadd.f32 %v5248, %v5312
    %v5347 = vadd.f32 %v5249, %v5314
    %v5348 = vadd.f32 %v5250, %v5316
    %s5349 = sld [smem:[#allocation4 + $0x12]]
    %v5350 = vstv %s5349
    %v5351 = vmul.f32 %v5350, %v323
    %v5352 = vmul.f32 %v5350, %v324
    %v5353 = vmul.f32 %v5350, %v325
    %v5354 = vmul.f32 %v5350, %v326
    %v5355 = vmul.f32 %v5350, %v327
    %v5356 = vmul.f32 %v5350, %v328
    %v5357 = vmul.f32 %v5350, %v329
    %v5358 = vmul.f32 %v5350, %v330
    %v5359 = vmul.f32 %v5350, %v331
    %v5360 = vmul.f32 %v5350, %v332
    %v5361 = vmul.f32 %v5350, %v333
    %v5362 = vmul.f32 %v5350, %v334
    %v5363 = vmul.f32 %v5350, %v335
    %v5364 = vmul.f32 %v5350, %v336
    %v5365 = vmul.f32 %v5350, %v337
    %v5366 = vmul.f32 %v5350, %v338
    %5383 = vrot.lane.b32.xlu0 %v5351, 124
    %v5384 = vpop.permute.xlu0 %5383
    %5385 = vrot.lane.b32.xlu0 %v5352, 124
    %v5386 = vpop.permute.xlu0 %5385
    %5387 = vrot.lane.b32.xlu0 %v5353, 124
    %v5388 = vpop.permute.xlu0 %5387
    %5389 = vrot.lane.b32.xlu0 %v5354, 124
    %v5390 = vpop.permute.xlu0 %5389
    %5391 = vrot.lane.b32.xlu0 %v5355, 124
    %v5392 = vpop.permute.xlu0 %5391
    %5393 = vrot.lane.b32.xlu0 %v5356, 124
    %v5394 = vpop.permute.xlu0 %5393
    %5395 = vrot.lane.b32.xlu0 %v5357, 124
    %v5396 = vpop.permute.xlu0 %5395
    %5397 = vrot.lane.b32.xlu0 %v5358, 124
    %v5398 = vpop.permute.xlu0 %5397
    %5399 = vrot.lane.b32.xlu0 %v5359, 124
    %v5400 = vpop.permute.xlu0 %5399
    %5401 = vrot.lane.b32.xlu0 %v5360, 124
    %v5402 = vpop.permute.xlu0 %5401
    %5403 = vrot.lane.b32.xlu0 %v5361, 124
    %v5404 = vpop.permute.xlu0 %5403
    %5405 = vrot.lane.b32.xlu0 %v5362, 124
    %v5406 = vpop.permute.xlu0 %5405
    %5407 = vrot.lane.b32.xlu0 %v5363, 124
    %v5408 = vpop.permute.xlu0 %5407
    %5409 = vrot.lane.b32.xlu0 %v5364, 124
    %v5410 = vpop.permute.xlu0 %5409
    %5411 = vrot.lane.b32.xlu0 %v5365, 124
    %v5412 = vpop.permute.xlu0 %5411
    %5413 = vrot.lane.b32.xlu0 %v5366, 124
    %v5414 = vpop.permute.xlu0 %5413
    %v5431 = vadd.f32 %v5333, %v5384
    %v5432 = vadd.f32 %v5334, %v5386
    %v5433 = vadd.f32 %v5335, %v5388
    %v5434 = vadd.f32 %v5336, %v5390
    %v5435 = vadd.f32 %v5337, %v5392
    %v5436 = vadd.f32 %v5338, %v5394
    %v5437 = vadd.f32 %v5339, %v5396
    %v5438 = vadd.f32 %v5340, %v5398
    %v5439 = vadd.f32 %v5341, %v5400
    %v5440 = vadd.f32 %v5342, %v5402
    %v5441 = vadd.f32 %v5343, %v5404
    %v5442 = vadd.f32 %v5344, %v5406
    %v5443 = vadd.f32 %v5345, %v5408
    %v5444 = vadd.f32 %v5346, %v5410
    %v5445 = vadd.f32 %v5347, %v5412
    %v5446 = vadd.f32 %v5348, %v5414
    %s5447 = sld [smem:[#allocation4 + $0x43]]
    %v5448 = vstv %s5447
    %v5449 = vmul.f32 %v5448, %v345
    %v5450 = vmul.f32 %v5448, %v346
    %v5451 = vmul.f32 %v5448, %v347
    %v5452 = vmul.f32 %v5448, %v348
    %v5453 = vmul.f32 %v5448, %v349
    %v5454 = vmul.f32 %v5448, %v350
    %v5455 = vmul.f32 %v5448, %v351
    %v5456 = vmul.f32 %v5448, %v352
    %v5457 = vmul.f32 %v5448, %v353
    %v5458 = vmul.f32 %v5448, %v354
    %v5459 = vmul.f32 %v5448, %v355
    %v5460 = vmul.f32 %v5448, %v356
    %v5461 = vmul.f32 %v5448, %v357
    %v5462 = vmul.f32 %v5448, %v358
    %v5463 = vmul.f32 %v5448, %v359
    %v5464 = vmul.f32 %v5448, %v360
    %5481 = vrot.lane.b32.xlu0 %v5449, 124
    %v5482 = vpop.permute.xlu0 %5481
    %5483 = vrot.lane.b32.xlu0 %v5450, 124
    %v5484 = vpop.permute.xlu0 %5483
    %5485 = vrot.lane.b32.xlu0 %v5451, 124
    %v5486 = vpop.permute.xlu0 %5485
    %5487 = vrot.lane.b32.xlu0 %v5452, 124
    %v5488 = vpop.permute.xlu0 %5487
    %5489 = vrot.lane.b32.xlu0 %v5453, 124
    %v5490 = vpop.permute.xlu0 %5489
    %5491 = vrot.lane.b32.xlu0 %v5454, 124
    %v5492 = vpop.permute.xlu0 %5491
    %5493 = vrot.lane.b32.xlu0 %v5455, 124
    %v5494 = vpop.permute.xlu0 %5493
    %5495 = vrot.lane.b32.xlu0 %v5456, 124
    %v5496 = vpop.permute.xlu0 %5495
    %5497 = vrot.lane.b32.xlu0 %v5457, 124
    %v5498 = vpop.permute.xlu0 %5497
    %5499 = vrot.lane.b32.xlu0 %v5458, 124
    %v5500 = vpop.permute.xlu0 %5499
    %5501 = vrot.lane.b32.xlu0 %v5459, 124
    %v5502 = vpop.permute.xlu0 %5501
    %5503 = vrot.lane.b32.xlu0 %v5460, 124
    %v5504 = vpop.permute.xlu0 %5503
    %5505 = vrot.lane.b32.xlu0 %v5461, 124
    %v5506 = vpop.permute.xlu0 %5505
    %5507 = vrot.lane.b32.xlu0 %v5462, 124
    %v5508 = vpop.permute.xlu0 %5507
    %5509 = vrot.lane.b32.xlu0 %v5463, 124
    %v5510 = vpop.permute.xlu0 %5509
    %5511 = vrot.lane.b32.xlu0 %v5464, 124
    %v5512 = vpop.permute.xlu0 %5511
    %v5529 = vadd.f32 %v5431, %v5482
    %v5530 = vadd.f32 %v5432, %v5484
    %v5531 = vadd.f32 %v5433, %v5486
    %v5532 = vadd.f32 %v5434, %v5488
    %v5533 = vadd.f32 %v5435, %v5490
    %v5534 = vadd.f32 %v5436, %v5492
    %v5535 = vadd.f32 %v5437, %v5494
    %v5536 = vadd.f32 %v5438, %v5496
    %v5537 = vadd.f32 %v5439, %v5498
    %v5538 = vadd.f32 %v5440, %v5500
    %v5539 = vadd.f32 %v5441, %v5502
    %v5540 = vadd.f32 %v5442, %v5504
    %v5541 = vadd.f32 %v5443, %v5506
    %v5542 = vadd.f32 %v5444, %v5508
    %v5543 = vadd.f32 %v5445, %v5510
    %v5544 = vadd.f32 %v5446, %v5512
    %s5545 = sld [smem:[#allocation4 + $0x19]]
    %v5546 = vstv %s5545
    %v5547 = vmul.f32 %v5546, %v324
    %v5548 = vmul.f32 %v5546, %v325
    %v5549 = vmul.f32 %v5546, %v326
    %v5550 = vmul.f32 %v5546, %v327
    %v5551 = vmul.f32 %v5546, %v328
    %v5552 = vmul.f32 %v5546, %v329
    %v5553 = vmul.f32 %v5546, %v330
    %v5554 = vmul.f32 %v5546, %v331
    %v5555 = vmul.f32 %v5546, %v332
    %v5556 = vmul.f32 %v5546, %v333
    %v5557 = vmul.f32 %v5546, %v334
    %v5558 = vmul.f32 %v5546, %v335
    %v5559 = vmul.f32 %v5546, %v336
    %v5560 = vmul.f32 %v5546, %v337
    %v5561 = vmul.f32 %v5546, %v338
    %v5562 = vmul.f32 %v5546, %v339
    %5579 = vrot.lane.b32.xlu0 %v5547, 124
    %v5580 = vpop.permute.xlu0 %5579
    %5581 = vrot.lane.b32.xlu0 %v5548, 124
    %v5582 = vpop.permute.xlu0 %5581
    %5583 = vrot.lane.b32.xlu0 %v5549, 124
    %v5584 = vpop.permute.xlu0 %5583
    %5585 = vrot.lane.b32.xlu0 %v5550, 124
    %v5586 = vpop.permute.xlu0 %5585
    %5587 = vrot.lane.b32.xlu0 %v5551, 124
    %v5588 = vpop.permute.xlu0 %5587
    %5589 = vrot.lane.b32.xlu0 %v5552, 124
    %v5590 = vpop.permute.xlu0 %5589
    %5591 = vrot.lane.b32.xlu0 %v5553, 124
    %v5592 = vpop.permute.xlu0 %5591
    %5593 = vrot.lane.b32.xlu0 %v5554, 124
    %v5594 = vpop.permute.xlu0 %5593
    %5595 = vrot.lane.b32.xlu0 %v5555, 124
    %v5596 = vpop.permute.xlu0 %5595
    %5597 = vrot.lane.b32.xlu0 %v5556, 124
    %v5598 = vpop.permute.xlu0 %5597
    %5599 = vrot.lane.b32.xlu0 %v5557, 124
    %v5600 = vpop.permute.xlu0 %5599
    %5601 = vrot.lane.b32.xlu0 %v5558, 124
    %v5602 = vpop.permute.xlu0 %5601
    %5603 = vrot.lane.b32.xlu0 %v5559, 124
    %v5604 = vpop.permute.xlu0 %5603
    %5605 = vrot.lane.b32.xlu0 %v5560, 124
    %v5606 = vpop.permute.xlu0 %5605
    %5607 = vrot.lane.b32.xlu0 %v5561, 124
    %v5608 = vpop.permute.xlu0 %5607
    %5609 = vrot.lane.b32.xlu0 %v5562, 124
    %v5610 = vpop.permute.xlu0 %5609
    %v5627 = vadd.f32 %v5529, %v5580
    %v5628 = vadd.f32 %v5530, %v5582
    %v5629 = vadd.f32 %v5531, %v5584
    %v5630 = vadd.f32 %v5532, %v5586
    %v5631 = vadd.f32 %v5533, %v5588
    %v5632 = vadd.f32 %v5534, %v5590
    %v5633 = vadd.f32 %v5535, %v5592
    %v5634 = vadd.f32 %v5536, %v5594
    %v5635 = vadd.f32 %v5537, %v5596
    %v5636 = vadd.f32 %v5538, %v5598
    %v5637 = vadd.f32 %v5539, %v5600
    %v5638 = vadd.f32 %v5540, %v5602
    %v5639 = vadd.f32 %v5541, %v5604
    %v5640 = vadd.f32 %v5542, %v5606
    %v5641 = vadd.f32 %v5543, %v5608
    %v5642 = vadd.f32 %v5544, %v5610
    %s5643 = sld [smem:[#allocation4 + $0x4a]]
    %v5644 = vstv %s5643
    %v5645 = vmul.f32 %v5644, %v346
    %v5646 = vmul.f32 %v5644, %v347
    %v5647 = vmul.f32 %v5644, %v348
    %v5648 = vmul.f32 %v5644, %v349
    %v5649 = vmul.f32 %v5644, %v350
    %v5650 = vmul.f32 %v5644, %v351
    %v5651 = vmul.f32 %v5644, %v352
    %v5652 = vmul.f32 %v5644, %v353
    %v5653 = vmul.f32 %v5644, %v354
    %v5654 = vmul.f32 %v5644, %v355
    %v5655 = vmul.f32 %v5644, %v356
    %v5656 = vmul.f32 %v5644, %v357
    %v5657 = vmul.f32 %v5644, %v358
    %v5658 = vmul.f32 %v5644, %v359
    %v5659 = vmul.f32 %v5644, %v360
    %v5660 = vmul.f32 %v5644, %v361
    %5677 = vrot.lane.b32.xlu0 %v5645, 124
    %v5678 = vpop.permute.xlu0 %5677
    %5679 = vrot.lane.b32.xlu0 %v5646, 124
    %v5680 = vpop.permute.xlu0 %5679
    %5681 = vrot.lane.b32.xlu0 %v5647, 124
    %v5682 = vpop.permute.xlu0 %5681
    %5683 = vrot.lane.b32.xlu0 %v5648, 124
    %v5684 = vpop.permute.xlu0 %5683
    %5685 = vrot.lane.b32.xlu0 %v5649, 124
    %v5686 = vpop.permute.xlu0 %5685
    %5687 = vrot.lane.b32.xlu0 %v5650, 124
    %v5688 = vpop.permute.xlu0 %5687
    %5689 = vrot.lane.b32.xlu0 %v5651, 124
    %v5690 = vpop.permute.xlu0 %5689
    %5691 = vrot.lane.b32.xlu0 %v5652, 124
    %v5692 = vpop.permute.xlu0 %5691
    %5693 = vrot.lane.b32.xlu0 %v5653, 124
    %v5694 = vpop.permute.xlu0 %5693
    %5695 = vrot.lane.b32.xlu0 %v5654, 124
    %v5696 = vpop.permute.xlu0 %5695
    %5697 = vrot.lane.b32.xlu0 %v5655, 124
    %v5698 = vpop.permute.xlu0 %5697
    %5699 = vrot.lane.b32.xlu0 %v5656, 124
    %v5700 = vpop.permute.xlu0 %5699
    %5701 = vrot.lane.b32.xlu0 %v5657, 124
    %v5702 = vpop.permute.xlu0 %5701
    %5703 = vrot.lane.b32.xlu0 %v5658, 124
    %v5704 = vpop.permute.xlu0 %5703
    %5705 = vrot.lane.b32.xlu0 %v5659, 124
    %v5706 = vpop.permute.xlu0 %5705
    %5707 = vrot.lane.b32.xlu0 %v5660, 124
    %v5708 = vpop.permute.xlu0 %5707
    %v5725 = vadd.f32 %v5627, %v5678
    %v5726 = vadd.f32 %v5628, %v5680
    %v5727 = vadd.f32 %v5629, %v5682
    %v5728 = vadd.f32 %v5630, %v5684
    %v5729 = vadd.f32 %v5631, %v5686
    %v5730 = vadd.f32 %v5632, %v5688
    %v5731 = vadd.f32 %v5633, %v5690
    %v5732 = vadd.f32 %v5634, %v5692
    %v5733 = vadd.f32 %v5635, %v5694
    %v5734 = vadd.f32 %v5636, %v5696
    %v5735 = vadd.f32 %v5637, %v5698
    %v5736 = vadd.f32 %v5638, %v5700
    %v5737 = vadd.f32 %v5639, %v5702
    %v5738 = vadd.f32 %v5640, %v5704
    %v5739 = vadd.f32 %v5641, %v5706
    %v5740 = vadd.f32 %v5642, %v5708
    %s5741 = sld [smem:[#allocation4 + $0x20]]
    %v5742 = vstv %s5741
    %v5743 = vmul.f32 %v5742, %v325
    %v5744 = vmul.f32 %v5742, %v326
    %v5745 = vmul.f32 %v5742, %v327
    %v5746 = vmul.f32 %v5742, %v328
    %v5747 = vmul.f32 %v5742, %v329
    %v5748 = vmul.f32 %v5742, %v330
    %v5749 = vmul.f32 %v5742, %v331
    %v5750 = vmul.f32 %v5742, %v332
    %v5751 = vmul.f32 %v5742, %v333
    %v5752 = vmul.f32 %v5742, %v334
    %v5753 = vmul.f32 %v5742, %v335
    %v5754 = vmul.f32 %v5742, %v336
    %v5755 = vmul.f32 %v5742, %v337
    %v5756 = vmul.f32 %v5742, %v338
    %v5757 = vmul.f32 %v5742, %v339
    %v5758 = vmul.f32 %v5742, %v340
    %5775 = vrot.lane.b32.xlu0 %v5743, 124
    %v5776 = vpop.permute.xlu0 %5775
    %5777 = vrot.lane.b32.xlu0 %v5744, 124
    %v5778 = vpop.permute.xlu0 %5777
    %5779 = vrot.lane.b32.xlu0 %v5745, 124
    %v5780 = vpop.permute.xlu0 %5779
    %5781 = vrot.lane.b32.xlu0 %v5746, 124
    %v5782 = vpop.permute.xlu0 %5781
    %5783 = vrot.lane.b32.xlu0 %v5747, 124
    %v5784 = vpop.permute.xlu0 %5783
    %5785 = vrot.lane.b32.xlu0 %v5748, 124
    %v5786 = vpop.permute.xlu0 %5785
    %5787 = vrot.lane.b32.xlu0 %v5749, 124
    %v5788 = vpop.permute.xlu0 %5787
    %5789 = vrot.lane.b32.xlu0 %v5750, 124
    %v5790 = vpop.permute.xlu0 %5789
    %5791 = vrot.lane.b32.xlu0 %v5751, 124
    %v5792 = vpop.permute.xlu0 %5791
    %5793 = vrot.lane.b32.xlu0 %v5752, 124
    %v5794 = vpop.permute.xlu0 %5793
    %5795 = vrot.lane.b32.xlu0 %v5753, 124
    %v5796 = vpop.permute.xlu0 %5795
    %5797 = vrot.lane.b32.xlu0 %v5754, 124
    %v5798 = vpop.permute.xlu0 %5797
    %5799 = vrot.lane.b32.xlu0 %v5755, 124
    %v5800 = vpop.permute.xlu0 %5799
    %5801 = vrot.lane.b32.xlu0 %v5756, 124
    %v5802 = vpop.permute.xlu0 %5801
    %5803 = vrot.lane.b32.xlu0 %v5757, 124
    %v5804 = vpop.permute.xlu0 %5803
    %5805 = vrot.lane.b32.xlu0 %v5758, 124
    %v5806 = vpop.permute.xlu0 %5805
    %v5823 = vadd.f32 %v5725, %v5776
    %v5824 = vadd.f32 %v5726, %v5778
    %v5825 = vadd.f32 %v5727, %v5780
    %v5826 = vadd.f32 %v5728, %v5782
    %v5827 = vadd.f32 %v5729, %v5784
    %v5828 = vadd.f32 %v5730, %v5786
    %v5829 = vadd.f32 %v5731, %v5788
    %v5830 = vadd.f32 %v5732, %v5790
    %v5831 = vadd.f32 %v5733, %v5792
    %v5832 = vadd.f32 %v5734, %v5794
    %v5833 = vadd.f32 %v5735, %v5796
    %v5834 = vadd.f32 %v5736, %v5798
    %v5835 = vadd.f32 %v5737, %v5800
    %v5836 = vadd.f32 %v5738, %v5802
    %v5837 = vadd.f32 %v5739, %v5804
    %v5838 = vadd.f32 %v5740, %v5806
    %s5839 = sld [smem:[#allocation4 + $0x51]]
    %v5840 = vstv %s5839
    %v5841 = vmul.f32 %v5840, %v347
    %v5842 = vmul.f32 %v5840, %v348
    %v5843 = vmul.f32 %v5840, %v349
    %v5844 = vmul.f32 %v5840, %v350
    %v5845 = vmul.f32 %v5840, %v351
    %v5846 = vmul.f32 %v5840, %v352
    %v5847 = vmul.f32 %v5840, %v353
    %v5848 = vmul.f32 %v5840, %v354
    %v5849 = vmul.f32 %v5840, %v355
    %v5850 = vmul.f32 %v5840, %v356
    %v5851 = vmul.f32 %v5840, %v357
    %v5852 = vmul.f32 %v5840, %v358
    %v5853 = vmul.f32 %v5840, %v359
    %v5854 = vmul.f32 %v5840, %v360
    %v5855 = vmul.f32 %v5840, %v361
    %v5856 = vmul.f32 %v5840, %v362
    %5873 = vrot.lane.b32.xlu0 %v5841, 124
    %v5874 = vpop.permute.xlu0 %5873
    %5875 = vrot.lane.b32.xlu0 %v5842, 124
    %v5876 = vpop.permute.xlu0 %5875
    %5877 = vrot.lane.b32.xlu0 %v5843, 124
    %v5878 = vpop.permute.xlu0 %5877
    %5879 = vrot.lane.b32.xlu0 %v5844, 124
    %v5880 = vpop.permute.xlu0 %5879
    %5881 = vrot.lane.b32.xlu0 %v5845, 124
    %v5882 = vpop.permute.xlu0 %5881
    %5883 = vrot.lane.b32.xlu0 %v5846, 124
    %v5884 = vpop.permute.xlu0 %5883
    %5885 = vrot.lane.b32.xlu0 %v5847, 124
    %v5886 = vpop.permute.xlu0 %5885
    %5887 = vrot.lane.b32.xlu0 %v5848, 124
    %v5888 = vpop.permute.xlu0 %5887
    %5889 = vrot.lane.b32.xlu0 %v5849, 124
    %v5890 = vpop.permute.xlu0 %5889
    %5891 = vrot.lane.b32.xlu0 %v5850, 124
    %v5892 = vpop.permute.xlu0 %5891
    %5893 = vrot.lane.b32.xlu0 %v5851, 124
    %v5894 = vpop.permute.xlu0 %5893
    %5895 = vrot.lane.b32.xlu0 %v5852, 124
    %v5896 = vpop.permute.xlu0 %5895
    %5897 = vrot.lane.b32.xlu0 %v5853, 124
    %v5898 = vpop.permute.xlu0 %5897
    %5899 = vrot.lane.b32.xlu0 %v5854, 124
    %v5900 = vpop.permute.xlu0 %5899
    %5901 = vrot.lane.b32.xlu0 %v5855, 124
    %v5902 = vpop.permute.xlu0 %5901
    %5903 = vrot.lane.b32.xlu0 %v5856, 124
    %v5904 = vpop.permute.xlu0 %5903
    %v5921 = vadd.f32 %v5823, %v5874
    %v5922 = vadd.f32 %v5824, %v5876
    %v5923 = vadd.f32 %v5825, %v5878
    %v5924 = vadd.f32 %v5826, %v5880
    %v5925 = vadd.f32 %v5827, %v5882
    %v5926 = vadd.f32 %v5828, %v5884
    %v5927 = vadd.f32 %v5829, %v5886
    %v5928 = vadd.f32 %v5830, %v5888
    %v5929 = vadd.f32 %v5831, %v5890
    %v5930 = vadd.f32 %v5832, %v5892
    %v5931 = vadd.f32 %v5833, %v5894
    %v5932 = vadd.f32 %v5834, %v5896
    %v5933 = vadd.f32 %v5835, %v5898
    %v5934 = vadd.f32 %v5836, %v5900
    %v5935 = vadd.f32 %v5837, %v5902
    %v5936 = vadd.f32 %v5838, %v5904
    %s5937 = sld [smem:[#allocation4 + $0x27]]
    %v5938 = vstv %s5937
    %v5939 = vmul.f32 %v5938, %v326
    %v5940 = vmul.f32 %v5938, %v327
    %v5941 = vmul.f32 %v5938, %v328
    %v5942 = vmul.f32 %v5938, %v329
    %v5943 = vmul.f32 %v5938, %v330
    %v5944 = vmul.f32 %v5938, %v331
    %v5945 = vmul.f32 %v5938, %v332
    %v5946 = vmul.f32 %v5938, %v333
    %v5947 = vmul.f32 %v5938, %v334
    %v5948 = vmul.f32 %v5938, %v335
    %v5949 = vmul.f32 %v5938, %v336
    %v5950 = vmul.f32 %v5938, %v337
    %v5951 = vmul.f32 %v5938, %v338
    %v5952 = vmul.f32 %v5938, %v339
    %v5953 = vmul.f32 %v5938, %v340
    %v5954 = vmul.f32 %v5938, %v341
    %5971 = vrot.lane.b32.xlu0 %v5939, 124
    %v5972 = vpop.permute.xlu0 %5971
    %5973 = vrot.lane.b32.xlu0 %v5940, 124
    %v5974 = vpop.permute.xlu0 %5973
    %5975 = vrot.lane.b32.xlu0 %v5941, 124
    %v5976 = vpop.permute.xlu0 %5975
    %5977 = vrot.lane.b32.xlu0 %v5942, 124
    %v5978 = vpop.permute.xlu0 %5977
    %5979 = vrot.lane.b32.xlu0 %v5943, 124
    %v5980 = vpop.permute.xlu0 %5979
    %5981 = vrot.lane.b32.xlu0 %v5944, 124
    %v5982 = vpop.permute.xlu0 %5981
    %5983 = vrot.lane.b32.xlu0 %v5945, 124
    %v5984 = vpop.permute.xlu0 %5983
    %5985 = vrot.lane.b32.xlu0 %v5946, 124
    %v5986 = vpop.permute.xlu0 %5985
    %5987 = vrot.lane.b32.xlu0 %v5947, 124
    %v5988 = vpop.permute.xlu0 %5987
    %5989 = vrot.lane.b32.xlu0 %v5948, 124
    %v5990 = vpop.permute.xlu0 %5989
    %5991 = vrot.lane.b32.xlu0 %v5949, 124
    %v5992 = vpop.permute.xlu0 %5991
    %5993 = vrot.lane.b32.xlu0 %v5950, 124
    %v5994 = vpop.permute.xlu0 %5993
    %5995 = vrot.lane.b32.xlu0 %v5951, 124
    %v5996 = vpop.permute.xlu0 %5995
    %5997 = vrot.lane.b32.xlu0 %v5952, 124
    %v5998 = vpop.permute.xlu0 %5997
    %5999 = vrot.lane.b32.xlu0 %v5953, 124
    %v6000 = vpop.permute.xlu0 %5999
    %6001 = vrot.lane.b32.xlu0 %v5954, 124
    %v6002 = vpop.permute.xlu0 %6001
    %v6019 = vadd.f32 %v5921, %v5972
    %v6020 = vadd.f32 %v5922, %v5974
    %v6021 = vadd.f32 %v5923, %v5976
    %v6022 = vadd.f32 %v5924, %v5978
    %v6023 = vadd.f32 %v5925, %v5980
    %v6024 = vadd.f32 %v5926, %v5982
    %v6025 = vadd.f32 %v5927, %v5984
    %v6026 = vadd.f32 %v5928, %v5986
    %v6027 = vadd.f32 %v5929, %v5988
    %v6028 = vadd.f32 %v5930, %v5990
    %v6029 = vadd.f32 %v5931, %v5992
    %v6030 = vadd.f32 %v5932, %v5994
    %v6031 = vadd.f32 %v5933, %v5996
    %v6032 = vadd.f32 %v5934, %v5998
    %v6033 = vadd.f32 %v5935, %v6000
    %v6034 = vadd.f32 %v5936, %v6002
    %s6035 = sld [smem:[#allocation4 + $0x58]]
    %v6036 = vstv %s6035
    %v6037 = vmul.f32 %v6036, %v348
    %v6038 = vmul.f32 %v6036, %v349
    %v6039 = vmul.f32 %v6036, %v350
    %v6040 = vmul.f32 %v6036, %v351
    %v6041 = vmul.f32 %v6036, %v352
    %v6042 = vmul.f32 %v6036, %v353
    %v6043 = vmul.f32 %v6036, %v354
    %v6044 = vmul.f32 %v6036, %v355
    %v6045 = vmul.f32 %v6036, %v356
    %v6046 = vmul.f32 %v6036, %v357
    %v6047 = vmul.f32 %v6036, %v358
    %v6048 = vmul.f32 %v6036, %v359
    %v6049 = vmul.f32 %v6036, %v360
    %v6050 = vmul.f32 %v6036, %v361
    %v6051 = vmul.f32 %v6036, %v362
    %v6052 = vmul.f32 %v6036, %v363
    %6069 = vrot.lane.b32.xlu0 %v6037, 124
    %v6070 = vpop.permute.xlu0 %6069
    %6071 = vrot.lane.b32.xlu0 %v6038, 124
    %v6072 = vpop.permute.xlu0 %6071
    %6073 = vrot.lane.b32.xlu0 %v6039, 124
    %v6074 = vpop.permute.xlu0 %6073
    %6075 = vrot.lane.b32.xlu0 %v6040, 124
    %v6076 = vpop.permute.xlu0 %6075
    %6077 = vrot.lane.b32.xlu0 %v6041, 124
    %v6078 = vpop.permute.xlu0 %6077
    %6079 = vrot.lane.b32.xlu0 %v6042, 124
    %v6080 = vpop.permute.xlu0 %6079
    %6081 = vrot.lane.b32.xlu0 %v6043, 124
    %v6082 = vpop.permute.xlu0 %6081
    %6083 = vrot.lane.b32.xlu0 %v6044, 124
    %v6084 = vpop.permute.xlu0 %6083
    %6085 = vrot.lane.b32.xlu0 %v6045, 124
    %v6086 = vpop.permute.xlu0 %6085
    %6087 = vrot.lane.b32.xlu0 %v6046, 124
    %v6088 = vpop.permute.xlu0 %6087
    %6089 = vrot.lane.b32.xlu0 %v6047, 124
    %v6090 = vpop.permute.xlu0 %6089
    %6091 = vrot.lane.b32.xlu0 %v6048, 124
    %v6092 = vpop.permute.xlu0 %6091
    %6093 = vrot.lane.b32.xlu0 %v6049, 124
    %v6094 = vpop.permute.xlu0 %6093
    %6095 = vrot.lane.b32.xlu0 %v6050, 124
    %v6096 = vpop.permute.xlu0 %6095
    %6097 = vrot.lane.b32.xlu0 %v6051, 124
    %v6098 = vpop.permute.xlu0 %6097
    %6099 = vrot.lane.b32.xlu0 %v6052, 124
    %v6100 = vpop.permute.xlu0 %6099
    %v6117 = vadd.f32 %v6019, %v6070
    %v6118 = vadd.f32 %v6020, %v6072
    %v6119 = vadd.f32 %v6021, %v6074
    %v6120 = vadd.f32 %v6022, %v6076
    %v6121 = vadd.f32 %v6023, %v6078
    %v6122 = vadd.f32 %v6024, %v6080
    %v6123 = vadd.f32 %v6025, %v6082
    %v6124 = vadd.f32 %v6026, %v6084
    %v6125 = vadd.f32 %v6027, %v6086
    %v6126 = vadd.f32 %v6028, %v6088
    %v6127 = vadd.f32 %v6029, %v6090
    %v6128 = vadd.f32 %v6030, %v6092
    %v6129 = vadd.f32 %v6031, %v6094
    %v6130 = vadd.f32 %v6032, %v6096
    %v6131 = vadd.f32 %v6033, %v6098
    %v6132 = vadd.f32 %v6034, %v6100
    %s6133 = sld [smem:[#allocation4 + $0x2e]]
    %v6134 = vstv %s6133
    %v6135 = vmul.f32 %v6134, %v327
    %v6136 = vmul.f32 %v6134, %v328
    %v6137 = vmul.f32 %v6134, %v329
    %v6138 = vmul.f32 %v6134, %v330
    %v6139 = vmul.f32 %v6134, %v331
    %v6140 = vmul.f32 %v6134, %v332
    %v6141 = vmul.f32 %v6134, %v333
    %v6142 = vmul.f32 %v6134, %v334
    %v6143 = vmul.f32 %v6134, %v335
    %v6144 = vmul.f32 %v6134, %v336
    %v6145 = vmul.f32 %v6134, %v337
    %v6146 = vmul.f32 %v6134, %v338
    %v6147 = vmul.f32 %v6134, %v339
    %v6148 = vmul.f32 %v6134, %v340
    %v6149 = vmul.f32 %v6134, %v341
    %v6150 = vmul.f32 %v6134, %v342
    %6167 = vrot.lane.b32.xlu0 %v6135, 124
    %v6168 = vpop.permute.xlu0 %6167
    %6169 = vrot.lane.b32.xlu0 %v6136, 124
    %v6170 = vpop.permute.xlu0 %6169
    %6171 = vrot.lane.b32.xlu0 %v6137, 124
    %v6172 = vpop.permute.xlu0 %6171
    %6173 = vrot.lane.b32.xlu0 %v6138, 124
    %v6174 = vpop.permute.xlu0 %6173
    %6175 = vrot.lane.b32.xlu0 %v6139, 124
    %v6176 = vpop.permute.xlu0 %6175
    %6177 = vrot.lane.b32.xlu0 %v6140, 124
    %v6178 = vpop.permute.xlu0 %6177
    %6179 = vrot.lane.b32.xlu0 %v6141, 124
    %v6180 = vpop.permute.xlu0 %6179
    %6181 = vrot.lane.b32.xlu0 %v6142, 124
    %v6182 = vpop.permute.xlu0 %6181
    %6183 = vrot.lane.b32.xlu0 %v6143, 124
    %v6184 = vpop.permute.xlu0 %6183
    %6185 = vrot.lane.b32.xlu0 %v6144, 124
    %v6186 = vpop.permute.xlu0 %6185
    %6187 = vrot.lane.b32.xlu0 %v6145, 124
    %v6188 = vpop.permute.xlu0 %6187
    %6189 = vrot.lane.b32.xlu0 %v6146, 124
    %v6190 = vpop.permute.xlu0 %6189
    %6191 = vrot.lane.b32.xlu0 %v6147, 124
    %v6192 = vpop.permute.xlu0 %6191
    %6193 = vrot.lane.b32.xlu0 %v6148, 124
    %v6194 = vpop.permute.xlu0 %6193
    %6195 = vrot.lane.b32.xlu0 %v6149, 124
    %v6196 = vpop.permute.xlu0 %6195
    %6197 = vrot.lane.b32.xlu0 %v6150, 124
    %v6198 = vpop.permute.xlu0 %6197
    %v6215 = vadd.f32 %v6117, %v6168
    %v6216 = vadd.f32 %v6118, %v6170
    %v6217 = vadd.f32 %v6119, %v6172
    %v6218 = vadd.f32 %v6120, %v6174
    %v6219 = vadd.f32 %v6121, %v6176
    %v6220 = vadd.f32 %v6122, %v6178
    %v6221 = vadd.f32 %v6123, %v6180
    %v6222 = vadd.f32 %v6124, %v6182
    %v6223 = vadd.f32 %v6125, %v6184
    %v6224 = vadd.f32 %v6126, %v6186
    %v6225 = vadd.f32 %v6127, %v6188
    %v6226 = vadd.f32 %v6128, %v6190
    %v6227 = vadd.f32 %v6129, %v6192
    %v6228 = vadd.f32 %v6130, %v6194
    %v6229 = vadd.f32 %v6131, %v6196
    %v6230 = vadd.f32 %v6132, %v6198
    %s6231 = sld [smem:[#allocation4 + $0x5f]]
    %v6232 = vstv %s6231
    %v6233 = vmul.f32 %v6232, %v349
    %v6234 = vmul.f32 %v6232, %v350
    %v6235 = vmul.f32 %v6232, %v351
    %v6236 = vmul.f32 %v6232, %v352
    %v6237 = vmul.f32 %v6232, %v353
    %v6238 = vmul.f32 %v6232, %v354
    %v6239 = vmul.f32 %v6232, %v355
    %v6240 = vmul.f32 %v6232, %v356
    %v6241 = vmul.f32 %v6232, %v357
    %v6242 = vmul.f32 %v6232, %v358
    %v6243 = vmul.f32 %v6232, %v359
    %v6244 = vmul.f32 %v6232, %v360
    %v6245 = vmul.f32 %v6232, %v361
    %v6246 = vmul.f32 %v6232, %v362
    %v6247 = vmul.f32 %v6232, %v363
    %v6248 = vmul.f32 %v6232, %v364
    %6265 = vrot.lane.b32.xlu0 %v6233, 124
    %v6266 = vpop.permute.xlu0 %6265
    %6267 = vrot.lane.b32.xlu0 %v6234, 124
    %v6268 = vpop.permute.xlu0 %6267
    %6269 = vrot.lane.b32.xlu0 %v6235, 124
    %v6270 = vpop.permute.xlu0 %6269
    %6271 = vrot.lane.b32.xlu0 %v6236, 124
    %v6272 = vpop.permute.xlu0 %6271
    %6273 = vrot.lane.b32.xlu0 %v6237, 124
    %v6274 = vpop.permute.xlu0 %6273
    %6275 = vrot.lane.b32.xlu0 %v6238, 124
    %v6276 = vpop.permute.xlu0 %6275
    %6277 = vrot.lane.b32.xlu0 %v6239, 124
    %v6278 = vpop.permute.xlu0 %6277
    %6279 = vrot.lane.b32.xlu0 %v6240, 124
    %v6280 = vpop.permute.xlu0 %6279
    %6281 = vrot.lane.b32.xlu0 %v6241, 124
    %v6282 = vpop.permute.xlu0 %6281
    %6283 = vrot.lane.b32.xlu0 %v6242, 124
    %v6284 = vpop.permute.xlu0 %6283
    %6285 = vrot.lane.b32.xlu0 %v6243, 124
    %v6286 = vpop.permute.xlu0 %6285
    %6287 = vrot.lane.b32.xlu0 %v6244, 124
    %v6288 = vpop.permute.xlu0 %6287
    %6289 = vrot.lane.b32.xlu0 %v6245, 124
    %v6290 = vpop.permute.xlu0 %6289
    %6291 = vrot.lane.b32.xlu0 %v6246, 124
    %v6292 = vpop.permute.xlu0 %6291
    %6293 = vrot.lane.b32.xlu0 %v6247, 124
    %v6294 = vpop.permute.xlu0 %6293
    %6295 = vrot.lane.b32.xlu0 %v6248, 124
    %v6296 = vpop.permute.xlu0 %6295
    %v6313 = vadd.f32 %v6215, %v6266
    %v6314 = vadd.f32 %v6216, %v6268
    %v6315 = vadd.f32 %v6217, %v6270
    %v6316 = vadd.f32 %v6218, %v6272
    %v6317 = vadd.f32 %v6219, %v6274
    %v6318 = vadd.f32 %v6220, %v6276
    %v6319 = vadd.f32 %v6221, %v6278
    %v6320 = vadd.f32 %v6222, %v6280
    %v6321 = vadd.f32 %v6223, %v6282
    %v6322 = vadd.f32 %v6224, %v6284
    %v6323 = vadd.f32 %v6225, %v6286
    %v6324 = vadd.f32 %v6226, %v6288
    %v6325 = vadd.f32 %v6227, %v6290
    %v6326 = vadd.f32 %v6228, %v6292
    %v6327 = vadd.f32 %v6229, %v6294
    %v6328 = vadd.f32 %v6230, %v6296
    %s6329 = sld [smem:[#allocation4 + $0x5]]
    %v6330 = vstv %s6329
    %v6331 = vmul.f32 %v6330, %v321
    %v6332 = vmul.f32 %v6330, %v322
    %v6333 = vmul.f32 %v6330, %v323
    %v6334 = vmul.f32 %v6330, %v324
    %v6335 = vmul.f32 %v6330, %v325
    %v6336 = vmul.f32 %v6330, %v326
    %v6337 = vmul.f32 %v6330, %v327
    %v6338 = vmul.f32 %v6330, %v328
    %v6339 = vmul.f32 %v6330, %v329
    %v6340 = vmul.f32 %v6330, %v330
    %v6341 = vmul.f32 %v6330, %v331
    %v6342 = vmul.f32 %v6330, %v332
    %v6343 = vmul.f32 %v6330, %v333
    %v6344 = vmul.f32 %v6330, %v334
    %v6345 = vmul.f32 %v6330, %v335
    %v6346 = vmul.f32 %v6330, %v336
    %6363 = vrot.lane.b32.xlu0 %v6331, 123
    %v6364 = vpop.permute.xlu0 %6363
    %6365 = vrot.lane.b32.xlu0 %v6332, 123
    %v6366 = vpop.permute.xlu0 %6365
    %6367 = vrot.lane.b32.xlu0 %v6333, 123
    %v6368 = vpop.permute.xlu0 %6367
    %6369 = vrot.lane.b32.xlu0 %v6334, 123
    %v6370 = vpop.permute.xlu0 %6369
    %6371 = vrot.lane.b32.xlu0 %v6335, 123
    %v6372 = vpop.permute.xlu0 %6371
    %6373 = vrot.lane.b32.xlu0 %v6336, 123
    %v6374 = vpop.permute.xlu0 %6373
    %6375 = vrot.lane.b32.xlu0 %v6337, 123
    %v6376 = vpop.permute.xlu0 %6375
    %6377 = vrot.lane.b32.xlu0 %v6338, 123
    %v6378 = vpop.permute.xlu0 %6377
    %6379 = vrot.lane.b32.xlu0 %v6339, 123
    %v6380 = vpop.permute.xlu0 %6379
    %6381 = vrot.lane.b32.xlu0 %v6340, 123
    %v6382 = vpop.permute.xlu0 %6381
    %6383 = vrot.lane.b32.xlu0 %v6341, 123
    %v6384 = vpop.permute.xlu0 %6383
    %6385 = vrot.lane.b32.xlu0 %v6342, 123
    %v6386 = vpop.permute.xlu0 %6385
    %6387 = vrot.lane.b32.xlu0 %v6343, 123
    %v6388 = vpop.permute.xlu0 %6387
    %6389 = vrot.lane.b32.xlu0 %v6344, 123
    %v6390 = vpop.permute.xlu0 %6389
    %6391 = vrot.lane.b32.xlu0 %v6345, 123
    %v6392 = vpop.permute.xlu0 %6391
    %6393 = vrot.lane.b32.xlu0 %v6346, 123
    %v6394 = vpop.permute.xlu0 %6393
    %v6411 = vadd.f32 %v6313, %v6364
    %v6412 = vadd.f32 %v6314, %v6366
    %v6413 = vadd.f32 %v6315, %v6368
    %v6414 = vadd.f32 %v6316, %v6370
    %v6415 = vadd.f32 %v6317, %v6372
    %v6416 = vadd.f32 %v6318, %v6374
    %v6417 = vadd.f32 %v6319, %v6376
    %v6418 = vadd.f32 %v6320, %v6378
    %v6419 = vadd.f32 %v6321, %v6380
    %v6420 = vadd.f32 %v6322, %v6382
    %v6421 = vadd.f32 %v6323, %v6384
    %v6422 = vadd.f32 %v6324, %v6386
    %v6423 = vadd.f32 %v6325, %v6388
    %v6424 = vadd.f32 %v6326, %v6390
    %v6425 = vadd.f32 %v6327, %v6392
    %v6426 = vadd.f32 %v6328, %v6394
    %s6427 = sld [smem:[#allocation4 + $0x36]]
    %v6428 = vstv %s6427
    %v6429 = vmul.f32 %v6428, %v343
    %v6430 = vmul.f32 %v6428, %v344
    %v6431 = vmul.f32 %v6428, %v345
    %v6432 = vmul.f32 %v6428, %v346
    %v6433 = vmul.f32 %v6428, %v347
    %v6434 = vmul.f32 %v6428, %v348
    %v6435 = vmul.f32 %v6428, %v349
    %v6436 = vmul.f32 %v6428, %v350
    %v6437 = vmul.f32 %v6428, %v351
    %v6438 = vmul.f32 %v6428, %v352
    %v6439 = vmul.f32 %v6428, %v353
    %v6440 = vmul.f32 %v6428, %v354
    %v6441 = vmul.f32 %v6428, %v355
    %v6442 = vmul.f32 %v6428, %v356
    %v6443 = vmul.f32 %v6428, %v357
    %v6444 = vmul.f32 %v6428, %v358
    %6461 = vrot.lane.b32.xlu0 %v6429, 123
    %v6462 = vpop.permute.xlu0 %6461
    %6463 = vrot.lane.b32.xlu0 %v6430, 123
    %v6464 = vpop.permute.xlu0 %6463
    %6465 = vrot.lane.b32.xlu0 %v6431, 123
    %v6466 = vpop.permute.xlu0 %6465
    %6467 = vrot.lane.b32.xlu0 %v6432, 123
    %v6468 = vpop.permute.xlu0 %6467
    %6469 = vrot.lane.b32.xlu0 %v6433, 123
    %v6470 = vpop.permute.xlu0 %6469
    %6471 = vrot.lane.b32.xlu0 %v6434, 123
    %v6472 = vpop.permute.xlu0 %6471
    %6473 = vrot.lane.b32.xlu0 %v6435, 123
    %v6474 = vpop.permute.xlu0 %6473
    %6475 = vrot.lane.b32.xlu0 %v6436, 123
    %v6476 = vpop.permute.xlu0 %6475
    %6477 = vrot.lane.b32.xlu0 %v6437, 123
    %v6478 = vpop.permute.xlu0 %6477
    %6479 = vrot.lane.b32.xlu0 %v6438, 123
    %v6480 = vpop.permute.xlu0 %6479
    %6481 = vrot.lane.b32.xlu0 %v6439, 123
    %v6482 = vpop.permute.xlu0 %6481
    %6483 = vrot.lane.b32.xlu0 %v6440, 123
    %v6484 = vpop.permute.xlu0 %6483
    %6485 = vrot.lane.b32.xlu0 %v6441, 123
    %v6486 = vpop.permute.xlu0 %6485
    %6487 = vrot.lane.b32.xlu0 %v6442, 123
    %v6488 = vpop.permute.xlu0 %6487
    %6489 = vrot.lane.b32.xlu0 %v6443, 123
    %v6490 = vpop.permute.xlu0 %6489
    %6491 = vrot.lane.b32.xlu0 %v6444, 123
    %v6492 = vpop.permute.xlu0 %6491
    %v6509 = vadd.f32 %v6411, %v6462
    %v6510 = vadd.f32 %v6412, %v6464
    %v6511 = vadd.f32 %v6413, %v6466
    %v6512 = vadd.f32 %v6414, %v6468
    %v6513 = vadd.f32 %v6415, %v6470
    %v6514 = vadd.f32 %v6416, %v6472
    %v6515 = vadd.f32 %v6417, %v6474
    %v6516 = vadd.f32 %v6418, %v6476
    %v6517 = vadd.f32 %v6419, %v6478
    %v6518 = vadd.f32 %v6420, %v6480
    %v6519 = vadd.f32 %v6421, %v6482
    %v6520 = vadd.f32 %v6422, %v6484
    %v6521 = vadd.f32 %v6423, %v6486
    %v6522 = vadd.f32 %v6424, %v6488
    %v6523 = vadd.f32 %v6425, %v6490
    %v6524 = vadd.f32 %v6426, %v6492
    %s6525 = sld [smem:[#allocation4 + $0xc]]
    %v6526 = vstv %s6525
    %v6527 = vmul.f32 %v6526, %v322
    %v6528 = vmul.f32 %v6526, %v323
    %v6529 = vmul.f32 %v6526, %v324
    %v6530 = vmul.f32 %v6526, %v325
    %v6531 = vmul.f32 %v6526, %v326
    %v6532 = vmul.f32 %v6526, %v327
    %v6533 = vmul.f32 %v6526, %v328
    %v6534 = vmul.f32 %v6526, %v329
    %v6535 = vmul.f32 %v6526, %v330
    %v6536 = vmul.f32 %v6526, %v331
    %v6537 = vmul.f32 %v6526, %v332
    %v6538 = vmul.f32 %v6526, %v333
    %v6539 = vmul.f32 %v6526, %v334
    %v6540 = vmul.f32 %v6526, %v335
    %v6541 = vmul.f32 %v6526, %v336
    %v6542 = vmul.f32 %v6526, %v337
    %6559 = vrot.lane.b32.xlu0 %v6527, 123
    %v6560 = vpop.permute.xlu0 %6559
    %6561 = vrot.lane.b32.xlu0 %v6528, 123
    %v6562 = vpop.permute.xlu0 %6561
    %6563 = vrot.lane.b32.xlu0 %v6529, 123
    %v6564 = vpop.permute.xlu0 %6563
    %6565 = vrot.lane.b32.xlu0 %v6530, 123
    %v6566 = vpop.permute.xlu0 %6565
    %6567 = vrot.lane.b32.xlu0 %v6531, 123
    %v6568 = vpop.permute.xlu0 %6567
    %6569 = vrot.lane.b32.xlu0 %v6532, 123
    %v6570 = vpop.permute.xlu0 %6569
    %6571 = vrot.lane.b32.xlu0 %v6533, 123
    %v6572 = vpop.permute.xlu0 %6571
    %6573 = vrot.lane.b32.xlu0 %v6534, 123
    %v6574 = vpop.permute.xlu0 %6573
    %6575 = vrot.lane.b32.xlu0 %v6535, 123
    %v6576 = vpop.permute.xlu0 %6575
    %6577 = vrot.lane.b32.xlu0 %v6536, 123
    %v6578 = vpop.permute.xlu0 %6577
    %6579 = vrot.lane.b32.xlu0 %v6537, 123
    %v6580 = vpop.permute.xlu0 %6579
    %6581 = vrot.lane.b32.xlu0 %v6538, 123
    %v6582 = vpop.permute.xlu0 %6581
    %6583 = vrot.lane.b32.xlu0 %v6539, 123
    %v6584 = vpop.permute.xlu0 %6583
    %6585 = vrot.lane.b32.xlu0 %v6540, 123
    %v6586 = vpop.permute.xlu0 %6585
    %6587 = vrot.lane.b32.xlu0 %v6541, 123
    %v6588 = vpop.permute.xlu0 %6587
    %6589 = vrot.lane.b32.xlu0 %v6542, 123
    %v6590 = vpop.permute.xlu0 %6589
    %v6607 = vadd.f32 %v6509, %v6560
    %v6608 = vadd.f32 %v6510, %v6562
    %v6609 = vadd.f32 %v6511, %v6564
    %v6610 = vadd.f32 %v6512, %v6566
    %v6611 = vadd.f32 %v6513, %v6568
    %v6612 = vadd.f32 %v6514, %v6570
    %v6613 = vadd.f32 %v6515, %v6572
    %v6614 = vadd.f32 %v6516, %v6574
    %v6615 = vadd.f32 %v6517, %v6576
    %v6616 = vadd.f32 %v6518, %v6578
    %v6617 = vadd.f32 %v6519, %v6580
    %v6618 = vadd.f32 %v6520, %v6582
    %v6619 = vadd.f32 %v6521, %v6584
    %v6620 = vadd.f32 %v6522, %v6586
    %v6621 = vadd.f32 %v6523, %v6588
    %v6622 = vadd.f32 %v6524, %v6590
    %s6623 = sld [smem:[#allocation4 + $0x3d]]
    %v6624 = vstv %s6623
    %v6625 = vmul.f32 %v6624, %v344
    %v6626 = vmul.f32 %v6624, %v345
    %v6627 = vmul.f32 %v6624, %v346
    %v6628 = vmul.f32 %v6624, %v347
    %v6629 = vmul.f32 %v6624, %v348
    %v6630 = vmul.f32 %v6624, %v349
    %v6631 = vmul.f32 %v6624, %v350
    %v6632 = vmul.f32 %v6624, %v351
    %v6633 = vmul.f32 %v6624, %v352
    %v6634 = vmul.f32 %v6624, %v353
    %v6635 = vmul.f32 %v6624, %v354
    %v6636 = vmul.f32 %v6624, %v355
    %v6637 = vmul.f32 %v6624, %v356
    %v6638 = vmul.f32 %v6624, %v357
    %v6639 = vmul.f32 %v6624, %v358
    %v6640 = vmul.f32 %v6624, %v359
    %6657 = vrot.lane.b32.xlu0 %v6625, 123
    %v6658 = vpop.permute.xlu0 %6657
    %6659 = vrot.lane.b32.xlu0 %v6626, 123
    %v6660 = vpop.permute.xlu0 %6659
    %6661 = vrot.lane.b32.xlu0 %v6627, 123
    %v6662 = vpop.permute.xlu0 %6661
    %6663 = vrot.lane.b32.xlu0 %v6628, 123
    %v6664 = vpop.permute.xlu0 %6663
    %6665 = vrot.lane.b32.xlu0 %v6629, 123
    %v6666 = vpop.permute.xlu0 %6665
    %6667 = vrot.lane.b32.xlu0 %v6630, 123
    %v6668 = vpop.permute.xlu0 %6667
    %6669 = vrot.lane.b32.xlu0 %v6631, 123
    %v6670 = vpop.permute.xlu0 %6669
    %6671 = vrot.lane.b32.xlu0 %v6632, 123
    %v6672 = vpop.permute.xlu0 %6671
    %6673 = vrot.lane.b32.xlu0 %v6633, 123
    %v6674 = vpop.permute.xlu0 %6673
    %6675 = vrot.lane.b32.xlu0 %v6634, 123
    %v6676 = vpop.permute.xlu0 %6675
    %6677 = vrot.lane.b32.xlu0 %v6635, 123
    %v6678 = vpop.permute.xlu0 %6677
    %6679 = vrot.lane.b32.xlu0 %v6636, 123
    %v6680 = vpop.permute.xlu0 %6679
    %6681 = vrot.lane.b32.xlu0 %v6637, 123
    %v6682 = vpop.permute.xlu0 %6681
    %6683 = vrot.lane.b32.xlu0 %v6638, 123
    %v6684 = vpop.permute.xlu0 %6683
    %6685 = vrot.lane.b32.xlu0 %v6639, 123
    %v6686 = vpop.permute.xlu0 %6685
    %6687 = vrot.lane.b32.xlu0 %v6640, 123
    %v6688 = vpop.permute.xlu0 %6687
    %v6705 = vadd.f32 %v6607, %v6658
    %v6706 = vadd.f32 %v6608, %v6660
    %v6707 = vadd.f32 %v6609, %v6662
    %v6708 = vadd.f32 %v6610, %v6664
    %v6709 = vadd.f32 %v6611, %v6666
    %v6710 = vadd.f32 %v6612, %v6668
    %v6711 = vadd.f32 %v6613, %v6670
    %v6712 = vadd.f32 %v6614, %v6672
    %v6713 = vadd.f32 %v6615, %v6674
    %v6714 = vadd.f32 %v6616, %v6676
    %v6715 = vadd.f32 %v6617, %v6678
    %v6716 = vadd.f32 %v6618, %v6680
    %v6717 = vadd.f32 %v6619, %v6682
    %v6718 = vadd.f32 %v6620, %v6684
    %v6719 = vadd.f32 %v6621, %v6686
    %v6720 = vadd.f32 %v6622, %v6688
    %s6721 = sld [smem:[#allocation4 + $0x13]]
    %v6722 = vstv %s6721
    %v6723 = vmul.f32 %v6722, %v323
    %v6724 = vmul.f32 %v6722, %v324
    %v6725 = vmul.f32 %v6722, %v325
    %v6726 = vmul.f32 %v6722, %v326
    %v6727 = vmul.f32 %v6722, %v327
    %v6728 = vmul.f32 %v6722, %v328
    %v6729 = vmul.f32 %v6722, %v329
    %v6730 = vmul.f32 %v6722, %v330
    %v6731 = vmul.f32 %v6722, %v331
    %v6732 = vmul.f32 %v6722, %v332
    %v6733 = vmul.f32 %v6722, %v333
    %v6734 = vmul.f32 %v6722, %v334
    %v6735 = vmul.f32 %v6722, %v335
    %v6736 = vmul.f32 %v6722, %v336
    %v6737 = vmul.f32 %v6722, %v337
    %v6738 = vmul.f32 %v6722, %v338
    %6755 = vrot.lane.b32.xlu0 %v6723, 123
    %v6756 = vpop.permute.xlu0 %6755
    %6757 = vrot.lane.b32.xlu0 %v6724, 123
    %v6758 = vpop.permute.xlu0 %6757
    %6759 = vrot.lane.b32.xlu0 %v6725, 123
    %v6760 = vpop.permute.xlu0 %6759
    %6761 = vrot.lane.b32.xlu0 %v6726, 123
    %v6762 = vpop.permute.xlu0 %6761
    %6763 = vrot.lane.b32.xlu0 %v6727, 123
    %v6764 = vpop.permute.xlu0 %6763
    %6765 = vrot.lane.b32.xlu0 %v6728, 123
    %v6766 = vpop.permute.xlu0 %6765
    %6767 = vrot.lane.b32.xlu0 %v6729, 123
    %v6768 = vpop.permute.xlu0 %6767
    %6769 = vrot.lane.b32.xlu0 %v6730, 123
    %v6770 = vpop.permute.xlu0 %6769
    %6771 = vrot.lane.b32.xlu0 %v6731, 123
    %v6772 = vpop.permute.xlu0 %6771
    %6773 = vrot.lane.b32.xlu0 %v6732, 123
    %v6774 = vpop.permute.xlu0 %6773
    %6775 = vrot.lane.b32.xlu0 %v6733, 123
    %v6776 = vpop.permute.xlu0 %6775
    %6777 = vrot.lane.b32.xlu0 %v6734, 123
    %v6778 = vpop.permute.xlu0 %6777
    %6779 = vrot.lane.b32.xlu0 %v6735, 123
    %v6780 = vpop.permute.xlu0 %6779
    %6781 = vrot.lane.b32.xlu0 %v6736, 123
    %v6782 = vpop.permute.xlu0 %6781
    %6783 = vrot.lane.b32.xlu0 %v6737, 123
    %v6784 = vpop.permute.xlu0 %6783
    %6785 = vrot.lane.b32.xlu0 %v6738, 123
    %v6786 = vpop.permute.xlu0 %6785
    %v6803 = vadd.f32 %v6705, %v6756
    %v6804 = vadd.f32 %v6706, %v6758
    %v6805 = vadd.f32 %v6707, %v6760
    %v6806 = vadd.f32 %v6708, %v6762
    %v6807 = vadd.f32 %v6709, %v6764
    %v6808 = vadd.f32 %v6710, %v6766
    %v6809 = vadd.f32 %v6711, %v6768
    %v6810 = vadd.f32 %v6712, %v6770
    %v6811 = vadd.f32 %v6713, %v6772
    %v6812 = vadd.f32 %v6714, %v6774
    %v6813 = vadd.f32 %v6715, %v6776
    %v6814 = vadd.f32 %v6716, %v6778
    %v6815 = vadd.f32 %v6717, %v6780
    %v6816 = vadd.f32 %v6718, %v6782
    %v6817 = vadd.f32 %v6719, %v6784
    %v6818 = vadd.f32 %v6720, %v6786
    %s6819 = sld [smem:[#allocation4 + $0x44]]
    %v6820 = vstv %s6819
    %v6821 = vmul.f32 %v6820, %v345
    %v6822 = vmul.f32 %v6820, %v346
    %v6823 = vmul.f32 %v6820, %v347
    %v6824 = vmul.f32 %v6820, %v348
    %v6825 = vmul.f32 %v6820, %v349
    %v6826 = vmul.f32 %v6820, %v350
    %v6827 = vmul.f32 %v6820, %v351
    %v6828 = vmul.f32 %v6820, %v352
    %v6829 = vmul.f32 %v6820, %v353
    %v6830 = vmul.f32 %v6820, %v354
    %v6831 = vmul.f32 %v6820, %v355
    %v6832 = vmul.f32 %v6820, %v356
    %v6833 = vmul.f32 %v6820, %v357
    %v6834 = vmul.f32 %v6820, %v358
    %v6835 = vmul.f32 %v6820, %v359
    %v6836 = vmul.f32 %v6820, %v360
    %6853 = vrot.lane.b32.xlu0 %v6821, 123
    %v6854 = vpop.permute.xlu0 %6853
    %6855 = vrot.lane.b32.xlu0 %v6822, 123
    %v6856 = vpop.permute.xlu0 %6855
    %6857 = vrot.lane.b32.xlu0 %v6823, 123
    %v6858 = vpop.permute.xlu0 %6857
    %6859 = vrot.lane.b32.xlu0 %v6824, 123
    %v6860 = vpop.permute.xlu0 %6859
    %6861 = vrot.lane.b32.xlu0 %v6825, 123
    %v6862 = vpop.permute.xlu0 %6861
    %6863 = vrot.lane.b32.xlu0 %v6826, 123
    %v6864 = vpop.permute.xlu0 %6863
    %6865 = vrot.lane.b32.xlu0 %v6827, 123
    %v6866 = vpop.permute.xlu0 %6865
    %6867 = vrot.lane.b32.xlu0 %v6828, 123
    %v6868 = vpop.permute.xlu0 %6867
    %6869 = vrot.lane.b32.xlu0 %v6829, 123
    %v6870 = vpop.permute.xlu0 %6869
    %6871 = vrot.lane.b32.xlu0 %v6830, 123
    %v6872 = vpop.permute.xlu0 %6871
    %6873 = vrot.lane.b32.xlu0 %v6831, 123
    %v6874 = vpop.permute.xlu0 %6873
    %6875 = vrot.lane.b32.xlu0 %v6832, 123
    %v6876 = vpop.permute.xlu0 %6875
    %6877 = vrot.lane.b32.xlu0 %v6833, 123
    %v6878 = vpop.permute.xlu0 %6877
    %6879 = vrot.lane.b32.xlu0 %v6834, 123
    %v6880 = vpop.permute.xlu0 %6879
    %6881 = vrot.lane.b32.xlu0 %v6835, 123
    %v6882 = vpop.permute.xlu0 %6881
    %6883 = vrot.lane.b32.xlu0 %v6836, 123
    %v6884 = vpop.permute.xlu0 %6883
    %v6901 = vadd.f32 %v6803, %v6854
    %v6902 = vadd.f32 %v6804, %v6856
    %v6903 = vadd.f32 %v6805, %v6858
    %v6904 = vadd.f32 %v6806, %v6860
    %v6905 = vadd.f32 %v6807, %v6862
    %v6906 = vadd.f32 %v6808, %v6864
    %v6907 = vadd.f32 %v6809, %v6866
    %v6908 = vadd.f32 %v6810, %v6868
    %v6909 = vadd.f32 %v6811, %v6870
    %v6910 = vadd.f32 %v6812, %v6872
    %v6911 = vadd.f32 %v6813, %v6874
    %v6912 = vadd.f32 %v6814, %v6876
    %v6913 = vadd.f32 %v6815, %v6878
    %v6914 = vadd.f32 %v6816, %v6880
    %v6915 = vadd.f32 %v6817, %v6882
    %v6916 = vadd.f32 %v6818, %v6884
    %s6917 = sld [smem:[#allocation4 + $0x1a]]
    %v6918 = vstv %s6917
    %v6919 = vmul.f32 %v6918, %v324
    %v6920 = vmul.f32 %v6918, %v325
    %v6921 = vmul.f32 %v6918, %v326
    %v6922 = vmul.f32 %v6918, %v327
    %v6923 = vmul.f32 %v6918, %v328
    %v6924 = vmul.f32 %v6918, %v329
    %v6925 = vmul.f32 %v6918, %v330
    %v6926 = vmul.f32 %v6918, %v331
    %v6927 = vmul.f32 %v6918, %v332
    %v6928 = vmul.f32 %v6918, %v333
    %v6929 = vmul.f32 %v6918, %v334
    %v6930 = vmul.f32 %v6918, %v335
    %v6931 = vmul.f32 %v6918, %v336
    %v6932 = vmul.f32 %v6918, %v337
    %v6933 = vmul.f32 %v6918, %v338
    %v6934 = vmul.f32 %v6918, %v339
    %6951 = vrot.lane.b32.xlu0 %v6919, 123
    %v6952 = vpop.permute.xlu0 %6951
    %6953 = vrot.lane.b32.xlu0 %v6920, 123
    %v6954 = vpop.permute.xlu0 %6953
    %6955 = vrot.lane.b32.xlu0 %v6921, 123
    %v6956 = vpop.permute.xlu0 %6955
    %6957 = vrot.lane.b32.xlu0 %v6922, 123
    %v6958 = vpop.permute.xlu0 %6957
    %6959 = vrot.lane.b32.xlu0 %v6923, 123
    %v6960 = vpop.permute.xlu0 %6959
    %6961 = vrot.lane.b32.xlu0 %v6924, 123
    %v6962 = vpop.permute.xlu0 %6961
    %6963 = vrot.lane.b32.xlu0 %v6925, 123
    %v6964 = vpop.permute.xlu0 %6963
    %6965 = vrot.lane.b32.xlu0 %v6926, 123
    %v6966 = vpop.permute.xlu0 %6965
    %6967 = vrot.lane.b32.xlu0 %v6927, 123
    %v6968 = vpop.permute.xlu0 %6967
    %6969 = vrot.lane.b32.xlu0 %v6928, 123
    %v6970 = vpop.permute.xlu0 %6969
    %6971 = vrot.lane.b32.xlu0 %v6929, 123
    %v6972 = vpop.permute.xlu0 %6971
    %6973 = vrot.lane.b32.xlu0 %v6930, 123
    %v6974 = vpop.permute.xlu0 %6973
    %6975 = vrot.lane.b32.xlu0 %v6931, 123
    %v6976 = vpop.permute.xlu0 %6975
    %6977 = vrot.lane.b32.xlu0 %v6932, 123
    %v6978 = vpop.permute.xlu0 %6977
    %6979 = vrot.lane.b32.xlu0 %v6933, 123
    %v6980 = vpop.permute.xlu0 %6979
    %6981 = vrot.lane.b32.xlu0 %v6934, 123
    %v6982 = vpop.permute.xlu0 %6981
    %v6999 = vadd.f32 %v6901, %v6952
    %v7000 = vadd.f32 %v6902, %v6954
    %v7001 = vadd.f32 %v6903, %v6956
    %v7002 = vadd.f32 %v6904, %v6958
    %v7003 = vadd.f32 %v6905, %v6960
    %v7004 = vadd.f32 %v6906, %v6962
    %v7005 = vadd.f32 %v6907, %v6964
    %v7006 = vadd.f32 %v6908, %v6966
    %v7007 = vadd.f32 %v6909, %v6968
    %v7008 = vadd.f32 %v6910, %v6970
    %v7009 = vadd.f32 %v6911, %v6972
    %v7010 = vadd.f32 %v6912, %v6974
    %v7011 = vadd.f32 %v6913, %v6976
    %v7012 = vadd.f32 %v6914, %v6978
    %v7013 = vadd.f32 %v6915, %v6980
    %v7014 = vadd.f32 %v6916, %v6982
    %s7015 = sld [smem:[#allocation4 + $0x4b]]
    %v7016 = vstv %s7015
    %v7017 = vmul.f32 %v7016, %v346
    %v7018 = vmul.f32 %v7016, %v347
    %v7019 = vmul.f32 %v7016, %v348
    %v7020 = vmul.f32 %v7016, %v349
    %v7021 = vmul.f32 %v7016, %v350
    %v7022 = vmul.f32 %v7016, %v351
    %v7023 = vmul.f32 %v7016, %v352
    %v7024 = vmul.f32 %v7016, %v353
    %v7025 = vmul.f32 %v7016, %v354
    %v7026 = vmul.f32 %v7016, %v355
    %v7027 = vmul.f32 %v7016, %v356
    %v7028 = vmul.f32 %v7016, %v357
    %v7029 = vmul.f32 %v7016, %v358
    %v7030 = vmul.f32 %v7016, %v359
    %v7031 = vmul.f32 %v7016, %v360
    %v7032 = vmul.f32 %v7016, %v361
    %7049 = vrot.lane.b32.xlu0 %v7017, 123
    %v7050 = vpop.permute.xlu0 %7049
    %7051 = vrot.lane.b32.xlu0 %v7018, 123
    %v7052 = vpop.permute.xlu0 %7051
    %7053 = vrot.lane.b32.xlu0 %v7019, 123
    %v7054 = vpop.permute.xlu0 %7053
    %7055 = vrot.lane.b32.xlu0 %v7020, 123
    %v7056 = vpop.permute.xlu0 %7055
    %7057 = vrot.lane.b32.xlu0 %v7021, 123
    %v7058 = vpop.permute.xlu0 %7057
    %7059 = vrot.lane.b32.xlu0 %v7022, 123
    %v7060 = vpop.permute.xlu0 %7059
    %7061 = vrot.lane.b32.xlu0 %v7023, 123
    %v7062 = vpop.permute.xlu0 %7061
    %7063 = vrot.lane.b32.xlu0 %v7024, 123
    %v7064 = vpop.permute.xlu0 %7063
    %7065 = vrot.lane.b32.xlu0 %v7025, 123
    %v7066 = vpop.permute.xlu0 %7065
    %7067 = vrot.lane.b32.xlu0 %v7026, 123
    %v7068 = vpop.permute.xlu0 %7067
    %7069 = vrot.lane.b32.xlu0 %v7027, 123
    %v7070 = vpop.permute.xlu0 %7069
    %7071 = vrot.lane.b32.xlu0 %v7028, 123
    %v7072 = vpop.permute.xlu0 %7071
    %7073 = vrot.lane.b32.xlu0 %v7029, 123
    %v7074 = vpop.permute.xlu0 %7073
    %7075 = vrot.lane.b32.xlu0 %v7030, 123
    %v7076 = vpop.permute.xlu0 %7075
    %7077 = vrot.lane.b32.xlu0 %v7031, 123
    %v7078 = vpop.permute.xlu0 %7077
    %7079 = vrot.lane.b32.xlu0 %v7032, 123
    %v7080 = vpop.permute.xlu0 %7079
    %v7097 = vadd.f32 %v6999, %v7050
    %v7098 = vadd.f32 %v7000, %v7052
    %v7099 = vadd.f32 %v7001, %v7054
    %v7100 = vadd.f32 %v7002, %v7056
    %v7101 = vadd.f32 %v7003, %v7058
    %v7102 = vadd.f32 %v7004, %v7060
    %v7103 = vadd.f32 %v7005, %v7062
    %v7104 = vadd.f32 %v7006, %v7064
    %v7105 = vadd.f32 %v7007, %v7066
    %v7106 = vadd.f32 %v7008, %v7068
    %v7107 = vadd.f32 %v7009, %v7070
    %v7108 = vadd.f32 %v7010, %v7072
    %v7109 = vadd.f32 %v7011, %v7074
    %v7110 = vadd.f32 %v7012, %v7076
    %v7111 = vadd.f32 %v7013, %v7078
    %v7112 = vadd.f32 %v7014, %v7080
    %s7113 = sld [smem:[#allocation4 + $0x21]]
    %v7114 = vstv %s7113
    %v7115 = vmul.f32 %v7114, %v325
    %v7116 = vmul.f32 %v7114, %v326
    %v7117 = vmul.f32 %v7114, %v327
    %v7118 = vmul.f32 %v7114, %v328
    %v7119 = vmul.f32 %v7114, %v329
    %v7120 = vmul.f32 %v7114, %v330
    %v7121 = vmul.f32 %v7114, %v331
    %v7122 = vmul.f32 %v7114, %v332
    %v7123 = vmul.f32 %v7114, %v333
    %v7124 = vmul.f32 %v7114, %v334
    %v7125 = vmul.f32 %v7114, %v335
    %v7126 = vmul.f32 %v7114, %v336
    %v7127 = vmul.f32 %v7114, %v337
    %v7128 = vmul.f32 %v7114, %v338
    %v7129 = vmul.f32 %v7114, %v339
    %v7130 = vmul.f32 %v7114, %v340
    %7147 = vrot.lane.b32.xlu0 %v7115, 123
    %v7148 = vpop.permute.xlu0 %7147
    %7149 = vrot.lane.b32.xlu0 %v7116, 123
    %v7150 = vpop.permute.xlu0 %7149
    %7151 = vrot.lane.b32.xlu0 %v7117, 123
    %v7152 = vpop.permute.xlu0 %7151
    %7153 = vrot.lane.b32.xlu0 %v7118, 123
    %v7154 = vpop.permute.xlu0 %7153
    %7155 = vrot.lane.b32.xlu0 %v7119, 123
    %v7156 = vpop.permute.xlu0 %7155
    %7157 = vrot.lane.b32.xlu0 %v7120, 123
    %v7158 = vpop.permute.xlu0 %7157
    %7159 = vrot.lane.b32.xlu0 %v7121, 123
    %v7160 = vpop.permute.xlu0 %7159
    %7161 = vrot.lane.b32.xlu0 %v7122, 123
    %v7162 = vpop.permute.xlu0 %7161
    %7163 = vrot.lane.b32.xlu0 %v7123, 123
    %v7164 = vpop.permute.xlu0 %7163
    %7165 = vrot.lane.b32.xlu0 %v7124, 123
    %v7166 = vpop.permute.xlu0 %7165
    %7167 = vrot.lane.b32.xlu0 %v7125, 123
    %v7168 = vpop.permute.xlu0 %7167
    %7169 = vrot.lane.b32.xlu0 %v7126, 123
    %v7170 = vpop.permute.xlu0 %7169
    %7171 = vrot.lane.b32.xlu0 %v7127, 123
    %v7172 = vpop.permute.xlu0 %7171
    %7173 = vrot.lane.b32.xlu0 %v7128, 123
    %v7174 = vpop.permute.xlu0 %7173
    %7175 = vrot.lane.b32.xlu0 %v7129, 123
    %v7176 = vpop.permute.xlu0 %7175
    %7177 = vrot.lane.b32.xlu0 %v7130, 123
    %v7178 = vpop.permute.xlu0 %7177
    %v7195 = vadd.f32 %v7097, %v7148
    %v7196 = vadd.f32 %v7098, %v7150
    %v7197 = vadd.f32 %v7099, %v7152
    %v7198 = vadd.f32 %v7100, %v7154
    %v7199 = vadd.f32 %v7101, %v7156
    %v7200 = vadd.f32 %v7102, %v7158
    %v7201 = vadd.f32 %v7103, %v7160
    %v7202 = vadd.f32 %v7104, %v7162
    %v7203 = vadd.f32 %v7105, %v7164
    %v7204 = vadd.f32 %v7106, %v7166
    %v7205 = vadd.f32 %v7107, %v7168
    %v7206 = vadd.f32 %v7108, %v7170
    %v7207 = vadd.f32 %v7109, %v7172
    %v7208 = vadd.f32 %v7110, %v7174
    %v7209 = vadd.f32 %v7111, %v7176
    %v7210 = vadd.f32 %v7112, %v7178
    %s7211 = sld [smem:[#allocation4 + $0x52]]
    %v7212 = vstv %s7211
    %v7213 = vmul.f32 %v7212, %v347
    %v7214 = vmul.f32 %v7212, %v348
    %v7215 = vmul.f32 %v7212, %v349
    %v7216 = vmul.f32 %v7212, %v350
    %v7217 = vmul.f32 %v7212, %v351
    %v7218 = vmul.f32 %v7212, %v352
    %v7219 = vmul.f32 %v7212, %v353
    %v7220 = vmul.f32 %v7212, %v354
    %v7221 = vmul.f32 %v7212, %v355
    %v7222 = vmul.f32 %v7212, %v356
    %v7223 = vmul.f32 %v7212, %v357
    %v7224 = vmul.f32 %v7212, %v358
    %v7225 = vmul.f32 %v7212, %v359
    %v7226 = vmul.f32 %v7212, %v360
    %v7227 = vmul.f32 %v7212, %v361
    %v7228 = vmul.f32 %v7212, %v362
    %7245 = vrot.lane.b32.xlu0 %v7213, 123
    %v7246 = vpop.permute.xlu0 %7245
    %7247 = vrot.lane.b32.xlu0 %v7214, 123
    %v7248 = vpop.permute.xlu0 %7247
    %7249 = vrot.lane.b32.xlu0 %v7215, 123
    %v7250 = vpop.permute.xlu0 %7249
    %7251 = vrot.lane.b32.xlu0 %v7216, 123
    %v7252 = vpop.permute.xlu0 %7251
    %7253 = vrot.lane.b32.xlu0 %v7217, 123
    %v7254 = vpop.permute.xlu0 %7253
    %7255 = vrot.lane.b32.xlu0 %v7218, 123
    %v7256 = vpop.permute.xlu0 %7255
    %7257 = vrot.lane.b32.xlu0 %v7219, 123
    %v7258 = vpop.permute.xlu0 %7257
    %7259 = vrot.lane.b32.xlu0 %v7220, 123
    %v7260 = vpop.permute.xlu0 %7259
    %7261 = vrot.lane.b32.xlu0 %v7221, 123
    %v7262 = vpop.permute.xlu0 %7261
    %7263 = vrot.lane.b32.xlu0 %v7222, 123
    %v7264 = vpop.permute.xlu0 %7263
    %7265 = vrot.lane.b32.xlu0 %v7223, 123
    %v7266 = vpop.permute.xlu0 %7265
    %7267 = vrot.lane.b32.xlu0 %v7224, 123
    %v7268 = vpop.permute.xlu0 %7267
    %7269 = vrot.lane.b32.xlu0 %v7225, 123
    %v7270 = vpop.permute.xlu0 %7269
    %7271 = vrot.lane.b32.xlu0 %v7226, 123
    %v7272 = vpop.permute.xlu0 %7271
    %7273 = vrot.lane.b32.xlu0 %v7227, 123
    %v7274 = vpop.permute.xlu0 %7273
    %7275 = vrot.lane.b32.xlu0 %v7228, 123
    %v7276 = vpop.permute.xlu0 %7275
    %v7293 = vadd.f32 %v7195, %v7246
    %v7294 = vadd.f32 %v7196, %v7248
    %v7295 = vadd.f32 %v7197, %v7250
    %v7296 = vadd.f32 %v7198, %v7252
    %v7297 = vadd.f32 %v7199, %v7254
    %v7298 = vadd.f32 %v7200, %v7256
    %v7299 = vadd.f32 %v7201, %v7258
    %v7300 = vadd.f32 %v7202, %v7260
    %v7301 = vadd.f32 %v7203, %v7262
    %v7302 = vadd.f32 %v7204, %v7264
    %v7303 = vadd.f32 %v7205, %v7266
    %v7304 = vadd.f32 %v7206, %v7268
    %v7305 = vadd.f32 %v7207, %v7270
    %v7306 = vadd.f32 %v7208, %v7272
    %v7307 = vadd.f32 %v7209, %v7274
    %v7308 = vadd.f32 %v7210, %v7276
    %s7309 = sld [smem:[#allocation4 + $0x28]]
    %v7310 = vstv %s7309
    %v7311 = vmul.f32 %v7310, %v326
    %v7312 = vmul.f32 %v7310, %v327
    %v7313 = vmul.f32 %v7310, %v328
    %v7314 = vmul.f32 %v7310, %v329
    %v7315 = vmul.f32 %v7310, %v330
    %v7316 = vmul.f32 %v7310, %v331
    %v7317 = vmul.f32 %v7310, %v332
    %v7318 = vmul.f32 %v7310, %v333
    %v7319 = vmul.f32 %v7310, %v334
    %v7320 = vmul.f32 %v7310, %v335
    %v7321 = vmul.f32 %v7310, %v336
    %v7322 = vmul.f32 %v7310, %v337
    %v7323 = vmul.f32 %v7310, %v338
    %v7324 = vmul.f32 %v7310, %v339
    %v7325 = vmul.f32 %v7310, %v340
    %v7326 = vmul.f32 %v7310, %v341
    %7343 = vrot.lane.b32.xlu0 %v7311, 123
    %v7344 = vpop.permute.xlu0 %7343
    %7345 = vrot.lane.b32.xlu0 %v7312, 123
    %v7346 = vpop.permute.xlu0 %7345
    %7347 = vrot.lane.b32.xlu0 %v7313, 123
    %v7348 = vpop.permute.xlu0 %7347
    %7349 = vrot.lane.b32.xlu0 %v7314, 123
    %v7350 = vpop.permute.xlu0 %7349
    %7351 = vrot.lane.b32.xlu0 %v7315, 123
    %v7352 = vpop.permute.xlu0 %7351
    %7353 = vrot.lane.b32.xlu0 %v7316, 123
    %v7354 = vpop.permute.xlu0 %7353
    %7355 = vrot.lane.b32.xlu0 %v7317, 123
    %v7356 = vpop.permute.xlu0 %7355
    %7357 = vrot.lane.b32.xlu0 %v7318, 123
    %v7358 = vpop.permute.xlu0 %7357
    %7359 = vrot.lane.b32.xlu0 %v7319, 123
    %v7360 = vpop.permute.xlu0 %7359
    %7361 = vrot.lane.b32.xlu0 %v7320, 123
    %v7362 = vpop.permute.xlu0 %7361
    %7363 = vrot.lane.b32.xlu0 %v7321, 123
    %v7364 = vpop.permute.xlu0 %7363
    %7365 = vrot.lane.b32.xlu0 %v7322, 123
    %v7366 = vpop.permute.xlu0 %7365
    %7367 = vrot.lane.b32.xlu0 %v7323, 123
    %v7368 = vpop.permute.xlu0 %7367
    %7369 = vrot.lane.b32.xlu0 %v7324, 123
    %v7370 = vpop.permute.xlu0 %7369
    %7371 = vrot.lane.b32.xlu0 %v7325, 123
    %v7372 = vpop.permute.xlu0 %7371
    %7373 = vrot.lane.b32.xlu0 %v7326, 123
    %v7374 = vpop.permute.xlu0 %7373
    %v7391 = vadd.f32 %v7293, %v7344
    %v7392 = vadd.f32 %v7294, %v7346
    %v7393 = vadd.f32 %v7295, %v7348
    %v7394 = vadd.f32 %v7296, %v7350
    %v7395 = vadd.f32 %v7297, %v7352
    %v7396 = vadd.f32 %v7298, %v7354
    %v7397 = vadd.f32 %v7299, %v7356
    %v7398 = vadd.f32 %v7300, %v7358
    %v7399 = vadd.f32 %v7301, %v7360
    %v7400 = vadd.f32 %v7302, %v7362
    %v7401 = vadd.f32 %v7303, %v7364
    %v7402 = vadd.f32 %v7304, %v7366
    %v7403 = vadd.f32 %v7305, %v7368
    %v7404 = vadd.f32 %v7306, %v7370
    %v7405 = vadd.f32 %v7307, %v7372
    %v7406 = vadd.f32 %v7308, %v7374
    %s7407 = sld [smem:[#allocation4 + $0x59]]
    %v7408 = vstv %s7407
    %v7409 = vmul.f32 %v7408, %v348
    %v7410 = vmul.f32 %v7408, %v349
    %v7411 = vmul.f32 %v7408, %v350
    %v7412 = vmul.f32 %v7408, %v351
    %v7413 = vmul.f32 %v7408, %v352
    %v7414 = vmul.f32 %v7408, %v353
    %v7415 = vmul.f32 %v7408, %v354
    %v7416 = vmul.f32 %v7408, %v355
    %v7417 = vmul.f32 %v7408, %v356
    %v7418 = vmul.f32 %v7408, %v357
    %v7419 = vmul.f32 %v7408, %v358
    %v7420 = vmul.f32 %v7408, %v359
    %v7421 = vmul.f32 %v7408, %v360
    %v7422 = vmul.f32 %v7408, %v361
    %v7423 = vmul.f32 %v7408, %v362
    %v7424 = vmul.f32 %v7408, %v363
    %7441 = vrot.lane.b32.xlu0 %v7409, 123
    %v7442 = vpop.permute.xlu0 %7441
    %7443 = vrot.lane.b32.xlu0 %v7410, 123
    %v7444 = vpop.permute.xlu0 %7443
    %7445 = vrot.lane.b32.xlu0 %v7411, 123
    %v7446 = vpop.permute.xlu0 %7445
    %7447 = vrot.lane.b32.xlu0 %v7412, 123
    %v7448 = vpop.permute.xlu0 %7447
    %7449 = vrot.lane.b32.xlu0 %v7413, 123
    %v7450 = vpop.permute.xlu0 %7449
    %7451 = vrot.lane.b32.xlu0 %v7414, 123
    %v7452 = vpop.permute.xlu0 %7451
    %7453 = vrot.lane.b32.xlu0 %v7415, 123
    %v7454 = vpop.permute.xlu0 %7453
    %7455 = vrot.lane.b32.xlu0 %v7416, 123
    %v7456 = vpop.permute.xlu0 %7455
    %7457 = vrot.lane.b32.xlu0 %v7417, 123
    %v7458 = vpop.permute.xlu0 %7457
    %7459 = vrot.lane.b32.xlu0 %v7418, 123
    %v7460 = vpop.permute.xlu0 %7459
    %7461 = vrot.lane.b32.xlu0 %v7419, 123
    %v7462 = vpop.permute.xlu0 %7461
    %7463 = vrot.lane.b32.xlu0 %v7420, 123
    %v7464 = vpop.permute.xlu0 %7463
    %7465 = vrot.lane.b32.xlu0 %v7421, 123
    %v7466 = vpop.permute.xlu0 %7465
    %7467 = vrot.lane.b32.xlu0 %v7422, 123
    %v7468 = vpop.permute.xlu0 %7467
    %7469 = vrot.lane.b32.xlu0 %v7423, 123
    %v7470 = vpop.permute.xlu0 %7469
    %7471 = vrot.lane.b32.xlu0 %v7424, 123
    %v7472 = vpop.permute.xlu0 %7471
    %v7489 = vadd.f32 %v7391, %v7442
    %v7490 = vadd.f32 %v7392, %v7444
    %v7491 = vadd.f32 %v7393, %v7446
    %v7492 = vadd.f32 %v7394, %v7448
    %v7493 = vadd.f32 %v7395, %v7450
    %v7494 = vadd.f32 %v7396, %v7452
    %v7495 = vadd.f32 %v7397, %v7454
    %v7496 = vadd.f32 %v7398, %v7456
    %v7497 = vadd.f32 %v7399, %v7458
    %v7498 = vadd.f32 %v7400, %v7460
    %v7499 = vadd.f32 %v7401, %v7462
    %v7500 = vadd.f32 %v7402, %v7464
    %v7501 = vadd.f32 %v7403, %v7466
    %v7502 = vadd.f32 %v7404, %v7468
    %v7503 = vadd.f32 %v7405, %v7470
    %v7504 = vadd.f32 %v7406, %v7472
    %s7505 = sld [smem:[#allocation4 + $0x2f]]
    %v7506 = vstv %s7505
    %v7507 = vmul.f32 %v7506, %v327
    %v7508 = vmul.f32 %v7506, %v328
    %v7509 = vmul.f32 %v7506, %v329
    %v7510 = vmul.f32 %v7506, %v330
    %v7511 = vmul.f32 %v7506, %v331
    %v7512 = vmul.f32 %v7506, %v332
    %v7513 = vmul.f32 %v7506, %v333
    %v7514 = vmul.f32 %v7506, %v334
    %v7515 = vmul.f32 %v7506, %v335
    %v7516 = vmul.f32 %v7506, %v336
    %v7517 = vmul.f32 %v7506, %v337
    %v7518 = vmul.f32 %v7506, %v338
    %v7519 = vmul.f32 %v7506, %v339
    %v7520 = vmul.f32 %v7506, %v340
    %v7521 = vmul.f32 %v7506, %v341
    %v7522 = vmul.f32 %v7506, %v342
    %7539 = vrot.lane.b32.xlu0 %v7507, 123
    %v7540 = vpop.permute.xlu0 %7539
    %7541 = vrot.lane.b32.xlu0 %v7508, 123
    %v7542 = vpop.permute.xlu0 %7541
    %7543 = vrot.lane.b32.xlu0 %v7509, 123
    %v7544 = vpop.permute.xlu0 %7543
    %7545 = vrot.lane.b32.xlu0 %v7510, 123
    %v7546 = vpop.permute.xlu0 %7545
    %7547 = vrot.lane.b32.xlu0 %v7511, 123
    %v7548 = vpop.permute.xlu0 %7547
    %7549 = vrot.lane.b32.xlu0 %v7512, 123
    %v7550 = vpop.permute.xlu0 %7549
    %7551 = vrot.lane.b32.xlu0 %v7513, 123
    %v7552 = vpop.permute.xlu0 %7551
    %7553 = vrot.lane.b32.xlu0 %v7514, 123
    %v7554 = vpop.permute.xlu0 %7553
    %7555 = vrot.lane.b32.xlu0 %v7515, 123
    %v7556 = vpop.permute.xlu0 %7555
    %7557 = vrot.lane.b32.xlu0 %v7516, 123
    %v7558 = vpop.permute.xlu0 %7557
    %7559 = vrot.lane.b32.xlu0 %v7517, 123
    %v7560 = vpop.permute.xlu0 %7559
    %7561 = vrot.lane.b32.xlu0 %v7518, 123
    %v7562 = vpop.permute.xlu0 %7561
    %7563 = vrot.lane.b32.xlu0 %v7519, 123
    %v7564 = vpop.permute.xlu0 %7563
    %7565 = vrot.lane.b32.xlu0 %v7520, 123
    %v7566 = vpop.permute.xlu0 %7565
    %7567 = vrot.lane.b32.xlu0 %v7521, 123
    %v7568 = vpop.permute.xlu0 %7567
    %7569 = vrot.lane.b32.xlu0 %v7522, 123
    %v7570 = vpop.permute.xlu0 %7569
    %v7587 = vadd.f32 %v7489, %v7540
    %v7588 = vadd.f32 %v7490, %v7542
    %v7589 = vadd.f32 %v7491, %v7544
    %v7590 = vadd.f32 %v7492, %v7546
    %v7591 = vadd.f32 %v7493, %v7548
    %v7592 = vadd.f32 %v7494, %v7550
    %v7593 = vadd.f32 %v7495, %v7552
    %v7594 = vadd.f32 %v7496, %v7554
    %v7595 = vadd.f32 %v7497, %v7556
    %v7596 = vadd.f32 %v7498, %v7558
    %v7597 = vadd.f32 %v7499, %v7560
    %v7598 = vadd.f32 %v7500, %v7562
    %v7599 = vadd.f32 %v7501, %v7564
    %v7600 = vadd.f32 %v7502, %v7566
    %v7601 = vadd.f32 %v7503, %v7568
    %v7602 = vadd.f32 %v7504, %v7570
    %s7603 = sld [smem:[#allocation4 + $0x60]]
    %v7604 = vstv %s7603
    %v7605 = vmul.f32 %v7604, %v349
    %v7606 = vmul.f32 %v7604, %v350
    %v7607 = vmul.f32 %v7604, %v351
    %v7608 = vmul.f32 %v7604, %v352
    %v7609 = vmul.f32 %v7604, %v353
    %v7610 = vmul.f32 %v7604, %v354
    %v7611 = vmul.f32 %v7604, %v355
    %v7612 = vmul.f32 %v7604, %v356
    %v7613 = vmul.f32 %v7604, %v357
    %v7614 = vmul.f32 %v7604, %v358
    %v7615 = vmul.f32 %v7604, %v359
    %v7616 = vmul.f32 %v7604, %v360
    %v7617 = vmul.f32 %v7604, %v361
    %v7618 = vmul.f32 %v7604, %v362
    %v7619 = vmul.f32 %v7604, %v363
    %v7620 = vmul.f32 %v7604, %v364
    %7637 = vrot.lane.b32.xlu0 %v7605, 123
    %v7638 = vpop.permute.xlu0 %7637
    %7639 = vrot.lane.b32.xlu0 %v7606, 123
    %v7640 = vpop.permute.xlu0 %7639
    %7641 = vrot.lane.b32.xlu0 %v7607, 123
    %v7642 = vpop.permute.xlu0 %7641
    %7643 = vrot.lane.b32.xlu0 %v7608, 123
    %v7644 = vpop.permute.xlu0 %7643
    %7645 = vrot.lane.b32.xlu0 %v7609, 123
    %v7646 = vpop.permute.xlu0 %7645
    %7647 = vrot.lane.b32.xlu0 %v7610, 123
    %v7648 = vpop.permute.xlu0 %7647
    %7649 = vrot.lane.b32.xlu0 %v7611, 123
    %v7650 = vpop.permute.xlu0 %7649
    %7651 = vrot.lane.b32.xlu0 %v7612, 123
    %v7652 = vpop.permute.xlu0 %7651
    %7653 = vrot.lane.b32.xlu0 %v7613, 123
    %v7654 = vpop.permute.xlu0 %7653
    %7655 = vrot.lane.b32.xlu0 %v7614, 123
    %v7656 = vpop.permute.xlu0 %7655
    %7657 = vrot.lane.b32.xlu0 %v7615, 123
    %v7658 = vpop.permute.xlu0 %7657
    %7659 = vrot.lane.b32.xlu0 %v7616, 123
    %v7660 = vpop.permute.xlu0 %7659
    %7661 = vrot.lane.b32.xlu0 %v7617, 123
    %v7662 = vpop.permute.xlu0 %7661
    %7663 = vrot.lane.b32.xlu0 %v7618, 123
    %v7664 = vpop.permute.xlu0 %7663
    %7665 = vrot.lane.b32.xlu0 %v7619, 123
    %v7666 = vpop.permute.xlu0 %7665
    %7667 = vrot.lane.b32.xlu0 %v7620, 123
    %v7668 = vpop.permute.xlu0 %7667
    %v7685 = vadd.f32 %v7587, %v7638
    %v7686 = vadd.f32 %v7588, %v7640
    %v7687 = vadd.f32 %v7589, %v7642
    %v7688 = vadd.f32 %v7590, %v7644
    %v7689 = vadd.f32 %v7591, %v7646
    %v7690 = vadd.f32 %v7592, %v7648
    %v7691 = vadd.f32 %v7593, %v7650
    %v7692 = vadd.f32 %v7594, %v7652
    %v7693 = vadd.f32 %v7595, %v7654
    %v7694 = vadd.f32 %v7596, %v7656
    %v7695 = vadd.f32 %v7597, %v7658
    %v7696 = vadd.f32 %v7598, %v7660
    %v7697 = vadd.f32 %v7599, %v7662
    %v7698 = vadd.f32 %v7600, %v7664
    %v7699 = vadd.f32 %v7601, %v7666
    %v7700 = vadd.f32 %v7602, %v7668
    %s7701 = sld [smem:[#allocation4 + $0x6]]
    %v7702 = vstv %s7701
    %v7703 = vmul.f32 %v7702, %v321
    %v7704 = vmul.f32 %v7702, %v322
    %v7705 = vmul.f32 %v7702, %v323
    %v7706 = vmul.f32 %v7702, %v324
    %v7707 = vmul.f32 %v7702, %v325
    %v7708 = vmul.f32 %v7702, %v326
    %v7709 = vmul.f32 %v7702, %v327
    %v7710 = vmul.f32 %v7702, %v328
    %v7711 = vmul.f32 %v7702, %v329
    %v7712 = vmul.f32 %v7702, %v330
    %v7713 = vmul.f32 %v7702, %v331
    %v7714 = vmul.f32 %v7702, %v332
    %v7715 = vmul.f32 %v7702, %v333
    %v7716 = vmul.f32 %v7702, %v334
    %v7717 = vmul.f32 %v7702, %v335
    %v7718 = vmul.f32 %v7702, %v336
    %7735 = vrot.lane.b32.xlu0 %v7703, 122
    %v7736 = vpop.permute.xlu0 %7735
    %7737 = vrot.lane.b32.xlu0 %v7704, 122
    %v7738 = vpop.permute.xlu0 %7737
    %7739 = vrot.lane.b32.xlu0 %v7705, 122
    %v7740 = vpop.permute.xlu0 %7739
    %7741 = vrot.lane.b32.xlu0 %v7706, 122
    %v7742 = vpop.permute.xlu0 %7741
    %7743 = vrot.lane.b32.xlu0 %v7707, 122
    %v7744 = vpop.permute.xlu0 %7743
    %7745 = vrot.lane.b32.xlu0 %v7708, 122
    %v7746 = vpop.permute.xlu0 %7745
    %7747 = vrot.lane.b32.xlu0 %v7709, 122
    %v7748 = vpop.permute.xlu0 %7747
    %7749 = vrot.lane.b32.xlu0 %v7710, 122
    %v7750 = vpop.permute.xlu0 %7749
    %7751 = vrot.lane.b32.xlu0 %v7711, 122
    %v7752 = vpop.permute.xlu0 %7751
    %7753 = vrot.lane.b32.xlu0 %v7712, 122
    %v7754 = vpop.permute.xlu0 %7753
    %7755 = vrot.lane.b32.xlu0 %v7713, 122
    %v7756 = vpop.permute.xlu0 %7755
    %7757 = vrot.lane.b32.xlu0 %v7714, 122
    %v7758 = vpop.permute.xlu0 %7757
    %7759 = vrot.lane.b32.xlu0 %v7715, 122
    %v7760 = vpop.permute.xlu0 %7759
    %7761 = vrot.lane.b32.xlu0 %v7716, 122
    %v7762 = vpop.permute.xlu0 %7761
    %7763 = vrot.lane.b32.xlu0 %v7717, 122
    %v7764 = vpop.permute.xlu0 %7763
    %7765 = vrot.lane.b32.xlu0 %v7718, 122
    %v7766 = vpop.permute.xlu0 %7765
    %v7783 = vadd.f32 %v7685, %v7736
    %v7784 = vadd.f32 %v7686, %v7738
    %v7785 = vadd.f32 %v7687, %v7740
    %v7786 = vadd.f32 %v7688, %v7742
    %v7787 = vadd.f32 %v7689, %v7744
    %v7788 = vadd.f32 %v7690, %v7746
    %v7789 = vadd.f32 %v7691, %v7748
    %v7790 = vadd.f32 %v7692, %v7750
    %v7791 = vadd.f32 %v7693, %v7752
    %v7792 = vadd.f32 %v7694, %v7754
    %v7793 = vadd.f32 %v7695, %v7756
    %v7794 = vadd.f32 %v7696, %v7758
    %v7795 = vadd.f32 %v7697, %v7760
    %v7796 = vadd.f32 %v7698, %v7762
    %v7797 = vadd.f32 %v7699, %v7764
    %v7798 = vadd.f32 %v7700, %v7766
    %s7799 = sld [smem:[#allocation4 + $0x37]]
    %v7800 = vstv %s7799
    %v7801 = vmul.f32 %v7800, %v343
    %v7802 = vmul.f32 %v7800, %v344
    %v7803 = vmul.f32 %v7800, %v345
    %v7804 = vmul.f32 %v7800, %v346
    %v7805 = vmul.f32 %v7800, %v347
    %v7806 = vmul.f32 %v7800, %v348
    %v7807 = vmul.f32 %v7800, %v349
    %v7808 = vmul.f32 %v7800, %v350
    %v7809 = vmul.f32 %v7800, %v351
    %v7810 = vmul.f32 %v7800, %v352
    %v7811 = vmul.f32 %v7800, %v353
    %v7812 = vmul.f32 %v7800, %v354
    %v7813 = vmul.f32 %v7800, %v355
    %v7814 = vmul.f32 %v7800, %v356
    %v7815 = vmul.f32 %v7800, %v357
    %v7816 = vmul.f32 %v7800, %v358
    %7833 = vrot.lane.b32.xlu0 %v7801, 122
    %v7834 = vpop.permute.xlu0 %7833
    %7835 = vrot.lane.b32.xlu0 %v7802, 122
    %v7836 = vpop.permute.xlu0 %7835
    %7837 = vrot.lane.b32.xlu0 %v7803, 122
    %v7838 = vpop.permute.xlu0 %7837
    %7839 = vrot.lane.b32.xlu0 %v7804, 122
    %v7840 = vpop.permute.xlu0 %7839
    %7841 = vrot.lane.b32.xlu0 %v7805, 122
    %v7842 = vpop.permute.xlu0 %7841
    %7843 = vrot.lane.b32.xlu0 %v7806, 122
    %v7844 = vpop.permute.xlu0 %7843
    %7845 = vrot.lane.b32.xlu0 %v7807, 122
    %v7846 = vpop.permute.xlu0 %7845
    %7847 = vrot.lane.b32.xlu0 %v7808, 122
    %v7848 = vpop.permute.xlu0 %7847
    %7849 = vrot.lane.b32.xlu0 %v7809, 122
    %v7850 = vpop.permute.xlu0 %7849
    %7851 = vrot.lane.b32.xlu0 %v7810, 122
    %v7852 = vpop.permute.xlu0 %7851
    %7853 = vrot.lane.b32.xlu0 %v7811, 122
    %v7854 = vpop.permute.xlu0 %7853
    %7855 = vrot.lane.b32.xlu0 %v7812, 122
    %v7856 = vpop.permute.xlu0 %7855
    %7857 = vrot.lane.b32.xlu0 %v7813, 122
    %v7858 = vpop.permute.xlu0 %7857
    %7859 = vrot.lane.b32.xlu0 %v7814, 122
    %v7860 = vpop.permute.xlu0 %7859
    %7861 = vrot.lane.b32.xlu0 %v7815, 122
    %v7862 = vpop.permute.xlu0 %7861
    %7863 = vrot.lane.b32.xlu0 %v7816, 122
    %v7864 = vpop.permute.xlu0 %7863
    %v7881 = vadd.f32 %v7783, %v7834
    %v7882 = vadd.f32 %v7784, %v7836
    %v7883 = vadd.f32 %v7785, %v7838
    %v7884 = vadd.f32 %v7786, %v7840
    %v7885 = vadd.f32 %v7787, %v7842
    %v7886 = vadd.f32 %v7788, %v7844
    %v7887 = vadd.f32 %v7789, %v7846
    %v7888 = vadd.f32 %v7790, %v7848
    %v7889 = vadd.f32 %v7791, %v7850
    %v7890 = vadd.f32 %v7792, %v7852
    %v7891 = vadd.f32 %v7793, %v7854
    %v7892 = vadd.f32 %v7794, %v7856
    %v7893 = vadd.f32 %v7795, %v7858
    %v7894 = vadd.f32 %v7796, %v7860
    %v7895 = vadd.f32 %v7797, %v7862
    %v7896 = vadd.f32 %v7798, %v7864
    %s7897 = sld [smem:[#allocation4 + $0xd]]
    %v7898 = vstv %s7897
    %v7899 = vmul.f32 %v7898, %v322
    %v7900 = vmul.f32 %v7898, %v323
    %v7901 = vmul.f32 %v7898, %v324
    %v7902 = vmul.f32 %v7898, %v325
    %v7903 = vmul.f32 %v7898, %v326
    %v7904 = vmul.f32 %v7898, %v327
    %v7905 = vmul.f32 %v7898, %v328
    %v7906 = vmul.f32 %v7898, %v329
    %v7907 = vmul.f32 %v7898, %v330
    %v7908 = vmul.f32 %v7898, %v331
    %v7909 = vmul.f32 %v7898, %v332
    %v7910 = vmul.f32 %v7898, %v333
    %v7911 = vmul.f32 %v7898, %v334
    %v7912 = vmul.f32 %v7898, %v335
    %v7913 = vmul.f32 %v7898, %v336
    %v7914 = vmul.f32 %v7898, %v337
    %7931 = vrot.lane.b32.xlu0 %v7899, 122
    %v7932 = vpop.permute.xlu0 %7931
    %7933 = vrot.lane.b32.xlu0 %v7900, 122
    %v7934 = vpop.permute.xlu0 %7933
    %7935 = vrot.lane.b32.xlu0 %v7901, 122
    %v7936 = vpop.permute.xlu0 %7935
    %7937 = vrot.lane.b32.xlu0 %v7902, 122
    %v7938 = vpop.permute.xlu0 %7937
    %7939 = vrot.lane.b32.xlu0 %v7903, 122
    %v7940 = vpop.permute.xlu0 %7939
    %7941 = vrot.lane.b32.xlu0 %v7904, 122
    %v7942 = vpop.permute.xlu0 %7941
    %7943 = vrot.lane.b32.xlu0 %v7905, 122
    %v7944 = vpop.permute.xlu0 %7943
    %7945 = vrot.lane.b32.xlu0 %v7906, 122
    %v7946 = vpop.permute.xlu0 %7945
    %7947 = vrot.lane.b32.xlu0 %v7907, 122
    %v7948 = vpop.permute.xlu0 %7947
    %7949 = vrot.lane.b32.xlu0 %v7908, 122
    %v7950 = vpop.permute.xlu0 %7949
    %7951 = vrot.lane.b32.xlu0 %v7909, 122
    %v7952 = vpop.permute.xlu0 %7951
    %7953 = vrot.lane.b32.xlu0 %v7910, 122
    %v7954 = vpop.permute.xlu0 %7953
    %7955 = vrot.lane.b32.xlu0 %v7911, 122
    %v7956 = vpop.permute.xlu0 %7955
    %7957 = vrot.lane.b32.xlu0 %v7912, 122
    %v7958 = vpop.permute.xlu0 %7957
    %7959 = vrot.lane.b32.xlu0 %v7913, 122
    %v7960 = vpop.permute.xlu0 %7959
    %7961 = vrot.lane.b32.xlu0 %v7914, 122
    %v7962 = vpop.permute.xlu0 %7961
    %v7979 = vadd.f32 %v7881, %v7932
    %v7980 = vadd.f32 %v7882, %v7934
    %v7981 = vadd.f32 %v7883, %v7936
    %v7982 = vadd.f32 %v7884, %v7938
    %v7983 = vadd.f32 %v7885, %v7940
    %v7984 = vadd.f32 %v7886, %v7942
    %v7985 = vadd.f32 %v7887, %v7944
    %v7986 = vadd.f32 %v7888, %v7946
    %v7987 = vadd.f32 %v7889, %v7948
    %v7988 = vadd.f32 %v7890, %v7950
    %v7989 = vadd.f32 %v7891, %v7952
    %v7990 = vadd.f32 %v7892, %v7954
    %v7991 = vadd.f32 %v7893, %v7956
    %v7992 = vadd.f32 %v7894, %v7958
    %v7993 = vadd.f32 %v7895, %v7960
    %v7994 = vadd.f32 %v7896, %v7962
    %s7995 = sld [smem:[#allocation4 + $0x3e]]
    %v7996 = vstv %s7995
    %v7997 = vmul.f32 %v7996, %v344
    %v7998 = vmul.f32 %v7996, %v345
    %v7999 = vmul.f32 %v7996, %v346
    %v8000 = vmul.f32 %v7996, %v347
    %v8001 = vmul.f32 %v7996, %v348
    %v8002 = vmul.f32 %v7996, %v349
    %v8003 = vmul.f32 %v7996, %v350
    %v8004 = vmul.f32 %v7996, %v351
    %v8005 = vmul.f32 %v7996, %v352
    %v8006 = vmul.f32 %v7996, %v353
    %v8007 = vmul.f32 %v7996, %v354
    %v8008 = vmul.f32 %v7996, %v355
    %v8009 = vmul.f32 %v7996, %v356
    %v8010 = vmul.f32 %v7996, %v357
    %v8011 = vmul.f32 %v7996, %v358
    %v8012 = vmul.f32 %v7996, %v359
    %8029 = vrot.lane.b32.xlu0 %v7997, 122
    %v8030 = vpop.permute.xlu0 %8029
    %8031 = vrot.lane.b32.xlu0 %v7998, 122
    %v8032 = vpop.permute.xlu0 %8031
    %8033 = vrot.lane.b32.xlu0 %v7999, 122
    %v8034 = vpop.permute.xlu0 %8033
    %8035 = vrot.lane.b32.xlu0 %v8000, 122
    %v8036 = vpop.permute.xlu0 %8035
    %8037 = vrot.lane.b32.xlu0 %v8001, 122
    %v8038 = vpop.permute.xlu0 %8037
    %8039 = vrot.lane.b32.xlu0 %v8002, 122
    %v8040 = vpop.permute.xlu0 %8039
    %8041 = vrot.lane.b32.xlu0 %v8003, 122
    %v8042 = vpop.permute.xlu0 %8041
    %8043 = vrot.lane.b32.xlu0 %v8004, 122
    %v8044 = vpop.permute.xlu0 %8043
    %8045 = vrot.lane.b32.xlu0 %v8005, 122
    %v8046 = vpop.permute.xlu0 %8045
    %8047 = vrot.lane.b32.xlu0 %v8006, 122
    %v8048 = vpop.permute.xlu0 %8047
    %8049 = vrot.lane.b32.xlu0 %v8007, 122
    %v8050 = vpop.permute.xlu0 %8049
    %8051 = vrot.lane.b32.xlu0 %v8008, 122
    %v8052 = vpop.permute.xlu0 %8051
    %8053 = vrot.lane.b32.xlu0 %v8009, 122
    %v8054 = vpop.permute.xlu0 %8053
    %8055 = vrot.lane.b32.xlu0 %v8010, 122
    %v8056 = vpop.permute.xlu0 %8055
    %8057 = vrot.lane.b32.xlu0 %v8011, 122
    %v8058 = vpop.permute.xlu0 %8057
    %8059 = vrot.lane.b32.xlu0 %v8012, 122
    %v8060 = vpop.permute.xlu0 %8059
    %v8077 = vadd.f32 %v7979, %v8030
    %v8078 = vadd.f32 %v7980, %v8032
    %v8079 = vadd.f32 %v7981, %v8034
    %v8080 = vadd.f32 %v7982, %v8036
    %v8081 = vadd.f32 %v7983, %v8038
    %v8082 = vadd.f32 %v7984, %v8040
    %v8083 = vadd.f32 %v7985, %v8042
    %v8084 = vadd.f32 %v7986, %v8044
    %v8085 = vadd.f32 %v7987, %v8046
    %v8086 = vadd.f32 %v7988, %v8048
    %v8087 = vadd.f32 %v7989, %v8050
    %v8088 = vadd.f32 %v7990, %v8052
    %v8089 = vadd.f32 %v7991, %v8054
    %v8090 = vadd.f32 %v7992, %v8056
    %v8091 = vadd.f32 %v7993, %v8058
    %v8092 = vadd.f32 %v7994, %v8060
    %s8093 = sld [smem:[#allocation4 + $0x14]]
    %v8094 = vstv %s8093
    %v8095 = vmul.f32 %v8094, %v323
    %v8096 = vmul.f32 %v8094, %v324
    %v8097 = vmul.f32 %v8094, %v325
    %v8098 = vmul.f32 %v8094, %v326
    %v8099 = vmul.f32 %v8094, %v327
    %v8100 = vmul.f32 %v8094, %v328
    %v8101 = vmul.f32 %v8094, %v329
    %v8102 = vmul.f32 %v8094, %v330
    %v8103 = vmul.f32 %v8094, %v331
    %v8104 = vmul.f32 %v8094, %v332
    %v8105 = vmul.f32 %v8094, %v333
    %v8106 = vmul.f32 %v8094, %v334
    %v8107 = vmul.f32 %v8094, %v335
    %v8108 = vmul.f32 %v8094, %v336
    %v8109 = vmul.f32 %v8094, %v337
    %v8110 = vmul.f32 %v8094, %v338
    %8127 = vrot.lane.b32.xlu0 %v8095, 122
    %v8128 = vpop.permute.xlu0 %8127
    %8129 = vrot.lane.b32.xlu0 %v8096, 122
    %v8130 = vpop.permute.xlu0 %8129
    %8131 = vrot.lane.b32.xlu0 %v8097, 122
    %v8132 = vpop.permute.xlu0 %8131
    %8133 = vrot.lane.b32.xlu0 %v8098, 122
    %v8134 = vpop.permute.xlu0 %8133
    %8135 = vrot.lane.b32.xlu0 %v8099, 122
    %v8136 = vpop.permute.xlu0 %8135
    %8137 = vrot.lane.b32.xlu0 %v8100, 122
    %v8138 = vpop.permute.xlu0 %8137
    %8139 = vrot.lane.b32.xlu0 %v8101, 122
    %v8140 = vpop.permute.xlu0 %8139
    %8141 = vrot.lane.b32.xlu0 %v8102, 122
    %v8142 = vpop.permute.xlu0 %8141
    %8143 = vrot.lane.b32.xlu0 %v8103, 122
    %v8144 = vpop.permute.xlu0 %8143
    %8145 = vrot.lane.b32.xlu0 %v8104, 122
    %v8146 = vpop.permute.xlu0 %8145
    %8147 = vrot.lane.b32.xlu0 %v8105, 122
    %v8148 = vpop.permute.xlu0 %8147
    %8149 = vrot.lane.b32.xlu0 %v8106, 122
    %v8150 = vpop.permute.xlu0 %8149
    %8151 = vrot.lane.b32.xlu0 %v8107, 122
    %v8152 = vpop.permute.xlu0 %8151
    %8153 = vrot.lane.b32.xlu0 %v8108, 122
    %v8154 = vpop.permute.xlu0 %8153
    %8155 = vrot.lane.b32.xlu0 %v8109, 122
    %v8156 = vpop.permute.xlu0 %8155
    %8157 = vrot.lane.b32.xlu0 %v8110, 122
    %v8158 = vpop.permute.xlu0 %8157
    %v8175 = vadd.f32 %v8077, %v8128
    %v8176 = vadd.f32 %v8078, %v8130
    %v8177 = vadd.f32 %v8079, %v8132
    %v8178 = vadd.f32 %v8080, %v8134
    %v8179 = vadd.f32 %v8081, %v8136
    %v8180 = vadd.f32 %v8082, %v8138
    %v8181 = vadd.f32 %v8083, %v8140
    %v8182 = vadd.f32 %v8084, %v8142
    %v8183 = vadd.f32 %v8085, %v8144
    %v8184 = vadd.f32 %v8086, %v8146
    %v8185 = vadd.f32 %v8087, %v8148
    %v8186 = vadd.f32 %v8088, %v8150
    %v8187 = vadd.f32 %v8089, %v8152
    %v8188 = vadd.f32 %v8090, %v8154
    %v8189 = vadd.f32 %v8091, %v8156
    %v8190 = vadd.f32 %v8092, %v8158
    %s8191 = sld [smem:[#allocation4 + $0x45]]
    %v8192 = vstv %s8191
    %v8193 = vmul.f32 %v8192, %v345
    %v8194 = vmul.f32 %v8192, %v346
    %v8195 = vmul.f32 %v8192, %v347
    %v8196 = vmul.f32 %v8192, %v348
    %v8197 = vmul.f32 %v8192, %v349
    %v8198 = vmul.f32 %v8192, %v350
    %v8199 = vmul.f32 %v8192, %v351
    %v8200 = vmul.f32 %v8192, %v352
    %v8201 = vmul.f32 %v8192, %v353
    %v8202 = vmul.f32 %v8192, %v354
    %v8203 = vmul.f32 %v8192, %v355
    %v8204 = vmul.f32 %v8192, %v356
    %v8205 = vmul.f32 %v8192, %v357
    %v8206 = vmul.f32 %v8192, %v358
    %v8207 = vmul.f32 %v8192, %v359
    %v8208 = vmul.f32 %v8192, %v360
    %8225 = vrot.lane.b32.xlu0 %v8193, 122
    %v8226 = vpop.permute.xlu0 %8225
    %8227 = vrot.lane.b32.xlu0 %v8194, 122
    %v8228 = vpop.permute.xlu0 %8227
    %8229 = vrot.lane.b32.xlu0 %v8195, 122
    %v8230 = vpop.permute.xlu0 %8229
    %8231 = vrot.lane.b32.xlu0 %v8196, 122
    %v8232 = vpop.permute.xlu0 %8231
    %8233 = vrot.lane.b32.xlu0 %v8197, 122
    %v8234 = vpop.permute.xlu0 %8233
    %8235 = vrot.lane.b32.xlu0 %v8198, 122
    %v8236 = vpop.permute.xlu0 %8235
    %8237 = vrot.lane.b32.xlu0 %v8199, 122
    %v8238 = vpop.permute.xlu0 %8237
    %8239 = vrot.lane.b32.xlu0 %v8200, 122
    %v8240 = vpop.permute.xlu0 %8239
    %8241 = vrot.lane.b32.xlu0 %v8201, 122
    %v8242 = vpop.permute.xlu0 %8241
    %8243 = vrot.lane.b32.xlu0 %v8202, 122
    %v8244 = vpop.permute.xlu0 %8243
    %8245 = vrot.lane.b32.xlu0 %v8203, 122
    %v8246 = vpop.permute.xlu0 %8245
    %8247 = vrot.lane.b32.xlu0 %v8204, 122
    %v8248 = vpop.permute.xlu0 %8247
    %8249 = vrot.lane.b32.xlu0 %v8205, 122
    %v8250 = vpop.permute.xlu0 %8249
    %8251 = vrot.lane.b32.xlu0 %v8206, 122
    %v8252 = vpop.permute.xlu0 %8251
    %8253 = vrot.lane.b32.xlu0 %v8207, 122
    %v8254 = vpop.permute.xlu0 %8253
    %8255 = vrot.lane.b32.xlu0 %v8208, 122
    %v8256 = vpop.permute.xlu0 %8255
    %v8273 = vadd.f32 %v8175, %v8226
    %v8274 = vadd.f32 %v8176, %v8228
    %v8275 = vadd.f32 %v8177, %v8230
    %v8276 = vadd.f32 %v8178, %v8232
    %v8277 = vadd.f32 %v8179, %v8234
    %v8278 = vadd.f32 %v8180, %v8236
    %v8279 = vadd.f32 %v8181, %v8238
    %v8280 = vadd.f32 %v8182, %v8240
    %v8281 = vadd.f32 %v8183, %v8242
    %v8282 = vadd.f32 %v8184, %v8244
    %v8283 = vadd.f32 %v8185, %v8246
    %v8284 = vadd.f32 %v8186, %v8248
    %v8285 = vadd.f32 %v8187, %v8250
    %v8286 = vadd.f32 %v8188, %v8252
    %v8287 = vadd.f32 %v8189, %v8254
    %v8288 = vadd.f32 %v8190, %v8256
    %s8289 = sld [smem:[#allocation4 + $0x1b]]
    %v8290 = vstv %s8289
    %v8291 = vmul.f32 %v8290, %v324
    %v8292 = vmul.f32 %v8290, %v325
    %v8293 = vmul.f32 %v8290, %v326
    %v8294 = vmul.f32 %v8290, %v327
    %v8295 = vmul.f32 %v8290, %v328
    %v8296 = vmul.f32 %v8290, %v329
    %v8297 = vmul.f32 %v8290, %v330
    %v8298 = vmul.f32 %v8290, %v331
    %v8299 = vmul.f32 %v8290, %v332
    %v8300 = vmul.f32 %v8290, %v333
    %v8301 = vmul.f32 %v8290, %v334
    %v8302 = vmul.f32 %v8290, %v335
    %v8303 = vmul.f32 %v8290, %v336
    %v8304 = vmul.f32 %v8290, %v337
    %v8305 = vmul.f32 %v8290, %v338
    %v8306 = vmul.f32 %v8290, %v339
    %8323 = vrot.lane.b32.xlu0 %v8291, 122
    %v8324 = vpop.permute.xlu0 %8323
    %8325 = vrot.lane.b32.xlu0 %v8292, 122
    %v8326 = vpop.permute.xlu0 %8325
    %8327 = vrot.lane.b32.xlu0 %v8293, 122
    %v8328 = vpop.permute.xlu0 %8327
    %8329 = vrot.lane.b32.xlu0 %v8294, 122
    %v8330 = vpop.permute.xlu0 %8329
    %8331 = vrot.lane.b32.xlu0 %v8295, 122
    %v8332 = vpop.permute.xlu0 %8331
    %8333 = vrot.lane.b32.xlu0 %v8296, 122
    %v8334 = vpop.permute.xlu0 %8333
    %8335 = vrot.lane.b32.xlu0 %v8297, 122
    %v8336 = vpop.permute.xlu0 %8335
    %8337 = vrot.lane.b32.xlu0 %v8298, 122
    %v8338 = vpop.permute.xlu0 %8337
    %8339 = vrot.lane.b32.xlu0 %v8299, 122
    %v8340 = vpop.permute.xlu0 %8339
    %8341 = vrot.lane.b32.xlu0 %v8300, 122
    %v8342 = vpop.permute.xlu0 %8341
    %8343 = vrot.lane.b32.xlu0 %v8301, 122
    %v8344 = vpop.permute.xlu0 %8343
    %8345 = vrot.lane.b32.xlu0 %v8302, 122
    %v8346 = vpop.permute.xlu0 %8345
    %8347 = vrot.lane.b32.xlu0 %v8303, 122
    %v8348 = vpop.permute.xlu0 %8347
    %8349 = vrot.lane.b32.xlu0 %v8304, 122
    %v8350 = vpop.permute.xlu0 %8349
    %8351 = vrot.lane.b32.xlu0 %v8305, 122
    %v8352 = vpop.permute.xlu0 %8351
    %8353 = vrot.lane.b32.xlu0 %v8306, 122
    %v8354 = vpop.permute.xlu0 %8353
    %v8371 = vadd.f32 %v8273, %v8324
    %v8372 = vadd.f32 %v8274, %v8326
    %v8373 = vadd.f32 %v8275, %v8328
    %v8374 = vadd.f32 %v8276, %v8330
    %v8375 = vadd.f32 %v8277, %v8332
    %v8376 = vadd.f32 %v8278, %v8334
    %v8377 = vadd.f32 %v8279, %v8336
    %v8378 = vadd.f32 %v8280, %v8338
    %v8379 = vadd.f32 %v8281, %v8340
    %v8380 = vadd.f32 %v8282, %v8342
    %v8381 = vadd.f32 %v8283, %v8344
    %v8382 = vadd.f32 %v8284, %v8346
    %v8383 = vadd.f32 %v8285, %v8348
    %v8384 = vadd.f32 %v8286, %v8350
    %v8385 = vadd.f32 %v8287, %v8352
    %v8386 = vadd.f32 %v8288, %v8354
    %s8387 = sld [smem:[#allocation4 + $0x4c]]
    %v8388 = vstv %s8387
    %v8389 = vmul.f32 %v8388, %v346
    %v8390 = vmul.f32 %v8388, %v347
    %v8391 = vmul.f32 %v8388, %v348
    %v8392 = vmul.f32 %v8388, %v349
    %v8393 = vmul.f32 %v8388, %v350
    %v8394 = vmul.f32 %v8388, %v351
    %v8395 = vmul.f32 %v8388, %v352
    %v8396 = vmul.f32 %v8388, %v353
    %v8397 = vmul.f32 %v8388, %v354
    %v8398 = vmul.f32 %v8388, %v355
    %v8399 = vmul.f32 %v8388, %v356
    %v8400 = vmul.f32 %v8388, %v357
    %v8401 = vmul.f32 %v8388, %v358
    %v8402 = vmul.f32 %v8388, %v359
    %v8403 = vmul.f32 %v8388, %v360
    %v8404 = vmul.f32 %v8388, %v361
    %8421 = vrot.lane.b32.xlu0 %v8389, 122
    %v8422 = vpop.permute.xlu0 %8421
    %8423 = vrot.lane.b32.xlu0 %v8390, 122
    %v8424 = vpop.permute.xlu0 %8423
    %8425 = vrot.lane.b32.xlu0 %v8391, 122
    %v8426 = vpop.permute.xlu0 %8425
    %8427 = vrot.lane.b32.xlu0 %v8392, 122
    %v8428 = vpop.permute.xlu0 %8427
    %8429 = vrot.lane.b32.xlu0 %v8393, 122
    %v8430 = vpop.permute.xlu0 %8429
    %8431 = vrot.lane.b32.xlu0 %v8394, 122
    %v8432 = vpop.permute.xlu0 %8431
    %8433 = vrot.lane.b32.xlu0 %v8395, 122
    %v8434 = vpop.permute.xlu0 %8433
    %8435 = vrot.lane.b32.xlu0 %v8396, 122
    %v8436 = vpop.permute.xlu0 %8435
    %8437 = vrot.lane.b32.xlu0 %v8397, 122
    %v8438 = vpop.permute.xlu0 %8437
    %8439 = vrot.lane.b32.xlu0 %v8398, 122
    %v8440 = vpop.permute.xlu0 %8439
    %8441 = vrot.lane.b32.xlu0 %v8399, 122
    %v8442 = vpop.permute.xlu0 %8441
    %8443 = vrot.lane.b32.xlu0 %v8400, 122
    %v8444 = vpop.permute.xlu0 %8443
    %8445 = vrot.lane.b32.xlu0 %v8401, 122
    %v8446 = vpop.permute.xlu0 %8445
    %8447 = vrot.lane.b32.xlu0 %v8402, 122
    %v8448 = vpop.permute.xlu0 %8447
    %8449 = vrot.lane.b32.xlu0 %v8403, 122
    %v8450 = vpop.permute.xlu0 %8449
    %8451 = vrot.lane.b32.xlu0 %v8404, 122
    %v8452 = vpop.permute.xlu0 %8451
    %v8469 = vadd.f32 %v8371, %v8422
    %v8470 = vadd.f32 %v8372, %v8424
    %v8471 = vadd.f32 %v8373, %v8426
    %v8472 = vadd.f32 %v8374, %v8428
    %v8473 = vadd.f32 %v8375, %v8430
    %v8474 = vadd.f32 %v8376, %v8432
    %v8475 = vadd.f32 %v8377, %v8434
    %v8476 = vadd.f32 %v8378, %v8436
    %v8477 = vadd.f32 %v8379, %v8438
    %v8478 = vadd.f32 %v8380, %v8440
    %v8479 = vadd.f32 %v8381, %v8442
    %v8480 = vadd.f32 %v8382, %v8444
    %v8481 = vadd.f32 %v8383, %v8446
    %v8482 = vadd.f32 %v8384, %v8448
    %v8483 = vadd.f32 %v8385, %v8450
    %v8484 = vadd.f32 %v8386, %v8452
    %s8485 = sld [smem:[#allocation4 + $0x22]]
    %v8486 = vstv %s8485
    %v8487 = vmul.f32 %v8486, %v325
    %v8488 = vmul.f32 %v8486, %v326
    %v8489 = vmul.f32 %v8486, %v327
    %v8490 = vmul.f32 %v8486, %v328
    %v8491 = vmul.f32 %v8486, %v329
    %v8492 = vmul.f32 %v8486, %v330
    %v8493 = vmul.f32 %v8486, %v331
    %v8494 = vmul.f32 %v8486, %v332
    %v8495 = vmul.f32 %v8486, %v333
    %v8496 = vmul.f32 %v8486, %v334
    %v8497 = vmul.f32 %v8486, %v335
    %v8498 = vmul.f32 %v8486, %v336
    %v8499 = vmul.f32 %v8486, %v337
    %v8500 = vmul.f32 %v8486, %v338
    %v8501 = vmul.f32 %v8486, %v339
    %v8502 = vmul.f32 %v8486, %v340
    %8519 = vrot.lane.b32.xlu0 %v8487, 122
    %v8520 = vpop.permute.xlu0 %8519
    %8521 = vrot.lane.b32.xlu0 %v8488, 122
    %v8522 = vpop.permute.xlu0 %8521
    %8523 = vrot.lane.b32.xlu0 %v8489, 122
    %v8524 = vpop.permute.xlu0 %8523
    %8525 = vrot.lane.b32.xlu0 %v8490, 122
    %v8526 = vpop.permute.xlu0 %8525
    %8527 = vrot.lane.b32.xlu0 %v8491, 122
    %v8528 = vpop.permute.xlu0 %8527
    %8529 = vrot.lane.b32.xlu0 %v8492, 122
    %v8530 = vpop.permute.xlu0 %8529
    %8531 = vrot.lane.b32.xlu0 %v8493, 122
    %v8532 = vpop.permute.xlu0 %8531
    %8533 = vrot.lane.b32.xlu0 %v8494, 122
    %v8534 = vpop.permute.xlu0 %8533
    %8535 = vrot.lane.b32.xlu0 %v8495, 122
    %v8536 = vpop.permute.xlu0 %8535
    %8537 = vrot.lane.b32.xlu0 %v8496, 122
    %v8538 = vpop.permute.xlu0 %8537
    %8539 = vrot.lane.b32.xlu0 %v8497, 122
    %v8540 = vpop.permute.xlu0 %8539
    %8541 = vrot.lane.b32.xlu0 %v8498, 122
    %v8542 = vpop.permute.xlu0 %8541
    %8543 = vrot.lane.b32.xlu0 %v8499, 122
    %v8544 = vpop.permute.xlu0 %8543
    %8545 = vrot.lane.b32.xlu0 %v8500, 122
    %v8546 = vpop.permute.xlu0 %8545
    %8547 = vrot.lane.b32.xlu0 %v8501, 122
    %v8548 = vpop.permute.xlu0 %8547
    %8549 = vrot.lane.b32.xlu0 %v8502, 122
    %v8550 = vpop.permute.xlu0 %8549
    %v8567 = vadd.f32 %v8469, %v8520
    %v8568 = vadd.f32 %v8470, %v8522
    %v8569 = vadd.f32 %v8471, %v8524
    %v8570 = vadd.f32 %v8472, %v8526
    %v8571 = vadd.f32 %v8473, %v8528
    %v8572 = vadd.f32 %v8474, %v8530
    %v8573 = vadd.f32 %v8475, %v8532
    %v8574 = vadd.f32 %v8476, %v8534
    %v8575 = vadd.f32 %v8477, %v8536
    %v8576 = vadd.f32 %v8478, %v8538
    %v8577 = vadd.f32 %v8479, %v8540
    %v8578 = vadd.f32 %v8480, %v8542
    %v8579 = vadd.f32 %v8481, %v8544
    %v8580 = vadd.f32 %v8482, %v8546
    %v8581 = vadd.f32 %v8483, %v8548
    %v8582 = vadd.f32 %v8484, %v8550
    %s8583 = sld [smem:[#allocation4 + $0x53]]
    %v8584 = vstv %s8583
    %v8585 = vmul.f32 %v8584, %v347
    %v8586 = vmul.f32 %v8584, %v348
    %v8587 = vmul.f32 %v8584, %v349
    %v8588 = vmul.f32 %v8584, %v350
    %v8589 = vmul.f32 %v8584, %v351
    %v8590 = vmul.f32 %v8584, %v352
    %v8591 = vmul.f32 %v8584, %v353
    %v8592 = vmul.f32 %v8584, %v354
    %v8593 = vmul.f32 %v8584, %v355
    %v8594 = vmul.f32 %v8584, %v356
    %v8595 = vmul.f32 %v8584, %v357
    %v8596 = vmul.f32 %v8584, %v358
    %v8597 = vmul.f32 %v8584, %v359
    %v8598 = vmul.f32 %v8584, %v360
    %v8599 = vmul.f32 %v8584, %v361
    %v8600 = vmul.f32 %v8584, %v362
    %8617 = vrot.lane.b32.xlu0 %v8585, 122
    %v8618 = vpop.permute.xlu0 %8617
    %8619 = vrot.lane.b32.xlu0 %v8586, 122
    %v8620 = vpop.permute.xlu0 %8619
    %8621 = vrot.lane.b32.xlu0 %v8587, 122
    %v8622 = vpop.permute.xlu0 %8621
    %8623 = vrot.lane.b32.xlu0 %v8588, 122
    %v8624 = vpop.permute.xlu0 %8623
    %8625 = vrot.lane.b32.xlu0 %v8589, 122
    %v8626 = vpop.permute.xlu0 %8625
    %8627 = vrot.lane.b32.xlu0 %v8590, 122
    %v8628 = vpop.permute.xlu0 %8627
    %8629 = vrot.lane.b32.xlu0 %v8591, 122
    %v8630 = vpop.permute.xlu0 %8629
    %8631 = vrot.lane.b32.xlu0 %v8592, 122
    %v8632 = vpop.permute.xlu0 %8631
    %8633 = vrot.lane.b32.xlu0 %v8593, 122
    %v8634 = vpop.permute.xlu0 %8633
    %8635 = vrot.lane.b32.xlu0 %v8594, 122
    %v8636 = vpop.permute.xlu0 %8635
    %8637 = vrot.lane.b32.xlu0 %v8595, 122
    %v8638 = vpop.permute.xlu0 %8637
    %8639 = vrot.lane.b32.xlu0 %v8596, 122
    %v8640 = vpop.permute.xlu0 %8639
    %8641 = vrot.lane.b32.xlu0 %v8597, 122
    %v8642 = vpop.permute.xlu0 %8641
    %8643 = vrot.lane.b32.xlu0 %v8598, 122
    %v8644 = vpop.permute.xlu0 %8643
    %8645 = vrot.lane.b32.xlu0 %v8599, 122
    %v8646 = vpop.permute.xlu0 %8645
    %8647 = vrot.lane.b32.xlu0 %v8600, 122
    %v8648 = vpop.permute.xlu0 %8647
    %v8665 = vadd.f32 %v8567, %v8618
    %v8666 = vadd.f32 %v8568, %v8620
    %v8667 = vadd.f32 %v8569, %v8622
    %v8668 = vadd.f32 %v8570, %v8624
    %v8669 = vadd.f32 %v8571, %v8626
    %v8670 = vadd.f32 %v8572, %v8628
    %v8671 = vadd.f32 %v8573, %v8630
    %v8672 = vadd.f32 %v8574, %v8632
    %v8673 = vadd.f32 %v8575, %v8634
    %v8674 = vadd.f32 %v8576, %v8636
    %v8675 = vadd.f32 %v8577, %v8638
    %v8676 = vadd.f32 %v8578, %v8640
    %v8677 = vadd.f32 %v8579, %v8642
    %v8678 = vadd.f32 %v8580, %v8644
    %v8679 = vadd.f32 %v8581, %v8646
    %v8680 = vadd.f32 %v8582, %v8648
    %s8681 = sld [smem:[#allocation4 + $0x29]]
    %v8682 = vstv %s8681
    %v8683 = vmul.f32 %v8682, %v326
    %v8684 = vmul.f32 %v8682, %v327
    %v8685 = vmul.f32 %v8682, %v328
    %v8686 = vmul.f32 %v8682, %v329
    %v8687 = vmul.f32 %v8682, %v330
    %v8688 = vmul.f32 %v8682, %v331
    %v8689 = vmul.f32 %v8682, %v332
    %v8690 = vmul.f32 %v8682, %v333
    %v8691 = vmul.f32 %v8682, %v334
    %v8692 = vmul.f32 %v8682, %v335
    %v8693 = vmul.f32 %v8682, %v336
    %v8694 = vmul.f32 %v8682, %v337
    %v8695 = vmul.f32 %v8682, %v338
    %v8696 = vmul.f32 %v8682, %v339
    %v8697 = vmul.f32 %v8682, %v340
    %v8698 = vmul.f32 %v8682, %v341
    %8715 = vrot.lane.b32.xlu0 %v8683, 122
    %v8716 = vpop.permute.xlu0 %8715
    %8717 = vrot.lane.b32.xlu0 %v8684, 122
    %v8718 = vpop.permute.xlu0 %8717
    %8719 = vrot.lane.b32.xlu0 %v8685, 122
    %v8720 = vpop.permute.xlu0 %8719
    %8721 = vrot.lane.b32.xlu0 %v8686, 122
    %v8722 = vpop.permute.xlu0 %8721
    %8723 = vrot.lane.b32.xlu0 %v8687, 122
    %v8724 = vpop.permute.xlu0 %8723
    %8725 = vrot.lane.b32.xlu0 %v8688, 122
    %v8726 = vpop.permute.xlu0 %8725
    %8727 = vrot.lane.b32.xlu0 %v8689, 122
    %v8728 = vpop.permute.xlu0 %8727
    %8729 = vrot.lane.b32.xlu0 %v8690, 122
    %v8730 = vpop.permute.xlu0 %8729
    %8731 = vrot.lane.b32.xlu0 %v8691, 122
    %v8732 = vpop.permute.xlu0 %8731
    %8733 = vrot.lane.b32.xlu0 %v8692, 122
    %v8734 = vpop.permute.xlu0 %8733
    %8735 = vrot.lane.b32.xlu0 %v8693, 122
    %v8736 = vpop.permute.xlu0 %8735
    %8737 = vrot.lane.b32.xlu0 %v8694, 122
    %v8738 = vpop.permute.xlu0 %8737
    %8739 = vrot.lane.b32.xlu0 %v8695, 122
    %v8740 = vpop.permute.xlu0 %8739
    %8741 = vrot.lane.b32.xlu0 %v8696, 122
    %v8742 = vpop.permute.xlu0 %8741
    %8743 = vrot.lane.b32.xlu0 %v8697, 122
    %v8744 = vpop.permute.xlu0 %8743
    %8745 = vrot.lane.b32.xlu0 %v8698, 122
    %v8746 = vpop.permute.xlu0 %8745
    %v8763 = vadd.f32 %v8665, %v8716
    %v8764 = vadd.f32 %v8666, %v8718
    %v8765 = vadd.f32 %v8667, %v8720
    %v8766 = vadd.f32 %v8668, %v8722
    %v8767 = vadd.f32 %v8669, %v8724
    %v8768 = vadd.f32 %v8670, %v8726
    %v8769 = vadd.f32 %v8671, %v8728
    %v8770 = vadd.f32 %v8672, %v8730
    %v8771 = vadd.f32 %v8673, %v8732
    %v8772 = vadd.f32 %v8674, %v8734
    %v8773 = vadd.f32 %v8675, %v8736
    %v8774 = vadd.f32 %v8676, %v8738
    %v8775 = vadd.f32 %v8677, %v8740
    %v8776 = vadd.f32 %v8678, %v8742
    %v8777 = vadd.f32 %v8679, %v8744
    %v8778 = vadd.f32 %v8680, %v8746
    %s8779 = sld [smem:[#allocation4 + $0x5a]]
    %v8780 = vstv %s8779
    %v8781 = vmul.f32 %v8780, %v348
    %v8782 = vmul.f32 %v8780, %v349
    %v8783 = vmul.f32 %v8780, %v350
    %v8784 = vmul.f32 %v8780, %v351
    %v8785 = vmul.f32 %v8780, %v352
    %v8786 = vmul.f32 %v8780, %v353
    %v8787 = vmul.f32 %v8780, %v354
    %v8788 = vmul.f32 %v8780, %v355
    %v8789 = vmul.f32 %v8780, %v356
    %v8790 = vmul.f32 %v8780, %v357
    %v8791 = vmul.f32 %v8780, %v358
    %v8792 = vmul.f32 %v8780, %v359
    %v8793 = vmul.f32 %v8780, %v360
    %v8794 = vmul.f32 %v8780, %v361
    %v8795 = vmul.f32 %v8780, %v362
    %v8796 = vmul.f32 %v8780, %v363
    %8813 = vrot.lane.b32.xlu0 %v8781, 122
    %v8814 = vpop.permute.xlu0 %8813
    %8815 = vrot.lane.b32.xlu0 %v8782, 122
    %v8816 = vpop.permute.xlu0 %8815
    %8817 = vrot.lane.b32.xlu0 %v8783, 122
    %v8818 = vpop.permute.xlu0 %8817
    %8819 = vrot.lane.b32.xlu0 %v8784, 122
    %v8820 = vpop.permute.xlu0 %8819
    %8821 = vrot.lane.b32.xlu0 %v8785, 122
    %v8822 = vpop.permute.xlu0 %8821
    %8823 = vrot.lane.b32.xlu0 %v8786, 122
    %v8824 = vpop.permute.xlu0 %8823
    %8825 = vrot.lane.b32.xlu0 %v8787, 122
    %v8826 = vpop.permute.xlu0 %8825
    %8827 = vrot.lane.b32.xlu0 %v8788, 122
    %v8828 = vpop.permute.xlu0 %8827
    %8829 = vrot.lane.b32.xlu0 %v8789, 122
    %v8830 = vpop.permute.xlu0 %8829
    %8831 = vrot.lane.b32.xlu0 %v8790, 122
    %v8832 = vpop.permute.xlu0 %8831
    %8833 = vrot.lane.b32.xlu0 %v8791, 122
    %v8834 = vpop.permute.xlu0 %8833
    %8835 = vrot.lane.b32.xlu0 %v8792, 122
    %v8836 = vpop.permute.xlu0 %8835
    %8837 = vrot.lane.b32.xlu0 %v8793, 122
    %v8838 = vpop.permute.xlu0 %8837
    %8839 = vrot.lane.b32.xlu0 %v8794, 122
    %v8840 = vpop.permute.xlu0 %8839
    %8841 = vrot.lane.b32.xlu0 %v8795, 122
    %v8842 = vpop.permute.xlu0 %8841
    %8843 = vrot.lane.b32.xlu0 %v8796, 122
    %v8844 = vpop.permute.xlu0 %8843
    %v8861 = vadd.f32 %v8763, %v8814
    %v8862 = vadd.f32 %v8764, %v8816
    %v8863 = vadd.f32 %v8765, %v8818
    %v8864 = vadd.f32 %v8766, %v8820
    %v8865 = vadd.f32 %v8767, %v8822
    %v8866 = vadd.f32 %v8768, %v8824
    %v8867 = vadd.f32 %v8769, %v8826
    %v8868 = vadd.f32 %v8770, %v8828
    %v8869 = vadd.f32 %v8771, %v8830
    %v8870 = vadd.f32 %v8772, %v8832
    %v8871 = vadd.f32 %v8773, %v8834
    %v8872 = vadd.f32 %v8774, %v8836
    %v8873 = vadd.f32 %v8775, %v8838
    %v8874 = vadd.f32 %v8776, %v8840
    %v8875 = vadd.f32 %v8777, %v8842
    %v8876 = vadd.f32 %v8778, %v8844
    %s8877 = sld [smem:[#allocation4 + $0x30]]
    %v8878 = vstv %s8877
    %v8879 = vmul.f32 %v8878, %v327
    %v8880 = vmul.f32 %v8878, %v328
    %v8881 = vmul.f32 %v8878, %v329
    %v8882 = vmul.f32 %v8878, %v330
    %v8883 = vmul.f32 %v8878, %v331
    %v8884 = vmul.f32 %v8878, %v332
    %v8885 = vmul.f32 %v8878, %v333
    %v8886 = vmul.f32 %v8878, %v334
    %v8887 = vmul.f32 %v8878, %v335
    %v8888 = vmul.f32 %v8878, %v336
    %v8889 = vmul.f32 %v8878, %v337
    %v8890 = vmul.f32 %v8878, %v338
    %v8891 = vmul.f32 %v8878, %v339
    %v8892 = vmul.f32 %v8878, %v340
    %v8893 = vmul.f32 %v8878, %v341
    %v8894 = vmul.f32 %v8878, %v342
    %8911 = vrot.lane.b32.xlu0 %v8879, 122
    %v8912 = vpop.permute.xlu0 %8911
    %8913 = vrot.lane.b32.xlu0 %v8880, 122
    %v8914 = vpop.permute.xlu0 %8913
    %8915 = vrot.lane.b32.xlu0 %v8881, 122
    %v8916 = vpop.permute.xlu0 %8915
    %8917 = vrot.lane.b32.xlu0 %v8882, 122
    %v8918 = vpop.permute.xlu0 %8917
    %8919 = vrot.lane.b32.xlu0 %v8883, 122
    %v8920 = vpop.permute.xlu0 %8919
    %8921 = vrot.lane.b32.xlu0 %v8884, 122
    %v8922 = vpop.permute.xlu0 %8921
    %8923 = vrot.lane.b32.xlu0 %v8885, 122
    %v8924 = vpop.permute.xlu0 %8923
    %8925 = vrot.lane.b32.xlu0 %v8886, 122
    %v8926 = vpop.permute.xlu0 %8925
    %8927 = vrot.lane.b32.xlu0 %v8887, 122
    %v8928 = vpop.permute.xlu0 %8927
    %8929 = vrot.lane.b32.xlu0 %v8888, 122
    %v8930 = vpop.permute.xlu0 %8929
    %8931 = vrot.lane.b32.xlu0 %v8889, 122
    %v8932 = vpop.permute.xlu0 %8931
    %8933 = vrot.lane.b32.xlu0 %v8890, 122
    %v8934 = vpop.permute.xlu0 %8933
    %8935 = vrot.lane.b32.xlu0 %v8891, 122
    %v8936 = vpop.permute.xlu0 %8935
    %8937 = vrot.lane.b32.xlu0 %v8892, 122
    %v8938 = vpop.permute.xlu0 %8937
    %8939 = vrot.lane.b32.xlu0 %v8893, 122
    %v8940 = vpop.permute.xlu0 %8939
    %8941 = vrot.lane.b32.xlu0 %v8894, 122
    %v8942 = vpop.permute.xlu0 %8941
    %v8959 = vadd.f32 %v8861, %v8912
    %v8960 = vadd.f32 %v8862, %v8914
    %v8961 = vadd.f32 %v8863, %v8916
    %v8962 = vadd.f32 %v8864, %v8918
    %v8963 = vadd.f32 %v8865, %v8920
    %v8964 = vadd.f32 %v8866, %v8922
    %v8965 = vadd.f32 %v8867, %v8924
    %v8966 = vadd.f32 %v8868, %v8926
    %v8967 = vadd.f32 %v8869, %v8928
    %v8968 = vadd.f32 %v8870, %v8930
    %v8969 = vadd.f32 %v8871, %v8932
    %v8970 = vadd.f32 %v8872, %v8934
    %v8971 = vadd.f32 %v8873, %v8936
    %v8972 = vadd.f32 %v8874, %v8938
    %v8973 = vadd.f32 %v8875, %v8940
    %v8974 = vadd.f32 %v8876, %v8942
    %s8975 = sld [smem:[#allocation4 + $0x61]]
    %v8976 = vstv %s8975
    %v8977 = vmul.f32 %v8976, %v349
    %v8978 = vmul.f32 %v8976, %v350
    %v8979 = vmul.f32 %v8976, %v351
    %v8980 = vmul.f32 %v8976, %v352
    %v8981 = vmul.f32 %v8976, %v353
    %v8982 = vmul.f32 %v8976, %v354
    %v8983 = vmul.f32 %v8976, %v355
    %v8984 = vmul.f32 %v8976, %v356
    %v8985 = vmul.f32 %v8976, %v357
    %v8986 = vmul.f32 %v8976, %v358
    %v8987 = vmul.f32 %v8976, %v359
    %v8988 = vmul.f32 %v8976, %v360
    %v8989 = vmul.f32 %v8976, %v361
    %v8990 = vmul.f32 %v8976, %v362
    %v8991 = vmul.f32 %v8976, %v363
    %v8992 = vmul.f32 %v8976, %v364
    %9009 = vrot.lane.b32.xlu0 %v8977, 122
    %v9010 = vpop.permute.xlu0 %9009
    %9011 = vrot.lane.b32.xlu0 %v8978, 122
    %v9012 = vpop.permute.xlu0 %9011
    %9013 = vrot.lane.b32.xlu0 %v8979, 122
    %v9014 = vpop.permute.xlu0 %9013
    %9015 = vrot.lane.b32.xlu0 %v8980, 122
    %v9016 = vpop.permute.xlu0 %9015
    %9017 = vrot.lane.b32.xlu0 %v8981, 122
    %v9018 = vpop.permute.xlu0 %9017
    %9019 = vrot.lane.b32.xlu0 %v8982, 122
    %v9020 = vpop.permute.xlu0 %9019
    %9021 = vrot.lane.b32.xlu0 %v8983, 122
    %v9022 = vpop.permute.xlu0 %9021
    %9023 = vrot.lane.b32.xlu0 %v8984, 122
    %v9024 = vpop.permute.xlu0 %9023
    %9025 = vrot.lane.b32.xlu0 %v8985, 122
    %v9026 = vpop.permute.xlu0 %9025
    %9027 = vrot.lane.b32.xlu0 %v8986, 122
    %v9028 = vpop.permute.xlu0 %9027
    %9029 = vrot.lane.b32.xlu0 %v8987, 122
    %v9030 = vpop.permute.xlu0 %9029
    %9031 = vrot.lane.b32.xlu0 %v8988, 122
    %v9032 = vpop.permute.xlu0 %9031
    %9033 = vrot.lane.b32.xlu0 %v8989, 122
    %v9034 = vpop.permute.xlu0 %9033
    %9035 = vrot.lane.b32.xlu0 %v8990, 122
    %v9036 = vpop.permute.xlu0 %9035
    %9037 = vrot.lane.b32.xlu0 %v8991, 122
    %v9038 = vpop.permute.xlu0 %9037
    %9039 = vrot.lane.b32.xlu0 %v8992, 122
    %v9040 = vpop.permute.xlu0 %9039
    %v9057 = vadd.f32 %v8959, %v9010
    %v9058 = vadd.f32 %v8960, %v9012
    %v9059 = vadd.f32 %v8961, %v9014
    %v9060 = vadd.f32 %v8962, %v9016
    %v9061 = vadd.f32 %v8963, %v9018
    %v9062 = vadd.f32 %v8964, %v9020
    %v9063 = vadd.f32 %v8965, %v9022
    %v9064 = vadd.f32 %v8966, %v9024
    %v9065 = vadd.f32 %v8967, %v9026
    %v9066 = vadd.f32 %v8968, %v9028
    %v9067 = vadd.f32 %v8969, %v9030
    %v9068 = vadd.f32 %v8970, %v9032
    %v9069 = vadd.f32 %v8971, %v9034
    %v9070 = vadd.f32 %v8972, %v9036
    %v9071 = vadd.f32 %v8973, %v9038
    %v9072 = vadd.f32 %v8974, %v9040
    %v9073 = vxor.u32 %v9057, 2147483648
    %v9074 = vxor.u32 %v9058, 2147483648
    %v9075 = vxor.u32 %v9059, 2147483648
    %v9076 = vxor.u32 %v9060, 2147483648
    %v9077 = vxor.u32 %v9061, 2147483648
    %v9078 = vxor.u32 %v9062, 2147483648
    %v9079 = vxor.u32 %v9063, 2147483648
    %v9080 = vxor.u32 %v9064, 2147483648
    %v9081 = vxor.u32 %v9065, 2147483648
    %v9082 = vxor.u32 %v9066, 2147483648
    %v9083 = vxor.u32 %v9067, 2147483648
    %v9084 = vxor.u32 %v9068, 2147483648
    %v9085 = vxor.u32 %v9069, 2147483648
    %v9086 = vxor.u32 %v9070, 2147483648
    %v9087 = vxor.u32 %v9071, 2147483648
    %v9088 = vxor.u32 %v9072, 2147483648
    %v9089 = vmul.f32 %v9073, 1.442695
    %v9090 = vpow.pop %v9089
    %v9091 = vmul.f32 %v9074, 1.442695
    %v9092 = vpow.pop %v9091
    %v9093 = vmul.f32 %v9075, 1.442695
    %v9094 = vpow.pop %v9093
    %v9095 = vmul.f32 %v9076, 1.442695
    %v9096 = vpow.pop %v9095
    %v9097 = vmul.f32 %v9077, 1.442695
    %v9098 = vpow.pop %v9097
    %v9099 = vmul.f32 %v9078, 1.442695
    %v9100 = vpow.pop %v9099
    %v9101 = vmul.f32 %v9079, 1.442695
    %v9102 = vpow.pop %v9101
    %v9103 = vmul.f32 %v9080, 1.442695
    %v9104 = vpow.pop %v9103
    %v9105 = vmul.f32 %v9081, 1.442695
    %v9106 = vpow.pop %v9105
    %v9107 = vmul.f32 %v9082, 1.442695
    %v9108 = vpow.pop %v9107
    %v9109 = vmul.f32 %v9083, 1.442695
    %v9110 = vpow.pop %v9109
    %v9111 = vmul.f32 %v9084, 1.442695
    %v9112 = vpow.pop %v9111
    %v9113 = vmul.f32 %v9085, 1.442695
    %v9114 = vpow.pop %v9113
    %v9115 = vmul.f32 %v9086, 1.442695
    %v9116 = vpow.pop %v9115
    %v9117 = vmul.f32 %v9087, 1.442695
    %v9118 = vpow.pop %v9117
    %v9119 = vmul.f32 %v9088, 1.442695
    %v9120 = vpow.pop %v9119
    %v9121 = vadd.f32 %v9090, 1.0
    %v9122 = vadd.f32 %v9092, 1.0
    %v9123 = vadd.f32 %v9094, 1.0
    %v9124 = vadd.f32 %v9096, 1.0
    %v9125 = vadd.f32 %v9098, 1.0
    %v9126 = vadd.f32 %v9100, 1.0
    %v9127 = vadd.f32 %v9102, 1.0
    %v9128 = vadd.f32 %v9104, 1.0
    %v9129 = vadd.f32 %v9106, 1.0
    %v9130 = vadd.f32 %v9108, 1.0
    %v9131 = vadd.f32 %v9110, 1.0
    %v9132 = vadd.f32 %v9112, 1.0
    %v9133 = vadd.f32 %v9114, 1.0
    %v9134 = vadd.f32 %v9116, 1.0
    %v9135 = vadd.f32 %v9118, 1.0
    %v9136 = vadd.f32 %v9120, 1.0
    %v9137 = vrcp.pop %v9121
    %v9138 = vmul.f32 1.0, %v9137
    %v9139 = vrcp.pop %v9122
    %v9140 = vmul.f32 1.0, %v9139
    %v9141 = vrcp.pop %v9123
    %v9142 = vmul.f32 1.0, %v9141
    %v9143 = vrcp.pop %v9124
    %v9144 = vmul.f32 1.0, %v9143
    %v9145 = vrcp.pop %v9125
    %v9146 = vmul.f32 1.0, %v9145
    %v9147 = vrcp.pop %v9126
    %v9148 = vmul.f32 1.0, %v9147
    %v9149 = vrcp.pop %v9127
    %v9150 = vmul.f32 1.0, %v9149
    %v9151 = vrcp.pop %v9128
    %v9152 = vmul.f32 1.0, %v9151
    %v9153 = vrcp.pop %v9129
    %v9154 = vmul.f32 1.0, %v9153
    %v9155 = vrcp.pop %v9130
    %v9156 = vmul.f32 1.0, %v9155
    %v9157 = vrcp.pop %v9131
    %v9158 = vmul.f32 1.0, %v9157
    %v9159 = vrcp.pop %v9132
    %v9160 = vmul.f32 1.0, %v9159
    %v9161 = vrcp.pop %v9133
    %v9162 = vmul.f32 1.0, %v9161
    %v9163 = vrcp.pop %v9134
    %v9164 = vmul.f32 1.0, %v9163
    %v9165 = vrcp.pop %v9135
    %v9166 = vmul.f32 1.0, %v9165
    %v9167 = vrcp.pop %v9136
    %v9168 = vmul.f32 1.0, %v9167
    %vm9169 = vcmask 123904
    %9170 = vst.msk [vmem:[#allocation9] sm:$0x3] %vm9169, %v9138
    %v9173 = vunpack.c.l.s4 1983009808
    %v9174 = vunpack.c.0.s8 %v9173
    %v9175 = vlaneseq
    %v9176 = vshrl.u32 %v9175, 7
    %v9177 = vsub.s32 %v9174, %v9176
    %v9178 = vrot.slane %v9140, %v9177
    %9179 = vrot.lane.b32.xlu0 %v9178, 16
    %v9180 = vpop.permute.xlu0 %9179
    %vm9182 = vcmask 255104
    %9183 = vst.msk [vmem:[#allocation9] sm:$0x3] %vm9182, %v9180
    %v9186 = vunpack.c.l.s4 1983009808
    %v9187 = vunpack.c.0.s8 %v9186
    %v9188 = vlaneseq
    %v9189 = vshrl.u32 %v9188, 7
    %v9190 = vsub.s32 %v9187, %v9189
    %v9191 = vrot.slane %v9142, %v9190
    %9192 = vrot.lane.b32.xlu0 %v9191, 32
    %v9193 = vpop.permute.xlu0 %9192
    %vm9195 = vcmask 386304
    %9196 = vst.msk [vmem:[#allocation9] sm:$0x3] %vm9195, %v9193
    %v9199 = vunpack.c.l.s4 1983009808
    %v9200 = vunpack.c.0.s8 %v9199
    %v9201 = vlaneseq
    %v9202 = vshrl.u32 %v9201, 7
    %v9203 = vsub.s32 %v9200, %v9202
    %v9204 = vrot.slane %v9144, %v9203
    %9205 = vrot.lane.b32.xlu0 %v9204, 48
    %v9206 = vpop.permute.xlu0 %9205
    %vm9208 = vcmask 517504
    %9209 = vst.msk [vmem:[#allocation9] sm:$0x3] %vm9208, %v9206
    %v9212 = vunpack.c.l.s4 1983009808
    %v9213 = vunpack.c.0.s8 %v9212
    %v9214 = vlaneseq
    %v9215 = vshrl.u32 %v9214, 7
    %v9216 = vsub.s32 %v9213, %v9215
    %v9217 = vrot.slane %v9146, %v9216
    %9218 = vrot.lane.b32.xlu0 %v9217, 64
    %v9219 = vpop.permute.xlu0 %9218
    %vm9221 = vcmask 648704
    %9222 = vst.msk [vmem:[#allocation9] sm:$0x3] %vm9221, %v9219
    %v9225 = vunpack.c.l.s4 1983009808
    %v9226 = vunpack.c.0.s8 %v9225
    %v9227 = vlaneseq
    %v9228 = vshrl.u32 %v9227, 7
    %v9229 = vsub.s32 %v9226, %v9228
    %v9230 = vrot.slane %v9148, %v9229
    %9231 = vrot.lane.b32.xlu0 %v9230, 80
    %v9232 = vpop.permute.xlu0 %9231
    %vm9234 = vcmask 779904
    %9235 = vst.msk [vmem:[#allocation9] sm:$0x3] %vm9234, %v9232
    %v9238 = vunpack.c.l.s4 1983009808
    %v9239 = vunpack.c.0.s8 %v9238
    %v9240 = vlaneseq
    %v9241 = vshrl.u32 %v9240, 7
    %v9242 = vsub.s32 %v9239, %v9241
    %v9243 = vrot.slane %v9150, %v9242
    %9244 = vrot.lane.b32.xlu0 %v9243, 96
    %v9245 = vpop.permute.xlu0 %9244
    %vm9247 = vcmask 911104
    %9248 = vst.msk [vmem:[#allocation9] sm:$0x3] %vm9247, %v9245
    %v9251 = vunpack.c.l.s4 1983009808
    %v9252 = vunpack.c.0.s8 %v9251
    %v9253 = vlaneseq
    %v9254 = vshrl.u32 %v9253, 7
    %v9255 = vsub.s32 %v9252, %v9254
    %v9256 = vrot.slane %v9152, %v9255
    %9257 = vrot.lane.b32.xlu0 %v9256, 112
    %v9258 = vpop.permute.xlu0 %9257
    %vm9260 = vcmask 1042304
    %9261 = vst.msk [vmem:[#allocation9] sm:$0x3] %vm9260, %v9258
    %9262 = vst.msk [vmem:[#allocation9 + $0x2] sm:$0x3] %vm9169, %v9154
    %v9265 = vunpack.c.l.s4 1983009808
    %v9266 = vunpack.c.0.s8 %v9265
    %v9267 = vlaneseq
    %v9268 = vshrl.u32 %v9267, 7
    %v9269 = vsub.s32 %v9266, %v9268
    %v9270 = vrot.slane %v9156, %v9269
    %9271 = vrot.lane.b32.xlu0 %v9270, 16
    %v9272 = vpop.permute.xlu0 %9271
    %9274 = vst.msk [vmem:[#allocation9 + $0x2] sm:$0x3] %vm9182, %v9272
    %v9277 = vunpack.c.l.s4 1983009808
    %v9278 = vunpack.c.0.s8 %v9277
    %v9279 = vlaneseq
    %v9280 = vshrl.u32 %v9279, 7
    %v9281 = vsub.s32 %v9278, %v9280
    %v9282 = vrot.slane %v9158, %v9281
    %9283 = vrot.lane.b32.xlu0 %v9282, 32
    %v9284 = vpop.permute.xlu0 %9283
    %9286 = vst.msk [vmem:[#allocation9 + $0x2] sm:$0x3] %vm9195, %v9284
    %v9289 = vunpack.c.l.s4 1983009808
    %v9290 = vunpack.c.0.s8 %v9289
    %v9291 = vlaneseq
    %v9292 = vshrl.u32 %v9291, 7
    %v9293 = vsub.s32 %v9290, %v9292
    %v9294 = vrot.slane %v9160, %v9293
    %9295 = vrot.lane.b32.xlu0 %v9294, 48
    %v9296 = vpop.permute.xlu0 %9295
    %9298 = vst.msk [vmem:[#allocation9 + $0x2] sm:$0x3] %vm9208, %v9296
    %v9301 = vunpack.c.l.s4 1983009808
    %v9302 = vunpack.c.0.s8 %v9301
    %v9303 = vlaneseq
    %v9304 = vshrl.u32 %v9303, 7
    %v9305 = vsub.s32 %v9302, %v9304
    %v9306 = vrot.slane %v9162, %v9305
    %9307 = vrot.lane.b32.xlu0 %v9306, 64
    %v9308 = vpop.permute.xlu0 %9307
    %9310 = vst.msk [vmem:[#allocation9 + $0x2] sm:$0x3] %vm9221, %v9308
    %v9313 = vunpack.c.l.s4 1983009808
    %v9314 = vunpack.c.0.s8 %v9313
    %v9315 = vlaneseq
    %v9316 = vshrl.u32 %v9315, 7
    %v9317 = vsub.s32 %v9314, %v9316
    %v9318 = vrot.slane %v9164, %v9317
    %9319 = vrot.lane.b32.xlu0 %v9318, 80
    %v9320 = vpop.permute.xlu0 %9319
    %9322 = vst.msk [vmem:[#allocation9 + $0x2] sm:$0x3] %vm9234, %v9320
    %v9325 = vunpack.c.l.s4 1983009808
    %v9326 = vunpack.c.0.s8 %v9325
    %v9327 = vlaneseq
    %v9328 = vshrl.u32 %v9327, 7
    %v9329 = vsub.s32 %v9326, %v9328
    %v9330 = vrot.slane %v9166, %v9329
    %9331 = vrot.lane.b32.xlu0 %v9330, 96
    %v9332 = vpop.permute.xlu0 %9331
    %9334 = vst.msk [vmem:[#allocation9 + $0x2] sm:$0x3] %vm9247, %v9332
    %v9337 = vunpack.c.l.s4 1983009808
    %v9338 = vunpack.c.0.s8 %v9337
    %v9339 = vlaneseq
    %v9340 = vshrl.u32 %v9339, 7
    %v9341 = vsub.s32 %v9338, %v9340
    %v9342 = vrot.slane %v9168, %v9341
    %9343 = vrot.lane.b32.xlu0 %v9342, 112
    %v9344 = vpop.permute.xlu0 %9343
    %9346 = vst.msk [vmem:[#allocation9 + $0x2] sm:$0x3] %vm9260, %v9344
    // Predicated region
    $region18: #{tpu_custom_call.1} parent=1 // pred_check
      _
    $region19: #{tpu_custom_call.1} parent=1 // pred_check_branch
      %9348 = sbr.rel (0) target = $region21
    $region20: #{tpu_custom_call.1} parent=1 // pred_region
      %s9350 = ssub.s32 64, 64
      %9351 = vsyncadd [#allocation6], %s9350
      %s9353 = sshll.u32 [#allocation9], 4
      %s9354 = int_to_ptr.vmem [resolvable:$true] %s9353
      %9356 = dma.vmem_to_hbm [thread:$0]  %s9354, 64, %s2, [#allocation6]
    $region21: #{tpu_custom_call.1} parent=1 // pred_fallthru
      _
    // Predicated region
    $region22: #{tpu_custom_call.1} parent=1 // pred_check
      _
    $region23: #{tpu_custom_call.1} parent=1 // pred_check_branch
      %9358 = sbr.rel (0) target = $region25
    $region24: #{tpu_custom_call.1} parent=1 // pred_region
      %9359 = dma.done [#allocation6], 64
    $region25: #{tpu_custom_call.1} parent=1 // pred_fallthru
      _
    %9360 = vsyncpa [#allocation5], 1
    %9361 = vsyncpa [#allocation6], 1
    %9362 = vsyncpa [#allocation7], 1

</llo_original>
